<compile_context>
chip_gen: v7x
topology: tpu7x:2x2x1
jax: 0.10.0
libtpu: 0.0.40
codegen_flags: <defaults>
</compile_context>

<pallas_src>
import functools
import math

import jax
import jax.numpy as jnp
from jax import lax
from jax.experimental import pallas as pl
from jax.experimental.pallas import tpu as pltpu  # noqa: F401  (TPU backend / tuning hooks)

NEG_INF = jnp.float32(-1e30)
LN_EPS = 1e-5


# ------------------------------ fused kernel --------------------------------

def _decoder_layer_kernel(
    # data / masks
    x_ref, mem_ref, titles_ref,
    bias_self_ref, tkp_ref, tbias_ref, cbias_ref, nfp_ref,
    # self-attention + norm1
    qkv_w_ref, qkv_b_ref, sa_ow_ref, sa_ob_ref, n1_g_ref, n1_b_ref,
    # title + cross attention + norm2
    q2_w_ref, q2_b_ref, kv_w_ref, kv_b_ref, tk_w_ref, tk_b_ref,
    ca_ow_ref, ca_ob_ref, n2_g_ref, n2_b_ref,
    # FFN + norm3
    w1_ref, b1_ref, w2_ref, b2_ref, n3_g_ref, n3_b_ref,
    # output
    o_ref,
    *, B, L, NS, S, H, E, scale, eps):
    f32 = jnp.float32
    Dh = E // H

    def mm(a, w):
        # MXU matmul: bf16 operands, f32 accumulation (projection / FFN path).
        return jnp.dot(a.astype(jnp.bfloat16), w.astype(jnp.bfloat16),
                       preferred_element_type=f32)

    def dot_nt(a, b):
        # a @ b.T without materializing a transpose (f32, attention scores).
        return lax.dot_general(a, b, (((1,), (1,)), ((), ())),
                               preferred_element_type=f32)

    def dot_nn(a, b):
        return jnp.dot(a, b, preferred_element_type=f32)

    def softmax(s, exact=False):
        m = jnp.max(s, axis=-1, keepdims=True)
        e = jnp.exp(s - m)
        d = jnp.sum(e, axis=-1, keepdims=True)
        if exact:
            return e / d                       # exact: feeds the statement distribution
        return e * pl.reciprocal(d, approx=True)   # EUP slot, consumed by value matmul

    def layer_norm(y, g, b):
        mu = jnp.mean(y, axis=-1, keepdims=True)
        yc = y - mu
        var = jnp.mean(yc * yc, axis=-1, keepdims=True)
        return yc * lax.rsqrt(var + eps) * g + b

    # ---- load everything once (tiny; stays in VMEM/vregs) ----
    x = x_ref[...]                  # (B*L, E)  batch-first flattened tgt
    mem = mem_ref[...]              # (B*NS*S, E)
    titles = titles_ref[...]        # (B*NS, E) title tokens only
    bias_self = bias_self_ref[...]  # (L, L)    additive attn_mask
    tkp = tkp_ref[...]              # (B, L)    tgt key-padding bias (0 / -1e30)
    tbias = tbias_ref[...]          # (B, NS)   title key-padding bias
    cbias = cbias_ref[...]          # (B*NS, S) per-statement key-padding bias
    nfp = nfp_ref[...]              # (B, NS)   1.0 if statement not fully padded

    sa_ow = sa_ow_ref[...]; sa_ob = sa_ob_ref[...]
    ca_ow = ca_ow_ref[...]; ca_ob = ca_ob_ref[...]
    n1_g = n1_g_ref[...]; n1_b = n1_b_ref[...]
    n2_g = n2_g_ref[...]; n2_b = n2_b_ref[...]
    n3_g = n3_g_ref[...]; n3_b = n3_b_ref[...]
    q2w = q2_w_ref[...]; q2b = q2_b_ref[...]
    w1 = w1_ref[...]; b1 = b1_ref[...]
    w2 = w2_ref[...]; b2 = b2_ref[...]

    # ---- wide fused projections (single MXU passes, lane-dense) ----
    qkv = mm(x, qkv_w_ref[...]) + qkv_b_ref[...]     # (B*L, 3E)  [Q|K|V] self-attn
    kvm = mm(mem, kv_w_ref[...]) + kv_b_ref[...]     # (B*NS*S, 2E)  [K|V] cross-attn
    kt = mm(titles, tk_w_ref[...]) + tk_b_ref[...]   # (B*NS, E)  K of title attention

    inv_h = 1.0 / H

    # Static unroll over batches / heads / statements: everything below is
    # 2-D slices + 2-D dots, fully visible to the LLO scheduler.
    for b in range(B):
        r0 = b * L
        t0 = b * NS
        x_b = x[r0:r0 + L, :]                        # (L, E)

        # ---- 1) masked multi-head self-attention + residual + norm1 ----
        bias_b = bias_self + tkp[b:b + 1, :]         # (L, L)
        y1 = sa_ob + x_b                             # out-proj bias + residual
        for h in range(H):
            c = h * Dh
            q = qkv[r0:r0 + L, c:c + Dh]
            k = qkv[r0:r0 + L, E + c:E + c + Dh]
            v = qkv[r0:r0 + L, 2 * E + c:2 * E + c + Dh]
            s = dot_nt(q, k) * scale + bias_b
            p = softmax(s)
            o_h = dot_nn(p, v)                       # (L, Dh)
            y1 = y1 + mm(o_h, sa_ow[c:c + Dh, :])    # out-proj commuted per head
        tgt1_b = layer_norm(y1, n1_g, n1_b)          # (L, E)

        # ---- 2) fused Q projection (title | cross share the same input) ----
        q2 = mm(tgt1_b, q2w) + q2b                   # (L, 2E): [:, :E] title, [:, E:] cross

        # title attention -> head-averaged distribution over statements
        # TODO(synk): SimpleMHA is not defined in the provided source; reconstructed
        # as standard MHA returning head-averaged attention weights (L, NS) per batch.
        tb = tbias[b:b + 1, :]
        dist = jnp.zeros((L, NS), f32)
        for h in range(H):
            c = h * Dh
            qt = q2[:, c:c + Dh]
            ktb = kt[t0:t0 + NS, c:c + Dh]
            st = dot_nt(qt, ktb) * scale + tb
            dist = dist + softmax(st, exact=True)
        dist = dist * inv_h                          # (L, NS)

        # ---- 3) per-statement cross attention, dist-weighted sum commuted
        #         through the shared output projection ----
        acc_h = [jnp.zeros((L, Dh), f32) for _ in range(H)]
        csum = jnp.zeros((L, 1), f32)
        for i in range(NS):
            base = (t0 + i) * S
            # weight: dist * (statement not fully padded); zeroes garbage rows
            w_i = dist[:, i:i + 1] * nfp[b:b + 1, i:i + 1]     # (L, 1)
            csum = csum + w_i
            cb = cbias[t0 + i:t0 + i + 1, :]                   # (1, S)
            for h in range(H):
                c = h * Dh
                qc = q2[:, E + c:E + c + Dh]
                kc = kvm[base:base + S, c:c + Dh]
                vc = kvm[base:base + S, E + c:E + c + Dh]
                s = dot_nt(qc, kc) * scale + cb
                p = softmax(s)
                acc_h[h] = acc_h[h] + w_i * dot_nn(p, vc)
        y2 = csum * ca_ob + tgt1_b
        for h in range(H):
            c = h * Dh
            y2 = y2 + mm(acc_h[h], ca_ow[c:c + Dh, :])
        tgt2_b = layer_norm(y2, n2_g, n2_b)          # (L, E)

        # ---- 4) feed-forward + residual + norm3 (dropout = identity) ----
        h1 = jnp.maximum(mm(tgt2_b, w1) + b1, 0.0)
        y3 = mm(h1, w2) + b2 + tgt2_b
        o_ref[r0:r0 + L, :] = layer_norm(y3, n3_g, n3_b)


# ----------------------------- forward wrapper -------------------------------

@functools.partial(jax.jit, static_argnames=("n_head",))
def decoder_layer_forward(params, tgt, memory, tgt_mask, memory_key_padding_mask,
                          tgt_key_padding_mask=None, *, n_head):
    L, B, E = tgt.shape
    _, NS, S, _ = memory.shape
    H = n_head
    Dh = E // H
    scale = 1.0 / math.sqrt(Dh)

    # Tiny boundary layout conversions (a few KB); all heavy intermediates stay in VMEM.
    x = jnp.transpose(tgt, (1, 0, 2)).reshape(B * L, E).astype(jnp.float32)
    mem = memory.reshape(B * NS * S, E).astype(jnp.float32)
    titles = memory[:, :, 0, :].reshape(B * NS, E).astype(jnp.float32)

    bias_self = tgt_mask.astype(jnp.float32)                             # (L, L)
    if tgt_key_padding_mask is None:
        tkp_bias = jnp.zeros((B, L), jnp.float32)
    else:
        tkp_bias = jnp.where(tgt_key_padding_mask, NEG_INF, jnp.float32(0.0))

    title_pad = memory_key_padding_mask[:, :, 0]                         # (B, NS)
    title_bias = jnp.where(title_pad, NEG_INF, jnp.float32(0.0))
    final_pad = memory_key_padding_mask.at[:, :, 0].set(False)           # first token never masked
    cross_bias = jnp.where(final_pad, NEG_INF, jnp.float32(0.0)).reshape(B * NS, S)
    not_fp = (~title_pad).astype(jnp.float32)                            # (B, NS)

    p = params
    out_flat = pl.pallas_call(
        functools.partial(_decoder_layer_kernel,
                          B=B, L=L, NS=NS, S=S, H=H, E=E, scale=scale, eps=LN_EPS),
        out_shape=jax.ShapeDtypeStruct((B * L, E), jnp.float32),
    )(x, mem, titles, bias_self, tkp_bias, title_bias, cross_bias, not_fp,
      p["qkv_w"], p["qkv_b"], p["sa_out_w"], p["sa_out_b"], p["n1_g"], p["n1_b"],
      p["q2_w"], p["q2_b"], p["kv_w"], p["kv_b"], p["tk_w"], p["tk_b"],
      p["ca_out_w"], p["ca_out_b"], p["n2_g"], p["n2_b"],
      p["w1"], p["b1"], p["w2"], p["b2"], p["n3_g"], p["n3_b"])

    return out_flat.reshape(B, L, E).transpose(1, 0, 2)                  # (L, B, E)


# ------------------------------ Parameters ----------------------------------

def init_params(key, d_model, n_head, dim_feedforward):
    """Weights stored pre-transposed (in_features, out_features) and pre-fused."""
    E, F = d_model, dim_feedforward
    ks = iter(jax.random.split(key, 32))

    def w(shape, fan_in):
        return jax.random.normal(next(ks), shape, jnp.float32) / math.sqrt(fan_in)

    def b(shape):
        return jax.random.normal(next(ks), shape, jnp.float32) * 0.02

    def ln():
        return jnp.ones((1, E), jnp.float32), jnp.zeros((1, E), jnp.float32)

    n1_g, n1_b = ln()
    n2_g, n2_b = ln()
    n3_g, n3_b = ln()
    # Pre-concatenated fused projections (done ONCE here, not per forward):
    q2_w = jnp.concatenate([w((E, E), E), w((E, E), E)], axis=1)   # [title_q | cross_q]
    q2_b = jnp.concatenate([b((1, E)), b((1, E))], axis=1)

    return dict(
        qkv_w=w((E, 3 * E), E), qkv_b=b((1, 3 * E)),
        sa_out_w=w((E, E), E), sa_out_b=b((1, E)),
        n1_g=n1_g, n1_b=n1_b,
        q2_w=q2_w, q2_b=q2_b,
        kv_w=w((E, 2 * E), E), kv_b=b((1, 2 * E)),                 # cross [K | V]
        tk_w=w((E, E), E), tk_b=b((1, E)),                         # title K
        ca_out_w=w((E, E), E), ca_out_b=b((1, E)),
        n2_g=n2_g, n2_b=n2_b,
        w1=w((E, F), E), b1=jnp.zeros((1, F), jnp.float32),
        w2=w((F, E), F), b2=jnp.zeros((1, E), jnp.float32),
        n3_g=n3_g, n3_b=n3_b,
    )


# --------------------------------- Main --------------------------------------

if __name__ == "__main__":
    d_model, n_head, dim_ff = 32, 4, 64
    L, B, NS, S = 8, 2, 3, 8

    key = jax.random.PRNGKey(0)
    kparam, ktgt, kmem = jax.random.split(key, 3)
    params = init_params(kparam, d_model, n_head, dim_ff)

    tgt = jax.random.normal(ktgt, (L, B, d_model), jnp.float32)          # (L, B, E)
    memory = jax.random.normal(kmem, (B, NS, S, d_model), jnp.float32)   # (B, NS, S, E)

    # causal additive float mask (L, L)
    idx = jnp.arange(L)
    tgt_mask = jnp.where(idx[None, :] > idx[:, None], jnp.float32(-1e9), jnp.float32(0.0))

    # memory key padding mask (B, NS, S), True = padded; one statement fully padded
    valid_lens = jnp.array([[8, 5, 3], [6, 8, 0]], dtype=jnp.int32)
    pos = jnp.arange(S)
    memory_key_padding_mask = pos[None, None, :] >= valid_lens[:, :, None]

    out = decoder_layer_forward(params, tgt, memory, tgt_mask, memory_key_padding_mask,
                                n_head=n_head)
    out = jax.block_until_ready(out)

    assert out.shape == (L, B, d_model)
    assert bool(jnp.all(jnp.isfinite(out)))
    print("KERNEL_OK")
</pallas_src>

<mosaic_0001>
module attributes {stable_mosaic.version = 11 : i64} {
  func.func @_decoder_layer_kernel(%arg0: memref<16x32xf32, #tpu.memory_space<vmem>>, %arg1: memref<48x32xf32, #tpu.memory_space<vmem>>, %arg2: memref<6x32xf32, #tpu.memory_space<vmem>>, %arg3: memref<8x8xf32, #tpu.memory_space<vmem>>, %arg4: memref<2x8xf32, #tpu.memory_space<vmem>>, %arg5: memref<2x3xf32, #tpu.memory_space<vmem>>, %arg6: memref<6x8xf32, #tpu.memory_space<vmem>>, %arg7: memref<2x3xf32, #tpu.memory_space<vmem>>, %arg8: memref<32x96xf32, #tpu.memory_space<vmem>>, %arg9: memref<1x96xf32, #tpu.memory_space<vmem>>, %arg10: memref<32x32xf32, #tpu.memory_space<vmem>>, %arg11: memref<1x32xf32, #tpu.memory_space<vmem>>, %arg12: memref<1x32xf32, #tpu.memory_space<vmem>>, %arg13: memref<1x32xf32, #tpu.memory_space<vmem>>, %arg14: memref<32x64xf32, #tpu.memory_space<vmem>>, %arg15: memref<1x64xf32, #tpu.memory_space<vmem>>, %arg16: memref<32x64xf32, #tpu.memory_space<vmem>>, %arg17: memref<1x64xf32, #tpu.memory_space<vmem>>, %arg18: memref<32x32xf32, #tpu.memory_space<vmem>>, %arg19: memref<1x32xf32, #tpu.memory_space<vmem>>, %arg20: memref<32x32xf32, #tpu.memory_space<vmem>>, %arg21: memref<1x32xf32, #tpu.memory_space<vmem>>, %arg22: memref<1x32xf32, #tpu.memory_space<vmem>>, %arg23: memref<1x32xf32, #tpu.memory_space<vmem>>, %arg24: memref<32x64xf32, #tpu.memory_space<vmem>>, %arg25: memref<1x64xf32, #tpu.memory_space<vmem>>, %arg26: memref<64x32xf32, #tpu.memory_space<vmem>>, %arg27: memref<1x32xf32, #tpu.memory_space<vmem>>, %arg28: memref<1x32xf32, #tpu.memory_space<vmem>>, %arg29: memref<1x32xf32, #tpu.memory_space<vmem>>, %arg30: memref<16x32xf32, #tpu.memory_space<vmem>>) attributes {dimension_semantics = [], scalar_prefetch = 0 : i64, scratch_operands = 0 : i64, tpu.core_type = #tpu.core_type<tc>} {
    %c0 = arith.constant 0 : index
    %c0_0 = arith.constant 0 : index
    %0 = vector.load %arg0[%c0, %c0_0] : memref<16x32xf32, #tpu.memory_space<vmem>>, vector<16x32xf32>
    %c0_1 = arith.constant 0 : index
    %c0_2 = arith.constant 0 : index
    %1 = vector.load %arg1[%c0_1, %c0_2] : memref<48x32xf32, #tpu.memory_space<vmem>>, vector<48x32xf32>
    %c0_3 = arith.constant 0 : index
    %c0_4 = arith.constant 0 : index
    %2 = vector.load %arg2[%c0_3, %c0_4] : memref<6x32xf32, #tpu.memory_space<vmem>>, vector<6x32xf32>
    %c0_5 = arith.constant 0 : index
    %c0_6 = arith.constant 0 : index
    %3 = vector.load %arg3[%c0_5, %c0_6] : memref<8x8xf32, #tpu.memory_space<vmem>>, vector<8x8xf32>
    %c0_7 = arith.constant 0 : index
    %c0_8 = arith.constant 0 : index
    %4 = vector.load %arg4[%c0_7, %c0_8] : memref<2x8xf32, #tpu.memory_space<vmem>>, vector<2x8xf32>
    %c0_9 = arith.constant 0 : index
    %c0_10 = arith.constant 0 : index
    %5 = vector.load %arg5[%c0_9, %c0_10] : memref<2x3xf32, #tpu.memory_space<vmem>>, vector<2x3xf32>
    %c0_11 = arith.constant 0 : index
    %c0_12 = arith.constant 0 : index
    %6 = vector.load %arg6[%c0_11, %c0_12] : memref<6x8xf32, #tpu.memory_space<vmem>>, vector<6x8xf32>
    %c0_13 = arith.constant 0 : index
    %c0_14 = arith.constant 0 : index
    %7 = vector.load %arg7[%c0_13, %c0_14] : memref<2x3xf32, #tpu.memory_space<vmem>>, vector<2x3xf32>
    %c0_15 = arith.constant 0 : index
    %c0_16 = arith.constant 0 : index
    %8 = vector.load %arg10[%c0_15, %c0_16] : memref<32x32xf32, #tpu.memory_space<vmem>>, vector<32x32xf32>
    %c0_17 = arith.constant 0 : index
    %c0_18 = arith.constant 0 : index
    %9 = vector.load %arg11[%c0_17, %c0_18] : memref<1x32xf32, #tpu.memory_space<vmem>>, vector<1x32xf32>
    %c0_19 = arith.constant 0 : index
    %c0_20 = arith.constant 0 : index
    %10 = vector.load %arg20[%c0_19, %c0_20] : memref<32x32xf32, #tpu.memory_space<vmem>>, vector<32x32xf32>
    %c0_21 = arith.constant 0 : index
    %c0_22 = arith.constant 0 : index
    %11 = vector.load %arg21[%c0_21, %c0_22] : memref<1x32xf32, #tpu.memory_space<vmem>>, vector<1x32xf32>
    %c0_23 = arith.constant 0 : index
    %c0_24 = arith.constant 0 : index
    %12 = vector.load %arg12[%c0_23, %c0_24] : memref<1x32xf32, #tpu.memory_space<vmem>>, vector<1x32xf32>
    %c0_25 = arith.constant 0 : index
    %c0_26 = arith.constant 0 : index
    %13 = vector.load %arg13[%c0_25, %c0_26] : memref<1x32xf32, #tpu.memory_space<vmem>>, vector<1x32xf32>
    %c0_27 = arith.constant 0 : index
    %c0_28 = arith.constant 0 : index
    %14 = vector.load %arg22[%c0_27, %c0_28] : memref<1x32xf32, #tpu.memory_space<vmem>>, vector<1x32xf32>
    %c0_29 = arith.constant 0 : index
    %c0_30 = arith.constant 0 : index
    %15 = vector.load %arg23[%c0_29, %c0_30] : memref<1x32xf32, #tpu.memory_space<vmem>>, vector<1x32xf32>
    %c0_31 = arith.constant 0 : index
    %c0_32 = arith.constant 0 : index
    %16 = vector.load %arg28[%c0_31, %c0_32] : memref<1x32xf32, #tpu.memory_space<vmem>>, vector<1x32xf32>
    %c0_33 = arith.constant 0 : index
    %c0_34 = arith.constant 0 : index
    %17 = vector.load %arg29[%c0_33, %c0_34] : memref<1x32xf32, #tpu.memory_space<vmem>>, vector<1x32xf32>
    %c0_35 = arith.constant 0 : index
    %c0_36 = arith.constant 0 : index
    %18 = vector.load %arg14[%c0_35, %c0_36] : memref<32x64xf32, #tpu.memory_space<vmem>>, vector<32x64xf32>
    %c0_37 = arith.constant 0 : index
    %c0_38 = arith.constant 0 : index
    %19 = vector.load %arg15[%c0_37, %c0_38] : memref<1x64xf32, #tpu.memory_space<vmem>>, vector<1x64xf32>
    %c0_39 = arith.constant 0 : index
    %c0_40 = arith.constant 0 : index
    %20 = vector.load %arg24[%c0_39, %c0_40] : memref<32x64xf32, #tpu.memory_space<vmem>>, vector<32x64xf32>
    %c0_41 = arith.constant 0 : index
    %c0_42 = arith.constant 0 : index
    %21 = vector.load %arg25[%c0_41, %c0_42] : memref<1x64xf32, #tpu.memory_space<vmem>>, vector<1x64xf32>
    %c0_43 = arith.constant 0 : index
    %c0_44 = arith.constant 0 : index
    %22 = vector.load %arg26[%c0_43, %c0_44] : memref<64x32xf32, #tpu.memory_space<vmem>>, vector<64x32xf32>
    %c0_45 = arith.constant 0 : index
    %c0_46 = arith.constant 0 : index
    %23 = vector.load %arg27[%c0_45, %c0_46] : memref<1x32xf32, #tpu.memory_space<vmem>>, vector<1x32xf32>
    %c0_47 = arith.constant 0 : index
    %c0_48 = arith.constant 0 : index
    %24 = vector.load %arg8[%c0_47, %c0_48] : memref<32x96xf32, #tpu.memory_space<vmem>>, vector<32x96xf32>
    %25 = arith.truncf %0 : vector<16x32xf32> to vector<16x32xbf16>
    %26 = arith.truncf %24 : vector<32x96xf32> to vector<32x96xbf16>
    %cst = arith.constant dense<0.000000e+00> : vector<16x96xf32>
    %27 = tpu.matmul %25, %26, %cst {dimension_numbers = #tpu.dot_dimension_numbers<[1], [0], [0], [1], [0, 0, 1, 1], [], []>} : vector<16x32xbf16>, vector<32x96xbf16>, vector<16x96xf32> -> vector<16x96xf32>
    %c0_49 = arith.constant 0 : index
    %c0_50 = arith.constant 0 : index
    %28 = vector.load %arg9[%c0_49, %c0_50] : memref<1x96xf32, #tpu.memory_space<vmem>>, vector<1x96xf32>
    %29 = vector.broadcast %28 : vector<1x96xf32> to vector<16x96xf32>
    %30 = arith.addf %27, %29 : vector<16x96xf32>
    %c0_51 = arith.constant 0 : index
    %c0_52 = arith.constant 0 : index
    %31 = vector.load %arg16[%c0_51, %c0_52] : memref<32x64xf32, #tpu.memory_space<vmem>>, vector<32x64xf32>
    %32 = arith.truncf %1 : vector<48x32xf32> to vector<48x32xbf16>
    %33 = arith.truncf %31 : vector<32x64xf32> to vector<32x64xbf16>
    %cst_53 = arith.constant dense<0.000000e+00> : vector<48x64xf32>
    %34 = tpu.matmul %32, %33, %cst_53 {dimension_numbers = #tpu.dot_dimension_numbers<[1], [0], [0], [1], [0, 0, 1, 1], [], []>} : vector<48x32xbf16>, vector<32x64xbf16>, vector<48x64xf32> -> vector<48x64xf32>
    %c0_54 = arith.constant 0 : index
    %c0_55 = arith.constant 0 : index
    %35 = vector.load %arg17[%c0_54, %c0_55] : memref<1x64xf32, #tpu.memory_space<vmem>>, vector<1x64xf32>
    %36 = vector.broadcast %35 : vector<1x64xf32> to vector<48x64xf32>
    %37 = arith.addf %34, %36 : vector<48x64xf32>
    %c0_56 = arith.constant 0 : index
    %c0_57 = arith.constant 0 : index
    %38 = vector.load %arg18[%c0_56, %c0_57] : memref<32x32xf32, #tpu.memory_space<vmem>>, vector<32x32xf32>
    %39 = arith.truncf %2 : vector<6x32xf32> to vector<6x32xbf16>
    %40 = arith.truncf %38 : vector<32x32xf32> to vector<32x32xbf16>
    %cst_58 = arith.constant dense<0.000000e+00> : vector<6x32xf32>
    %41 = tpu.matmul %39, %40, %cst_58 {dimension_numbers = #tpu.dot_dimension_numbers<[1], [0], [0], [1], [0, 0, 1, 1], [], []>} : vector<6x32xbf16>, vector<32x32xbf16>, vector<6x32xf32> -> vector<6x32xf32>
    %c0_59 = arith.constant 0 : index
    %c0_60 = arith.constant 0 : index
    %42 = vector.load %arg19[%c0_59, %c0_60] : memref<1x32xf32, #tpu.memory_space<vmem>>, vector<1x32xf32>
    %43 = vector.broadcast %42 : vector<1x32xf32> to vector<6x32xf32>
    %44 = arith.addf %41, %43 : vector<6x32xf32>
    %45 = vector.extract_strided_slice %0 {offsets = [0, 0], sizes = [8, 32], strides = [1, 1]} : vector<16x32xf32> to vector<8x32xf32>
    %46 = vector.extract_strided_slice %4 {offsets = [0, 0], sizes = [1, 8], strides = [1, 1]} : vector<2x8xf32> to vector<1x8xf32>
    %47 = vector.broadcast %46 : vector<1x8xf32> to vector<8x8xf32>
    %48 = arith.addf %3, %47 : vector<8x8xf32>
    %49 = vector.broadcast %9 : vector<1x32xf32> to vector<8x32xf32>
    %50 = arith.addf %49, %45 : vector<8x32xf32>
    %51 = vector.extract_strided_slice %30 {offsets = [0, 0], sizes = [8, 8], strides = [1, 1]} : vector<16x96xf32> to vector<8x8xf32>
    %52 = vector.extract_strided_slice %30 {offsets = [0, 32], sizes = [8, 8], strides = [1, 1]} : vector<16x96xf32> to vector<8x8xf32>
    %53 = vector.extract_strided_slice %30 {offsets = [0, 64], sizes = [8, 8], strides = [1, 1]} : vector<16x96xf32> to vector<8x8xf32>
    %cst_61 = arith.constant dense<0.000000e+00> : vector<8x8xf32>
    %54 = tpu.matmul %51, %52, %cst_61 {dimension_numbers = #tpu.dot_dimension_numbers<[1], [1], [0], [0], [0, 0, 1, 0], [], []>} : vector<8x8xf32>, vector<8x8xf32>, vector<8x8xf32> -> vector<8x8xf32>
    %cst_62 = arith.constant 0.353553385 : f32
    %55 = vector.broadcast %cst_62 : f32 to vector<8x8xf32>
    %56 = arith.mulf %54, %55 : vector<8x8xf32>
    %57 = arith.addf %56, %48 : vector<8x8xf32>
    %cst_63 = arith.constant dense<0xFF800000> : vector<8xf32>
    %58 = vector.multi_reduction <maximumf>, %57, %cst_63 [1] : vector<8x8xf32> to vector<8xf32>
    %59 = vector.shape_cast %58 : vector<8xf32> to vector<8x1xf32>
    %60 = vector.broadcast %59 : vector<8x1xf32> to vector<8x8xf32>
    %61 = arith.subf %57, %60 : vector<8x8xf32>
    %62 = math.exp %61 : vector<8x8xf32>
    %cst_64 = arith.constant dense<0.000000e+00> : vector<8xf32>
    %63 = vector.multi_reduction <add>, %62, %cst_64 [1] : vector<8x8xf32> to vector<8xf32>
    %64 = vector.shape_cast %63 : vector<8xf32> to vector<8x1xf32>
    %65 = tpu.reciprocal %64 {approx = true} : vector<8x1xf32> -> vector<8x1xf32>
    %66 = vector.broadcast %65 : vector<8x1xf32> to vector<8x8xf32>
    %67 = arith.mulf %62, %66 : vector<8x8xf32>
    %cst_65 = arith.constant dense<0.000000e+00> : vector<8x8xf32>
    %68 = tpu.matmul %67, %53, %cst_65 {dimension_numbers = #tpu.dot_dimension_numbers<[1], [0], [0], [1], [0, 0, 1, 1], [], []>} : vector<8x8xf32>, vector<8x8xf32>, vector<8x8xf32> -> vector<8x8xf32>
    %69 = vector.extract_strided_slice %8 {offsets = [0, 0], sizes = [8, 32], strides = [1, 1]} : vector<32x32xf32> to vector<8x32xf32>
    %70 = arith.truncf %68 : vector<8x8xf32> to vector<8x8xbf16>
    %71 = arith.truncf %69 : vector<8x32xf32> to vector<8x32xbf16>
    %cst_66 = arith.constant dense<0.000000e+00> : vector<8x32xf32>
    %72 = tpu.matmul %70, %71, %cst_66 {dimension_numbers = #tpu.dot_dimension_numbers<[1], [0], [0], [1], [0, 0, 1, 1], [], []>} : vector<8x8xbf16>, vector<8x32xbf16>, vector<8x32xf32> -> vector<8x32xf32>
    %73 = arith.addf %50, %72 : vector<8x32xf32>
    %74 = vector.extract_strided_slice %30 {offsets = [0, 8], sizes = [8, 8], strides = [1, 1]} : vector<16x96xf32> to vector<8x8xf32>
    %75 = vector.extract_strided_slice %30 {offsets = [0, 40], sizes = [8, 8], strides = [1, 1]} : vector<16x96xf32> to vector<8x8xf32>
    %76 = vector.extract_strided_slice %30 {offsets = [0, 72], sizes = [8, 8], strides = [1, 1]} : vector<16x96xf32> to vector<8x8xf32>
    %cst_67 = arith.constant dense<0.000000e+00> : vector<8x8xf32>
    %77 = tpu.matmul %74, %75, %cst_67 {dimension_numbers = #tpu.dot_dimension_numbers<[1], [1], [0], [0], [0, 0, 1, 0], [], []>} : vector<8x8xf32>, vector<8x8xf32>, vector<8x8xf32> -> vector<8x8xf32>
    %cst_68 = arith.constant 0.353553385 : f32
    %78 = vector.broadcast %cst_68 : f32 to vector<8x8xf32>
    %79 = arith.mulf %77, %78 : vector<8x8xf32>
    %80 = arith.addf %79, %48 : vector<8x8xf32>
    %cst_69 = arith.constant dense<0xFF800000> : vector<8xf32>
    %81 = vector.multi_reduction <maximumf>, %80, %cst_69 [1] : vector<8x8xf32> to vector<8xf32>
    %82 = vector.shape_cast %81 : vector<8xf32> to vector<8x1xf32>
    %83 = vector.broadcast %82 : vector<8x1xf32> to vector<8x8xf32>
    %84 = arith.subf %80, %83 : vector<8x8xf32>
    %85 = math.exp %84 : vector<8x8xf32>
    %cst_70 = arith.constant dense<0.000000e+00> : vector<8xf32>
    %86 = vector.multi_reduction <add>, %85, %cst_70 [1] : vector<8x8xf32> to vector<8xf32>
    %87 = vector.shape_cast %86 : vector<8xf32> to vector<8x1xf32>
    %88 = tpu.reciprocal %87 {approx = true} : vector<8x1xf32> -> vector<8x1xf32>
    %89 = vector.broadcast %88 : vector<8x1xf32> to vector<8x8xf32>
    %90 = arith.mulf %85, %89 : vector<8x8xf32>
    %cst_71 = arith.constant dense<0.000000e+00> : vector<8x8xf32>
    %91 = tpu.matmul %90, %76, %cst_71 {dimension_numbers = #tpu.dot_dimension_numbers<[1], [0], [0], [1], [0, 0, 1, 1], [], []>} : vector<8x8xf32>, vector<8x8xf32>, vector<8x8xf32> -> vector<8x8xf32>
    %92 = vector.extract_strided_slice %8 {offsets = [8, 0], sizes = [8, 32], strides = [1, 1]} : vector<32x32xf32> to vector<8x32xf32>
    %93 = arith.truncf %91 : vector<8x8xf32> to vector<8x8xbf16>
    %94 = arith.truncf %92 : vector<8x32xf32> to vector<8x32xbf16>
    %cst_72 = arith.constant dense<0.000000e+00> : vector<8x32xf32>
    %95 = tpu.matmul %93, %94, %cst_72 {dimension_numbers = #tpu.dot_dimension_numbers<[1], [0], [0], [1], [0, 0, 1, 1], [], []>} : vector<8x8xbf16>, vector<8x32xbf16>, vector<8x32xf32> -> vector<8x32xf32>
    %96 = arith.addf %73, %95 : vector<8x32xf32>
    %97 = vector.extract_strided_slice %30 {offsets = [0, 16], sizes = [8, 8], strides = [1, 1]} : vector<16x96xf32> to vector<8x8xf32>
    %98 = vector.extract_strided_slice %30 {offsets = [0, 48], sizes = [8, 8], strides = [1, 1]} : vector<16x96xf32> to vector<8x8xf32>
    %99 = vector.extract_strided_slice %30 {offsets = [0, 80], sizes = [8, 8], strides = [1, 1]} : vector<16x96xf32> to vector<8x8xf32>
    %cst_73 = arith.constant dense<0.000000e+00> : vector<8x8xf32>
    %100 = tpu.matmul %97, %98, %cst_73 {dimension_numbers = #tpu.dot_dimension_numbers<[1], [1], [0], [0], [0, 0, 1, 0], [], []>} : vector<8x8xf32>, vector<8x8xf32>, vector<8x8xf32> -> vector<8x8xf32>
    %cst_74 = arith.constant 0.353553385 : f32
    %101 = vector.broadcast %cst_74 : f32 to vector<8x8xf32>
    %102 = arith.mulf %100, %101 : vector<8x8xf32>
    %103 = arith.addf %102, %48 : vector<8x8xf32>
    %cst_75 = arith.constant dense<0xFF800000> : vector<8xf32>
    %104 = vector.multi_reduction <maximumf>, %103, %cst_75 [1] : vector<8x8xf32> to vector<8xf32>
    %105 = vector.shape_cast %104 : vector<8xf32> to vector<8x1xf32>
    %106 = vector.broadcast %105 : vector<8x1xf32> to vector<8x8xf32>
    %107 = arith.subf %103, %106 : vector<8x8xf32>
    %108 = math.exp %107 : vector<8x8xf32>
    %cst_76 = arith.constant dense<0.000000e+00> : vector<8xf32>
    %109 = vector.multi_reduction <add>, %108, %cst_76 [1] : vector<8x8xf32> to vector<8xf32>
    %110 = vector.shape_cast %109 : vector<8xf32> to vector<8x1xf32>
    %111 = tpu.reciprocal %110 {approx = true} : vector<8x1xf32> -> vector<8x1xf32>
    %112 = vector.broadcast %111 : vector<8x1xf32> to vector<8x8xf32>
    %113 = arith.mulf %108, %112 : vector<8x8xf32>
    %cst_77 = arith.constant dense<0.000000e+00> : vector<8x8xf32>
    %114 = tpu.matmul %113, %99, %cst_77 {dimension_numbers = #tpu.dot_dimension_numbers<[1], [0], [0], [1], [0, 0, 1, 1], [], []>} : vector<8x8xf32>, vector<8x8xf32>, vector<8x8xf32> -> vector<8x8xf32>
    %115 = vector.extract_strided_slice %8 {offsets = [16, 0], sizes = [8, 32], strides = [1, 1]} : vector<32x32xf32> to vector<8x32xf32>
    %116 = arith.truncf %114 : vector<8x8xf32> to vector<8x8xbf16>
    %117 = arith.truncf %115 : vector<8x32xf32> to vector<8x32xbf16>
    %cst_78 = arith.constant dense<0.000000e+00> : vector<8x32xf32>
    %118 = tpu.matmul %116, %117, %cst_78 {dimension_numbers = #tpu.dot_dimension_numbers<[1], [0], [0], [1], [0, 0, 1, 1], [], []>} : vector<8x8xbf16>, vector<8x32xbf16>, vector<8x32xf32> -> vector<8x32xf32>
    %119 = arith.addf %96, %118 : vector<8x32xf32>
    %120 = vector.extract_strided_slice %30 {offsets = [0, 24], sizes = [8, 8], strides = [1, 1]} : vector<16x96xf32> to vector<8x8xf32>
    %121 = vector.extract_strided_slice %30 {offsets = [0, 56], sizes = [8, 8], strides = [1, 1]} : vector<16x96xf32> to vector<8x8xf32>
    %122 = vector.extract_strided_slice %30 {offsets = [0, 88], sizes = [8, 8], strides = [1, 1]} : vector<16x96xf32> to vector<8x8xf32>
    %cst_79 = arith.constant dense<0.000000e+00> : vector<8x8xf32>
    %123 = tpu.matmul %120, %121, %cst_79 {dimension_numbers = #tpu.dot_dimension_numbers<[1], [1], [0], [0], [0, 0, 1, 0], [], []>} : vector<8x8xf32>, vector<8x8xf32>, vector<8x8xf32> -> vector<8x8xf32>
    %cst_80 = arith.constant 0.353553385 : f32
    %124 = vector.broadcast %cst_80 : f32 to vector<8x8xf32>
    %125 = arith.mulf %123, %124 : vector<8x8xf32>
    %126 = arith.addf %125, %48 : vector<8x8xf32>
    %cst_81 = arith.constant dense<0xFF800000> : vector<8xf32>
    %127 = vector.multi_reduction <maximumf>, %126, %cst_81 [1] : vector<8x8xf32> to vector<8xf32>
    %128 = vector.shape_cast %127 : vector<8xf32> to vector<8x1xf32>
    %129 = vector.broadcast %128 : vector<8x1xf32> to vector<8x8xf32>
    %130 = arith.subf %126, %129 : vector<8x8xf32>
    %131 = math.exp %130 : vector<8x8xf32>
    %cst_82 = arith.constant dense<0.000000e+00> : vector<8xf32>
    %132 = vector.multi_reduction <add>, %131, %cst_82 [1] : vector<8x8xf32> to vector<8xf32>
    %133 = vector.shape_cast %132 : vector<8xf32> to vector<8x1xf32>
    %134 = tpu.reciprocal %133 {approx = true} : vector<8x1xf32> -> vector<8x1xf32>
    %135 = vector.broadcast %134 : vector<8x1xf32> to vector<8x8xf32>
    %136 = arith.mulf %131, %135 : vector<8x8xf32>
    %cst_83 = arith.constant dense<0.000000e+00> : vector<8x8xf32>
    %137 = tpu.matmul %136, %122, %cst_83 {dimension_numbers = #tpu.dot_dimension_numbers<[1], [0], [0], [1], [0, 0, 1, 1], [], []>} : vector<8x8xf32>, vector<8x8xf32>, vector<8x8xf32> -> vector<8x8xf32>
    %138 = vector.extract_strided_slice %8 {offsets = [24, 0], sizes = [8, 32], strides = [1, 1]} : vector<32x32xf32> to vector<8x32xf32>
    %139 = arith.truncf %137 : vector<8x8xf32> to vector<8x8xbf16>
    %140 = arith.truncf %138 : vector<8x32xf32> to vector<8x32xbf16>
    %cst_84 = arith.constant dense<0.000000e+00> : vector<8x32xf32>
    %141 = tpu.matmul %139, %140, %cst_84 {dimension_numbers = #tpu.dot_dimension_numbers<[1], [0], [0], [1], [0, 0, 1, 1], [], []>} : vector<8x8xbf16>, vector<8x32xbf16>, vector<8x32xf32> -> vector<8x32xf32>
    %142 = arith.addf %119, %141 : vector<8x32xf32>
    %cst_85 = arith.constant dense<0.000000e+00> : vector<8xf32>
    %143 = vector.multi_reduction <add>, %142, %cst_85 [1] : vector<8x32xf32> to vector<8xf32>
    %144 = vector.shape_cast %143 : vector<8xf32> to vector<8x1xf32>
    %cst_86 = arith.constant 3.200000e+01 : f32
    %145 = vector.broadcast %cst_86 : f32 to vector<8x1xf32>
    %146 = arith.divf %144, %145 : vector<8x1xf32>
    %147 = vector.broadcast %146 : vector<8x1xf32> to vector<8x32xf32>
    %148 = arith.subf %142, %147 : vector<8x32xf32>
    %149 = arith.mulf %148, %148 : vector<8x32xf32>
    %cst_87 = arith.constant dense<0.000000e+00> : vector<8xf32>
    %150 = vector.multi_reduction <add>, %149, %cst_87 [1] : vector<8x32xf32> to vector<8xf32>
    %151 = vector.shape_cast %150 : vector<8xf32> to vector<8x1xf32>
    %cst_88 = arith.constant 3.200000e+01 : f32
    %152 = vector.broadcast %cst_88 : f32 to vector<8x1xf32>
    %153 = arith.divf %151, %152 : vector<8x1xf32>
    %cst_89 = arith.constant 9.99999974E-6 : f32
    %154 = vector.broadcast %cst_89 : f32 to vector<8x1xf32>
    %155 = arith.addf %153, %154 : vector<8x1xf32>
    %156 = math.rsqrt %155 : vector<8x1xf32>
    %157 = vector.broadcast %156 : vector<8x1xf32> to vector<8x32xf32>
    %158 = arith.mulf %148, %157 : vector<8x32xf32>
    %159 = vector.broadcast %12 : vector<1x32xf32> to vector<8x32xf32>
    %160 = arith.mulf %158, %159 : vector<8x32xf32>
    %161 = vector.broadcast %13 : vector<1x32xf32> to vector<8x32xf32>
    %162 = arith.addf %160, %161 : vector<8x32xf32>
    %163 = arith.truncf %162 : vector<8x32xf32> to vector<8x32xbf16>
    %164 = arith.truncf %18 : vector<32x64xf32> to vector<32x64xbf16>
    %cst_90 = arith.constant dense<0.000000e+00> : vector<8x64xf32>
    %165 = tpu.matmul %163, %164, %cst_90 {dimension_numbers = #tpu.dot_dimension_numbers<[1], [0], [0], [1], [0, 0, 1, 1], [], []>} : vector<8x32xbf16>, vector<32x64xbf16>, vector<8x64xf32> -> vector<8x64xf32>
    %166 = vector.broadcast %19 : vector<1x64xf32> to vector<8x64xf32>
    %167 = arith.addf %165, %166 : vector<8x64xf32>
    %168 = vector.extract_strided_slice %5 {offsets = [0, 0], sizes = [1, 3], strides = [1, 1]} : vector<2x3xf32> to vector<1x3xf32>
    %cst_91 = arith.constant 0.000000e+00 : f32
    %169 = vector.broadcast %cst_91 : f32 to vector<8x3xf32>
    %170 = vector.extract_strided_slice %167 {offsets = [0, 0], sizes = [8, 8], strides = [1, 1]} : vector<8x64xf32> to vector<8x8xf32>
    %171 = vector.extract_strided_slice %44 {offsets = [0, 0], sizes = [3, 8], strides = [1, 1]} : vector<6x32xf32> to vector<3x8xf32>
    %cst_92 = arith.constant dense<0.000000e+00> : vector<8x3xf32>
    %172 = tpu.matmul %170, %171, %cst_92 {dimension_numbers = #tpu.dot_dimension_numbers<[1], [1], [0], [0], [0, 0, 1, 0], [], []>} : vector<8x8xf32>, vector<3x8xf32>, vector<8x3xf32> -> vector<8x3xf32>
    %cst_93 = arith.constant 0.353553385 : f32
    %173 = vector.broadcast %cst_93 : f32 to vector<8x3xf32>
    %174 = arith.mulf %172, %173 : vector<8x3xf32>
    %175 = vector.broadcast %168 : vector<1x3xf32> to vector<8x3xf32>
    %176 = arith.addf %174, %175 : vector<8x3xf32>
    %cst_94 = arith.constant dense<0xFF800000> : vector<8xf32>
    %177 = vector.multi_reduction <maximumf>, %176, %cst_94 [1] : vector<8x3xf32> to vector<8xf32>
    %178 = vector.shape_cast %177 : vector<8xf32> to vector<8x1xf32>
    %179 = vector.broadcast %178 : vector<8x1xf32> to vector<8x3xf32>
    %180 = arith.subf %176, %179 : vector<8x3xf32>
    %181 = math.exp %180 : vector<8x3xf32>
    %cst_95 = arith.constant dense<0.000000e+00> : vector<8xf32>
    %182 = vector.multi_reduction <add>, %181, %cst_95 [1] : vector<8x3xf32> to vector<8xf32>
    %183 = vector.shape_cast %182 : vector<8xf32> to vector<8x1xf32>
    %184 = vector.broadcast %183 : vector<8x1xf32> to vector<8x3xf32>
    %185 = arith.divf %181, %184 : vector<8x3xf32>
    %186 = arith.addf %169, %185 : vector<8x3xf32>
    %187 = vector.extract_strided_slice %167 {offsets = [0, 8], sizes = [8, 8], strides = [1, 1]} : vector<8x64xf32> to vector<8x8xf32>
    %188 = vector.extract_strided_slice %44 {offsets = [0, 8], sizes = [3, 8], strides = [1, 1]} : vector<6x32xf32> to vector<3x8xf32>
    %cst_96 = arith.constant dense<0.000000e+00> : vector<8x3xf32>
    %189 = tpu.matmul %187, %188, %cst_96 {dimension_numbers = #tpu.dot_dimension_numbers<[1], [1], [0], [0], [0, 0, 1, 0], [], []>} : vector<8x8xf32>, vector<3x8xf32>, vector<8x3xf32> -> vector<8x3xf32>
    %cst_97 = arith.constant 0.353553385 : f32
    %190 = vector.broadcast %cst_97 : f32 to vector<8x3xf32>
    %191 = arith.mulf %189, %190 : vector<8x3xf32>
    %192 = vector.broadcast %168 : vector<1x3xf32> to vector<8x3xf32>
    %193 = arith.addf %191, %192 : vector<8x3xf32>
    %cst_98 = arith.constant dense<0xFF800000> : vector<8xf32>
    %194 = vector.multi_reduction <maximumf>, %193, %cst_98 [1] : vector<8x3xf32> to vector<8xf32>
    %195 = vector.shape_cast %194 : vector<8xf32> to vector<8x1xf32>
    %196 = vector.broadcast %195 : vector<8x1xf32> to vector<8x3xf32>
    %197 = arith.subf %193, %196 : vector<8x3xf32>
    %198 = math.exp %197 : vector<8x3xf32>
    %cst_99 = arith.constant dense<0.000000e+00> : vector<8xf32>
    %199 = vector.multi_reduction <add>, %198, %cst_99 [1] : vector<8x3xf32> to vector<8xf32>
    %200 = vector.shape_cast %199 : vector<8xf32> to vector<8x1xf32>
    %201 = vector.broadcast %200 : vector<8x1xf32> to vector<8x3xf32>
    %202 = arith.divf %198, %201 : vector<8x3xf32>
    %203 = arith.addf %186, %202 : vector<8x3xf32>
    %204 = vector.extract_strided_slice %167 {offsets = [0, 16], sizes = [8, 8], strides = [1, 1]} : vector<8x64xf32> to vector<8x8xf32>
    %205 = vector.extract_strided_slice %44 {offsets = [0, 16], sizes = [3, 8], strides = [1, 1]} : vector<6x32xf32> to vector<3x8xf32>
    %cst_100 = arith.constant dense<0.000000e+00> : vector<8x3xf32>
    %206 = tpu.matmul %204, %205, %cst_100 {dimension_numbers = #tpu.dot_dimension_numbers<[1], [1], [0], [0], [0, 0, 1, 0], [], []>} : vector<8x8xf32>, vector<3x8xf32>, vector<8x3xf32> -> vector<8x3xf32>
    %cst_101 = arith.constant 0.353553385 : f32
    %207 = vector.broadcast %cst_101 : f32 to vector<8x3xf32>
    %208 = arith.mulf %206, %207 : vector<8x3xf32>
    %209 = vector.broadcast %168 : vector<1x3xf32> to vector<8x3xf32>
    %210 = arith.addf %208, %209 : vector<8x3xf32>
    %cst_102 = arith.constant dense<0xFF800000> : vector<8xf32>
    %211 = vector.multi_reduction <maximumf>, %210, %cst_102 [1] : vector<8x3xf32> to vector<8xf32>
    %212 = vector.shape_cast %211 : vector<8xf32> to vector<8x1xf32>
    %213 = vector.broadcast %212 : vector<8x1xf32> to vector<8x3xf32>
    %214 = arith.subf %210, %213 : vector<8x3xf32>
    %215 = math.exp %214 : vector<8x3xf32>
    %cst_103 = arith.constant dense<0.000000e+00> : vector<8xf32>
    %216 = vector.multi_reduction <add>, %215, %cst_103 [1] : vector<8x3xf32> to vector<8xf32>
    %217 = vector.shape_cast %216 : vector<8xf32> to vector<8x1xf32>
    %218 = vector.broadcast %217 : vector<8x1xf32> to vector<8x3xf32>
    %219 = arith.divf %215, %218 : vector<8x3xf32>
    %220 = arith.addf %203, %219 : vector<8x3xf32>
    %221 = vector.extract_strided_slice %167 {offsets = [0, 24], sizes = [8, 8], strides = [1, 1]} : vector<8x64xf32> to vector<8x8xf32>
    %222 = vector.extract_strided_slice %44 {offsets = [0, 24], sizes = [3, 8], strides = [1, 1]} : vector<6x32xf32> to vector<3x8xf32>
    %cst_104 = arith.constant dense<0.000000e+00> : vector<8x3xf32>
    %223 = tpu.matmul %221, %222, %cst_104 {dimension_numbers = #tpu.dot_dimension_numbers<[1], [1], [0], [0], [0, 0, 1, 0], [], []>} : vector<8x8xf32>, vector<3x8xf32>, vector<8x3xf32> -> vector<8x3xf32>
    %cst_105 = arith.constant 0.353553385 : f32
    %224 = vector.broadcast %cst_105 : f32 to vector<8x3xf32>
    %225 = arith.mulf %223, %224 : vector<8x3xf32>
    %226 = vector.broadcast %168 : vector<1x3xf32> to vector<8x3xf32>
    %227 = arith.addf %225, %226 : vector<8x3xf32>
    %cst_106 = arith.constant dense<0xFF800000> : vector<8xf32>
    %228 = vector.multi_reduction <maximumf>, %227, %cst_106 [1] : vector<8x3xf32> to vector<8xf32>
    %229 = vector.shape_cast %228 : vector<8xf32> to vector<8x1xf32>
    %230 = vector.broadcast %229 : vector<8x1xf32> to vector<8x3xf32>
    %231 = arith.subf %227, %230 : vector<8x3xf32>
    %232 = math.exp %231 : vector<8x3xf32>
    %cst_107 = arith.constant dense<0.000000e+00> : vector<8xf32>
    %233 = vector.multi_reduction <add>, %232, %cst_107 [1] : vector<8x3xf32> to vector<8xf32>
    %234 = vector.shape_cast %233 : vector<8xf32> to vector<8x1xf32>
    %235 = vector.broadcast %234 : vector<8x1xf32> to vector<8x3xf32>
    %236 = arith.divf %232, %235 : vector<8x3xf32>
    %237 = arith.addf %220, %236 : vector<8x3xf32>
    %cst_108 = arith.constant 2.500000e-01 : f32
    %238 = vector.broadcast %cst_108 : f32 to vector<8x3xf32>
    %239 = arith.mulf %237, %238 : vector<8x3xf32>
    %cst_109 = arith.constant 0.000000e+00 : f32
    %240 = vector.broadcast %cst_109 : f32 to vector<8x8xf32>
    %cst_110 = arith.constant 0.000000e+00 : f32
    %241 = vector.broadcast %cst_110 : f32 to vector<8x8xf32>
    %cst_111 = arith.constant 0.000000e+00 : f32
    %242 = vector.broadcast %cst_111 : f32 to vector<8x8xf32>
    %cst_112 = arith.constant 0.000000e+00 : f32
    %243 = vector.broadcast %cst_112 : f32 to vector<8x8xf32>
    %cst_113 = arith.constant 0.000000e+00 : f32
    %244 = vector.broadcast %cst_113 : f32 to vector<8x1xf32>
    %245 = vector.extract_strided_slice %239 {offsets = [0, 0], sizes = [8, 1], strides = [1, 1]} : vector<8x3xf32> to vector<8x1xf32>
    %246 = vector.extract_strided_slice %7 {offsets = [0, 0], sizes = [1, 1], strides = [1, 1]} : vector<2x3xf32> to vector<1x1xf32>
    %247 = vector.broadcast %246 : vector<1x1xf32> to vector<8x1xf32>
    %248 = arith.mulf %245, %247 : vector<8x1xf32>
    %249 = arith.addf %244, %248 : vector<8x1xf32>
    %250 = vector.extract_strided_slice %6 {offsets = [0, 0], sizes = [1, 8], strides = [1, 1]} : vector<6x8xf32> to vector<1x8xf32>
    %251 = vector.extract_strided_slice %167 {offsets = [0, 32], sizes = [8, 8], strides = [1, 1]} : vector<8x64xf32> to vector<8x8xf32>
    %252 = vector.extract_strided_slice %37 {offsets = [0, 0], sizes = [8, 8], strides = [1, 1]} : vector<48x64xf32> to vector<8x8xf32>
    %253 = vector.extract_strided_slice %37 {offsets = [0, 32], sizes = [8, 8], strides = [1, 1]} : vector<48x64xf32> to vector<8x8xf32>
    %cst_114 = arith.constant dense<0.000000e+00> : vector<8x8xf32>
    %254 = tpu.matmul %251, %252, %cst_114 {dimension_numbers = #tpu.dot_dimension_numbers<[1], [1], [0], [0], [0, 0, 1, 0], [], []>} : vector<8x8xf32>, vector<8x8xf32>, vector<8x8xf32> -> vector<8x8xf32>
    %cst_115 = arith.constant 0.353553385 : f32
    %255 = vector.broadcast %cst_115 : f32 to vector<8x8xf32>
    %256 = arith.mulf %254, %255 : vector<8x8xf32>
    %257 = vector.broadcast %250 : vector<1x8xf32> to vector<8x8xf32>
    %258 = arith.addf %256, %257 : vector<8x8xf32>
    %cst_116 = arith.constant dense<0xFF800000> : vector<8xf32>
    %259 = vector.multi_reduction <maximumf>, %258, %cst_116 [1] : vector<8x8xf32> to vector<8xf32>
    %260 = vector.shape_cast %259 : vector<8xf32> to vector<8x1xf32>
    %261 = vector.broadcast %260 : vector<8x1xf32> to vector<8x8xf32>
    %262 = arith.subf %258, %261 : vector<8x8xf32>
    %263 = math.exp %262 : vector<8x8xf32>
    %cst_117 = arith.constant dense<0.000000e+00> : vector<8xf32>
    %264 = vector.multi_reduction <add>, %263, %cst_117 [1] : vector<8x8xf32> to vector<8xf32>
    %265 = vector.shape_cast %264 : vector<8xf32> to vector<8x1xf32>
    %266 = tpu.reciprocal %265 {approx = true} : vector<8x1xf32> -> vector<8x1xf32>
    %267 = vector.broadcast %266 : vector<8x1xf32> to vector<8x8xf32>
    %268 = arith.mulf %263, %267 : vector<8x8xf32>
    %cst_118 = arith.constant dense<0.000000e+00> : vector<8x8xf32>
    %269 = tpu.matmul %268, %253, %cst_118 {dimension_numbers = #tpu.dot_dimension_numbers<[1], [0], [0], [1], [0, 0, 1, 1], [], []>} : vector<8x8xf32>, vector<8x8xf32>, vector<8x8xf32> -> vector<8x8xf32>
    %270 = vector.broadcast %248 : vector<8x1xf32> to vector<8x8xf32>
    %271 = arith.mulf %270, %269 : vector<8x8xf32>
    %272 = arith.addf %240, %271 : vector<8x8xf32>
    %273 = vector.extract_strided_slice %167 {offsets = [0, 40], sizes = [8, 8], strides = [1, 1]} : vector<8x64xf32> to vector<8x8xf32>
    %274 = vector.extract_strided_slice %37 {offsets = [0, 8], sizes = [8, 8], strides = [1, 1]} : vector<48x64xf32> to vector<8x8xf32>
    %275 = vector.extract_strided_slice %37 {offsets = [0, 40], sizes = [8, 8], strides = [1, 1]} : vector<48x64xf32> to vector<8x8xf32>
    %cst_119 = arith.constant dense<0.000000e+00> : vector<8x8xf32>
    %276 = tpu.matmul %273, %274, %cst_119 {dimension_numbers = #tpu.dot_dimension_numbers<[1], [1], [0], [0], [0, 0, 1, 0], [], []>} : vector<8x8xf32>, vector<8x8xf32>, vector<8x8xf32> -> vector<8x8xf32>
    %cst_120 = arith.constant 0.353553385 : f32
    %277 = vector.broadcast %cst_120 : f32 to vector<8x8xf32>
    %278 = arith.mulf %276, %277 : vector<8x8xf32>
    %279 = vector.broadcast %250 : vector<1x8xf32> to vector<8x8xf32>
    %280 = arith.addf %278, %279 : vector<8x8xf32>
    %cst_121 = arith.constant dense<0xFF800000> : vector<8xf32>
    %281 = vector.multi_reduction <maximumf>, %280, %cst_121 [1] : vector<8x8xf32> to vector<8xf32>
    %282 = vector.shape_cast %281 : vector<8xf32> to vector<8x1xf32>
    %283 = vector.broadcast %282 : vector<8x1xf32> to vector<8x8xf32>
    %284 = arith.subf %280, %283 : vector<8x8xf32>
    %285 = math.exp %284 : vector<8x8xf32>
    %cst_122 = arith.constant dense<0.000000e+00> : vector<8xf32>
    %286 = vector.multi_reduction <add>, %285, %cst_122 [1] : vector<8x8xf32> to vector<8xf32>
    %287 = vector.shape_cast %286 : vector<8xf32> to vector<8x1xf32>
    %288 = tpu.reciprocal %287 {approx = true} : vector<8x1xf32> -> vector<8x1xf32>
    %289 = vector.broadcast %288 : vector<8x1xf32> to vector<8x8xf32>
    %290 = arith.mulf %285, %289 : vector<8x8xf32>
    %cst_123 = arith.constant dense<0.000000e+00> : vector<8x8xf32>
    %291 = tpu.matmul %290, %275, %cst_123 {dimension_numbers = #tpu.dot_dimension_numbers<[1], [0], [0], [1], [0, 0, 1, 1], [], []>} : vector<8x8xf32>, vector<8x8xf32>, vector<8x8xf32> -> vector<8x8xf32>
    %292 = vector.broadcast %248 : vector<8x1xf32> to vector<8x8xf32>
    %293 = arith.mulf %292, %291 : vector<8x8xf32>
    %294 = arith.addf %241, %293 : vector<8x8xf32>
    %295 = vector.extract_strided_slice %167 {offsets = [0, 48], sizes = [8, 8], strides = [1, 1]} : vector<8x64xf32> to vector<8x8xf32>
    %296 = vector.extract_strided_slice %37 {offsets = [0, 16], sizes = [8, 8], strides = [1, 1]} : vector<48x64xf32> to vector<8x8xf32>
    %297 = vector.extract_strided_slice %37 {offsets = [0, 48], sizes = [8, 8], strides = [1, 1]} : vector<48x64xf32> to vector<8x8xf32>
    %cst_124 = arith.constant dense<0.000000e+00> : vector<8x8xf32>
    %298 = tpu.matmul %295, %296, %cst_124 {dimension_numbers = #tpu.dot_dimension_numbers<[1], [1], [0], [0], [0, 0, 1, 0], [], []>} : vector<8x8xf32>, vector<8x8xf32>, vector<8x8xf32> -> vector<8x8xf32>
    %cst_125 = arith.constant 0.353553385 : f32
    %299 = vector.broadcast %cst_125 : f32 to vector<8x8xf32>
    %300 = arith.mulf %298, %299 : vector<8x8xf32>
    %301 = vector.broadcast %250 : vector<1x8xf32> to vector<8x8xf32>
    %302 = arith.addf %300, %301 : vector<8x8xf32>
    %cst_126 = arith.constant dense<0xFF800000> : vector<8xf32>
    %303 = vector.multi_reduction <maximumf>, %302, %cst_126 [1] : vector<8x8xf32> to vector<8xf32>
    %304 = vector.shape_cast %303 : vector<8xf32> to vector<8x1xf32>
    %305 = vector.broadcast %304 : vector<8x1xf32> to vector<8x8xf32>
    %306 = arith.subf %302, %305 : vector<8x8xf32>
    %307 = math.exp %306 : vector<8x8xf32>
    %cst_127 = arith.constant dense<0.000000e+00> : vector<8xf32>
    %308 = vector.multi_reduction <add>, %307, %cst_127 [1] : vector<8x8xf32> to vector<8xf32>
    %309 = vector.shape_cast %308 : vector<8xf32> to vector<8x1xf32>
    %310 = tpu.reciprocal %309 {approx = true} : vector<8x1xf32> -> vector<8x1xf32>
    %311 = vector.broadcast %310 : vector<8x1xf32> to vector<8x8xf32>
    %312 = arith.mulf %307, %311 : vector<8x8xf32>
    %cst_128 = arith.constant dense<0.000000e+00> : vector<8x8xf32>
    %313 = tpu.matmul %312, %297, %cst_128 {dimension_numbers = #tpu.dot_dimension_numbers<[1], [0], [0], [1], [0, 0, 1, 1], [], []>} : vector<8x8xf32>, vector<8x8xf32>, vector<8x8xf32> -> vector<8x8xf32>
    %314 = vector.broadcast %248 : vector<8x1xf32> to vector<8x8xf32>
    %315 = arith.mulf %314, %313 : vector<8x8xf32>
    %316 = arith.addf %242, %315 : vector<8x8xf32>
    %317 = vector.extract_strided_slice %167 {offsets = [0, 56], sizes = [8, 8], strides = [1, 1]} : vector<8x64xf32> to vector<8x8xf32>
    %318 = vector.extract_strided_slice %37 {offsets = [0, 24], sizes = [8, 8], strides = [1, 1]} : vector<48x64xf32> to vector<8x8xf32>
    %319 = vector.extract_strided_slice %37 {offsets = [0, 56], sizes = [8, 8], strides = [1, 1]} : vector<48x64xf32> to vector<8x8xf32>
    %cst_129 = arith.constant dense<0.000000e+00> : vector<8x8xf32>
    %320 = tpu.matmul %317, %318, %cst_129 {dimension_numbers = #tpu.dot_dimension_numbers<[1], [1], [0], [0], [0, 0, 1, 0], [], []>} : vector<8x8xf32>, vector<8x8xf32>, vector<8x8xf32> -> vector<8x8xf32>
    %cst_130 = arith.constant 0.353553385 : f32
    %321 = vector.broadcast %cst_130 : f32 to vector<8x8xf32>
    %322 = arith.mulf %320, %321 : vector<8x8xf32>
    %323 = vector.broadcast %250 : vector<1x8xf32> to vector<8x8xf32>
    %324 = arith.addf %322, %323 : vector<8x8xf32>
    %cst_131 = arith.constant dense<0xFF800000> : vector<8xf32>
    %325 = vector.multi_reduction <maximumf>, %324, %cst_131 [1] : vector<8x8xf32> to vector<8xf32>
    %326 = vector.shape_cast %325 : vector<8xf32> to vector<8x1xf32>
    %327 = vector.broadcast %326 : vector<8x1xf32> to vector<8x8xf32>
    %328 = arith.subf %324, %327 : vector<8x8xf32>
    %329 = math.exp %328 : vector<8x8xf32>
    %cst_132 = arith.constant dense<0.000000e+00> : vector<8xf32>
    %330 = vector.multi_reduction <add>, %329, %cst_132 [1] : vector<8x8xf32> to vector<8xf32>
    %331 = vector.shape_cast %330 : vector<8xf32> to vector<8x1xf32>
    %332 = tpu.reciprocal %331 {approx = true} : vector<8x1xf32> -> vector<8x1xf32>
    %333 = vector.broadcast %332 : vector<8x1xf32> to vector<8x8xf32>
    %334 = arith.mulf %329, %333 : vector<8x8xf32>
    %cst_133 = arith.constant dense<0.000000e+00> : vector<8x8xf32>
    %335 = tpu.matmul %334, %319, %cst_133 {dimension_numbers = #tpu.dot_dimension_numbers<[1], [0], [0], [1], [0, 0, 1, 1], [], []>} : vector<8x8xf32>, vector<8x8xf32>, vector<8x8xf32> -> vector<8x8xf32>
    %336 = vector.broadcast %248 : vector<8x1xf32> to vector<8x8xf32>
    %337 = arith.mulf %336, %335 : vector<8x8xf32>
    %338 = arith.addf %243, %337 : vector<8x8xf32>
    %339 = vector.extract_strided_slice %239 {offsets = [0, 1], sizes = [8, 1], strides = [1, 1]} : vector<8x3xf32> to vector<8x1xf32>
    %340 = vector.extract_strided_slice %7 {offsets = [0, 1], sizes = [1, 1], strides = [1, 1]} : vector<2x3xf32> to vector<1x1xf32>
    %341 = vector.broadcast %340 : vector<1x1xf32> to vector<8x1xf32>
    %342 = arith.mulf %339, %341 : vector<8x1xf32>
    %343 = arith.addf %249, %342 : vector<8x1xf32>
    %344 = vector.extract_strided_slice %6 {offsets = [1, 0], sizes = [1, 8], strides = [1, 1]} : vector<6x8xf32> to vector<1x8xf32>
    %345 = vector.extract_strided_slice %167 {offsets = [0, 32], sizes = [8, 8], strides = [1, 1]} : vector<8x64xf32> to vector<8x8xf32>
    %346 = vector.extract_strided_slice %37 {offsets = [8, 0], sizes = [8, 8], strides = [1, 1]} : vector<48x64xf32> to vector<8x8xf32>
    %347 = vector.extract_strided_slice %37 {offsets = [8, 32], sizes = [8, 8], strides = [1, 1]} : vector<48x64xf32> to vector<8x8xf32>
    %cst_134 = arith.constant dense<0.000000e+00> : vector<8x8xf32>
    %348 = tpu.matmul %345, %346, %cst_134 {dimension_numbers = #tpu.dot_dimension_numbers<[1], [1], [0], [0], [0, 0, 1, 0], [], []>} : vector<8x8xf32>, vector<8x8xf32>, vector<8x8xf32> -> vector<8x8xf32>
    %cst_135 = arith.constant 0.353553385 : f32
    %349 = vector.broadcast %cst_135 : f32 to vector<8x8xf32>
    %350 = arith.mulf %348, %349 : vector<8x8xf32>
    %351 = vector.broadcast %344 : vector<1x8xf32> to vector<8x8xf32>
    %352 = arith.addf %350, %351 : vector<8x8xf32>
    %cst_136 = arith.constant dense<0xFF800000> : vector<8xf32>
    %353 = vector.multi_reduction <maximumf>, %352, %cst_136 [1] : vector<8x8xf32> to vector<8xf32>
    %354 = vector.shape_cast %353 : vector<8xf32> to vector<8x1xf32>
    %355 = vector.broadcast %354 : vector<8x1xf32> to vector<8x8xf32>
    %356 = arith.subf %352, %355 : vector<8x8xf32>
    %357 = math.exp %356 : vector<8x8xf32>
    %cst_137 = arith.constant dense<0.000000e+00> : vector<8xf32>
    %358 = vector.multi_reduction <add>, %357, %cst_137 [1] : vector<8x8xf32> to vector<8xf32>
    %359 = vector.shape_cast %358 : vector<8xf32> to vector<8x1xf32>
    %360 = tpu.reciprocal %359 {approx = true} : vector<8x1xf32> -> vector<8x1xf32>
    %361 = vector.broadcast %360 : vector<8x1xf32> to vector<8x8xf32>
    %362 = arith.mulf %357, %361 : vector<8x8xf32>
    %cst_138 = arith.constant dense<0.000000e+00> : vector<8x8xf32>
    %363 = tpu.matmul %362, %347, %cst_138 {dimension_numbers = #tpu.dot_dimension_numbers<[1], [0], [0], [1], [0, 0, 1, 1], [], []>} : vector<8x8xf32>, vector<8x8xf32>, vector<8x8xf32> -> vector<8x8xf32>
    %364 = vector.broadcast %342 : vector<8x1xf32> to vector<8x8xf32>
    %365 = arith.mulf %364, %363 : vector<8x8xf32>
    %366 = arith.addf %272, %365 : vector<8x8xf32>
    %367 = vector.extract_strided_slice %167 {offsets = [0, 40], sizes = [8, 8], strides = [1, 1]} : vector<8x64xf32> to vector<8x8xf32>
    %368 = vector.extract_strided_slice %37 {offsets = [8, 8], sizes = [8, 8], strides = [1, 1]} : vector<48x64xf32> to vector<8x8xf32>
    %369 = vector.extract_strided_slice %37 {offsets = [8, 40], sizes = [8, 8], strides = [1, 1]} : vector<48x64xf32> to vector<8x8xf32>
    %cst_139 = arith.constant dense<0.000000e+00> : vector<8x8xf32>
    %370 = tpu.matmul %367, %368, %cst_139 {dimension_numbers = #tpu.dot_dimension_numbers<[1], [1], [0], [0], [0, 0, 1, 0], [], []>} : vector<8x8xf32>, vector<8x8xf32>, vector<8x8xf32> -> vector<8x8xf32>
    %cst_140 = arith.constant 0.353553385 : f32
    %371 = vector.broadcast %cst_140 : f32 to vector<8x8xf32>
    %372 = arith.mulf %370, %371 : vector<8x8xf32>
    %373 = vector.broadcast %344 : vector<1x8xf32> to vector<8x8xf32>
    %374 = arith.addf %372, %373 : vector<8x8xf32>
    %cst_141 = arith.constant dense<0xFF800000> : vector<8xf32>
    %375 = vector.multi_reduction <maximumf>, %374, %cst_141 [1] : vector<8x8xf32> to vector<8xf32>
    %376 = vector.shape_cast %375 : vector<8xf32> to vector<8x1xf32>
    %377 = vector.broadcast %376 : vector<8x1xf32> to vector<8x8xf32>
    %378 = arith.subf %374, %377 : vector<8x8xf32>
    %379 = math.exp %378 : vector<8x8xf32>
    %cst_142 = arith.constant dense<0.000000e+00> : vector<8xf32>
    %380 = vector.multi_reduction <add>, %379, %cst_142 [1] : vector<8x8xf32> to vector<8xf32>
    %381 = vector.shape_cast %380 : vector<8xf32> to vector<8x1xf32>
    %382 = tpu.reciprocal %381 {approx = true} : vector<8x1xf32> -> vector<8x1xf32>
    %383 = vector.broadcast %382 : vector<8x1xf32> to vector<8x8xf32>
    %384 = arith.mulf %379, %383 : vector<8x8xf32>
    %cst_143 = arith.constant dense<0.000000e+00> : vector<8x8xf32>
    %385 = tpu.matmul %384, %369, %cst_143 {dimension_numbers = #tpu.dot_dimension_numbers<[1], [0], [0], [1], [0, 0, 1, 1], [], []>} : vector<8x8xf32>, vector<8x8xf32>, vector<8x8xf32> -> vector<8x8xf32>
    %386 = vector.broadcast %342 : vector<8x1xf32> to vector<8x8xf32>
    %387 = arith.mulf %386, %385 : vector<8x8xf32>
    %388 = arith.addf %294, %387 : vector<8x8xf32>
    %389 = vector.extract_strided_slice %167 {offsets = [0, 48], sizes = [8, 8], strides = [1, 1]} : vector<8x64xf32> to vector<8x8xf32>
    %390 = vector.extract_strided_slice %37 {offsets = [8, 16], sizes = [8, 8], strides = [1, 1]} : vector<48x64xf32> to vector<8x8xf32>
    %391 = vector.extract_strided_slice %37 {offsets = [8, 48], sizes = [8, 8], strides = [1, 1]} : vector<48x64xf32> to vector<8x8xf32>
    %cst_144 = arith.constant dense<0.000000e+00> : vector<8x8xf32>
    %392 = tpu.matmul %389, %390, %cst_144 {dimension_numbers = #tpu.dot_dimension_numbers<[1], [1], [0], [0], [0, 0, 1, 0], [], []>} : vector<8x8xf32>, vector<8x8xf32>, vector<8x8xf32> -> vector<8x8xf32>
    %cst_145 = arith.constant 0.353553385 : f32
    %393 = vector.broadcast %cst_145 : f32 to vector<8x8xf32>
    %394 = arith.mulf %392, %393 : vector<8x8xf32>
    %395 = vector.broadcast %344 : vector<1x8xf32> to vector<8x8xf32>
    %396 = arith.addf %394, %395 : vector<8x8xf32>
    %cst_146 = arith.constant dense<0xFF800000> : vector<8xf32>
    %397 = vector.multi_reduction <maximumf>, %396, %cst_146 [1] : vector<8x8xf32> to vector<8xf32>
    %398 = vector.shape_cast %397 : vector<8xf32> to vector<8x1xf32>
    %399 = vector.broadcast %398 : vector<8x1xf32> to vector<8x8xf32>
    %400 = arith.subf %396, %399 : vector<8x8xf32>
    %401 = math.exp %400 : vector<8x8xf32>
    %cst_147 = arith.constant dense<0.000000e+00> : vector<8xf32>
    %402 = vector.multi_reduction <add>, %401, %cst_147 [1] : vector<8x8xf32> to vector<8xf32>
    %403 = vector.shape_cast %402 : vector<8xf32> to vector<8x1xf32>
    %404 = tpu.reciprocal %403 {approx = true} : vector<8x1xf32> -> vector<8x1xf32>
    %405 = vector.broadcast %404 : vector<8x1xf32> to vector<8x8xf32>
    %406 = arith.mulf %401, %405 : vector<8x8xf32>
    %cst_148 = arith.constant dense<0.000000e+00> : vector<8x8xf32>
    %407 = tpu.matmul %406, %391, %cst_148 {dimension_numbers = #tpu.dot_dimension_numbers<[1], [0], [0], [1], [0, 0, 1, 1], [], []>} : vector<8x8xf32>, vector<8x8xf32>, vector<8x8xf32> -> vector<8x8xf32>
    %408 = vector.broadcast %342 : vector<8x1xf32> to vector<8x8xf32>
    %409 = arith.mulf %408, %407 : vector<8x8xf32>
    %410 = arith.addf %316, %409 : vector<8x8xf32>
    %411 = vector.extract_strided_slice %167 {offsets = [0, 56], sizes = [8, 8], strides = [1, 1]} : vector<8x64xf32> to vector<8x8xf32>
    %412 = vector.extract_strided_slice %37 {offsets = [8, 24], sizes = [8, 8], strides = [1, 1]} : vector<48x64xf32> to vector<8x8xf32>
    %413 = vector.extract_strided_slice %37 {offsets = [8, 56], sizes = [8, 8], strides = [1, 1]} : vector<48x64xf32> to vector<8x8xf32>
    %cst_149 = arith.constant dense<0.000000e+00> : vector<8x8xf32>
    %414 = tpu.matmul %411, %412, %cst_149 {dimension_numbers = #tpu.dot_dimension_numbers<[1], [1], [0], [0], [0, 0, 1, 0], [], []>} : vector<8x8xf32>, vector<8x8xf32>, vector<8x8xf32> -> vector<8x8xf32>
    %cst_150 = arith.constant 0.353553385 : f32
    %415 = vector.broadcast %cst_150 : f32 to vector<8x8xf32>
    %416 = arith.mulf %414, %415 : vector<8x8xf32>
    %417 = vector.broadcast %344 : vector<1x8xf32> to vector<8x8xf32>
    %418 = arith.addf %416, %417 : vector<8x8xf32>
    %cst_151 = arith.constant dense<0xFF800000> : vector<8xf32>
    %419 = vector.multi_reduction <maximumf>, %418, %cst_151 [1] : vector<8x8xf32> to vector<8xf32>
    %420 = vector.shape_cast %419 : vector<8xf32> to vector<8x1xf32>
    %421 = vector.broadcast %420 : vector<8x1xf32> to vector<8x8xf32>
    %422 = arith.subf %418, %421 : vector<8x8xf32>
    %423 = math.exp %422 : vector<8x8xf32>
    %cst_152 = arith.constant dense<0.000000e+00> : vector<8xf32>
    %424 = vector.multi_reduction <add>, %423, %cst_152 [1] : vector<8x8xf32> to vector<8xf32>
    %425 = vector.shape_cast %424 : vector<8xf32> to vector<8x1xf32>
    %426 = tpu.reciprocal %425 {approx = true} : vector<8x1xf32> -> vector<8x1xf32>
    %427 = vector.broadcast %426 : vector<8x1xf32> to vector<8x8xf32>
    %428 = arith.mulf %423, %427 : vector<8x8xf32>
    %cst_153 = arith.constant dense<0.000000e+00> : vector<8x8xf32>
    %429 = tpu.matmul %428, %413, %cst_153 {dimension_numbers = #tpu.dot_dimension_numbers<[1], [0], [0], [1], [0, 0, 1, 1], [], []>} : vector<8x8xf32>, vector<8x8xf32>, vector<8x8xf32> -> vector<8x8xf32>
    %430 = vector.broadcast %342 : vector<8x1xf32> to vector<8x8xf32>
    %431 = arith.mulf %430, %429 : vector<8x8xf32>
    %432 = arith.addf %338, %431 : vector<8x8xf32>
    %433 = vector.extract_strided_slice %239 {offsets = [0, 2], sizes = [8, 1], strides = [1, 1]} : vector<8x3xf32> to vector<8x1xf32>
    %434 = vector.extract_strided_slice %7 {offsets = [0, 2], sizes = [1, 1], strides = [1, 1]} : vector<2x3xf32> to vector<1x1xf32>
    %435 = vector.broadcast %434 : vector<1x1xf32> to vector<8x1xf32>
    %436 = arith.mulf %433, %435 : vector<8x1xf32>
    %437 = arith.addf %343, %436 : vector<8x1xf32>
    %438 = vector.extract_strided_slice %6 {offsets = [2, 0], sizes = [1, 8], strides = [1, 1]} : vector<6x8xf32> to vector<1x8xf32>
    %439 = vector.extract_strided_slice %167 {offsets = [0, 32], sizes = [8, 8], strides = [1, 1]} : vector<8x64xf32> to vector<8x8xf32>
    %440 = vector.extract_strided_slice %37 {offsets = [16, 0], sizes = [8, 8], strides = [1, 1]} : vector<48x64xf32> to vector<8x8xf32>
    %441 = vector.extract_strided_slice %37 {offsets = [16, 32], sizes = [8, 8], strides = [1, 1]} : vector<48x64xf32> to vector<8x8xf32>
    %cst_154 = arith.constant dense<0.000000e+00> : vector<8x8xf32>
    %442 = tpu.matmul %439, %440, %cst_154 {dimension_numbers = #tpu.dot_dimension_numbers<[1], [1], [0], [0], [0, 0, 1, 0], [], []>} : vector<8x8xf32>, vector<8x8xf32>, vector<8x8xf32> -> vector<8x8xf32>
    %cst_155 = arith.constant 0.353553385 : f32
    %443 = vector.broadcast %cst_155 : f32 to vector<8x8xf32>
    %444 = arith.mulf %442, %443 : vector<8x8xf32>
    %445 = vector.broadcast %438 : vector<1x8xf32> to vector<8x8xf32>
    %446 = arith.addf %444, %445 : vector<8x8xf32>
    %cst_156 = arith.constant dense<0xFF800000> : vector<8xf32>
    %447 = vector.multi_reduction <maximumf>, %446, %cst_156 [1] : vector<8x8xf32> to vector<8xf32>
    %448 = vector.shape_cast %447 : vector<8xf32> to vector<8x1xf32>
    %449 = vector.broadcast %448 : vector<8x1xf32> to vector<8x8xf32>
    %450 = arith.subf %446, %449 : vector<8x8xf32>
    %451 = math.exp %450 : vector<8x8xf32>
    %cst_157 = arith.constant dense<0.000000e+00> : vector<8xf32>
    %452 = vector.multi_reduction <add>, %451, %cst_157 [1] : vector<8x8xf32> to vector<8xf32>
    %453 = vector.shape_cast %452 : vector<8xf32> to vector<8x1xf32>
    %454 = tpu.reciprocal %453 {approx = true} : vector<8x1xf32> -> vector<8x1xf32>
    %455 = vector.broadcast %454 : vector<8x1xf32> to vector<8x8xf32>
    %456 = arith.mulf %451, %455 : vector<8x8xf32>
    %cst_158 = arith.constant dense<0.000000e+00> : vector<8x8xf32>
    %457 = tpu.matmul %456, %441, %cst_158 {dimension_numbers = #tpu.dot_dimension_numbers<[1], [0], [0], [1], [0, 0, 1, 1], [], []>} : vector<8x8xf32>, vector<8x8xf32>, vector<8x8xf32> -> vector<8x8xf32>
    %458 = vector.broadcast %436 : vector<8x1xf32> to vector<8x8xf32>
    %459 = arith.mulf %458, %457 : vector<8x8xf32>
    %460 = arith.addf %366, %459 : vector<8x8xf32>
    %461 = vector.extract_strided_slice %167 {offsets = [0, 40], sizes = [8, 8], strides = [1, 1]} : vector<8x64xf32> to vector<8x8xf32>
    %462 = vector.extract_strided_slice %37 {offsets = [16, 8], sizes = [8, 8], strides = [1, 1]} : vector<48x64xf32> to vector<8x8xf32>
    %463 = vector.extract_strided_slice %37 {offsets = [16, 40], sizes = [8, 8], strides = [1, 1]} : vector<48x64xf32> to vector<8x8xf32>
    %cst_159 = arith.constant dense<0.000000e+00> : vector<8x8xf32>
    %464 = tpu.matmul %461, %462, %cst_159 {dimension_numbers = #tpu.dot_dimension_numbers<[1], [1], [0], [0], [0, 0, 1, 0], [], []>} : vector<8x8xf32>, vector<8x8xf32>, vector<8x8xf32> -> vector<8x8xf32>
    %cst_160 = arith.constant 0.353553385 : f32
    %465 = vector.broadcast %cst_160 : f32 to vector<8x8xf32>
    %466 = arith.mulf %464, %465 : vector<8x8xf32>
    %467 = vector.broadcast %438 : vector<1x8xf32> to vector<8x8xf32>
    %468 = arith.addf %466, %467 : vector<8x8xf32>
    %cst_161 = arith.constant dense<0xFF800000> : vector<8xf32>
    %469 = vector.multi_reduction <maximumf>, %468, %cst_161 [1] : vector<8x8xf32> to vector<8xf32>
    %470 = vector.shape_cast %469 : vector<8xf32> to vector<8x1xf32>
    %471 = vector.broadcast %470 : vector<8x1xf32> to vector<8x8xf32>
    %472 = arith.subf %468, %471 : vector<8x8xf32>
    %473 = math.exp %472 : vector<8x8xf32>
    %cst_162 = arith.constant dense<0.000000e+00> : vector<8xf32>
    %474 = vector.multi_reduction <add>, %473, %cst_162 [1] : vector<8x8xf32> to vector<8xf32>
    %475 = vector.shape_cast %474 : vector<8xf32> to vector<8x1xf32>
    %476 = tpu.reciprocal %475 {approx = true} : vector<8x1xf32> -> vector<8x1xf32>
    %477 = vector.broadcast %476 : vector<8x1xf32> to vector<8x8xf32>
    %478 = arith.mulf %473, %477 : vector<8x8xf32>
    %cst_163 = arith.constant dense<0.000000e+00> : vector<8x8xf32>
    %479 = tpu.matmul %478, %463, %cst_163 {dimension_numbers = #tpu.dot_dimension_numbers<[1], [0], [0], [1], [0, 0, 1, 1], [], []>} : vector<8x8xf32>, vector<8x8xf32>, vector<8x8xf32> -> vector<8x8xf32>
    %480 = vector.broadcast %436 : vector<8x1xf32> to vector<8x8xf32>
    %481 = arith.mulf %480, %479 : vector<8x8xf32>
    %482 = arith.addf %388, %481 : vector<8x8xf32>
    %483 = vector.extract_strided_slice %167 {offsets = [0, 48], sizes = [8, 8], strides = [1, 1]} : vector<8x64xf32> to vector<8x8xf32>
    %484 = vector.extract_strided_slice %37 {offsets = [16, 16], sizes = [8, 8], strides = [1, 1]} : vector<48x64xf32> to vector<8x8xf32>
    %485 = vector.extract_strided_slice %37 {offsets = [16, 48], sizes = [8, 8], strides = [1, 1]} : vector<48x64xf32> to vector<8x8xf32>
    %cst_164 = arith.constant dense<0.000000e+00> : vector<8x8xf32>
    %486 = tpu.matmul %483, %484, %cst_164 {dimension_numbers = #tpu.dot_dimension_numbers<[1], [1], [0], [0], [0, 0, 1, 0], [], []>} : vector<8x8xf32>, vector<8x8xf32>, vector<8x8xf32> -> vector<8x8xf32>
    %cst_165 = arith.constant 0.353553385 : f32
    %487 = vector.broadcast %cst_165 : f32 to vector<8x8xf32>
    %488 = arith.mulf %486, %487 : vector<8x8xf32>
    %489 = vector.broadcast %438 : vector<1x8xf32> to vector<8x8xf32>
    %490 = arith.addf %488, %489 : vector<8x8xf32>
    %cst_166 = arith.constant dense<0xFF800000> : vector<8xf32>
    %491 = vector.multi_reduction <maximumf>, %490, %cst_166 [1] : vector<8x8xf32> to vector<8xf32>
    %492 = vector.shape_cast %491 : vector<8xf32> to vector<8x1xf32>
    %493 = vector.broadcast %492 : vector<8x1xf32> to vector<8x8xf32>
    %494 = arith.subf %490, %493 : vector<8x8xf32>
    %495 = math.exp %494 : vector<8x8xf32>
    %cst_167 = arith.constant dense<0.000000e+00> : vector<8xf32>
    %496 = vector.multi_reduction <add>, %495, %cst_167 [1] : vector<8x8xf32> to vector<8xf32>
    %497 = vector.shape_cast %496 : vector<8xf32> to vector<8x1xf32>
    %498 = tpu.reciprocal %497 {approx = true} : vector<8x1xf32> -> vector<8x1xf32>
    %499 = vector.broadcast %498 : vector<8x1xf32> to vector<8x8xf32>
    %500 = arith.mulf %495, %499 : vector<8x8xf32>
    %cst_168 = arith.constant dense<0.000000e+00> : vector<8x8xf32>
    %501 = tpu.matmul %500, %485, %cst_168 {dimension_numbers = #tpu.dot_dimension_numbers<[1], [0], [0], [1], [0, 0, 1, 1], [], []>} : vector<8x8xf32>, vector<8x8xf32>, vector<8x8xf32> -> vector<8x8xf32>
    %502 = vector.broadcast %436 : vector<8x1xf32> to vector<8x8xf32>
    %503 = arith.mulf %502, %501 : vector<8x8xf32>
    %504 = arith.addf %410, %503 : vector<8x8xf32>
    %505 = vector.extract_strided_slice %167 {offsets = [0, 56], sizes = [8, 8], strides = [1, 1]} : vector<8x64xf32> to vector<8x8xf32>
    %506 = vector.extract_strided_slice %37 {offsets = [16, 24], sizes = [8, 8], strides = [1, 1]} : vector<48x64xf32> to vector<8x8xf32>
    %507 = vector.extract_strided_slice %37 {offsets = [16, 56], sizes = [8, 8], strides = [1, 1]} : vector<48x64xf32> to vector<8x8xf32>
    %cst_169 = arith.constant dense<0.000000e+00> : vector<8x8xf32>
    %508 = tpu.matmul %505, %506, %cst_169 {dimension_numbers = #tpu.dot_dimension_numbers<[1], [1], [0], [0], [0, 0, 1, 0], [], []>} : vector<8x8xf32>, vector<8x8xf32>, vector<8x8xf32> -> vector<8x8xf32>
    %cst_170 = arith.constant 0.353553385 : f32
    %509 = vector.broadcast %cst_170 : f32 to vector<8x8xf32>
    %510 = arith.mulf %508, %509 : vector<8x8xf32>
    %511 = vector.broadcast %438 : vector<1x8xf32> to vector<8x8xf32>
    %512 = arith.addf %510, %511 : vector<8x8xf32>
    %cst_171 = arith.constant dense<0xFF800000> : vector<8xf32>
    %513 = vector.multi_reduction <maximumf>, %512, %cst_171 [1] : vector<8x8xf32> to vector<8xf32>
    %514 = vector.shape_cast %513 : vector<8xf32> to vector<8x1xf32>
    %515 = vector.broadcast %514 : vector<8x1xf32> to vector<8x8xf32>
    %516 = arith.subf %512, %515 : vector<8x8xf32>
    %517 = math.exp %516 : vector<8x8xf32>
    %cst_172 = arith.constant dense<0.000000e+00> : vector<8xf32>
    %518 = vector.multi_reduction <add>, %517, %cst_172 [1] : vector<8x8xf32> to vector<8xf32>
    %519 = vector.shape_cast %518 : vector<8xf32> to vector<8x1xf32>
    %520 = tpu.reciprocal %519 {approx = true} : vector<8x1xf32> -> vector<8x1xf32>
    %521 = vector.broadcast %520 : vector<8x1xf32> to vector<8x8xf32>
    %522 = arith.mulf %517, %521 : vector<8x8xf32>
    %cst_173 = arith.constant dense<0.000000e+00> : vector<8x8xf32>
    %523 = tpu.matmul %522, %507, %cst_173 {dimension_numbers = #tpu.dot_dimension_numbers<[1], [0], [0], [1], [0, 0, 1, 1], [], []>} : vector<8x8xf32>, vector<8x8xf32>, vector<8x8xf32> -> vector<8x8xf32>
    %524 = vector.broadcast %436 : vector<8x1xf32> to vector<8x8xf32>
    %525 = arith.mulf %524, %523 : vector<8x8xf32>
    %526 = arith.addf %432, %525 : vector<8x8xf32>
    %527 = vector.broadcast %437 : vector<8x1xf32> to vector<8x32xf32>
    %528 = vector.broadcast %11 : vector<1x32xf32> to vector<8x32xf32>
    %529 = arith.mulf %527, %528 : vector<8x32xf32>
    %530 = arith.addf %529, %162 : vector<8x32xf32>
    %531 = vector.extract_strided_slice %10 {offsets = [0, 0], sizes = [8, 32], strides = [1, 1]} : vector<32x32xf32> to vector<8x32xf32>
    %532 = arith.truncf %460 : vector<8x8xf32> to vector<8x8xbf16>
    %533 = arith.truncf %531 : vector<8x32xf32> to vector<8x32xbf16>
    %cst_174 = arith.constant dense<0.000000e+00> : vector<8x32xf32>
    %534 = tpu.matmul %532, %533, %cst_174 {dimension_numbers = #tpu.dot_dimension_numbers<[1], [0], [0], [1], [0, 0, 1, 1], [], []>} : vector<8x8xbf16>, vector<8x32xbf16>, vector<8x32xf32> -> vector<8x32xf32>
    %535 = arith.addf %530, %534 : vector<8x32xf32>
    %536 = vector.extract_strided_slice %10 {offsets = [8, 0], sizes = [8, 32], strides = [1, 1]} : vector<32x32xf32> to vector<8x32xf32>
    %537 = arith.truncf %482 : vector<8x8xf32> to vector<8x8xbf16>
    %538 = arith.truncf %536 : vector<8x32xf32> to vector<8x32xbf16>
    %cst_175 = arith.constant dense<0.000000e+00> : vector<8x32xf32>
    %539 = tpu.matmul %537, %538, %cst_175 {dimension_numbers = #tpu.dot_dimension_numbers<[1], [0], [0], [1], [0, 0, 1, 1], [], []>} : vector<8x8xbf16>, vector<8x32xbf16>, vector<8x32xf32> -> vector<8x32xf32>
    %540 = arith.addf %535, %539 : vector<8x32xf32>
    %541 = vector.extract_strided_slice %10 {offsets = [16, 0], sizes = [8, 32], strides = [1, 1]} : vector<32x32xf32> to vector<8x32xf32>
    %542 = arith.truncf %504 : vector<8x8xf32> to vector<8x8xbf16>
    %543 = arith.truncf %541 : vector<8x32xf32> to vector<8x32xbf16>
    %cst_176 = arith.constant dense<0.000000e+00> : vector<8x32xf32>
    %544 = tpu.matmul %542, %543, %cst_176 {dimension_numbers = #tpu.dot_dimension_numbers<[1], [0], [0], [1], [0, 0, 1, 1], [], []>} : vector<8x8xbf16>, vector<8x32xbf16>, vector<8x32xf32> -> vector<8x32xf32>
    %545 = arith.addf %540, %544 : vector<8x32xf32>
    %546 = vector.extract_strided_slice %10 {offsets = [24, 0], sizes = [8, 32], strides = [1, 1]} : vector<32x32xf32> to vector<8x32xf32>
    %547 = arith.truncf %526 : vector<8x8xf32> to vector<8x8xbf16>
    %548 = arith.truncf %546 : vector<8x32xf32> to vector<8x32xbf16>
    %cst_177 = arith.constant dense<0.000000e+00> : vector<8x32xf32>
    %549 = tpu.matmul %547, %548, %cst_177 {dimension_numbers = #tpu.dot_dimension_numbers<[1], [0], [0], [1], [0, 0, 1, 1], [], []>} : vector<8x8xbf16>, vector<8x32xbf16>, vector<8x32xf32> -> vector<8x32xf32>
    %550 = arith.addf %545, %549 : vector<8x32xf32>
    %cst_178 = arith.constant dense<0.000000e+00> : vector<8xf32>
    %551 = vector.multi_reduction <add>, %550, %cst_178 [1] : vector<8x32xf32> to vector<8xf32>
    %552 = vector.shape_cast %551 : vector<8xf32> to vector<8x1xf32>
    %cst_179 = arith.constant 3.200000e+01 : f32
    %553 = vector.broadcast %cst_179 : f32 to vector<8x1xf32>
    %554 = arith.divf %552, %553 : vector<8x1xf32>
    %555 = vector.broadcast %554 : vector<8x1xf32> to vector<8x32xf32>
    %556 = arith.subf %550, %555 : vector<8x32xf32>
    %557 = arith.mulf %556, %556 : vector<8x32xf32>
    %cst_180 = arith.constant dense<0.000000e+00> : vector<8xf32>
    %558 = vector.multi_reduction <add>, %557, %cst_180 [1] : vector<8x32xf32> to vector<8xf32>
    %559 = vector.shape_cast %558 : vector<8xf32> to vector<8x1xf32>
    %cst_181 = arith.constant 3.200000e+01 : f32
    %560 = vector.broadcast %cst_181 : f32 to vector<8x1xf32>
    %561 = arith.divf %559, %560 : vector<8x1xf32>
    %cst_182 = arith.constant 9.99999974E-6 : f32
    %562 = vector.broadcast %cst_182 : f32 to vector<8x1xf32>
    %563 = arith.addf %561, %562 : vector<8x1xf32>
    %564 = math.rsqrt %563 : vector<8x1xf32>
    %565 = vector.broadcast %564 : vector<8x1xf32> to vector<8x32xf32>
    %566 = arith.mulf %556, %565 : vector<8x32xf32>
    %567 = vector.broadcast %14 : vector<1x32xf32> to vector<8x32xf32>
    %568 = arith.mulf %566, %567 : vector<8x32xf32>
    %569 = vector.broadcast %15 : vector<1x32xf32> to vector<8x32xf32>
    %570 = arith.addf %568, %569 : vector<8x32xf32>
    %571 = arith.truncf %570 : vector<8x32xf32> to vector<8x32xbf16>
    %572 = arith.truncf %20 : vector<32x64xf32> to vector<32x64xbf16>
    %cst_183 = arith.constant dense<0.000000e+00> : vector<8x64xf32>
    %573 = tpu.matmul %571, %572, %cst_183 {dimension_numbers = #tpu.dot_dimension_numbers<[1], [0], [0], [1], [0, 0, 1, 1], [], []>} : vector<8x32xbf16>, vector<32x64xbf16>, vector<8x64xf32> -> vector<8x64xf32>
    %574 = vector.broadcast %21 : vector<1x64xf32> to vector<8x64xf32>
    %575 = arith.addf %573, %574 : vector<8x64xf32>
    %cst_184 = arith.constant 0.000000e+00 : f32
    %576 = vector.broadcast %cst_184 : f32 to vector<8x64xf32>
    %577 = arith.maximumf %575, %576 : vector<8x64xf32>
    %578 = arith.truncf %577 : vector<8x64xf32> to vector<8x64xbf16>
    %579 = arith.truncf %22 : vector<64x32xf32> to vector<64x32xbf16>
    %cst_185 = arith.constant dense<0.000000e+00> : vector<8x32xf32>
    %580 = tpu.matmul %578, %579, %cst_185 {dimension_numbers = #tpu.dot_dimension_numbers<[1], [0], [0], [1], [0, 0, 1, 1], [], []>} : vector<8x64xbf16>, vector<64x32xbf16>, vector<8x32xf32> -> vector<8x32xf32>
    %581 = vector.broadcast %23 : vector<1x32xf32> to vector<8x32xf32>
    %582 = arith.addf %580, %581 : vector<8x32xf32>
    %583 = arith.addf %582, %570 : vector<8x32xf32>
    %cst_186 = arith.constant dense<0.000000e+00> : vector<8xf32>
    %584 = vector.multi_reduction <add>, %583, %cst_186 [1] : vector<8x32xf32> to vector<8xf32>
    %585 = vector.shape_cast %584 : vector<8xf32> to vector<8x1xf32>
    %cst_187 = arith.constant 3.200000e+01 : f32
    %586 = vector.broadcast %cst_187 : f32 to vector<8x1xf32>
    %587 = arith.divf %585, %586 : vector<8x1xf32>
    %588 = vector.broadcast %587 : vector<8x1xf32> to vector<8x32xf32>
    %589 = arith.subf %583, %588 : vector<8x32xf32>
    %590 = arith.mulf %589, %589 : vector<8x32xf32>
    %cst_188 = arith.constant dense<0.000000e+00> : vector<8xf32>
    %591 = vector.multi_reduction <add>, %590, %cst_188 [1] : vector<8x32xf32> to vector<8xf32>
    %592 = vector.shape_cast %591 : vector<8xf32> to vector<8x1xf32>
    %cst_189 = arith.constant 3.200000e+01 : f32
    %593 = vector.broadcast %cst_189 : f32 to vector<8x1xf32>
    %594 = arith.divf %592, %593 : vector<8x1xf32>
    %cst_190 = arith.constant 9.99999974E-6 : f32
    %595 = vector.broadcast %cst_190 : f32 to vector<8x1xf32>
    %596 = arith.addf %594, %595 : vector<8x1xf32>
    %597 = math.rsqrt %596 : vector<8x1xf32>
    %598 = vector.broadcast %597 : vector<8x1xf32> to vector<8x32xf32>
    %599 = arith.mulf %589, %598 : vector<8x32xf32>
    %600 = vector.broadcast %16 : vector<1x32xf32> to vector<8x32xf32>
    %601 = arith.mulf %599, %600 : vector<8x32xf32>
    %602 = vector.broadcast %17 : vector<1x32xf32> to vector<8x32xf32>
    %603 = arith.addf %601, %602 : vector<8x32xf32>
    %c0_191 = arith.constant 0 : index
    %c0_192 = arith.constant 0 : index
    %604 = vector.load %arg30[%c0_191, %c0_192] : memref<16x32xf32, #tpu.memory_space<vmem>>, vector<8x32xf32>
    tpu.vector_store %arg30[%c0_191, %c0_192], %603 {strides = array<i32>} : memref<16x32xf32, #tpu.memory_space<vmem>>, vector<8x32xf32>,
    %605 = vector.extract_strided_slice %0 {offsets = [8, 0], sizes = [8, 32], strides = [1, 1]} : vector<16x32xf32> to vector<8x32xf32>
    %606 = vector.extract_strided_slice %4 {offsets = [1, 0], sizes = [1, 8], strides = [1, 1]} : vector<2x8xf32> to vector<1x8xf32>
    %607 = vector.broadcast %606 : vector<1x8xf32> to vector<8x8xf32>
    %608 = arith.addf %3, %607 : vector<8x8xf32>
    %609 = vector.broadcast %9 : vector<1x32xf32> to vector<8x32xf32>
    %610 = arith.addf %609, %605 : vector<8x32xf32>
    %611 = vector.extract_strided_slice %30 {offsets = [8, 0], sizes = [8, 8], strides = [1, 1]} : vector<16x96xf32> to vector<8x8xf32>
    %612 = vector.extract_strided_slice %30 {offsets = [8, 32], sizes = [8, 8], strides = [1, 1]} : vector<16x96xf32> to vector<8x8xf32>
    %613 = vector.extract_strided_slice %30 {offsets = [8, 64], sizes = [8, 8], strides = [1, 1]} : vector<16x96xf32> to vector<8x8xf32>
    %cst_193 = arith.constant dense<0.000000e+00> : vector<8x8xf32>
    %614 = tpu.matmul %611, %612, %cst_193 {dimension_numbers = #tpu.dot_dimension_numbers<[1], [1], [0], [0], [0, 0, 1, 0], [], []>} : vector<8x8xf32>, vector<8x8xf32>, vector<8x8xf32> -> vector<8x8xf32>
    %cst_194 = arith.constant 0.353553385 : f32
    %615 = vector.broadcast %cst_194 : f32 to vector<8x8xf32>
    %616 = arith.mulf %614, %615 : vector<8x8xf32>
    %617 = arith.addf %616, %608 : vector<8x8xf32>
    %cst_195 = arith.constant dense<0xFF800000> : vector<8xf32>
    %618 = vector.multi_reduction <maximumf>, %617, %cst_195 [1] : vector<8x8xf32> to vector<8xf32>
    %619 = vector.shape_cast %618 : vector<8xf32> to vector<8x1xf32>
    %620 = vector.broadcast %619 : vector<8x1xf32> to vector<8x8xf32>
    %621 = arith.subf %617, %620 : vector<8x8xf32>
    %622 = math.exp %621 : vector<8x8xf32>
    %cst_196 = arith.constant dense<0.000000e+00> : vector<8xf32>
    %623 = vector.multi_reduction <add>, %622, %cst_196 [1] : vector<8x8xf32> to vector<8xf32>
    %624 = vector.shape_cast %623 : vector<8xf32> to vector<8x1xf32>
    %625 = tpu.reciprocal %624 {approx = true} : vector<8x1xf32> -> vector<8x1xf32>
    %626 = vector.broadcast %625 : vector<8x1xf32> to vector<8x8xf32>
    %627 = arith.mulf %622, %626 : vector<8x8xf32>
    %cst_197 = arith.constant dense<0.000000e+00> : vector<8x8xf32>
    %628 = tpu.matmul %627, %613, %cst_197 {dimension_numbers = #tpu.dot_dimension_numbers<[1], [0], [0], [1], [0, 0, 1, 1], [], []>} : vector<8x8xf32>, vector<8x8xf32>, vector<8x8xf32> -> vector<8x8xf32>
    %629 = vector.extract_strided_slice %8 {offsets = [0, 0], sizes = [8, 32], strides = [1, 1]} : vector<32x32xf32> to vector<8x32xf32>
    %630 = arith.truncf %628 : vector<8x8xf32> to vector<8x8xbf16>
    %631 = arith.truncf %629 : vector<8x32xf32> to vector<8x32xbf16>
    %cst_198 = arith.constant dense<0.000000e+00> : vector<8x32xf32>
    %632 = tpu.matmul %630, %631, %cst_198 {dimension_numbers = #tpu.dot_dimension_numbers<[1], [0], [0], [1], [0, 0, 1, 1], [], []>} : vector<8x8xbf16>, vector<8x32xbf16>, vector<8x32xf32> -> vector<8x32xf32>
    %633 = arith.addf %610, %632 : vector<8x32xf32>
    %634 = vector.extract_strided_slice %30 {offsets = [8, 8], sizes = [8, 8], strides = [1, 1]} : vector<16x96xf32> to vector<8x8xf32>
    %635 = vector.extract_strided_slice %30 {offsets = [8, 40], sizes = [8, 8], strides = [1, 1]} : vector<16x96xf32> to vector<8x8xf32>
    %636 = vector.extract_strided_slice %30 {offsets = [8, 72], sizes = [8, 8], strides = [1, 1]} : vector<16x96xf32> to vector<8x8xf32>
    %cst_199 = arith.constant dense<0.000000e+00> : vector<8x8xf32>
    %637 = tpu.matmul %634, %635, %cst_199 {dimension_numbers = #tpu.dot_dimension_numbers<[1], [1], [0], [0], [0, 0, 1, 0], [], []>} : vector<8x8xf32>, vector<8x8xf32>, vector<8x8xf32> -> vector<8x8xf32>
    %cst_200 = arith.constant 0.353553385 : f32
    %638 = vector.broadcast %cst_200 : f32 to vector<8x8xf32>
    %639 = arith.mulf %637, %638 : vector<8x8xf32>
    %640 = arith.addf %639, %608 : vector<8x8xf32>
    %cst_201 = arith.constant dense<0xFF800000> : vector<8xf32>
    %641 = vector.multi_reduction <maximumf>, %640, %cst_201 [1] : vector<8x8xf32> to vector<8xf32>
    %642 = vector.shape_cast %641 : vector<8xf32> to vector<8x1xf32>
    %643 = vector.broadcast %642 : vector<8x1xf32> to vector<8x8xf32>
    %644 = arith.subf %640, %643 : vector<8x8xf32>
    %645 = math.exp %644 : vector<8x8xf32>
    %cst_202 = arith.constant dense<0.000000e+00> : vector<8xf32>
    %646 = vector.multi_reduction <add>, %645, %cst_202 [1] : vector<8x8xf32> to vector<8xf32>
    %647 = vector.shape_cast %646 : vector<8xf32> to vector<8x1xf32>
    %648 = tpu.reciprocal %647 {approx = true} : vector<8x1xf32> -> vector<8x1xf32>
    %649 = vector.broadcast %648 : vector<8x1xf32> to vector<8x8xf32>
    %650 = arith.mulf %645, %649 : vector<8x8xf32>
    %cst_203 = arith.constant dense<0.000000e+00> : vector<8x8xf32>
    %651 = tpu.matmul %650, %636, %cst_203 {dimension_numbers = #tpu.dot_dimension_numbers<[1], [0], [0], [1], [0, 0, 1, 1], [], []>} : vector<8x8xf32>, vector<8x8xf32>, vector<8x8xf32> -> vector<8x8xf32>
    %652 = vector.extract_strided_slice %8 {offsets = [8, 0], sizes = [8, 32], strides = [1, 1]} : vector<32x32xf32> to vector<8x32xf32>
    %653 = arith.truncf %651 : vector<8x8xf32> to vector<8x8xbf16>
    %654 = arith.truncf %652 : vector<8x32xf32> to vector<8x32xbf16>
    %cst_204 = arith.constant dense<0.000000e+00> : vector<8x32xf32>
    %655 = tpu.matmul %653, %654, %cst_204 {dimension_numbers = #tpu.dot_dimension_numbers<[1], [0], [0], [1], [0, 0, 1, 1], [], []>} : vector<8x8xbf16>, vector<8x32xbf16>, vector<8x32xf32> -> vector<8x32xf32>
    %656 = arith.addf %633, %655 : vector<8x32xf32>
    %657 = vector.extract_strided_slice %30 {offsets = [8, 16], sizes = [8, 8], strides = [1, 1]} : vector<16x96xf32> to vector<8x8xf32>
    %658 = vector.extract_strided_slice %30 {offsets = [8, 48], sizes = [8, 8], strides = [1, 1]} : vector<16x96xf32> to vector<8x8xf32>
    %659 = vector.extract_strided_slice %30 {offsets = [8, 80], sizes = [8, 8], strides = [1, 1]} : vector<16x96xf32> to vector<8x8xf32>
    %cst_205 = arith.constant dense<0.000000e+00> : vector<8x8xf32>
    %660 = tpu.matmul %657, %658, %cst_205 {dimension_numbers = #tpu.dot_dimension_numbers<[1], [1], [0], [0], [0, 0, 1, 0], [], []>} : vector<8x8xf32>, vector<8x8xf32>, vector<8x8xf32> -> vector<8x8xf32>
    %cst_206 = arith.constant 0.353553385 : f32
    %661 = vector.broadcast %cst_206 : f32 to vector<8x8xf32>
    %662 = arith.mulf %660, %661 : vector<8x8xf32>
    %663 = arith.addf %662, %608 : vector<8x8xf32>
    %cst_207 = arith.constant dense<0xFF800000> : vector<8xf32>
    %664 = vector.multi_reduction <maximumf>, %663, %cst_207 [1] : vector<8x8xf32> to vector<8xf32>
    %665 = vector.shape_cast %664 : vector<8xf32> to vector<8x1xf32>
    %666 = vector.broadcast %665 : vector<8x1xf32> to vector<8x8xf32>
    %667 = arith.subf %663, %666 : vector<8x8xf32>
    %668 = math.exp %667 : vector<8x8xf32>
    %cst_208 = arith.constant dense<0.000000e+00> : vector<8xf32>
    %669 = vector.multi_reduction <add>, %668, %cst_208 [1] : vector<8x8xf32> to vector<8xf32>
    %670 = vector.shape_cast %669 : vector<8xf32> to vector<8x1xf32>
    %671 = tpu.reciprocal %670 {approx = true} : vector<8x1xf32> -> vector<8x1xf32>
    %672 = vector.broadcast %671 : vector<8x1xf32> to vector<8x8xf32>
    %673 = arith.mulf %668, %672 : vector<8x8xf32>
    %cst_209 = arith.constant dense<0.000000e+00> : vector<8x8xf32>
    %674 = tpu.matmul %673, %659, %cst_209 {dimension_numbers = #tpu.dot_dimension_numbers<[1], [0], [0], [1], [0, 0, 1, 1], [], []>} : vector<8x8xf32>, vector<8x8xf32>, vector<8x8xf32> -> vector<8x8xf32>
    %675 = vector.extract_strided_slice %8 {offsets = [16, 0], sizes = [8, 32], strides = [1, 1]} : vector<32x32xf32> to vector<8x32xf32>
    %676 = arith.truncf %674 : vector<8x8xf32> to vector<8x8xbf16>
    %677 = arith.truncf %675 : vector<8x32xf32> to vector<8x32xbf16>
    %cst_210 = arith.constant dense<0.000000e+00> : vector<8x32xf32>
    %678 = tpu.matmul %676, %677, %cst_210 {dimension_numbers = #tpu.dot_dimension_numbers<[1], [0], [0], [1], [0, 0, 1, 1], [], []>} : vector<8x8xbf16>, vector<8x32xbf16>, vector<8x32xf32> -> vector<8x32xf32>
    %679 = arith.addf %656, %678 : vector<8x32xf32>
    %680 = vector.extract_strided_slice %30 {offsets = [8, 24], sizes = [8, 8], strides = [1, 1]} : vector<16x96xf32> to vector<8x8xf32>
    %681 = vector.extract_strided_slice %30 {offsets = [8, 56], sizes = [8, 8], strides = [1, 1]} : vector<16x96xf32> to vector<8x8xf32>
    %682 = vector.extract_strided_slice %30 {offsets = [8, 88], sizes = [8, 8], strides = [1, 1]} : vector<16x96xf32> to vector<8x8xf32>
    %cst_211 = arith.constant dense<0.000000e+00> : vector<8x8xf32>
    %683 = tpu.matmul %680, %681, %cst_211 {dimension_numbers = #tpu.dot_dimension_numbers<[1], [1], [0], [0], [0, 0, 1, 0], [], []>} : vector<8x8xf32>, vector<8x8xf32>, vector<8x8xf32> -> vector<8x8xf32>
    %cst_212 = arith.constant 0.353553385 : f32
    %684 = vector.broadcast %cst_212 : f32 to vector<8x8xf32>
    %685 = arith.mulf %683, %684 : vector<8x8xf32>
    %686 = arith.addf %685, %608 : vector<8x8xf32>
    %cst_213 = arith.constant dense<0xFF800000> : vector<8xf32>
    %687 = vector.multi_reduction <maximumf>, %686, %cst_213 [1] : vector<8x8xf32> to vector<8xf32>
    %688 = vector.shape_cast %687 : vector<8xf32> to vector<8x1xf32>
    %689 = vector.broadcast %688 : vector<8x1xf32> to vector<8x8xf32>
    %690 = arith.subf %686, %689 : vector<8x8xf32>
    %691 = math.exp %690 : vector<8x8xf32>
    %cst_214 = arith.constant dense<0.000000e+00> : vector<8xf32>
    %692 = vector.multi_reduction <add>, %691, %cst_214 [1] : vector<8x8xf32> to vector<8xf32>
    %693 = vector.shape_cast %692 : vector<8xf32> to vector<8x1xf32>
    %694 = tpu.reciprocal %693 {approx = true} : vector<8x1xf32> -> vector<8x1xf32>
    %695 = vector.broadcast %694 : vector<8x1xf32> to vector<8x8xf32>
    %696 = arith.mulf %691, %695 : vector<8x8xf32>
    %cst_215 = arith.constant dense<0.000000e+00> : vector<8x8xf32>
    %697 = tpu.matmul %696, %682, %cst_215 {dimension_numbers = #tpu.dot_dimension_numbers<[1], [0], [0], [1], [0, 0, 1, 1], [], []>} : vector<8x8xf32>, vector<8x8xf32>, vector<8x8xf32> -> vector<8x8xf32>
    %698 = vector.extract_strided_slice %8 {offsets = [24, 0], sizes = [8, 32], strides = [1, 1]} : vector<32x32xf32> to vector<8x32xf32>
    %699 = arith.truncf %697 : vector<8x8xf32> to vector<8x8xbf16>
    %700 = arith.truncf %698 : vector<8x32xf32> to vector<8x32xbf16>
    %cst_216 = arith.constant dense<0.000000e+00> : vector<8x32xf32>
    %701 = tpu.matmul %699, %700, %cst_216 {dimension_numbers = #tpu.dot_dimension_numbers<[1], [0], [0], [1], [0, 0, 1, 1], [], []>} : vector<8x8xbf16>, vector<8x32xbf16>, vector<8x32xf32> -> vector<8x32xf32>
    %702 = arith.addf %679, %701 : vector<8x32xf32>
    %cst_217 = arith.constant dense<0.000000e+00> : vector<8xf32>
    %703 = vector.multi_reduction <add>, %702, %cst_217 [1] : vector<8x32xf32> to vector<8xf32>
    %704 = vector.shape_cast %703 : vector<8xf32> to vector<8x1xf32>
    %cst_218 = arith.constant 3.200000e+01 : f32
    %705 = vector.broadcast %cst_218 : f32 to vector<8x1xf32>
    %706 = arith.divf %704, %705 : vector<8x1xf32>
    %707 = vector.broadcast %706 : vector<8x1xf32> to vector<8x32xf32>
    %708 = arith.subf %702, %707 : vector<8x32xf32>
    %709 = arith.mulf %708, %708 : vector<8x32xf32>
    %cst_219 = arith.constant dense<0.000000e+00> : vector<8xf32>
    %710 = vector.multi_reduction <add>, %709, %cst_219 [1] : vector<8x32xf32> to vector<8xf32>
    %711 = vector.shape_cast %710 : vector<8xf32> to vector<8x1xf32>
    %cst_220 = arith.constant 3.200000e+01 : f32
    %712 = vector.broadcast %cst_220 : f32 to vector<8x1xf32>
    %713 = arith.divf %711, %712 : vector<8x1xf32>
    %cst_221 = arith.constant 9.99999974E-6 : f32
    %714 = vector.broadcast %cst_221 : f32 to vector<8x1xf32>
    %715 = arith.addf %713, %714 : vector<8x1xf32>
    %716 = math.rsqrt %715 : vector<8x1xf32>
    %717 = vector.broadcast %716 : vector<8x1xf32> to vector<8x32xf32>
    %718 = arith.mulf %708, %717 : vector<8x32xf32>
    %719 = vector.broadcast %12 : vector<1x32xf32> to vector<8x32xf32>
    %720 = arith.mulf %718, %719 : vector<8x32xf32>
    %721 = vector.broadcast %13 : vector<1x32xf32> to vector<8x32xf32>
    %722 = arith.addf %720, %721 : vector<8x32xf32>
    %723 = arith.truncf %722 : vector<8x32xf32> to vector<8x32xbf16>
    %724 = arith.truncf %18 : vector<32x64xf32> to vector<32x64xbf16>
    %cst_222 = arith.constant dense<0.000000e+00> : vector<8x64xf32>
    %725 = tpu.matmul %723, %724, %cst_222 {dimension_numbers = #tpu.dot_dimension_numbers<[1], [0], [0], [1], [0, 0, 1, 1], [], []>} : vector<8x32xbf16>, vector<32x64xbf16>, vector<8x64xf32> -> vector<8x64xf32>
    %726 = vector.broadcast %19 : vector<1x64xf32> to vector<8x64xf32>
    %727 = arith.addf %725, %726 : vector<8x64xf32>
    %728 = vector.extract_strided_slice %5 {offsets = [1, 0], sizes = [1, 3], strides = [1, 1]} : vector<2x3xf32> to vector<1x3xf32>
    %cst_223 = arith.constant 0.000000e+00 : f32
    %729 = vector.broadcast %cst_223 : f32 to vector<8x3xf32>
    %730 = vector.extract_strided_slice %727 {offsets = [0, 0], sizes = [8, 8], strides = [1, 1]} : vector<8x64xf32> to vector<8x8xf32>
    %731 = vector.extract_strided_slice %44 {offsets = [3, 0], sizes = [3, 8], strides = [1, 1]} : vector<6x32xf32> to vector<3x8xf32>
    %cst_224 = arith.constant dense<0.000000e+00> : vector<8x3xf32>
    %732 = tpu.matmul %730, %731, %cst_224 {dimension_numbers = #tpu.dot_dimension_numbers<[1], [1], [0], [0], [0, 0, 1, 0], [], []>} : vector<8x8xf32>, vector<3x8xf32>, vector<8x3xf32> -> vector<8x3xf32>
    %cst_225 = arith.constant 0.353553385 : f32
    %733 = vector.broadcast %cst_225 : f32 to vector<8x3xf32>
    %734 = arith.mulf %732, %733 : vector<8x3xf32>
    %735 = vector.broadcast %728 : vector<1x3xf32> to vector<8x3xf32>
    %736 = arith.addf %734, %735 : vector<8x3xf32>
    %cst_226 = arith.constant dense<0xFF800000> : vector<8xf32>
    %737 = vector.multi_reduction <maximumf>, %736, %cst_226 [1] : vector<8x3xf32> to vector<8xf32>
    %738 = vector.shape_cast %737 : vector<8xf32> to vector<8x1xf32>
    %739 = vector.broadcast %738 : vector<8x1xf32> to vector<8x3xf32>
    %740 = arith.subf %736, %739 : vector<8x3xf32>
    %741 = math.exp %740 : vector<8x3xf32>
    %cst_227 = arith.constant dense<0.000000e+00> : vector<8xf32>
    %742 = vector.multi_reduction <add>, %741, %cst_227 [1] : vector<8x3xf32> to vector<8xf32>
    %743 = vector.shape_cast %742 : vector<8xf32> to vector<8x1xf32>
    %744 = vector.broadcast %743 : vector<8x1xf32> to vector<8x3xf32>
    %745 = arith.divf %741, %744 : vector<8x3xf32>
    %746 = arith.addf %729, %745 : vector<8x3xf32>
    %747 = vector.extract_strided_slice %727 {offsets = [0, 8], sizes = [8, 8], strides = [1, 1]} : vector<8x64xf32> to vector<8x8xf32>
    %748 = vector.extract_strided_slice %44 {offsets = [3, 8], sizes = [3, 8], strides = [1, 1]} : vector<6x32xf32> to vector<3x8xf32>
    %cst_228 = arith.constant dense<0.000000e+00> : vector<8x3xf32>
    %749 = tpu.matmul %747, %748, %cst_228 {dimension_numbers = #tpu.dot_dimension_numbers<[1], [1], [0], [0], [0, 0, 1, 0], [], []>} : vector<8x8xf32>, vector<3x8xf32>, vector<8x3xf32> -> vector<8x3xf32>
    %cst_229 = arith.constant 0.353553385 : f32
    %750 = vector.broadcast %cst_229 : f32 to vector<8x3xf32>
    %751 = arith.mulf %749, %750 : vector<8x3xf32>
    %752 = vector.broadcast %728 : vector<1x3xf32> to vector<8x3xf32>
    %753 = arith.addf %751, %752 : vector<8x3xf32>
    %cst_230 = arith.constant dense<0xFF800000> : vector<8xf32>
    %754 = vector.multi_reduction <maximumf>, %753, %cst_230 [1] : vector<8x3xf32> to vector<8xf32>
    %755 = vector.shape_cast %754 : vector<8xf32> to vector<8x1xf32>
    %756 = vector.broadcast %755 : vector<8x1xf32> to vector<8x3xf32>
    %757 = arith.subf %753, %756 : vector<8x3xf32>
    %758 = math.exp %757 : vector<8x3xf32>
    %cst_231 = arith.constant dense<0.000000e+00> : vector<8xf32>
    %759 = vector.multi_reduction <add>, %758, %cst_231 [1] : vector<8x3xf32> to vector<8xf32>
    %760 = vector.shape_cast %759 : vector<8xf32> to vector<8x1xf32>
    %761 = vector.broadcast %760 : vector<8x1xf32> to vector<8x3xf32>
    %762 = arith.divf %758, %761 : vector<8x3xf32>
    %763 = arith.addf %746, %762 : vector<8x3xf32>
    %764 = vector.extract_strided_slice %727 {offsets = [0, 16], sizes = [8, 8], strides = [1, 1]} : vector<8x64xf32> to vector<8x8xf32>
    %765 = vector.extract_strided_slice %44 {offsets = [3, 16], sizes = [3, 8], strides = [1, 1]} : vector<6x32xf32> to vector<3x8xf32>
    %cst_232 = arith.constant dense<0.000000e+00> : vector<8x3xf32>
    %766 = tpu.matmul %764, %765, %cst_232 {dimension_numbers = #tpu.dot_dimension_numbers<[1], [1], [0], [0], [0, 0, 1, 0], [], []>} : vector<8x8xf32>, vector<3x8xf32>, vector<8x3xf32> -> vector<8x3xf32>
    %cst_233 = arith.constant 0.353553385 : f32
    %767 = vector.broadcast %cst_233 : f32 to vector<8x3xf32>
    %768 = arith.mulf %766, %767 : vector<8x3xf32>
    %769 = vector.broadcast %728 : vector<1x3xf32> to vector<8x3xf32>
    %770 = arith.addf %768, %769 : vector<8x3xf32>
    %cst_234 = arith.constant dense<0xFF800000> : vector<8xf32>
    %771 = vector.multi_reduction <maximumf>, %770, %cst_234 [1] : vector<8x3xf32> to vector<8xf32>
    %772 = vector.shape_cast %771 : vector<8xf32> to vector<8x1xf32>
    %773 = vector.broadcast %772 : vector<8x1xf32> to vector<8x3xf32>
    %774 = arith.subf %770, %773 : vector<8x3xf32>
    %775 = math.exp %774 : vector<8x3xf32>
    %cst_235 = arith.constant dense<0.000000e+00> : vector<8xf32>
    %776 = vector.multi_reduction <add>, %775, %cst_235 [1] : vector<8x3xf32> to vector<8xf32>
    %777 = vector.shape_cast %776 : vector<8xf32> to vector<8x1xf32>
    %778 = vector.broadcast %777 : vector<8x1xf32> to vector<8x3xf32>
    %779 = arith.divf %775, %778 : vector<8x3xf32>
    %780 = arith.addf %763, %779 : vector<8x3xf32>
    %781 = vector.extract_strided_slice %727 {offsets = [0, 24], sizes = [8, 8], strides = [1, 1]} : vector<8x64xf32> to vector<8x8xf32>
    %782 = vector.extract_strided_slice %44 {offsets = [3, 24], sizes = [3, 8], strides = [1, 1]} : vector<6x32xf32> to vector<3x8xf32>
    %cst_236 = arith.constant dense<0.000000e+00> : vector<8x3xf32>
    %783 = tpu.matmul %781, %782, %cst_236 {dimension_numbers = #tpu.dot_dimension_numbers<[1], [1], [0], [0], [0, 0, 1, 0], [], []>} : vector<8x8xf32>, vector<3x8xf32>, vector<8x3xf32> -> vector<8x3xf32>
    %cst_237 = arith.constant 0.353553385 : f32
    %784 = vector.broadcast %cst_237 : f32 to vector<8x3xf32>
    %785 = arith.mulf %783, %784 : vector<8x3xf32>
    %786 = vector.broadcast %728 : vector<1x3xf32> to vector<8x3xf32>
    %787 = arith.addf %785, %786 : vector<8x3xf32>
    %cst_238 = arith.constant dense<0xFF800000> : vector<8xf32>
    %788 = vector.multi_reduction <maximumf>, %787, %cst_238 [1] : vector<8x3xf32> to vector<8xf32>
    %789 = vector.shape_cast %788 : vector<8xf32> to vector<8x1xf32>
    %790 = vector.broadcast %789 : vector<8x1xf32> to vector<8x3xf32>
    %791 = arith.subf %787, %790 : vector<8x3xf32>
    %792 = math.exp %791 : vector<8x3xf32>
    %cst_239 = arith.constant dense<0.000000e+00> : vector<8xf32>
    %793 = vector.multi_reduction <add>, %792, %cst_239 [1] : vector<8x3xf32> to vector<8xf32>
    %794 = vector.shape_cast %793 : vector<8xf32> to vector<8x1xf32>
    %795 = vector.broadcast %794 : vector<8x1xf32> to vector<8x3xf32>
    %796 = arith.divf %792, %795 : vector<8x3xf32>
    %797 = arith.addf %780, %796 : vector<8x3xf32>
    %cst_240 = arith.constant 2.500000e-01 : f32
    %798 = vector.broadcast %cst_240 : f32 to vector<8x3xf32>
    %799 = arith.mulf %797, %798 : vector<8x3xf32>
    %cst_241 = arith.constant 0.000000e+00 : f32
    %800 = vector.broadcast %cst_241 : f32 to vector<8x8xf32>
    %cst_242 = arith.constant 0.000000e+00 : f32
    %801 = vector.broadcast %cst_242 : f32 to vector<8x8xf32>
    %cst_243 = arith.constant 0.000000e+00 : f32
    %802 = vector.broadcast %cst_243 : f32 to vector<8x8xf32>
    %cst_244 = arith.constant 0.000000e+00 : f32
    %803 = vector.broadcast %cst_244 : f32 to vector<8x8xf32>
    %cst_245 = arith.constant 0.000000e+00 : f32
    %804 = vector.broadcast %cst_245 : f32 to vector<8x1xf32>
    %805 = vector.extract_strided_slice %799 {offsets = [0, 0], sizes = [8, 1], strides = [1, 1]} : vector<8x3xf32> to vector<8x1xf32>
    %806 = vector.extract_strided_slice %7 {offsets = [1, 0], sizes = [1, 1], strides = [1, 1]} : vector<2x3xf32> to vector<1x1xf32>
    %807 = vector.broadcast %806 : vector<1x1xf32> to vector<8x1xf32>
    %808 = arith.mulf %805, %807 : vector<8x1xf32>
    %809 = arith.addf %804, %808 : vector<8x1xf32>
    %810 = vector.extract_strided_slice %6 {offsets = [3, 0], sizes = [1, 8], strides = [1, 1]} : vector<6x8xf32> to vector<1x8xf32>
    %811 = vector.extract_strided_slice %727 {offsets = [0, 32], sizes = [8, 8], strides = [1, 1]} : vector<8x64xf32> to vector<8x8xf32>
    %812 = vector.extract_strided_slice %37 {offsets = [24, 0], sizes = [8, 8], strides = [1, 1]} : vector<48x64xf32> to vector<8x8xf32>
    %813 = vector.extract_strided_slice %37 {offsets = [24, 32], sizes = [8, 8], strides = [1, 1]} : vector<48x64xf32> to vector<8x8xf32>
    %cst_246 = arith.constant dense<0.000000e+00> : vector<8x8xf32>
    %814 = tpu.matmul %811, %812, %cst_246 {dimension_numbers = #tpu.dot_dimension_numbers<[1], [1], [0], [0], [0, 0, 1, 0], [], []>} : vector<8x8xf32>, vector<8x8xf32>, vector<8x8xf32> -> vector<8x8xf32>
    %cst_247 = arith.constant 0.353553385 : f32
    %815 = vector.broadcast %cst_247 : f32 to vector<8x8xf32>
    %816 = arith.mulf %814, %815 : vector<8x8xf32>
    %817 = vector.broadcast %810 : vector<1x8xf32> to vector<8x8xf32>
    %818 = arith.addf %816, %817 : vector<8x8xf32>
    %cst_248 = arith.constant dense<0xFF800000> : vector<8xf32>
    %819 = vector.multi_reduction <maximumf>, %818, %cst_248 [1] : vector<8x8xf32> to vector<8xf32>
    %820 = vector.shape_cast %819 : vector<8xf32> to vector<8x1xf32>
    %821 = vector.broadcast %820 : vector<8x1xf32> to vector<8x8xf32>
    %822 = arith.subf %818, %821 : vector<8x8xf32>
    %823 = math.exp %822 : vector<8x8xf32>
    %cst_249 = arith.constant dense<0.000000e+00> : vector<8xf32>
    %824 = vector.multi_reduction <add>, %823, %cst_249 [1] : vector<8x8xf32> to vector<8xf32>
    %825 = vector.shape_cast %824 : vector<8xf32> to vector<8x1xf32>
    %826 = tpu.reciprocal %825 {approx = true} : vector<8x1xf32> -> vector<8x1xf32>
    %827 = vector.broadcast %826 : vector<8x1xf32> to vector<8x8xf32>
    %828 = arith.mulf %823, %827 : vector<8x8xf32>
    %cst_250 = arith.constant dense<0.000000e+00> : vector<8x8xf32>
    %829 = tpu.matmul %828, %813, %cst_250 {dimension_numbers = #tpu.dot_dimension_numbers<[1], [0], [0], [1], [0, 0, 1, 1], [], []>} : vector<8x8xf32>, vector<8x8xf32>, vector<8x8xf32> -> vector<8x8xf32>
    %830 = vector.broadcast %808 : vector<8x1xf32> to vector<8x8xf32>
    %831 = arith.mulf %830, %829 : vector<8x8xf32>
    %832 = arith.addf %800, %831 : vector<8x8xf32>
    %833 = vector.extract_strided_slice %727 {offsets = [0, 40], sizes = [8, 8], strides = [1, 1]} : vector<8x64xf32> to vector<8x8xf32>
    %834 = vector.extract_strided_slice %37 {offsets = [24, 8], sizes = [8, 8], strides = [1, 1]} : vector<48x64xf32> to vector<8x8xf32>
    %835 = vector.extract_strided_slice %37 {offsets = [24, 40], sizes = [8, 8], strides = [1, 1]} : vector<48x64xf32> to vector<8x8xf32>
    %cst_251 = arith.constant dense<0.000000e+00> : vector<8x8xf32>
    %836 = tpu.matmul %833, %834, %cst_251 {dimension_numbers = #tpu.dot_dimension_numbers<[1], [1], [0], [0], [0, 0, 1, 0], [], []>} : vector<8x8xf32>, vector<8x8xf32>, vector<8x8xf32> -> vector<8x8xf32>
    %cst_252 = arith.constant 0.353553385 : f32
    %837 = vector.broadcast %cst_252 : f32 to vector<8x8xf32>
    %838 = arith.mulf %836, %837 : vector<8x8xf32>
    %839 = vector.broadcast %810 : vector<1x8xf32> to vector<8x8xf32>
    %840 = arith.addf %838, %839 : vector<8x8xf32>
    %cst_253 = arith.constant dense<0xFF800000> : vector<8xf32>
    %841 = vector.multi_reduction <maximumf>, %840, %cst_253 [1] : vector<8x8xf32> to vector<8xf32>
    %842 = vector.shape_cast %841 : vector<8xf32> to vector<8x1xf32>
    %843 = vector.broadcast %842 : vector<8x1xf32> to vector<8x8xf32>
    %844 = arith.subf %840, %843 : vector<8x8xf32>
    %845 = math.exp %844 : vector<8x8xf32>
    %cst_254 = arith.constant dense<0.000000e+00> : vector<8xf32>
    %846 = vector.multi_reduction <add>, %845, %cst_254 [1] : vector<8x8xf32> to vector<8xf32>
    %847 = vector.shape_cast %846 : vector<8xf32> to vector<8x1xf32>
    %848 = tpu.reciprocal %847 {approx = true} : vector<8x1xf32> -> vector<8x1xf32>
    %849 = vector.broadcast %848 : vector<8x1xf32> to vector<8x8xf32>
    %850 = arith.mulf %845, %849 : vector<8x8xf32>
    %cst_255 = arith.constant dense<0.000000e+00> : vector<8x8xf32>
    %851 = tpu.matmul %850, %835, %cst_255 {dimension_numbers = #tpu.dot_dimension_numbers<[1], [0], [0], [1], [0, 0, 1, 1], [], []>} : vector<8x8xf32>, vector<8x8xf32>, vector<8x8xf32> -> vector<8x8xf32>
    %852 = vector.broadcast %808 : vector<8x1xf32> to vector<8x8xf32>
    %853 = arith.mulf %852, %851 : vector<8x8xf32>
    %854 = arith.addf %801, %853 : vector<8x8xf32>
    %855 = vector.extract_strided_slice %727 {offsets = [0, 48], sizes = [8, 8], strides = [1, 1]} : vector<8x64xf32> to vector<8x8xf32>
    %856 = vector.extract_strided_slice %37 {offsets = [24, 16], sizes = [8, 8], strides = [1, 1]} : vector<48x64xf32> to vector<8x8xf32>
    %857 = vector.extract_strided_slice %37 {offsets = [24, 48], sizes = [8, 8], strides = [1, 1]} : vector<48x64xf32> to vector<8x8xf32>
    %cst_256 = arith.constant dense<0.000000e+00> : vector<8x8xf32>
    %858 = tpu.matmul %855, %856, %cst_256 {dimension_numbers = #tpu.dot_dimension_numbers<[1], [1], [0], [0], [0, 0, 1, 0], [], []>} : vector<8x8xf32>, vector<8x8xf32>, vector<8x8xf32> -> vector<8x8xf32>
    %cst_257 = arith.constant 0.353553385 : f32
    %859 = vector.broadcast %cst_257 : f32 to vector<8x8xf32>
    %860 = arith.mulf %858, %859 : vector<8x8xf32>
    %861 = vector.broadcast %810 : vector<1x8xf32> to vector<8x8xf32>
    %862 = arith.addf %860, %861 : vector<8x8xf32>
    %cst_258 = arith.constant dense<0xFF800000> : vector<8xf32>
    %863 = vector.multi_reduction <maximumf>, %862, %cst_258 [1] : vector<8x8xf32> to vector<8xf32>
    %864 = vector.shape_cast %863 : vector<8xf32> to vector<8x1xf32>
    %865 = vector.broadcast %864 : vector<8x1xf32> to vector<8x8xf32>
    %866 = arith.subf %862, %865 : vector<8x8xf32>
    %867 = math.exp %866 : vector<8x8xf32>
    %cst_259 = arith.constant dense<0.000000e+00> : vector<8xf32>
    %868 = vector.multi_reduction <add>, %867, %cst_259 [1] : vector<8x8xf32> to vector<8xf32>
    %869 = vector.shape_cast %868 : vector<8xf32> to vector<8x1xf32>
    %870 = tpu.reciprocal %869 {approx = true} : vector<8x1xf32> -> vector<8x1xf32>
    %871 = vector.broadcast %870 : vector<8x1xf32> to vector<8x8xf32>
    %872 = arith.mulf %867, %871 : vector<8x8xf32>
    %cst_260 = arith.constant dense<0.000000e+00> : vector<8x8xf32>
    %873 = tpu.matmul %872, %857, %cst_260 {dimension_numbers = #tpu.dot_dimension_numbers<[1], [0], [0], [1], [0, 0, 1, 1], [], []>} : vector<8x8xf32>, vector<8x8xf32>, vector<8x8xf32> -> vector<8x8xf32>
    %874 = vector.broadcast %808 : vector<8x1xf32> to vector<8x8xf32>
    %875 = arith.mulf %874, %873 : vector<8x8xf32>
    %876 = arith.addf %802, %875 : vector<8x8xf32>
    %877 = vector.extract_strided_slice %727 {offsets = [0, 56], sizes = [8, 8], strides = [1, 1]} : vector<8x64xf32> to vector<8x8xf32>
    %878 = vector.extract_strided_slice %37 {offsets = [24, 24], sizes = [8, 8], strides = [1, 1]} : vector<48x64xf32> to vector<8x8xf32>
    %879 = vector.extract_strided_slice %37 {offsets = [24, 56], sizes = [8, 8], strides = [1, 1]} : vector<48x64xf32> to vector<8x8xf32>
    %cst_261 = arith.constant dense<0.000000e+00> : vector<8x8xf32>
    %880 = tpu.matmul %877, %878, %cst_261 {dimension_numbers = #tpu.dot_dimension_numbers<[1], [1], [0], [0], [0, 0, 1, 0], [], []>} : vector<8x8xf32>, vector<8x8xf32>, vector<8x8xf32> -> vector<8x8xf32>
    %cst_262 = arith.constant 0.353553385 : f32
    %881 = vector.broadcast %cst_262 : f32 to vector<8x8xf32>
    %882 = arith.mulf %880, %881 : vector<8x8xf32>
    %883 = vector.broadcast %810 : vector<1x8xf32> to vector<8x8xf32>
    %884 = arith.addf %882, %883 : vector<8x8xf32>
    %cst_263 = arith.constant dense<0xFF800000> : vector<8xf32>
    %885 = vector.multi_reduction <maximumf>, %884, %cst_263 [1] : vector<8x8xf32> to vector<8xf32>
    %886 = vector.shape_cast %885 : vector<8xf32> to vector<8x1xf32>
    %887 = vector.broadcast %886 : vector<8x1xf32> to vector<8x8xf32>
    %888 = arith.subf %884, %887 : vector<8x8xf32>
    %889 = math.exp %888 : vector<8x8xf32>
    %cst_264 = arith.constant dense<0.000000e+00> : vector<8xf32>
    %890 = vector.multi_reduction <add>, %889, %cst_264 [1] : vector<8x8xf32> to vector<8xf32>
    %891 = vector.shape_cast %890 : vector<8xf32> to vector<8x1xf32>
    %892 = tpu.reciprocal %891 {approx = true} : vector<8x1xf32> -> vector<8x1xf32>
    %893 = vector.broadcast %892 : vector<8x1xf32> to vector<8x8xf32>
    %894 = arith.mulf %889, %893 : vector<8x8xf32>
    %cst_265 = arith.constant dense<0.000000e+00> : vector<8x8xf32>
    %895 = tpu.matmul %894, %879, %cst_265 {dimension_numbers = #tpu.dot_dimension_numbers<[1], [0], [0], [1], [0, 0, 1, 1], [], []>} : vector<8x8xf32>, vector<8x8xf32>, vector<8x8xf32> -> vector<8x8xf32>
    %896 = vector.broadcast %808 : vector<8x1xf32> to vector<8x8xf32>
    %897 = arith.mulf %896, %895 : vector<8x8xf32>
    %898 = arith.addf %803, %897 : vector<8x8xf32>
    %899 = vector.extract_strided_slice %799 {offsets = [0, 1], sizes = [8, 1], strides = [1, 1]} : vector<8x3xf32> to vector<8x1xf32>
    %900 = vector.extract_strided_slice %7 {offsets = [1, 1], sizes = [1, 1], strides = [1, 1]} : vector<2x3xf32> to vector<1x1xf32>
    %901 = vector.broadcast %900 : vector<1x1xf32> to vector<8x1xf32>
    %902 = arith.mulf %899, %901 : vector<8x1xf32>
    %903 = arith.addf %809, %902 : vector<8x1xf32>
    %904 = vector.extract_strided_slice %6 {offsets = [4, 0], sizes = [1, 8], strides = [1, 1]} : vector<6x8xf32> to vector<1x8xf32>
    %905 = vector.extract_strided_slice %727 {offsets = [0, 32], sizes = [8, 8], strides = [1, 1]} : vector<8x64xf32> to vector<8x8xf32>
    %906 = vector.extract_strided_slice %37 {offsets = [32, 0], sizes = [8, 8], strides = [1, 1]} : vector<48x64xf32> to vector<8x8xf32>
    %907 = vector.extract_strided_slice %37 {offsets = [32, 32], sizes = [8, 8], strides = [1, 1]} : vector<48x64xf32> to vector<8x8xf32>
    %cst_266 = arith.constant dense<0.000000e+00> : vector<8x8xf32>
    %908 = tpu.matmul %905, %906, %cst_266 {dimension_numbers = #tpu.dot_dimension_numbers<[1], [1], [0], [0], [0, 0, 1, 0], [], []>} : vector<8x8xf32>, vector<8x8xf32>, vector<8x8xf32> -> vector<8x8xf32>
    %cst_267 = arith.constant 0.353553385 : f32
    %909 = vector.broadcast %cst_267 : f32 to vector<8x8xf32>
    %910 = arith.mulf %908, %909 : vector<8x8xf32>
    %911 = vector.broadcast %904 : vector<1x8xf32> to vector<8x8xf32>
    %912 = arith.addf %910, %911 : vector<8x8xf32>
    %cst_268 = arith.constant dense<0xFF800000> : vector<8xf32>
    %913 = vector.multi_reduction <maximumf>, %912, %cst_268 [1] : vector<8x8xf32> to vector<8xf32>
    %914 = vector.shape_cast %913 : vector<8xf32> to vector<8x1xf32>
    %915 = vector.broadcast %914 : vector<8x1xf32> to vector<8x8xf32>
    %916 = arith.subf %912, %915 : vector<8x8xf32>
    %917 = math.exp %916 : vector<8x8xf32>
    %cst_269 = arith.constant dense<0.000000e+00> : vector<8xf32>
    %918 = vector.multi_reduction <add>, %917, %cst_269 [1] : vector<8x8xf32> to vector<8xf32>
    %919 = vector.shape_cast %918 : vector<8xf32> to vector<8x1xf32>
    %920 = tpu.reciprocal %919 {approx = true} : vector<8x1xf32> -> vector<8x1xf32>
    %921 = vector.broadcast %920 : vector<8x1xf32> to vector<8x8xf32>
    %922 = arith.mulf %917, %921 : vector<8x8xf32>
    %cst_270 = arith.constant dense<0.000000e+00> : vector<8x8xf32>
    %923 = tpu.matmul %922, %907, %cst_270 {dimension_numbers = #tpu.dot_dimension_numbers<[1], [0], [0], [1], [0, 0, 1, 1], [], []>} : vector<8x8xf32>, vector<8x8xf32>, vector<8x8xf32> -> vector<8x8xf32>
    %924 = vector.broadcast %902 : vector<8x1xf32> to vector<8x8xf32>
    %925 = arith.mulf %924, %923 : vector<8x8xf32>
    %926 = arith.addf %832, %925 : vector<8x8xf32>
    %927 = vector.extract_strided_slice %727 {offsets = [0, 40], sizes = [8, 8], strides = [1, 1]} : vector<8x64xf32> to vector<8x8xf32>
    %928 = vector.extract_strided_slice %37 {offsets = [32, 8], sizes = [8, 8], strides = [1, 1]} : vector<48x64xf32> to vector<8x8xf32>
    %929 = vector.extract_strided_slice %37 {offsets = [32, 40], sizes = [8, 8], strides = [1, 1]} : vector<48x64xf32> to vector<8x8xf32>
    %cst_271 = arith.constant dense<0.000000e+00> : vector<8x8xf32>
    %930 = tpu.matmul %927, %928, %cst_271 {dimension_numbers = #tpu.dot_dimension_numbers<[1], [1], [0], [0], [0, 0, 1, 0], [], []>} : vector<8x8xf32>, vector<8x8xf32>, vector<8x8xf32> -> vector<8x8xf32>
    %cst_272 = arith.constant 0.353553385 : f32
    %931 = vector.broadcast %cst_272 : f32 to vector<8x8xf32>
    %932 = arith.mulf %930, %931 : vector<8x8xf32>
    %933 = vector.broadcast %904 : vector<1x8xf32> to vector<8x8xf32>
    %934 = arith.addf %932, %933 : vector<8x8xf32>
    %cst_273 = arith.constant dense<0xFF800000> : vector<8xf32>
    %935 = vector.multi_reduction <maximumf>, %934, %cst_273 [1] : vector<8x8xf32> to vector<8xf32>
    %936 = vector.shape_cast %935 : vector<8xf32> to vector<8x1xf32>
    %937 = vector.broadcast %936 : vector<8x1xf32> to vector<8x8xf32>
    %938 = arith.subf %934, %937 : vector<8x8xf32>
    %939 = math.exp %938 : vector<8x8xf32>
    %cst_274 = arith.constant dense<0.000000e+00> : vector<8xf32>
    %940 = vector.multi_reduction <add>, %939, %cst_274 [1] : vector<8x8xf32> to vector<8xf32>
    %941 = vector.shape_cast %940 : vector<8xf32> to vector<8x1xf32>
    %942 = tpu.reciprocal %941 {approx = true} : vector<8x1xf32> -> vector<8x1xf32>
    %943 = vector.broadcast %942 : vector<8x1xf32> to vector<8x8xf32>
    %944 = arith.mulf %939, %943 : vector<8x8xf32>
    %cst_275 = arith.constant dense<0.000000e+00> : vector<8x8xf32>
    %945 = tpu.matmul %944, %929, %cst_275 {dimension_numbers = #tpu.dot_dimension_numbers<[1], [0], [0], [1], [0, 0, 1, 1], [], []>} : vector<8x8xf32>, vector<8x8xf32>, vector<8x8xf32> -> vector<8x8xf32>
    %946 = vector.broadcast %902 : vector<8x1xf32> to vector<8x8xf32>
    %947 = arith.mulf %946, %945 : vector<8x8xf32>
    %948 = arith.addf %854, %947 : vector<8x8xf32>
    %949 = vector.extract_strided_slice %727 {offsets = [0, 48], sizes = [8, 8], strides = [1, 1]} : vector<8x64xf32> to vector<8x8xf32>
    %950 = vector.extract_strided_slice %37 {offsets = [32, 16], sizes = [8, 8], strides = [1, 1]} : vector<48x64xf32> to vector<8x8xf32>
    %951 = vector.extract_strided_slice %37 {offsets = [32, 48], sizes = [8, 8], strides = [1, 1]} : vector<48x64xf32> to vector<8x8xf32>
    %cst_276 = arith.constant dense<0.000000e+00> : vector<8x8xf32>
    %952 = tpu.matmul %949, %950, %cst_276 {dimension_numbers = #tpu.dot_dimension_numbers<[1], [1], [0], [0], [0, 0, 1, 0], [], []>} : vector<8x8xf32>, vector<8x8xf32>, vector<8x8xf32> -> vector<8x8xf32>
    %cst_277 = arith.constant 0.353553385 : f32
    %953 = vector.broadcast %cst_277 : f32 to vector<8x8xf32>
    %954 = arith.mulf %952, %953 : vector<8x8xf32>
    %955 = vector.broadcast %904 : vector<1x8xf32> to vector<8x8xf32>
    %956 = arith.addf %954, %955 : vector<8x8xf32>
    %cst_278 = arith.constant dense<0xFF800000> : vector<8xf32>
    %957 = vector.multi_reduction <maximumf>, %956, %cst_278 [1] : vector<8x8xf32> to vector<8xf32>
    %958 = vector.shape_cast %957 : vector<8xf32> to vector<8x1xf32>
    %959 = vector.broadcast %958 : vector<8x1xf32> to vector<8x8xf32>
    %960 = arith.subf %956, %959 : vector<8x8xf32>
    %961 = math.exp %960 : vector<8x8xf32>
    %cst_279 = arith.constant dense<0.000000e+00> : vector<8xf32>
    %962 = vector.multi_reduction <add>, %961, %cst_279 [1] : vector<8x8xf32> to vector<8xf32>
    %963 = vector.shape_cast %962 : vector<8xf32> to vector<8x1xf32>
    %964 = tpu.reciprocal %963 {approx = true} : vector<8x1xf32> -> vector<8x1xf32>
    %965 = vector.broadcast %964 : vector<8x1xf32> to vector<8x8xf32>
    %966 = arith.mulf %961, %965 : vector<8x8xf32>
    %cst_280 = arith.constant dense<0.000000e+00> : vector<8x8xf32>
    %967 = tpu.matmul %966, %951, %cst_280 {dimension_numbers = #tpu.dot_dimension_numbers<[1], [0], [0], [1], [0, 0, 1, 1], [], []>} : vector<8x8xf32>, vector<8x8xf32>, vector<8x8xf32> -> vector<8x8xf32>
    %968 = vector.broadcast %902 : vector<8x1xf32> to vector<8x8xf32>
    %969 = arith.mulf %968, %967 : vector<8x8xf32>
    %970 = arith.addf %876, %969 : vector<8x8xf32>
    %971 = vector.extract_strided_slice %727 {offsets = [0, 56], sizes = [8, 8], strides = [1, 1]} : vector<8x64xf32> to vector<8x8xf32>
    %972 = vector.extract_strided_slice %37 {offsets = [32, 24], sizes = [8, 8], strides = [1, 1]} : vector<48x64xf32> to vector<8x8xf32>
    %973 = vector.extract_strided_slice %37 {offsets = [32, 56], sizes = [8, 8], strides = [1, 1]} : vector<48x64xf32> to vector<8x8xf32>
    %cst_281 = arith.constant dense<0.000000e+00> : vector<8x8xf32>
    %974 = tpu.matmul %971, %972, %cst_281 {dimension_numbers = #tpu.dot_dimension_numbers<[1], [1], [0], [0], [0, 0, 1, 0], [], []>} : vector<8x8xf32>, vector<8x8xf32>, vector<8x8xf32> -> vector<8x8xf32>
    %cst_282 = arith.constant 0.353553385 : f32
    %975 = vector.broadcast %cst_282 : f32 to vector<8x8xf32>
    %976 = arith.mulf %974, %975 : vector<8x8xf32>
    %977 = vector.broadcast %904 : vector<1x8xf32> to vector<8x8xf32>
    %978 = arith.addf %976, %977 : vector<8x8xf32>
    %cst_283 = arith.constant dense<0xFF800000> : vector<8xf32>
    %979 = vector.multi_reduction <maximumf>, %978, %cst_283 [1] : vector<8x8xf32> to vector<8xf32>
    %980 = vector.shape_cast %979 : vector<8xf32> to vector<8x1xf32>
    %981 = vector.broadcast %980 : vector<8x1xf32> to vector<8x8xf32>
    %982 = arith.subf %978, %981 : vector<8x8xf32>
    %983 = math.exp %982 : vector<8x8xf32>
    %cst_284 = arith.constant dense<0.000000e+00> : vector<8xf32>
    %984 = vector.multi_reduction <add>, %983, %cst_284 [1] : vector<8x8xf32> to vector<8xf32>
    %985 = vector.shape_cast %984 : vector<8xf32> to vector<8x1xf32>
    %986 = tpu.reciprocal %985 {approx = true} : vector<8x1xf32> -> vector<8x1xf32>
    %987 = vector.broadcast %986 : vector<8x1xf32> to vector<8x8xf32>
    %988 = arith.mulf %983, %987 : vector<8x8xf32>
    %cst_285 = arith.constant dense<0.000000e+00> : vector<8x8xf32>
    %989 = tpu.matmul %988, %973, %cst_285 {dimension_numbers = #tpu.dot_dimension_numbers<[1], [0], [0], [1], [0, 0, 1, 1], [], []>} : vector<8x8xf32>, vector<8x8xf32>, vector<8x8xf32> -> vector<8x8xf32>
    %990 = vector.broadcast %902 : vector<8x1xf32> to vector<8x8xf32>
    %991 = arith.mulf %990, %989 : vector<8x8xf32>
    %992 = arith.addf %898, %991 : vector<8x8xf32>
    %993 = vector.extract_strided_slice %799 {offsets = [0, 2], sizes = [8, 1], strides = [1, 1]} : vector<8x3xf32> to vector<8x1xf32>
    %994 = vector.extract_strided_slice %7 {offsets = [1, 2], sizes = [1, 1], strides = [1, 1]} : vector<2x3xf32> to vector<1x1xf32>
    %995 = vector.broadcast %994 : vector<1x1xf32> to vector<8x1xf32>
    %996 = arith.mulf %993, %995 : vector<8x1xf32>
    %997 = arith.addf %903, %996 : vector<8x1xf32>
    %998 = vector.extract_strided_slice %6 {offsets = [5, 0], sizes = [1, 8], strides = [1, 1]} : vector<6x8xf32> to vector<1x8xf32>
    %999 = vector.extract_strided_slice %727 {offsets = [0, 32], sizes = [8, 8], strides = [1, 1]} : vector<8x64xf32> to vector<8x8xf32>
    %1000 = vector.extract_strided_slice %37 {offsets = [40, 0], sizes = [8, 8], strides = [1, 1]} : vector<48x64xf32> to vector<8x8xf32>
    %1001 = vector.extract_strided_slice %37 {offsets = [40, 32], sizes = [8, 8], strides = [1, 1]} : vector<48x64xf32> to vector<8x8xf32>
    %cst_286 = arith.constant dense<0.000000e+00> : vector<8x8xf32>
    %1002 = tpu.matmul %999, %1000, %cst_286 {dimension_numbers = #tpu.dot_dimension_numbers<[1], [1], [0], [0], [0, 0, 1, 0], [], []>} : vector<8x8xf32>, vector<8x8xf32>, vector<8x8xf32> -> vector<8x8xf32>
    %cst_287 = arith.constant 0.353553385 : f32
    %1003 = vector.broadcast %cst_287 : f32 to vector<8x8xf32>
    %1004 = arith.mulf %1002, %1003 : vector<8x8xf32>
    %1005 = vector.broadcast %998 : vector<1x8xf32> to vector<8x8xf32>
    %1006 = arith.addf %1004, %1005 : vector<8x8xf32>
    %cst_288 = arith.constant dense<0xFF800000> : vector<8xf32>
    %1007 = vector.multi_reduction <maximumf>, %1006, %cst_288 [1] : vector<8x8xf32> to vector<8xf32>
    %1008 = vector.shape_cast %1007 : vector<8xf32> to vector<8x1xf32>
    %1009 = vector.broadcast %1008 : vector<8x1xf32> to vector<8x8xf32>
    %1010 = arith.subf %1006, %1009 : vector<8x8xf32>
    %1011 = math.exp %1010 : vector<8x8xf32>
    %cst_289 = arith.constant dense<0.000000e+00> : vector<8xf32>
    %1012 = vector.multi_reduction <add>, %1011, %cst_289 [1] : vector<8x8xf32> to vector<8xf32>
    %1013 = vector.shape_cast %1012 : vector<8xf32> to vector<8x1xf32>
    %1014 = tpu.reciprocal %1013 {approx = true} : vector<8x1xf32> -> vector<8x1xf32>
    %1015 = vector.broadcast %1014 : vector<8x1xf32> to vector<8x8xf32>
    %1016 = arith.mulf %1011, %1015 : vector<8x8xf32>
    %cst_290 = arith.constant dense<0.000000e+00> : vector<8x8xf32>
    %1017 = tpu.matmul %1016, %1001, %cst_290 {dimension_numbers = #tpu.dot_dimension_numbers<[1], [0], [0], [1], [0, 0, 1, 1], [], []>} : vector<8x8xf32>, vector<8x8xf32>, vector<8x8xf32> -> vector<8x8xf32>
    %1018 = vector.broadcast %996 : vector<8x1xf32> to vector<8x8xf32>
    %1019 = arith.mulf %1018, %1017 : vector<8x8xf32>
    %1020 = arith.addf %926, %1019 : vector<8x8xf32>
    %1021 = vector.extract_strided_slice %727 {offsets = [0, 40], sizes = [8, 8], strides = [1, 1]} : vector<8x64xf32> to vector<8x8xf32>
    %1022 = vector.extract_strided_slice %37 {offsets = [40, 8], sizes = [8, 8], strides = [1, 1]} : vector<48x64xf32> to vector<8x8xf32>
    %1023 = vector.extract_strided_slice %37 {offsets = [40, 40], sizes = [8, 8], strides = [1, 1]} : vector<48x64xf32> to vector<8x8xf32>
    %cst_291 = arith.constant dense<0.000000e+00> : vector<8x8xf32>
    %1024 = tpu.matmul %1021, %1022, %cst_291 {dimension_numbers = #tpu.dot_dimension_numbers<[1], [1], [0], [0], [0, 0, 1, 0], [], []>} : vector<8x8xf32>, vector<8x8xf32>, vector<8x8xf32> -> vector<8x8xf32>
    %cst_292 = arith.constant 0.353553385 : f32
    %1025 = vector.broadcast %cst_292 : f32 to vector<8x8xf32>
    %1026 = arith.mulf %1024, %1025 : vector<8x8xf32>
    %1027 = vector.broadcast %998 : vector<1x8xf32> to vector<8x8xf32>
    %1028 = arith.addf %1026, %1027 : vector<8x8xf32>
    %cst_293 = arith.constant dense<0xFF800000> : vector<8xf32>
    %1029 = vector.multi_reduction <maximumf>, %1028, %cst_293 [1] : vector<8x8xf32> to vector<8xf32>
    %1030 = vector.shape_cast %1029 : vector<8xf32> to vector<8x1xf32>
    %1031 = vector.broadcast %1030 : vector<8x1xf32> to vector<8x8xf32>
    %1032 = arith.subf %1028, %1031 : vector<8x8xf32>
    %1033 = math.exp %1032 : vector<8x8xf32>
    %cst_294 = arith.constant dense<0.000000e+00> : vector<8xf32>
    %1034 = vector.multi_reduction <add>, %1033, %cst_294 [1] : vector<8x8xf32> to vector<8xf32>
    %1035 = vector.shape_cast %1034 : vector<8xf32> to vector<8x1xf32>
    %1036 = tpu.reciprocal %1035 {approx = true} : vector<8x1xf32> -> vector<8x1xf32>
    %1037 = vector.broadcast %1036 : vector<8x1xf32> to vector<8x8xf32>
    %1038 = arith.mulf %1033, %1037 : vector<8x8xf32>
    %cst_295 = arith.constant dense<0.000000e+00> : vector<8x8xf32>
    %1039 = tpu.matmul %1038, %1023, %cst_295 {dimension_numbers = #tpu.dot_dimension_numbers<[1], [0], [0], [1], [0, 0, 1, 1], [], []>} : vector<8x8xf32>, vector<8x8xf32>, vector<8x8xf32> -> vector<8x8xf32>
    %1040 = vector.broadcast %996 : vector<8x1xf32> to vector<8x8xf32>
    %1041 = arith.mulf %1040, %1039 : vector<8x8xf32>
    %1042 = arith.addf %948, %1041 : vector<8x8xf32>
    %1043 = vector.extract_strided_slice %727 {offsets = [0, 48], sizes = [8, 8], strides = [1, 1]} : vector<8x64xf32> to vector<8x8xf32>
    %1044 = vector.extract_strided_slice %37 {offsets = [40, 16], sizes = [8, 8], strides = [1, 1]} : vector<48x64xf32> to vector<8x8xf32>
    %1045 = vector.extract_strided_slice %37 {offsets = [40, 48], sizes = [8, 8], strides = [1, 1]} : vector<48x64xf32> to vector<8x8xf32>
    %cst_296 = arith.constant dense<0.000000e+00> : vector<8x8xf32>
    %1046 = tpu.matmul %1043, %1044, %cst_296 {dimension_numbers = #tpu.dot_dimension_numbers<[1], [1], [0], [0], [0, 0, 1, 0], [], []>} : vector<8x8xf32>, vector<8x8xf32>, vector<8x8xf32> -> vector<8x8xf32>
    %cst_297 = arith.constant 0.353553385 : f32
    %1047 = vector.broadcast %cst_297 : f32 to vector<8x8xf32>
    %1048 = arith.mulf %1046, %1047 : vector<8x8xf32>
    %1049 = vector.broadcast %998 : vector<1x8xf32> to vector<8x8xf32>
    %1050 = arith.addf %1048, %1049 : vector<8x8xf32>
    %cst_298 = arith.constant dense<0xFF800000> : vector<8xf32>
    %1051 = vector.multi_reduction <maximumf>, %1050, %cst_298 [1] : vector<8x8xf32> to vector<8xf32>
    %1052 = vector.shape_cast %1051 : vector<8xf32> to vector<8x1xf32>
    %1053 = vector.broadcast %1052 : vector<8x1xf32> to vector<8x8xf32>
    %1054 = arith.subf %1050, %1053 : vector<8x8xf32>
    %1055 = math.exp %1054 : vector<8x8xf32>
    %cst_299 = arith.constant dense<0.000000e+00> : vector<8xf32>
    %1056 = vector.multi_reduction <add>, %1055, %cst_299 [1] : vector<8x8xf32> to vector<8xf32>
    %1057 = vector.shape_cast %1056 : vector<8xf32> to vector<8x1xf32>
    %1058 = tpu.reciprocal %1057 {approx = true} : vector<8x1xf32> -> vector<8x1xf32>
    %1059 = vector.broadcast %1058 : vector<8x1xf32> to vector<8x8xf32>
    %1060 = arith.mulf %1055, %1059 : vector<8x8xf32>
    %cst_300 = arith.constant dense<0.000000e+00> : vector<8x8xf32>
    %1061 = tpu.matmul %1060, %1045, %cst_300 {dimension_numbers = #tpu.dot_dimension_numbers<[1], [0], [0], [1], [0, 0, 1, 1], [], []>} : vector<8x8xf32>, vector<8x8xf32>, vector<8x8xf32> -> vector<8x8xf32>
    %1062 = vector.broadcast %996 : vector<8x1xf32> to vector<8x8xf32>
    %1063 = arith.mulf %1062, %1061 : vector<8x8xf32>
    %1064 = arith.addf %970, %1063 : vector<8x8xf32>
    %1065 = vector.extract_strided_slice %727 {offsets = [0, 56], sizes = [8, 8], strides = [1, 1]} : vector<8x64xf32> to vector<8x8xf32>
    %1066 = vector.extract_strided_slice %37 {offsets = [40, 24], sizes = [8, 8], strides = [1, 1]} : vector<48x64xf32> to vector<8x8xf32>
    %1067 = vector.extract_strided_slice %37 {offsets = [40, 56], sizes = [8, 8], strides = [1, 1]} : vector<48x64xf32> to vector<8x8xf32>
    %cst_301 = arith.constant dense<0.000000e+00> : vector<8x8xf32>
    %1068 = tpu.matmul %1065, %1066, %cst_301 {dimension_numbers = #tpu.dot_dimension_numbers<[1], [1], [0], [0], [0, 0, 1, 0], [], []>} : vector<8x8xf32>, vector<8x8xf32>, vector<8x8xf32> -> vector<8x8xf32>
    %cst_302 = arith.constant 0.353553385 : f32
    %1069 = vector.broadcast %cst_302 : f32 to vector<8x8xf32>
    %1070 = arith.mulf %1068, %1069 : vector<8x8xf32>
    %1071 = vector.broadcast %998 : vector<1x8xf32> to vector<8x8xf32>
    %1072 = arith.addf %1070, %1071 : vector<8x8xf32>
    %cst_303 = arith.constant dense<0xFF800000> : vector<8xf32>
    %1073 = vector.multi_reduction <maximumf>, %1072, %cst_303 [1] : vector<8x8xf32> to vector<8xf32>
    %1074 = vector.shape_cast %1073 : vector<8xf32> to vector<8x1xf32>
    %1075 = vector.broadcast %1074 : vector<8x1xf32> to vector<8x8xf32>
    %1076 = arith.subf %1072, %1075 : vector<8x8xf32>
    %1077 = math.exp %1076 : vector<8x8xf32>
    %cst_304 = arith.constant dense<0.000000e+00> : vector<8xf32>
    %1078 = vector.multi_reduction <add>, %1077, %cst_304 [1] : vector<8x8xf32> to vector<8xf32>
    %1079 = vector.shape_cast %1078 : vector<8xf32> to vector<8x1xf32>
    %1080 = tpu.reciprocal %1079 {approx = true} : vector<8x1xf32> -> vector<8x1xf32>
    %1081 = vector.broadcast %1080 : vector<8x1xf32> to vector<8x8xf32>
    %1082 = arith.mulf %1077, %1081 : vector<8x8xf32>
    %cst_305 = arith.constant dense<0.000000e+00> : vector<8x8xf32>
    %1083 = tpu.matmul %1082, %1067, %cst_305 {dimension_numbers = #tpu.dot_dimension_numbers<[1], [0], [0], [1], [0, 0, 1, 1], [], []>} : vector<8x8xf32>, vector<8x8xf32>, vector<8x8xf32> -> vector<8x8xf32>
    %1084 = vector.broadcast %996 : vector<8x1xf32> to vector<8x8xf32>
    %1085 = arith.mulf %1084, %1083 : vector<8x8xf32>
    %1086 = arith.addf %992, %1085 : vector<8x8xf32>
    %1087 = vector.broadcast %997 : vector<8x1xf32> to vector<8x32xf32>
    %1088 = vector.broadcast %11 : vector<1x32xf32> to vector<8x32xf32>
    %1089 = arith.mulf %1087, %1088 : vector<8x32xf32>
    %1090 = arith.addf %1089, %722 : vector<8x32xf32>
    %1091 = vector.extract_strided_slice %10 {offsets = [0, 0], sizes = [8, 32], strides = [1, 1]} : vector<32x32xf32> to vector<8x32xf32>
    %1092 = arith.truncf %1020 : vector<8x8xf32> to vector<8x8xbf16>
    %1093 = arith.truncf %1091 : vector<8x32xf32> to vector<8x32xbf16>
    %cst_306 = arith.constant dense<0.000000e+00> : vector<8x32xf32>
    %1094 = tpu.matmul %1092, %1093, %cst_306 {dimension_numbers = #tpu.dot_dimension_numbers<[1], [0], [0], [1], [0, 0, 1, 1], [], []>} : vector<8x8xbf16>, vector<8x32xbf16>, vector<8x32xf32> -> vector<8x32xf32>
    %1095 = arith.addf %1090, %1094 : vector<8x32xf32>
    %1096 = vector.extract_strided_slice %10 {offsets = [8, 0], sizes = [8, 32], strides = [1, 1]} : vector<32x32xf32> to vector<8x32xf32>
    %1097 = arith.truncf %1042 : vector<8x8xf32> to vector<8x8xbf16>
    %1098 = arith.truncf %1096 : vector<8x32xf32> to vector<8x32xbf16>
    %cst_307 = arith.constant dense<0.000000e+00> : vector<8x32xf32>
    %1099 = tpu.matmul %1097, %1098, %cst_307 {dimension_numbers = #tpu.dot_dimension_numbers<[1], [0], [0], [1], [0, 0, 1, 1], [], []>} : vector<8x8xbf16>, vector<8x32xbf16>, vector<8x32xf32> -> vector<8x32xf32>
    %1100 = arith.addf %1095, %1099 : vector<8x32xf32>
    %1101 = vector.extract_strided_slice %10 {offsets = [16, 0], sizes = [8, 32], strides = [1, 1]} : vector<32x32xf32> to vector<8x32xf32>
    %1102 = arith.truncf %1064 : vector<8x8xf32> to vector<8x8xbf16>
    %1103 = arith.truncf %1101 : vector<8x32xf32> to vector<8x32xbf16>
    %cst_308 = arith.constant dense<0.000000e+00> : vector<8x32xf32>
    %1104 = tpu.matmul %1102, %1103, %cst_308 {dimension_numbers = #tpu.dot_dimension_numbers<[1], [0], [0], [1], [0, 0, 1, 1], [], []>} : vector<8x8xbf16>, vector<8x32xbf16>, vector<8x32xf32> -> vector<8x32xf32>
    %1105 = arith.addf %1100, %1104 : vector<8x32xf32>
    %1106 = vector.extract_strided_slice %10 {offsets = [24, 0], sizes = [8, 32], strides = [1, 1]} : vector<32x32xf32> to vector<8x32xf32>
    %1107 = arith.truncf %1086 : vector<8x8xf32> to vector<8x8xbf16>
    %1108 = arith.truncf %1106 : vector<8x32xf32> to vector<8x32xbf16>
    %cst_309 = arith.constant dense<0.000000e+00> : vector<8x32xf32>
    %1109 = tpu.matmul %1107, %1108, %cst_309 {dimension_numbers = #tpu.dot_dimension_numbers<[1], [0], [0], [1], [0, 0, 1, 1], [], []>} : vector<8x8xbf16>, vector<8x32xbf16>, vector<8x32xf32> -> vector<8x32xf32>
    %1110 = arith.addf %1105, %1109 : vector<8x32xf32>
    %cst_310 = arith.constant dense<0.000000e+00> : vector<8xf32>
    %1111 = vector.multi_reduction <add>, %1110, %cst_310 [1] : vector<8x32xf32> to vector<8xf32>
    %1112 = vector.shape_cast %1111 : vector<8xf32> to vector<8x1xf32>
    %cst_311 = arith.constant 3.200000e+01 : f32
    %1113 = vector.broadcast %cst_311 : f32 to vector<8x1xf32>
    %1114 = arith.divf %1112, %1113 : vector<8x1xf32>
    %1115 = vector.broadcast %1114 : vector<8x1xf32> to vector<8x32xf32>
    %1116 = arith.subf %1110, %1115 : vector<8x32xf32>
    %1117 = arith.mulf %1116, %1116 : vector<8x32xf32>
    %cst_312 = arith.constant dense<0.000000e+00> : vector<8xf32>
    %1118 = vector.multi_reduction <add>, %1117, %cst_312 [1] : vector<8x32xf32> to vector<8xf32>
    %1119 = vector.shape_cast %1118 : vector<8xf32> to vector<8x1xf32>
    %cst_313 = arith.constant 3.200000e+01 : f32
    %1120 = vector.broadcast %cst_313 : f32 to vector<8x1xf32>
    %1121 = arith.divf %1119, %1120 : vector<8x1xf32>
    %cst_314 = arith.constant 9.99999974E-6 : f32
    %1122 = vector.broadcast %cst_314 : f32 to vector<8x1xf32>
    %1123 = arith.addf %1121, %1122 : vector<8x1xf32>
    %1124 = math.rsqrt %1123 : vector<8x1xf32>
    %1125 = vector.broadcast %1124 : vector<8x1xf32> to vector<8x32xf32>
    %1126 = arith.mulf %1116, %1125 : vector<8x32xf32>
    %1127 = vector.broadcast %14 : vector<1x32xf32> to vector<8x32xf32>
    %1128 = arith.mulf %1126, %1127 : vector<8x32xf32>
    %1129 = vector.broadcast %15 : vector<1x32xf32> to vector<8x32xf32>
    %1130 = arith.addf %1128, %1129 : vector<8x32xf32>
    %1131 = arith.truncf %1130 : vector<8x32xf32> to vector<8x32xbf16>
    %1132 = arith.truncf %20 : vector<32x64xf32> to vector<32x64xbf16>
    %cst_315 = arith.constant dense<0.000000e+00> : vector<8x64xf32>
    %1133 = tpu.matmul %1131, %1132, %cst_315 {dimension_numbers = #tpu.dot_dimension_numbers<[1], [0], [0], [1], [0, 0, 1, 1], [], []>} : vector<8x32xbf16>, vector<32x64xbf16>, vector<8x64xf32> -> vector<8x64xf32>
    %1134 = vector.broadcast %21 : vector<1x64xf32> to vector<8x64xf32>
    %1135 = arith.addf %1133, %1134 : vector<8x64xf32>
    %cst_316 = arith.constant 0.000000e+00 : f32
    %1136 = vector.broadcast %cst_316 : f32 to vector<8x64xf32>
    %1137 = arith.maximumf %1135, %1136 : vector<8x64xf32>
    %1138 = arith.truncf %1137 : vector<8x64xf32> to vector<8x64xbf16>
    %1139 = arith.truncf %22 : vector<64x32xf32> to vector<64x32xbf16>
    %cst_317 = arith.constant dense<0.000000e+00> : vector<8x32xf32>
    %1140 = tpu.matmul %1138, %1139, %cst_317 {dimension_numbers = #tpu.dot_dimension_numbers<[1], [0], [0], [1], [0, 0, 1, 1], [], []>} : vector<8x64xbf16>, vector<64x32xbf16>, vector<8x32xf32> -> vector<8x32xf32>
    %1141 = vector.broadcast %23 : vector<1x32xf32> to vector<8x32xf32>
    %1142 = arith.addf %1140, %1141 : vector<8x32xf32>
    %1143 = arith.addf %1142, %1130 : vector<8x32xf32>
    %cst_318 = arith.constant dense<0.000000e+00> : vector<8xf32>
    %1144 = vector.multi_reduction <add>, %1143, %cst_318 [1] : vector<8x32xf32> to vector<8xf32>
    %1145 = vector.shape_cast %1144 : vector<8xf32> to vector<8x1xf32>
    %cst_319 = arith.constant 3.200000e+01 : f32
    %1146 = vector.broadcast %cst_319 : f32 to vector<8x1xf32>
    %1147 = arith.divf %1145, %1146 : vector<8x1xf32>
    %1148 = vector.broadcast %1147 : vector<8x1xf32> to vector<8x32xf32>
    %1149 = arith.subf %1143, %1148 : vector<8x32xf32>
    %1150 = arith.mulf %1149, %1149 : vector<8x32xf32>
    %cst_320 = arith.constant dense<0.000000e+00> : vector<8xf32>
    %1151 = vector.multi_reduction <add>, %1150, %cst_320 [1] : vector<8x32xf32> to vector<8xf32>
    %1152 = vector.shape_cast %1151 : vector<8xf32> to vector<8x1xf32>
    %cst_321 = arith.constant 3.200000e+01 : f32
    %1153 = vector.broadcast %cst_321 : f32 to vector<8x1xf32>
    %1154 = arith.divf %1152, %1153 : vector<8x1xf32>
    %cst_322 = arith.constant 9.99999974E-6 : f32
    %1155 = vector.broadcast %cst_322 : f32 to vector<8x1xf32>
    %1156 = arith.addf %1154, %1155 : vector<8x1xf32>
    %1157 = math.rsqrt %1156 : vector<8x1xf32>
    %1158 = vector.broadcast %1157 : vector<8x1xf32> to vector<8x32xf32>
    %1159 = arith.mulf %1149, %1158 : vector<8x32xf32>
    %1160 = vector.broadcast %16 : vector<1x32xf32> to vector<8x32xf32>
    %1161 = arith.mulf %1159, %1160 : vector<8x32xf32>
    %1162 = vector.broadcast %17 : vector<1x32xf32> to vector<8x32xf32>
    %1163 = arith.addf %1161, %1162 : vector<8x32xf32>
    %c8 = arith.constant 8 : index
    %c0_323 = arith.constant 0 : index
    %1164 = vector.load %arg30[%c8, %c0_323] : memref<16x32xf32, #tpu.memory_space<vmem>>, vector<8x32xf32>
    tpu.vector_store %arg30[%c8, %c0_323], %1163 {strides = array<i32>} : memref<16x32xf32, #tpu.memory_space<vmem>>, vector<8x32xf32>,
    return
  }
}

</mosaic_0001>

<llo_original>
// kernel: squeeze.2
$region0: #{squeeze.2}
  %s0 = inlined_call_operand.vmem [shape: f32[2,3,32], index: 0, kind: input, shape index: {}]
  %s1 = inlined_call_operand.vmem [shape: f32[6,32], index: 1, kind: output, shape index: {}]
  $region1: #{squeeze.2} parent=0
    #allocation0 [shape = 'u8[8192]{0}', space=vmem, size = 0x2000, scoped, tag = 'scoped mem for input reshape']
    %s3 = sshllo.u32 0, 4
    %s4 = scalar_lea.vmem %s0, 4
    %v5 = vld [vmem:[%s4] sm:%s3]
    %s6 = scalar_lea.vmem [#allocation0], 8
    %7 = vst [vmem:[%s6] sm:%s3] %v5
    %v8 = vld [vmem:[%s0] sm:%s3]
    %9 = vst [vmem:[#allocation0] sm:%s3] %v8
    %v10 = vld [vmem:[#allocation0] sm:$0x7]
    %vm11 = vcmask 261120
    %12 = vst.msk [vmem:[%s1] sm:$0x7] %vm11, %v10
    %s13 = scalar_lea.vmem [#allocation0], 8
    %v14 = vld [vmem:[%s13] sm:$0x7]
    %vm15 = vcmask 261120
    %s16 = scalar_lea.vmem %s1, 3
    %17 = vst.msk [vmem:[%s16] sm:$0x7] %vm15, %v14

// kernel: decoder_layer_forward.1
$region0: #{decoder_layer_forward.1}
  #allocation0 [shape = 'u32[]', space=smem, size = 0x4, offset = 0x4, fixed_abs, tag = 'smem constant byte address 0x4 - core index']
  #allocation1 [shape = 'u32[144,128]{1,0:T(1,128)}', space=vmem, size = 0x12000, scoped, tag = 'internal scratch']
  %s0 = inlined_call_operand.smem [shape: u32[31], index: -1, kind: input, shape index: {}]
  %s1 = sld [smem:[%s0]]
  %s2 = scalar_lea.smem %s0, 1
  %s3 = sld [smem:[%s2]]
  %s4 = scalar_lea.smem %s0, 2
  %s5 = sld [smem:[%s4]]
  %s6 = scalar_lea.smem %s0, 3
  %s7 = sld [smem:[%s6]]
  %s8 = scalar_lea.smem %s0, 4
  %s9 = sld [smem:[%s8]]
  %s10 = scalar_lea.smem %s0, 5
  %s11 = sld [smem:[%s10]]
  %s12 = scalar_lea.smem %s0, 6
  %s13 = sld [smem:[%s12]]
  %s14 = scalar_lea.smem %s0, 7
  %s15 = sld [smem:[%s14]]
  %s16 = scalar_lea.smem %s0, 8
  %s17 = sld [smem:[%s16]]
  %s18 = scalar_lea.smem %s0, 9
  %s19 = sld [smem:[%s18]]
  %s20 = scalar_lea.smem %s0, 10
  %s21 = sld [smem:[%s20]]
  %s22 = scalar_lea.smem %s0, 11
  %s23 = sld [smem:[%s22]]
  %s24 = scalar_lea.smem %s0, 12
  %s25 = sld [smem:[%s24]]
  %s26 = scalar_lea.smem %s0, 13
  %s27 = sld [smem:[%s26]]
  %s28 = scalar_lea.smem %s0, 14
  %s29 = sld [smem:[%s28]]
  %s30 = scalar_lea.smem %s0, 15
  %s31 = sld [smem:[%s30]]
  %s32 = scalar_lea.smem %s0, 16
  %s33 = sld [smem:[%s32]]
  %s34 = scalar_lea.smem %s0, 17
  %s35 = sld [smem:[%s34]]
  %s36 = scalar_lea.smem %s0, 18
  %s37 = sld [smem:[%s36]]
  %s38 = scalar_lea.smem %s0, 19
  %s39 = sld [smem:[%s38]]
  %s40 = scalar_lea.smem %s0, 20
  %s41 = sld [smem:[%s40]]
  %s42 = scalar_lea.smem %s0, 21
  %s43 = sld [smem:[%s42]]
  %s44 = scalar_lea.smem %s0, 22
  %s45 = sld [smem:[%s44]]
  %s46 = scalar_lea.smem %s0, 23
  %s47 = sld [smem:[%s46]]
  %s48 = scalar_lea.smem %s0, 24
  %s49 = sld [smem:[%s48]]
  %s50 = scalar_lea.smem %s0, 25
  %s51 = sld [smem:[%s50]]
  %s52 = scalar_lea.smem %s0, 26
  %s53 = sld [smem:[%s52]]
  %s54 = scalar_lea.smem %s0, 27
  %s55 = sld [smem:[%s54]]
  %s56 = scalar_lea.smem %s0, 28
  %s57 = sld [smem:[%s56]]
  %s58 = scalar_lea.smem %s0, 29
  %s59 = sld [smem:[%s58]]
  %s60 = scalar_lea.smem %s0, 30
  %s61 = sld [smem:[%s60]]
  %s62 = sld [smem:[#allocation0]]
  $region154: #{decoder_layer_forward.1} parent=0
    _
  %s64 = ssub.s32 1, %s62
  %s65 = scalar_select 0, %s64, %s62
  $region1: #{decoder_layer_forward.1} parent=0
    #allocation2 [shape = 'u8[4096]{0}', space=vmem, size = 0x1000, scoped, tag = 'input window, operand 3, single buffered']
    #allocation3 [shape = 's32[1]{0}', space=sflag, size = 0x4, scoped, tag = 'scoped memory for decoder_layer_forward.1']
    #allocation4 [shape = 'u8[512]{0}', space=vmem, size = 0x400, scoped, tag = 'input window, operand 15, single buffered']
    #allocation5 [shape = 's32[1]{0}', space=sflag, size = 0x4, scoped, tag = 'scoped memory for decoder_layer_forward.1']
    #allocation6 [shape = 'u8[512]{0}', space=vmem, size = 0x400, scoped, tag = 'input window, operand 19, single buffered']
    #allocation7 [shape = 'u8[16384]{0}', space=vmem, size = 0x4000, scoped, tag = 'input window, operand 24, single buffered']
    #allocation8 [shape = 's32[1]{0}', space=sflag, size = 0x4, scoped, tag = 'scoped memory for decoder_layer_forward.1']
    #allocation9 [shape = 'u8[512]{0}', space=vmem, size = 0x400, scoped, tag = 'input window, operand 28, single buffered']
    #allocation10 [shape = 'u8[512]{0}', space=vmem, size = 0x400, scoped, tag = 'input window, operand 29, single buffered']
    #allocation11 [shape = 's32[1]{0}', space=sflag, size = 0x4, scoped, tag = 'scoped memory for decoder_layer_forward.1']
    %66 = vsyncpa [#allocation3], 0
    %67 = vsyncpa [#allocation5], 0
    %68 = vsyncpa [#allocation8], 0
    %69 = vsyncpa [#allocation11], 0
    // Predicated region
    $region2: #{decoder_layer_forward.1} parent=1 // pred_check
      _
    $region3: #{decoder_layer_forward.1} parent=1 // pred_check_branch
      %71 = sbr.rel (0) target = $region5
    $region4: #{decoder_layer_forward.1} parent=1 // pred_region
      _
    $region5: #{decoder_layer_forward.1} parent=1 // pred_fallthru
      _
    // Predicated region
    $region6: #{decoder_layer_forward.1} parent=1 // pred_check
      _
    $region7: #{decoder_layer_forward.1} parent=1 // pred_check_branch
      %73 = sbr.rel (0) target = $region9
    $region8: #{decoder_layer_forward.1} parent=1 // pred_region
      _
    $region9: #{decoder_layer_forward.1} parent=1 // pred_fallthru
      _
    // Predicated region
    $region10: #{decoder_layer_forward.1} parent=1 // pred_check
      _
    $region11: #{decoder_layer_forward.1} parent=1 // pred_check_branch
      %75 = sbr.rel (0) target = $region13
    $region12: #{decoder_layer_forward.1} parent=1 // pred_region
      _
    $region13: #{decoder_layer_forward.1} parent=1 // pred_fallthru
      _
    // Predicated region
    $region14: #{decoder_layer_forward.1} parent=1 // pred_check
      _
    $region15: #{decoder_layer_forward.1} parent=1 // pred_check_branch
      %77 = sbr.rel (0) target = $region17
    $region16: #{decoder_layer_forward.1} parent=1 // pred_region
      %s79 = ssub.s32 128, 128
      %80 = vsyncadd [#allocation3], %s79
      %s82 = sshll.u32 [#allocation2], 4
      %s83 = int_to_ptr.vmem [resolvable:$true] %s82
      %85 = dma.hbm_to_vmem [thread:$0]  %s7, 128, %s83, [#allocation3]
    $region17: #{decoder_layer_forward.1} parent=1 // pred_fallthru
      _
    // Predicated region
    $region18: #{decoder_layer_forward.1} parent=1 // pred_check
      _
    $region19: #{decoder_layer_forward.1} parent=1 // pred_check_branch
      %87 = sbr.rel (0) target = $region21
    $region20: #{decoder_layer_forward.1} parent=1 // pred_region
      _
    $region21: #{decoder_layer_forward.1} parent=1 // pred_fallthru
      _
    // Predicated region
    $region22: #{decoder_layer_forward.1} parent=1 // pred_check
      _
    $region23: #{decoder_layer_forward.1} parent=1 // pred_check_branch
      %89 = sbr.rel (0) target = $region25
    $region24: #{decoder_layer_forward.1} parent=1 // pred_region
      _
    $region25: #{decoder_layer_forward.1} parent=1 // pred_fallthru
      _
    // Predicated region
    $region26: #{decoder_layer_forward.1} parent=1 // pred_check
      _
    $region27: #{decoder_layer_forward.1} parent=1 // pred_check_branch
      %91 = sbr.rel (0) target = $region29
    $region28: #{decoder_layer_forward.1} parent=1 // pred_region
      _
    $region29: #{decoder_layer_forward.1} parent=1 // pred_fallthru
      _
    // Predicated region
    $region30: #{decoder_layer_forward.1} parent=1 // pred_check
      _
    $region31: #{decoder_layer_forward.1} parent=1 // pred_check_branch
      %93 = sbr.rel (0) target = $region33
    $region32: #{decoder_layer_forward.1} parent=1 // pred_region
      _
    $region33: #{decoder_layer_forward.1} parent=1 // pred_fallthru
      _
    // Predicated region
    $region34: #{decoder_layer_forward.1} parent=1 // pred_check
      _
    $region35: #{decoder_layer_forward.1} parent=1 // pred_check_branch
      %95 = sbr.rel (0) target = $region37
    $region36: #{decoder_layer_forward.1} parent=1 // pred_region
      _
    $region37: #{decoder_layer_forward.1} parent=1 // pred_fallthru
      _
    // Predicated region
    $region38: #{decoder_layer_forward.1} parent=1 // pred_check
      _
    $region39: #{decoder_layer_forward.1} parent=1 // pred_check_branch
      %97 = sbr.rel (0) target = $region41
    $region40: #{decoder_layer_forward.1} parent=1 // pred_region
      _
    $region41: #{decoder_layer_forward.1} parent=1 // pred_fallthru
      _
    // Predicated region
    $region42: #{decoder_layer_forward.1} parent=1 // pred_check
      _
    $region43: #{decoder_layer_forward.1} parent=1 // pred_check_branch
      %99 = sbr.rel (0) target = $region45
    $region44: #{decoder_layer_forward.1} parent=1 // pred_region
      _
    $region45: #{decoder_layer_forward.1} parent=1 // pred_fallthru
      _
    // Predicated region
    $region46: #{decoder_layer_forward.1} parent=1 // pred_check
      _
    $region47: #{decoder_layer_forward.1} parent=1 // pred_check_branch
      %101 = sbr.rel (0) target = $region49
    $region48: #{decoder_layer_forward.1} parent=1 // pred_region
      _
    $region49: #{decoder_layer_forward.1} parent=1 // pred_fallthru
      _
    // Predicated region
    $region50: #{decoder_layer_forward.1} parent=1 // pred_check
      _
    $region51: #{decoder_layer_forward.1} parent=1 // pred_check_branch
      %103 = sbr.rel (0) target = $region53
    $region52: #{decoder_layer_forward.1} parent=1 // pred_region
      _
    $region53: #{decoder_layer_forward.1} parent=1 // pred_fallthru
      _
    // Predicated region
    $region54: #{decoder_layer_forward.1} parent=1 // pred_check
      _
    $region55: #{decoder_layer_forward.1} parent=1 // pred_check_branch
      %105 = sbr.rel (0) target = $region57
    $region56: #{decoder_layer_forward.1} parent=1 // pred_region
      _
    $region57: #{decoder_layer_forward.1} parent=1 // pred_fallthru
      _
    // Predicated region
    $region58: #{decoder_layer_forward.1} parent=1 // pred_check
      _
    $region59: #{decoder_layer_forward.1} parent=1 // pred_check_branch
      %107 = sbr.rel (0) target = $region61
    $region60: #{decoder_layer_forward.1} parent=1 // pred_region
      _
    $region61: #{decoder_layer_forward.1} parent=1 // pred_fallthru
      _
    // Predicated region
    $region62: #{decoder_layer_forward.1} parent=1 // pred_check
      _
    $region63: #{decoder_layer_forward.1} parent=1 // pred_check_branch
      %109 = sbr.rel (0) target = $region65
    $region64: #{decoder_layer_forward.1} parent=1 // pred_region
      %s111 = ssub.s32 16, 16
      %112 = vsyncadd [#allocation5], %s111
      %s114 = sshll.u32 [#allocation4], 4
      %s115 = int_to_ptr.vmem [resolvable:$true] %s114
      %117 = dma.hbm_to_vmem [thread:$0]  %s31, 16, %s115, [#allocation5]
    $region65: #{decoder_layer_forward.1} parent=1 // pred_fallthru
      _
    // Predicated region
    $region66: #{decoder_layer_forward.1} parent=1 // pred_check
      _
    $region67: #{decoder_layer_forward.1} parent=1 // pred_check_branch
      %119 = sbr.rel (0) target = $region69
    $region68: #{decoder_layer_forward.1} parent=1 // pred_region
      _
    $region69: #{decoder_layer_forward.1} parent=1 // pred_fallthru
      _
    // Predicated region
    $region70: #{decoder_layer_forward.1} parent=1 // pred_check
      _
    $region71: #{decoder_layer_forward.1} parent=1 // pred_check_branch
      %121 = sbr.rel (0) target = $region73
    $region72: #{decoder_layer_forward.1} parent=1 // pred_region
      _
    $region73: #{decoder_layer_forward.1} parent=1 // pred_fallthru
      _
    // Predicated region
    $region74: #{decoder_layer_forward.1} parent=1 // pred_check
      _
    $region75: #{decoder_layer_forward.1} parent=1 // pred_check_branch
      %123 = sbr.rel (0) target = $region77
    $region76: #{decoder_layer_forward.1} parent=1 // pred_region
      _
    $region77: #{decoder_layer_forward.1} parent=1 // pred_fallthru
      _
    // Predicated region
    $region78: #{decoder_layer_forward.1} parent=1 // pred_check
      _
    $region79: #{decoder_layer_forward.1} parent=1 // pred_check_branch
      %125 = sbr.rel (0) target = $region81
    $region80: #{decoder_layer_forward.1} parent=1 // pred_region
      %s127 = ssub.s32 16, 16
      %128 = vsyncadd [#allocation5], %s127
      %s130 = sshll.u32 [#allocation6], 4
      %s131 = int_to_ptr.vmem [resolvable:$true] %s130
      %133 = dma.hbm_to_vmem [thread:$0]  %s39, 16, %s131, [#allocation5]
    $region81: #{decoder_layer_forward.1} parent=1 // pred_fallthru
      _
    // Predicated region
    $region82: #{decoder_layer_forward.1} parent=1 // pred_check
      _
    $region83: #{decoder_layer_forward.1} parent=1 // pred_check_branch
      %135 = sbr.rel (0) target = $region85
    $region84: #{decoder_layer_forward.1} parent=1 // pred_region
      _
    $region85: #{decoder_layer_forward.1} parent=1 // pred_fallthru
      _
    // Predicated region
    $region86: #{decoder_layer_forward.1} parent=1 // pred_check
      _
    $region87: #{decoder_layer_forward.1} parent=1 // pred_check_branch
      %137 = sbr.rel (0) target = $region89
    $region88: #{decoder_layer_forward.1} parent=1 // pred_region
      _
    $region89: #{decoder_layer_forward.1} parent=1 // pred_fallthru
      _
    // Predicated region
    $region90: #{decoder_layer_forward.1} parent=1 // pred_check
      _
    $region91: #{decoder_layer_forward.1} parent=1 // pred_check_branch
      %139 = sbr.rel (0) target = $region93
    $region92: #{decoder_layer_forward.1} parent=1 // pred_region
      _
    $region93: #{decoder_layer_forward.1} parent=1 // pred_fallthru
      _
    // Predicated region
    $region94: #{decoder_layer_forward.1} parent=1 // pred_check
      _
    $region95: #{decoder_layer_forward.1} parent=1 // pred_check_branch
      %141 = sbr.rel (0) target = $region97
    $region96: #{decoder_layer_forward.1} parent=1 // pred_region
      _
    $region97: #{decoder_layer_forward.1} parent=1 // pred_fallthru
      _
    // Predicated region
    $region98: #{decoder_layer_forward.1} parent=1 // pred_check
      _
    $region99: #{decoder_layer_forward.1} parent=1 // pred_check_branch
      %143 = sbr.rel (0) target = $region101
    $region100: #{decoder_layer_forward.1} parent=1 // pred_region
      %s145 = ssub.s32 512, 512
      %146 = vsyncadd [#allocation8], %s145
      %s147 = sshll.u32 [#allocation7], 4
      %s148 = int_to_ptr.vmem [resolvable:$true] %s147
      %153 = dma.hbm_to_vmem [thread:$0]  %s49, 512, %s148, [#allocation8], 128, 128, 8
    $region101: #{decoder_layer_forward.1} parent=1 // pred_fallthru
      _
    // Predicated region
    $region102: #{decoder_layer_forward.1} parent=1 // pred_check
      _
    $region103: #{decoder_layer_forward.1} parent=1 // pred_check_branch
      %155 = sbr.rel (0) target = $region105
    $region104: #{decoder_layer_forward.1} parent=1 // pred_region
      _
    $region105: #{decoder_layer_forward.1} parent=1 // pred_fallthru
      _
    // Predicated region
    $region106: #{decoder_layer_forward.1} parent=1 // pred_check
      _
    $region107: #{decoder_layer_forward.1} parent=1 // pred_check_branch
      %157 = sbr.rel (0) target = $region109
    $region108: #{decoder_layer_forward.1} parent=1 // pred_region
      _
    $region109: #{decoder_layer_forward.1} parent=1 // pred_fallthru
      _
    // Predicated region
    $region110: #{decoder_layer_forward.1} parent=1 // pred_check
      _
    $region111: #{decoder_layer_forward.1} parent=1 // pred_check_branch
      %159 = sbr.rel (0) target = $region113
    $region112: #{decoder_layer_forward.1} parent=1 // pred_region
      _
    $region113: #{decoder_layer_forward.1} parent=1 // pred_fallthru
      _
    // Predicated region
    $region114: #{decoder_layer_forward.1} parent=1 // pred_check
      _
    $region115: #{decoder_layer_forward.1} parent=1 // pred_check_branch
      %161 = sbr.rel (0) target = $region117
    $region116: #{decoder_layer_forward.1} parent=1 // pred_region
      %s163 = ssub.s32 16, 16
      %164 = vsyncadd [#allocation8], %s163
      %s166 = sshll.u32 [#allocation9], 4
      %s167 = int_to_ptr.vmem [resolvable:$true] %s166
      %169 = dma.hbm_to_vmem [thread:$0]  %s57, 16, %s167, [#allocation8]
    $region117: #{decoder_layer_forward.1} parent=1 // pred_fallthru
      _
    // Predicated region
    $region118: #{decoder_layer_forward.1} parent=1 // pred_check
      _
    $region119: #{decoder_layer_forward.1} parent=1 // pred_check_branch
      %171 = sbr.rel (0) target = $region121
    $region120: #{decoder_layer_forward.1} parent=1 // pred_region
      %s173 = ssub.s32 16, 16
      %174 = vsyncadd [#allocation11], %s173
      %s176 = sshll.u32 [#allocation10], 4
      %s177 = int_to_ptr.vmem [resolvable:$true] %s176
      %179 = dma.hbm_to_vmem [thread:$0]  %s59, 16, %s177, [#allocation11]
    $region121: #{decoder_layer_forward.1} parent=1 // pred_fallthru
      _
    // Predicated region
    $region122: #{decoder_layer_forward.1} parent=1 // pred_check
      _
    $region123: #{decoder_layer_forward.1} parent=1 // pred_check_branch
      %181 = sbr.rel (0) target = $region125
    $region124: #{decoder_layer_forward.1} parent=1 // pred_region
      %182 = dma.done [#allocation3], 128
    $region125: #{decoder_layer_forward.1} parent=1 // pred_fallthru
      _
    // Predicated region
    $region126: #{decoder_layer_forward.1} parent=1 // pred_check
      _
    $region127: #{decoder_layer_forward.1} parent=1 // pred_check_branch
      %184 = sbr.rel (0) target = $region129
    $region128: #{decoder_layer_forward.1} parent=1 // pred_region
      %185 = dma.done [#allocation5], 16
    $region129: #{decoder_layer_forward.1} parent=1 // pred_fallthru
      _
    // Predicated region
    $region130: #{decoder_layer_forward.1} parent=1 // pred_check
      _
    $region131: #{decoder_layer_forward.1} parent=1 // pred_check_branch
      %187 = sbr.rel (0) target = $region133
    $region132: #{decoder_layer_forward.1} parent=1 // pred_region
      %188 = dma.done [#allocation5], 16
    $region133: #{decoder_layer_forward.1} parent=1 // pred_fallthru
      _
    // Predicated region
    $region134: #{decoder_layer_forward.1} parent=1 // pred_check
      _
    $region135: #{decoder_layer_forward.1} parent=1 // pred_check_branch
      %190 = sbr.rel (0) target = $region137
    $region136: #{decoder_layer_forward.1} parent=1 // pred_region
      %191 = dma.done [#allocation8], 512
    $region137: #{decoder_layer_forward.1} parent=1 // pred_fallthru
      _
    // Predicated region
    $region138: #{decoder_layer_forward.1} parent=1 // pred_check
      _
    $region139: #{decoder_layer_forward.1} parent=1 // pred_check_branch
      %193 = sbr.rel (0) target = $region141
    $region140: #{decoder_layer_forward.1} parent=1 // pred_region
      %194 = dma.done [#allocation8], 16
    $region141: #{decoder_layer_forward.1} parent=1 // pred_fallthru
      _
    // Predicated region
    $region142: #{decoder_layer_forward.1} parent=1 // pred_check
      _
    $region143: #{decoder_layer_forward.1} parent=1 // pred_check_branch
      %196 = sbr.rel (0) target = $region145
    $region144: #{decoder_layer_forward.1} parent=1 // pred_region
      %197 = dma.done [#allocation11], 16
    $region145: #{decoder_layer_forward.1} parent=1 // pred_fallthru
      _
    %v199 = vld [vmem:[%s1] sm:$0xff]
    %v200 = vld [vmem:[%s1 + $0x8] sm:$0xff]
    %v201 = vld [vmem:[%s3] sm:$0xff]
    %v202 = vld [vmem:[%s3 + $0x8] sm:$0xff]
    %v203 = vld [vmem:[%s3 + $0x10] sm:$0xff]
    %v204 = vld [vmem:[%s3 + $0x18] sm:$0xff]
    %v205 = vld [vmem:[%s3 + $0x20] sm:$0xff]
    %v206 = vld [vmem:[%s3 + $0x28] sm:$0xff]
    %v207 = vld [vmem:[%s5] sm:$0x3f]
    %v208 = vld [vmem:[#allocation2] sm:$0xff]
    %v209 = vld [vmem:[%s9] sm:$0x3]
    %v210 = vld [vmem:[%s11] sm:$0x3]
    %v211 = vld [vmem:[%s13] sm:$0x3f]
    %v212 = vld [vmem:[%s15] sm:$0x3]
    %v213 = vld [vmem:[%s21] sm:$0xff]
    %v214 = vld [vmem:[%s21 + $0x8] sm:$0xff]
    %v215 = vld [vmem:[%s21 + $0x10] sm:$0xff]
    %v216 = vld [vmem:[%s21 + $0x18] sm:$0xff]
    %v217 = vld [vmem:[%s23] sm:$0x1]
    %v218 = vld [vmem:[%s41] sm:$0xff]
    %v219 = vld [vmem:[%s41 + $0x8] sm:$0xff]
    %v220 = vld [vmem:[%s41 + $0x10] sm:$0xff]
    %v221 = vld [vmem:[%s41 + $0x18] sm:$0xff]
    %v222 = vld [vmem:[%s43] sm:$0x1]
    %v223 = vld [vmem:[%s25] sm:$0x1]
    %v224 = vld [vmem:[%s27] sm:$0x1]
    %v225 = vld [vmem:[%s45] sm:$0x1]
    %v226 = vld [vmem:[%s47] sm:$0x1]
    %v227 = vld [vmem:[#allocation9] sm:$0x1]
    %v228 = vld [vmem:[#allocation10] sm:$0x1]
    %v229 = vld [vmem:[%s29] sm:$0xff]
    %v230 = vld [vmem:[%s29 + $0x8] sm:$0xff]
    %v231 = vld [vmem:[%s29 + $0x10] sm:$0xff]
    %v232 = vld [vmem:[%s29 + $0x18] sm:$0xff]
    %v233 = vld [vmem:[#allocation4] sm:$0x1]
    %v234 = vld [vmem:[#allocation7] sm:$0xff]
    %v235 = vld [vmem:[#allocation7 + $0x8] sm:$0xff]
    %v236 = vld [vmem:[#allocation7 + $0x10] sm:$0xff]
    %v237 = vld [vmem:[#allocation7 + $0x18] sm:$0xff]
    %v238 = vld [vmem:[%s51] sm:$0x1]
    %v239 = vld [vmem:[%s53] sm:$0xff]
    %v240 = vld [vmem:[%s53 + $0x8] sm:$0xff]
    %v241 = vld [vmem:[%s53 + $0x10] sm:$0xff]
    %v242 = vld [vmem:[%s53 + $0x18] sm:$0xff]
    %v243 = vld [vmem:[%s53 + $0x20] sm:$0xff]
    %v244 = vld [vmem:[%s53 + $0x28] sm:$0xff]
    %v245 = vld [vmem:[%s53 + $0x30] sm:$0xff]
    %v246 = vld [vmem:[%s53 + $0x38] sm:$0xff]
    %v247 = vld [vmem:[%s55] sm:$0x1]
    %v248 = vld [vmem:[%s17] sm:$0xff]
    %v249 = vld [vmem:[%s17 + $0x8] sm:$0xff]
    %v250 = vld [vmem:[%s17 + $0x10] sm:$0xff]
    %v251 = vld [vmem:[%s17 + $0x18] sm:$0xff]
    %v252 = vpack.c.bf16 %v200, %v199
    %v253 = vpack.c.bf16 %v249, %v248
    %v254 = vpack.c.bf16 %v251, %v250
    %v255 = vld [vmem:[%s19] sm:$0x1]
    %v257 = vlaneseq
    %v258 = vshrl.u32 %v257, 7
    %v259 = vsub.s32 0, %v258
    %v260 = vrot.slane %v255, %v259
    %vm262 = vcmask 261120
    %v264 = vsel %vm262, %v252, 0
    %266 = vmatprep.subr.bf16.mxu0 0
    %267 = vmatpush1.bf16.msra.mxu0 %v253
    %268 = vmatprep.subr.bf16.mxu0 0
    %269 = vmatpush1.bf16.msra.mxu0 %v254
    %270 = vmatprep.subr.bf16.mxu0 0
    %271 = vmatpush1.bf16.msra.mxu0 0
    %272 = vmatprep.subr.bf16.mxu0 0
    %273 = vmatpush1.bf16.msra.mxu0 0
    %274 = vmatprep.subr.bf16.mxu0 0
    %275 = vmatpush1.bf16.msra.mxu0 0
    %276 = vmatprep.subr.bf16.mxu0 0
    %277 = vmatpush1.bf16.msra.mxu0 0
    %278 = vmatprep.subr.bf16.mxu0 0
    %279 = vmatpush1.bf16.msra.mxu0 0
    %280 = vmatprep.subr.bf16.mxu0 0
    %281 = vmatpush1.bf16.msra.mxu0 0
    %282 = vmatprep.subr.bf16.mxu0 0
    %283 = vmatpush1.bf16.msra.mxu0 0
    %284 = vmatprep.subr.bf16.mxu0 0
    %285 = vmatpush1.bf16.msra.mxu0 0
    %286 = vmatprep.subr.bf16.mxu0 0
    %287 = vmatpush1.bf16.msra.mxu0 0
    %288 = vmatprep.subr.bf16.mxu0 0
    %289 = vmatpush1.bf16.msra.mxu0 0
    %290 = vmatprep.subr.bf16.mxu0 0
    %291 = vmatpush1.bf16.msra.mxu0 0
    %292 = vmatprep.subr.bf16.mxu0 0
    %293 = vmatpush1.bf16.msra.mxu0 0
    %294 = vmatprep.subr.bf16.mxu0 0
    %295 = vmatpush1.bf16.msra.mxu0 0
    %296 = vmatprep.subr.bf16.mxu0 0
    %297 = vmatpush1.bf16.msra.mxu0 0
    %298 = vmatprep.mubr.bf16.mxu0 0
    %299 = vmatmul.mubr.bf16.gmra.mrb[0].mxu0 %v264
    %v300 = vpop.f32.mrb[0].mxu0
    %v301 = vadd.f32 %v260, %v300
    %v302 = vpop.f32.mrb[0].mxu0
    %v303 = vpop.f32.mrb[0].mxu0
    %v304 = vadd.f32 %v260, %v303
    %v305 = vpop.f32.mrb[0].mxu0
    %306 = vdwg.mxu0
    %v307 = vld [vmem:[%s33] sm:$0xff]
    %v308 = vld [vmem:[%s33 + $0x8] sm:$0xff]
    %v309 = vld [vmem:[%s33 + $0x10] sm:$0xff]
    %v310 = vld [vmem:[%s33 + $0x18] sm:$0xff]
    %v311 = vpack.c.bf16 %v202, %v201
    %v312 = vpack.c.bf16 %v204, %v203
    %v313 = vpack.c.bf16 %v206, %v205
    %v314 = vpack.c.bf16 %v308, %v307
    %v315 = vpack.c.bf16 %v310, %v309
    %v316 = vld [vmem:[%s35] sm:$0x1]
    %v318 = vlaneseq
    %v319 = vshrl.u32 %v318, 7
    %v320 = vsub.s32 0, %v319
    %v321 = vrot.slane %v316, %v320
    %v324 = vsel %vm262, %v311, 0
    %v327 = vsel %vm262, %v312, 0
    %v330 = vsel %vm262, %v313, 0
    %332 = vmatprep.subr.bf16.mxu0 0
    %333 = vmatpush1.bf16.msra.mxu0 %v314
    %334 = vmatprep.subr.bf16.mxu0 0
    %335 = vmatpush1.bf16.msra.mxu0 %v315
    %336 = vmatprep.subr.bf16.mxu0 0
    %337 = vmatpush1.bf16.msra.mxu0 0
    %338 = vmatprep.subr.bf16.mxu0 0
    %339 = vmatpush1.bf16.msra.mxu0 0
    %340 = vmatprep.subr.bf16.mxu0 0
    %341 = vmatpush1.bf16.msra.mxu0 0
    %342 = vmatprep.subr.bf16.mxu0 0
    %343 = vmatpush1.bf16.msra.mxu0 0
    %344 = vmatprep.subr.bf16.mxu0 0
    %345 = vmatpush1.bf16.msra.mxu0 0
    %346 = vmatprep.subr.bf16.mxu0 0
    %347 = vmatpush1.bf16.msra.mxu0 0
    %348 = vmatprep.subr.bf16.mxu0 0
    %349 = vmatpush1.bf16.msra.mxu0 0
    %350 = vmatprep.subr.bf16.mxu0 0
    %351 = vmatpush1.bf16.msra.mxu0 0
    %352 = vmatprep.subr.bf16.mxu0 0
    %353 = vmatpush1.bf16.msra.mxu0 0
    %354 = vmatprep.subr.bf16.mxu0 0
    %355 = vmatpush1.bf16.msra.mxu0 0
    %356 = vmatprep.subr.bf16.mxu0 0
    %357 = vmatpush1.bf16.msra.mxu0 0
    %358 = vmatprep.subr.bf16.mxu0 0
    %359 = vmatpush1.bf16.msra.mxu0 0
    %360 = vmatprep.subr.bf16.mxu0 0
    %361 = vmatpush1.bf16.msra.mxu0 0
    %362 = vmatprep.subr.bf16.mxu0 0
    %363 = vmatpush1.bf16.msra.mxu0 0
    %364 = vmatprep.mubr.bf16.mxu0 0
    %365 = vmatmul.mubr.bf16.gmra.mrb[0].mxu0 %v324
    %v366 = vpop.f32.mrb[0].mxu0
    %v367 = vadd.f32 %v321, %v366
    %v368 = vpop.f32.mrb[0].mxu0
    %v369 = vpop.f32.mrb[0].mxu0
    %v370 = vadd.f32 %v321, %v369
    %v371 = vpop.f32.mrb[0].mxu0
    %372 = vmatprep.mubr.bf16.mxu0 0
    %373 = vmatmul.mubr.bf16.gmra.mrb[0].mxu0 %v327
    %v374 = vpop.f32.mrb[0].mxu0
    %v375 = vadd.f32 %v321, %v374
    %v376 = vpop.f32.mrb[0].mxu0
    %v377 = vpop.f32.mrb[0].mxu0
    %v378 = vadd.f32 %v321, %v377
    %v379 = vpop.f32.mrb[0].mxu0
    %380 = vmatprep.mubr.bf16.mxu0 0
    %381 = vmatmul.mubr.bf16.gmra.mrb[0].mxu0 %v330
    %v382 = vpop.f32.mrb[0].mxu0
    %v383 = vadd.f32 %v321, %v382
    %v384 = vpop.f32.mrb[0].mxu0
    %v385 = vpop.f32.mrb[0].mxu0
    %v386 = vadd.f32 %v321, %v385
    %v387 = vpop.f32.mrb[0].mxu0
    %388 = vdwg.mxu0
    %v389 = vld [vmem:[%s37] sm:$0xff]
    %v390 = vld [vmem:[%s37 + $0x8] sm:$0xff]
    %v391 = vld [vmem:[%s37 + $0x10] sm:$0xff]
    %v392 = vld [vmem:[%s37 + $0x18] sm:$0xff]
    %v393 = vpack.c.bf16 %v207, %v207
    %v394 = vpack.c.bf16 %v390, %v389
    %v395 = vpack.c.bf16 %v392, %v391
    %v396 = vld [vmem:[#allocation6] sm:$0x1]
    %v398 = vlaneseq
    %v399 = vshrl.u32 %v398, 7
    %v400 = vsub.s32 0, %v399
    %v401 = vrot.slane %v396, %v400
    %v404 = vsel %vm262, %v393, 0
    %406 = vmatprep.subr.bf16.mxu0 0
    %407 = vmatpush1.bf16.msra.mxu0 %v394
    %408 = vmatprep.subr.bf16.mxu0 0
    %409 = vmatpush1.bf16.msra.mxu0 %v395
    %410 = vmatprep.subr.bf16.mxu0 0
    %411 = vmatpush1.bf16.msra.mxu0 0
    %412 = vmatprep.subr.bf16.mxu0 0
    %413 = vmatpush1.bf16.msra.mxu0 0
    %414 = vmatprep.subr.bf16.mxu0 0
    %415 = vmatpush1.bf16.msra.mxu0 0
    %416 = vmatprep.subr.bf16.mxu0 0
    %417 = vmatpush1.bf16.msra.mxu0 0
    %418 = vmatprep.subr.bf16.mxu0 0
    %419 = vmatpush1.bf16.msra.mxu0 0
    %420 = vmatprep.subr.bf16.mxu0 0
    %421 = vmatpush1.bf16.msra.mxu0 0
    %422 = vmatprep.subr.bf16.mxu0 0
    %423 = vmatpush1.bf16.msra.mxu0 0
    %424 = vmatprep.subr.bf16.mxu0 0
    %425 = vmatpush1.bf16.msra.mxu0 0
    %426 = vmatprep.subr.bf16.mxu0 0
    %427 = vmatpush1.bf16.msra.mxu0 0
    %428 = vmatprep.subr.bf16.mxu0 0
    %429 = vmatpush1.bf16.msra.mxu0 0
    %430 = vmatprep.subr.bf16.mxu0 0
    %431 = vmatpush1.bf16.msra.mxu0 0
    %432 = vmatprep.subr.bf16.mxu0 0
    %433 = vmatpush1.bf16.msra.mxu0 0
    %434 = vmatprep.subr.bf16.mxu0 0
    %435 = vmatpush1.bf16.msra.mxu0 0
    %436 = vmatprep.subr.bf16.mxu0 0
    %437 = vmatpush1.bf16.msra.mxu0 0
    %438 = vmatprep.mubr.bf16.mxu0 0
    %439 = vmatmul.mubr.bf16.gmra.mrb[0].mxu0 %v404
    %v440 = vpop.f32.mrb[0].mxu0
    %v441 = vadd.f32 %v401, %v440
    %v442 = vpop.f32.mrb[0].mxu0
    %v443 = vpop.f32.mrb[0].mxu0
    %v444 = vpop.f32.mrb[0].mxu0
    %445 = vdwg.mxu0
    %v446 = vlaneseq
    %v447 = vshrl.u32 %v446, 7
    %v448 = vsub.s32 0, %v447
    %v449 = vrot.slane %v209, %v448
    %v450 = vadd.f32 %v208, %v449
    %v452 = vlaneseq
    %v453 = vshrl.u32 %v452, 7
    %v454 = vsub.s32 0, %v453
    %v455 = vrot.slane %v217, %v454
    %v457 = vadd.f32 %v455, %v199
    %459 = vrot.lane.b32.xlu0 %v301, 96
    %v460 = vpop.permute.xlu0 %459
    %vm461 = vcmask 64512
    %v462 = vsel %vm461, %v301, 0
    %v464 = vsel %vm461, %v460, 0
    %466 = vmatprep.subr.mxu0 0.0
    %467 = vmatpush1.xpose.msra.mxu0 %v464
    %468 = vmatprep.subr.mxu0 0.0
    %469 = vmatpush1.xpose.msra.mxu0 0.0
    %470 = vmatprep.subr.mxu0 0.0
    %471 = vmatpush1.xpose.msra.mxu0 0.0
    %472 = vmatprep.subr.mxu0 0.0
    %473 = vmatpush1.xpose.msra.mxu0 0.0
    %474 = vmatprep.subr.mxu0 0.0
    %475 = vmatpush1.xpose.msra.mxu0 0.0
    %476 = vmatprep.subr.mxu0 0.0
    %477 = vmatpush1.xpose.msra.mxu0 0.0
    %478 = vmatprep.subr.mxu0 0.0
    %479 = vmatpush1.xpose.msra.mxu0 0.0
    %480 = vmatprep.subr.mxu0 0.0
    %481 = vmatpush1.xpose.msra.mxu0 0.0
    %482 = vmatprep.subr.mxu0 0.0
    %483 = vmatpush1.xpose.msra.mxu0 0.0
    %484 = vmatprep.subr.mxu0 0.0
    %485 = vmatpush1.xpose.msra.mxu0 0.0
    %486 = vmatprep.subr.mxu0 0.0
    %487 = vmatpush1.xpose.msra.mxu0 0.0
    %488 = vmatprep.subr.mxu0 0.0
    %489 = vmatpush1.xpose.msra.mxu0 0.0
    %490 = vmatprep.subr.mxu0 0.0
    %491 = vmatpush1.xpose.msra.mxu0 0.0
    %492 = vmatprep.subr.mxu0 0.0
    %493 = vmatpush1.xpose.msra.mxu0 0.0
    %494 = vmatprep.subr.mxu0 0.0
    %495 = vmatpush1.xpose.msra.mxu0 0.0
    %496 = vmatprep.subr.mxu0 0.0
    %497 = vmatpush1.xpose.msra.mxu0 0.0
    %498 = vmatprep.subr.mxu0 0.0
    %499 = vmatpush1.xpose.msra.mxu0 0.0
    %500 = vmatprep.subr.mxu0 0.0
    %501 = vmatpush1.xpose.msra.mxu0 0.0
    %502 = vmatprep.subr.mxu0 0.0
    %503 = vmatpush1.xpose.msra.mxu0 0.0
    %504 = vmatprep.subr.mxu0 0.0
    %505 = vmatpush1.xpose.msra.mxu0 0.0
    %506 = vmatprep.subr.mxu0 0.0
    %507 = vmatpush1.xpose.msra.mxu0 0.0
    %508 = vmatprep.subr.mxu0 0.0
    %509 = vmatpush1.xpose.msra.mxu0 0.0
    %510 = vmatprep.subr.mxu0 0.0
    %511 = vmatpush1.xpose.msra.mxu0 0.0
    %512 = vmatprep.subr.mxu0 0.0
    %513 = vmatpush1.xpose.msra.mxu0 0.0
    %514 = vmatprep.subr.mxu0 0.0
    %515 = vmatpush1.xpose.msra.mxu0 0.0
    %516 = vmatprep.subr.mxu0 0.0
    %517 = vmatpush1.xpose.msra.mxu0 0.0
    %518 = vmatprep.subr.mxu0 0.0
    %519 = vmatpush1.xpose.msra.mxu0 0.0
    %520 = vmatprep.subr.mxu0 0.0
    %521 = vmatpush1.xpose.msra.mxu0 0.0
    %522 = vmatprep.subr.mxu0 0.0
    %523 = vmatpush1.xpose.msra.mxu0 0.0
    %524 = vmatprep.subr.mxu0 0.0
    %525 = vmatpush1.xpose.msra.mxu0 0.0
    %526 = vmatprep.subr.mxu0 0.0
    %527 = vmatpush1.xpose.msra.mxu0 0.0
    %528 = vmatprep.subr.mxu0 0.0
    %529 = vmatpush1.xpose.msra.mxu0 0.0
    %530 = vmatprep.mubr.f32.mxu0 0.0
    %531 = vmatmul.mubr.f32.gmra.mrb[0].mxu0 %v462
    %v532 = vpop.f32.mrb[0].mxu0
    %v533 = vadd.f32 0.0, %v532
    %v534 = vpop.f32.mrb[0].mxu0
    %535 = vdwg.mxu0
    %v536 = vmul.f32 %v533, 0.35355338
    %v537 = vadd.f32 %v536, %v450
    %v538 = vsel %vm461, %v537, -inf
    %539 = vmax.xlane.f32.xlu0 %v538
    %v540 = vpop.xlane.xlu0 %539
    %v541 = vsub.f32 %v537, %v540
    %v542 = vmul.f32 %v541, 1.442695
    %v543 = vpow.pop %v542
    %v544 = vsel %vm461, %v543, 0.0
    %545 = vadd.xlane.f32.xlu0 %v544
    %v546 = vpop.xlane.xlu0 %545
    %v547 = vrcp.pop %v546
    %v548 = vmul.f32 %v543, %v547
    %549 = vrot.lane.b32.xlu0 %v301, 64
    %v550 = vpop.permute.xlu0 %549
    %v553 = vsel %vm461, %v548, 0
    %555 = vmatprep.subr.mxu0 0.0
    %556 = vmatpush1.msra.mxu0 %v550
    %557 = vmatprep.subr.mxu0 0.0
    %558 = vmatpush1.msra.mxu0 0.0
    %559 = vmatprep.subr.mxu0 0.0
    %560 = vmatpush1.msra.mxu0 0.0
    %561 = vmatprep.subr.mxu0 0.0
    %562 = vmatpush1.msra.mxu0 0.0
    %563 = vmatprep.subr.mxu0 0.0
    %564 = vmatpush1.msra.mxu0 0.0
    %565 = vmatprep.subr.mxu0 0.0
    %566 = vmatpush1.msra.mxu0 0.0
    %567 = vmatprep.subr.mxu0 0.0
    %568 = vmatpush1.msra.mxu0 0.0
    %569 = vmatprep.subr.mxu0 0.0
    %570 = vmatpush1.msra.mxu0 0.0
    %571 = vmatprep.subr.mxu0 0.0
    %572 = vmatpush1.msra.mxu0 0.0
    %573 = vmatprep.subr.mxu0 0.0
    %574 = vmatpush1.msra.mxu0 0.0
    %575 = vmatprep.subr.mxu0 0.0
    %576 = vmatpush1.msra.mxu0 0.0
    %577 = vmatprep.subr.mxu0 0.0
    %578 = vmatpush1.msra.mxu0 0.0
    %579 = vmatprep.subr.mxu0 0.0
    %580 = vmatpush1.msra.mxu0 0.0
    %581 = vmatprep.subr.mxu0 0.0
    %582 = vmatpush1.msra.mxu0 0.0
    %583 = vmatprep.subr.mxu0 0.0
    %584 = vmatpush1.msra.mxu0 0.0
    %585 = vmatprep.subr.mxu0 0.0
    %586 = vmatpush1.msra.mxu0 0.0
    %587 = vmatprep.subr.mxu0 0.0
    %588 = vmatpush1.msra.mxu0 0.0
    %589 = vmatprep.subr.mxu0 0.0
    %590 = vmatpush1.msra.mxu0 0.0
    %591 = vmatprep.subr.mxu0 0.0
    %592 = vmatpush1.msra.mxu0 0.0
    %593 = vmatprep.subr.mxu0 0.0
    %594 = vmatpush1.msra.mxu0 0.0
    %595 = vmatprep.subr.mxu0 0.0
    %596 = vmatpush1.msra.mxu0 0.0
    %597 = vmatprep.subr.mxu0 0.0
    %598 = vmatpush1.msra.mxu0 0.0
    %599 = vmatprep.subr.mxu0 0.0
    %600 = vmatpush1.msra.mxu0 0.0
    %601 = vmatprep.subr.mxu0 0.0
    %602 = vmatpush1.msra.mxu0 0.0
    %603 = vmatprep.subr.mxu0 0.0
    %604 = vmatpush1.msra.mxu0 0.0
    %605 = vmatprep.subr.mxu0 0.0
    %606 = vmatpush1.msra.mxu0 0.0
    %607 = vmatprep.subr.mxu0 0.0
    %608 = vmatpush1.msra.mxu0 0.0
    %609 = vmatprep.subr.mxu0 0.0
    %610 = vmatpush1.msra.mxu0 0.0
    %611 = vmatprep.subr.mxu0 0.0
    %612 = vmatpush1.msra.mxu0 0.0
    %613 = vmatprep.subr.mxu0 0.0
    %614 = vmatpush1.msra.mxu0 0.0
    %615 = vmatprep.subr.mxu0 0.0
    %616 = vmatpush1.msra.mxu0 0.0
    %617 = vmatprep.subr.mxu0 0.0
    %618 = vmatpush1.msra.mxu0 0.0
    %619 = vmatprep.mubr.f32.mxu0 0.0
    %620 = vmatmul.mubr.f32.gmra.mrb[0].mxu0 %v553
    %v621 = vpop.f32.mrb[0].mxu0
    %v622 = vadd.f32 0.0, %v621
    %v623 = vpop.f32.mrb[0].mxu0
    %624 = vdwg.mxu0
    %v625 = vpack.c.bf16 %v622, %v622
    %v626 = vpack.c.bf16 %v213, %v213
    %v628 = vsel %vm461, %v625, 0
    %vm630 = vcmask 1043456
    %v632 = vsel %vm630, %v626, 0
    %634 = vmatprep.subr.bf16.mxu0 0
    %635 = vmatpush1.bf16.msra.mxu0 %v632
    %636 = vmatprep.subr.bf16.mxu0 0
    %637 = vmatpush1.bf16.msra.mxu0 0
    %638 = vmatprep.subr.bf16.mxu0 0
    %639 = vmatpush1.bf16.msra.mxu0 0
    %640 = vmatprep.subr.bf16.mxu0 0
    %641 = vmatpush1.bf16.msra.mxu0 0
    %642 = vmatprep.subr.bf16.mxu0 0
    %643 = vmatpush1.bf16.msra.mxu0 0
    %644 = vmatprep.subr.bf16.mxu0 0
    %645 = vmatpush1.bf16.msra.mxu0 0
    %646 = vmatprep.subr.bf16.mxu0 0
    %647 = vmatpush1.bf16.msra.mxu0 0
    %648 = vmatprep.subr.bf16.mxu0 0
    %649 = vmatpush1.bf16.msra.mxu0 0
    %650 = vmatprep.subr.bf16.mxu0 0
    %651 = vmatpush1.bf16.msra.mxu0 0
    %652 = vmatprep.subr.bf16.mxu0 0
    %653 = vmatpush1.bf16.msra.mxu0 0
    %654 = vmatprep.subr.bf16.mxu0 0
    %655 = vmatpush1.bf16.msra.mxu0 0
    %656 = vmatprep.subr.bf16.mxu0 0
    %657 = vmatpush1.bf16.msra.mxu0 0
    %658 = vmatprep.subr.bf16.mxu0 0
    %659 = vmatpush1.bf16.msra.mxu0 0
    %660 = vmatprep.subr.bf16.mxu0 0
    %661 = vmatpush1.bf16.msra.mxu0 0
    %662 = vmatprep.subr.bf16.mxu0 0
    %663 = vmatpush1.bf16.msra.mxu0 0
    %664 = vmatprep.subr.bf16.mxu0 0
    %665 = vmatpush1.bf16.msra.mxu0 0
    %666 = vmatprep.mubr.bf16.mxu0 0
    %667 = vmatmul.mubr.bf16.gmra.mrb[0].mxu0 %v628
    %v668 = vpop.f32.mrb[0].mxu0
    %v669 = vadd.f32 0.0, %v668
    %v670 = vpop.f32.mrb[0].mxu0
    %v671 = vpop.f32.mrb[0].mxu0
    %v672 = vpop.f32.mrb[0].mxu0
    %673 = vdwg.mxu0
    %v674 = vadd.f32 %v457, %v669
    %675 = vrot.lane.b32.xlu0 %v301, 120
    %v676 = vpop.permute.xlu0 %675
    %677 = vrot.lane.b32.xlu0 %v301, 88
    %v678 = vpop.permute.xlu0 %677
    %v679 = vsel %vm461, %v676, 0
    %v681 = vsel %vm461, %v678, 0
    %683 = vmatprep.subr.mxu0 0.0
    %684 = vmatpush1.xpose.msra.mxu0 %v681
    %685 = vmatprep.subr.mxu0 0.0
    %686 = vmatpush1.xpose.msra.mxu0 0.0
    %687 = vmatprep.subr.mxu0 0.0
    %688 = vmatpush1.xpose.msra.mxu0 0.0
    %689 = vmatprep.subr.mxu0 0.0
    %690 = vmatpush1.xpose.msra.mxu0 0.0
    %691 = vmatprep.subr.mxu0 0.0
    %692 = vmatpush1.xpose.msra.mxu0 0.0
    %693 = vmatprep.subr.mxu0 0.0
    %694 = vmatpush1.xpose.msra.mxu0 0.0
    %695 = vmatprep.subr.mxu0 0.0
    %696 = vmatpush1.xpose.msra.mxu0 0.0
    %697 = vmatprep.subr.mxu0 0.0
    %698 = vmatpush1.xpose.msra.mxu0 0.0
    %699 = vmatprep.subr.mxu0 0.0
    %700 = vmatpush1.xpose.msra.mxu0 0.0
    %701 = vmatprep.subr.mxu0 0.0
    %702 = vmatpush1.xpose.msra.mxu0 0.0
    %703 = vmatprep.subr.mxu0 0.0
    %704 = vmatpush1.xpose.msra.mxu0 0.0
    %705 = vmatprep.subr.mxu0 0.0
    %706 = vmatpush1.xpose.msra.mxu0 0.0
    %707 = vmatprep.subr.mxu0 0.0
    %708 = vmatpush1.xpose.msra.mxu0 0.0
    %709 = vmatprep.subr.mxu0 0.0
    %710 = vmatpush1.xpose.msra.mxu0 0.0
    %711 = vmatprep.subr.mxu0 0.0
    %712 = vmatpush1.xpose.msra.mxu0 0.0
    %713 = vmatprep.subr.mxu0 0.0
    %714 = vmatpush1.xpose.msra.mxu0 0.0
    %715 = vmatprep.subr.mxu0 0.0
    %716 = vmatpush1.xpose.msra.mxu0 0.0
    %717 = vmatprep.subr.mxu0 0.0
    %718 = vmatpush1.xpose.msra.mxu0 0.0
    %719 = vmatprep.subr.mxu0 0.0
    %720 = vmatpush1.xpose.msra.mxu0 0.0
    %721 = vmatprep.subr.mxu0 0.0
    %722 = vmatpush1.xpose.msra.mxu0 0.0
    %723 = vmatprep.subr.mxu0 0.0
    %724 = vmatpush1.xpose.msra.mxu0 0.0
    %725 = vmatprep.subr.mxu0 0.0
    %726 = vmatpush1.xpose.msra.mxu0 0.0
    %727 = vmatprep.subr.mxu0 0.0
    %728 = vmatpush1.xpose.msra.mxu0 0.0
    %729 = vmatprep.subr.mxu0 0.0
    %730 = vmatpush1.xpose.msra.mxu0 0.0
    %731 = vmatprep.subr.mxu0 0.0
    %732 = vmatpush1.xpose.msra.mxu0 0.0
    %733 = vmatprep.subr.mxu0 0.0
    %734 = vmatpush1.xpose.msra.mxu0 0.0
    %735 = vmatprep.subr.mxu0 0.0
    %736 = vmatpush1.xpose.msra.mxu0 0.0
    %737 = vmatprep.subr.mxu0 0.0
    %738 = vmatpush1.xpose.msra.mxu0 0.0
    %739 = vmatprep.subr.mxu0 0.0
    %740 = vmatpush1.xpose.msra.mxu0 0.0
    %741 = vmatprep.subr.mxu0 0.0
    %742 = vmatpush1.xpose.msra.mxu0 0.0
    %743 = vmatprep.subr.mxu0 0.0
    %744 = vmatpush1.xpose.msra.mxu0 0.0
    %745 = vmatprep.subr.mxu0 0.0
    %746 = vmatpush1.xpose.msra.mxu0 0.0
    %747 = vmatprep.mubr.f32.mxu0 0.0
    %748 = vmatmul.mubr.f32.gmra.mrb[0].mxu0 %v679
    %v749 = vpop.f32.mrb[0].mxu0
    %v750 = vadd.f32 0.0, %v749
    %v751 = vpop.f32.mrb[0].mxu0
    %752 = vdwg.mxu0
    %v753 = vmul.f32 %v750, 0.35355338
    %v754 = vadd.f32 %v753, %v450
    %v755 = vsel %vm461, %v754, -inf
    %756 = vmax.xlane.f32.xlu0 %v755
    %v757 = vpop.xlane.xlu0 %756
    %v758 = vsub.f32 %v754, %v757
    %v759 = vmul.f32 %v758, 1.442695
    %v760 = vpow.pop %v759
    %v761 = vsel %vm461, %v760, 0.0
    %762 = vadd.xlane.f32.xlu0 %v761
    %v763 = vpop.xlane.xlu0 %762
    %v764 = vrcp.pop %v763
    %v765 = vmul.f32 %v760, %v764
    %766 = vrot.lane.b32.xlu0 %v301, 56
    %v767 = vpop.permute.xlu0 %766
    %v770 = vsel %vm461, %v765, 0
    %772 = vmatprep.subr.mxu0 0.0
    %773 = vmatpush1.msra.mxu0 %v767
    %774 = vmatprep.subr.mxu0 0.0
    %775 = vmatpush1.msra.mxu0 0.0
    %776 = vmatprep.subr.mxu0 0.0
    %777 = vmatpush1.msra.mxu0 0.0
    %778 = vmatprep.subr.mxu0 0.0
    %779 = vmatpush1.msra.mxu0 0.0
    %780 = vmatprep.subr.mxu0 0.0
    %781 = vmatpush1.msra.mxu0 0.0
    %782 = vmatprep.subr.mxu0 0.0
    %783 = vmatpush1.msra.mxu0 0.0
    %784 = vmatprep.subr.mxu0 0.0
    %785 = vmatpush1.msra.mxu0 0.0
    %786 = vmatprep.subr.mxu0 0.0
    %787 = vmatpush1.msra.mxu0 0.0
    %788 = vmatprep.subr.mxu0 0.0
    %789 = vmatpush1.msra.mxu0 0.0
    %790 = vmatprep.subr.mxu0 0.0
    %791 = vmatpush1.msra.mxu0 0.0
    %792 = vmatprep.subr.mxu0 0.0
    %793 = vmatpush1.msra.mxu0 0.0
    %794 = vmatprep.subr.mxu0 0.0
    %795 = vmatpush1.msra.mxu0 0.0
    %796 = vmatprep.subr.mxu0 0.0
    %797 = vmatpush1.msra.mxu0 0.0
    %798 = vmatprep.subr.mxu0 0.0
    %799 = vmatpush1.msra.mxu0 0.0
    %800 = vmatprep.subr.mxu0 0.0
    %801 = vmatpush1.msra.mxu0 0.0
    %802 = vmatprep.subr.mxu0 0.0
    %803 = vmatpush1.msra.mxu0 0.0
    %804 = vmatprep.subr.mxu0 0.0
    %805 = vmatpush1.msra.mxu0 0.0
    %806 = vmatprep.subr.mxu0 0.0
    %807 = vmatpush1.msra.mxu0 0.0
    %808 = vmatprep.subr.mxu0 0.0
    %809 = vmatpush1.msra.mxu0 0.0
    %810 = vmatprep.subr.mxu0 0.0
    %811 = vmatpush1.msra.mxu0 0.0
    %812 = vmatprep.subr.mxu0 0.0
    %813 = vmatpush1.msra.mxu0 0.0
    %814 = vmatprep.subr.mxu0 0.0
    %815 = vmatpush1.msra.mxu0 0.0
    %816 = vmatprep.subr.mxu0 0.0
    %817 = vmatpush1.msra.mxu0 0.0
    %818 = vmatprep.subr.mxu0 0.0
    %819 = vmatpush1.msra.mxu0 0.0
    %820 = vmatprep.subr.mxu0 0.0
    %821 = vmatpush1.msra.mxu0 0.0
    %822 = vmatprep.subr.mxu0 0.0
    %823 = vmatpush1.msra.mxu0 0.0
    %824 = vmatprep.subr.mxu0 0.0
    %825 = vmatpush1.msra.mxu0 0.0
    %826 = vmatprep.subr.mxu0 0.0
    %827 = vmatpush1.msra.mxu0 0.0
    %828 = vmatprep.subr.mxu0 0.0
    %829 = vmatpush1.msra.mxu0 0.0
    %830 = vmatprep.subr.mxu0 0.0
    %831 = vmatpush1.msra.mxu0 0.0
    %832 = vmatprep.subr.mxu0 0.0
    %833 = vmatpush1.msra.mxu0 0.0
    %834 = vmatprep.subr.mxu0 0.0
    %835 = vmatpush1.msra.mxu0 0.0
    %836 = vmatprep.mubr.f32.mxu0 0.0
    %837 = vmatmul.mubr.f32.gmra.mrb[0].mxu0 %v770
    %v838 = vpop.f32.mrb[0].mxu0
    %v839 = vadd.f32 0.0, %v838
    %v840 = vpop.f32.mrb[0].mxu0
    %841 = vdwg.mxu0
    %v842 = vpack.c.bf16 %v839, %v839
    %v843 = vpack.c.bf16 %v214, %v214
    %v845 = vsel %vm461, %v842, 0
    %v848 = vsel %vm630, %v843, 0
    %850 = vmatprep.subr.bf16.mxu0 0
    %851 = vmatpush1.bf16.msra.mxu0 %v848
    %852 = vmatprep.subr.bf16.mxu0 0
    %853 = vmatpush1.bf16.msra.mxu0 0
    %854 = vmatprep.subr.bf16.mxu0 0
    %855 = vmatpush1.bf16.msra.mxu0 0
    %856 = vmatprep.subr.bf16.mxu0 0
    %857 = vmatpush1.bf16.msra.mxu0 0
    %858 = vmatprep.subr.bf16.mxu0 0
    %859 = vmatpush1.bf16.msra.mxu0 0
    %860 = vmatprep.subr.bf16.mxu0 0
    %861 = vmatpush1.bf16.msra.mxu0 0
    %862 = vmatprep.subr.bf16.mxu0 0
    %863 = vmatpush1.bf16.msra.mxu0 0
    %864 = vmatprep.subr.bf16.mxu0 0
    %865 = vmatpush1.bf16.msra.mxu0 0
    %866 = vmatprep.subr.bf16.mxu0 0
    %867 = vmatpush1.bf16.msra.mxu0 0
    %868 = vmatprep.subr.bf16.mxu0 0
    %869 = vmatpush1.bf16.msra.mxu0 0
    %870 = vmatprep.subr.bf16.mxu0 0
    %871 = vmatpush1.bf16.msra.mxu0 0
    %872 = vmatprep.subr.bf16.mxu0 0
    %873 = vmatpush1.bf16.msra.mxu0 0
    %874 = vmatprep.subr.bf16.mxu0 0
    %875 = vmatpush1.bf16.msra.mxu0 0
    %876 = vmatprep.subr.bf16.mxu0 0
    %877 = vmatpush1.bf16.msra.mxu0 0
    %878 = vmatprep.subr.bf16.mxu0 0
    %879 = vmatpush1.bf16.msra.mxu0 0
    %880 = vmatprep.subr.bf16.mxu0 0
    %881 = vmatpush1.bf16.msra.mxu0 0
    %882 = vmatprep.mubr.bf16.mxu0 0
    %883 = vmatmul.mubr.bf16.gmra.mrb[0].mxu0 %v845
    %v884 = vpop.f32.mrb[0].mxu0
    %v885 = vadd.f32 0.0, %v884
    %v886 = vpop.f32.mrb[0].mxu0
    %v887 = vpop.f32.mrb[0].mxu0
    %v888 = vpop.f32.mrb[0].mxu0
    %889 = vdwg.mxu0
    %v890 = vadd.f32 %v674, %v885
    %891 = vrot.lane.b32.xlu0 %v301, 112
    %v892 = vpop.permute.xlu0 %891
    %893 = vrot.lane.b32.xlu0 %v301, 80
    %v894 = vpop.permute.xlu0 %893
    %v895 = vsel %vm461, %v892, 0
    %v897 = vsel %vm461, %v894, 0
    %899 = vmatprep.subr.mxu0 0.0
    %900 = vmatpush1.xpose.msra.mxu0 %v897
    %901 = vmatprep.subr.mxu0 0.0
    %902 = vmatpush1.xpose.msra.mxu0 0.0
    %903 = vmatprep.subr.mxu0 0.0
    %904 = vmatpush1.xpose.msra.mxu0 0.0
    %905 = vmatprep.subr.mxu0 0.0
    %906 = vmatpush1.xpose.msra.mxu0 0.0
    %907 = vmatprep.subr.mxu0 0.0
    %908 = vmatpush1.xpose.msra.mxu0 0.0
    %909 = vmatprep.subr.mxu0 0.0
    %910 = vmatpush1.xpose.msra.mxu0 0.0
    %911 = vmatprep.subr.mxu0 0.0
    %912 = vmatpush1.xpose.msra.mxu0 0.0
    %913 = vmatprep.subr.mxu0 0.0
    %914 = vmatpush1.xpose.msra.mxu0 0.0
    %915 = vmatprep.subr.mxu0 0.0
    %916 = vmatpush1.xpose.msra.mxu0 0.0
    %917 = vmatprep.subr.mxu0 0.0
    %918 = vmatpush1.xpose.msra.mxu0 0.0
    %919 = vmatprep.subr.mxu0 0.0
    %920 = vmatpush1.xpose.msra.mxu0 0.0
    %921 = vmatprep.subr.mxu0 0.0
    %922 = vmatpush1.xpose.msra.mxu0 0.0
    %923 = vmatprep.subr.mxu0 0.0
    %924 = vmatpush1.xpose.msra.mxu0 0.0
    %925 = vmatprep.subr.mxu0 0.0
    %926 = vmatpush1.xpose.msra.mxu0 0.0
    %927 = vmatprep.subr.mxu0 0.0
    %928 = vmatpush1.xpose.msra.mxu0 0.0
    %929 = vmatprep.subr.mxu0 0.0
    %930 = vmatpush1.xpose.msra.mxu0 0.0
    %931 = vmatprep.subr.mxu0 0.0
    %932 = vmatpush1.xpose.msra.mxu0 0.0
    %933 = vmatprep.subr.mxu0 0.0
    %934 = vmatpush1.xpose.msra.mxu0 0.0
    %935 = vmatprep.subr.mxu0 0.0
    %936 = vmatpush1.xpose.msra.mxu0 0.0
    %937 = vmatprep.subr.mxu0 0.0
    %938 = vmatpush1.xpose.msra.mxu0 0.0
    %939 = vmatprep.subr.mxu0 0.0
    %940 = vmatpush1.xpose.msra.mxu0 0.0
    %941 = vmatprep.subr.mxu0 0.0
    %942 = vmatpush1.xpose.msra.mxu0 0.0
    %943 = vmatprep.subr.mxu0 0.0
    %944 = vmatpush1.xpose.msra.mxu0 0.0
    %945 = vmatprep.subr.mxu0 0.0
    %946 = vmatpush1.xpose.msra.mxu0 0.0
    %947 = vmatprep.subr.mxu0 0.0
    %948 = vmatpush1.xpose.msra.mxu0 0.0
    %949 = vmatprep.subr.mxu0 0.0
    %950 = vmatpush1.xpose.msra.mxu0 0.0
    %951 = vmatprep.subr.mxu0 0.0
    %952 = vmatpush1.xpose.msra.mxu0 0.0
    %953 = vmatprep.subr.mxu0 0.0
    %954 = vmatpush1.xpose.msra.mxu0 0.0
    %955 = vmatprep.subr.mxu0 0.0
    %956 = vmatpush1.xpose.msra.mxu0 0.0
    %957 = vmatprep.subr.mxu0 0.0
    %958 = vmatpush1.xpose.msra.mxu0 0.0
    %959 = vmatprep.subr.mxu0 0.0
    %960 = vmatpush1.xpose.msra.mxu0 0.0
    %961 = vmatprep.subr.mxu0 0.0
    %962 = vmatpush1.xpose.msra.mxu0 0.0
    %963 = vmatprep.mubr.f32.mxu0 0.0
    %964 = vmatmul.mubr.f32.gmra.mrb[0].mxu0 %v895
    %v965 = vpop.f32.mrb[0].mxu0
    %v966 = vadd.f32 0.0, %v965
    %v967 = vpop.f32.mrb[0].mxu0
    %968 = vdwg.mxu0
    %v969 = vmul.f32 %v966, 0.35355338
    %v970 = vadd.f32 %v969, %v450
    %v971 = vsel %vm461, %v970, -inf
    %972 = vmax.xlane.f32.xlu0 %v971
    %v973 = vpop.xlane.xlu0 %972
    %v974 = vsub.f32 %v970, %v973
    %v975 = vmul.f32 %v974, 1.442695
    %v976 = vpow.pop %v975
    %v977 = vsel %vm461, %v976, 0.0
    %978 = vadd.xlane.f32.xlu0 %v977
    %v979 = vpop.xlane.xlu0 %978
    %v980 = vrcp.pop %v979
    %v981 = vmul.f32 %v976, %v980
    %982 = vrot.lane.b32.xlu0 %v301, 48
    %v983 = vpop.permute.xlu0 %982
    %v986 = vsel %vm461, %v981, 0
    %988 = vmatprep.subr.mxu0 0.0
    %989 = vmatpush1.msra.mxu0 %v983
    %990 = vmatprep.subr.mxu0 0.0
    %991 = vmatpush1.msra.mxu0 0.0
    %992 = vmatprep.subr.mxu0 0.0
    %993 = vmatpush1.msra.mxu0 0.0
    %994 = vmatprep.subr.mxu0 0.0
    %995 = vmatpush1.msra.mxu0 0.0
    %996 = vmatprep.subr.mxu0 0.0
    %997 = vmatpush1.msra.mxu0 0.0
    %998 = vmatprep.subr.mxu0 0.0
    %999 = vmatpush1.msra.mxu0 0.0
    %1000 = vmatprep.subr.mxu0 0.0
    %1001 = vmatpush1.msra.mxu0 0.0
    %1002 = vmatprep.subr.mxu0 0.0
    %1003 = vmatpush1.msra.mxu0 0.0
    %1004 = vmatprep.subr.mxu0 0.0
    %1005 = vmatpush1.msra.mxu0 0.0
    %1006 = vmatprep.subr.mxu0 0.0
    %1007 = vmatpush1.msra.mxu0 0.0
    %1008 = vmatprep.subr.mxu0 0.0
    %1009 = vmatpush1.msra.mxu0 0.0
    %1010 = vmatprep.subr.mxu0 0.0
    %1011 = vmatpush1.msra.mxu0 0.0
    %1012 = vmatprep.subr.mxu0 0.0
    %1013 = vmatpush1.msra.mxu0 0.0
    %1014 = vmatprep.subr.mxu0 0.0
    %1015 = vmatpush1.msra.mxu0 0.0
    %1016 = vmatprep.subr.mxu0 0.0
    %1017 = vmatpush1.msra.mxu0 0.0
    %1018 = vmatprep.subr.mxu0 0.0
    %1019 = vmatpush1.msra.mxu0 0.0
    %1020 = vmatprep.subr.mxu0 0.0
    %1021 = vmatpush1.msra.mxu0 0.0
    %1022 = vmatprep.subr.mxu0 0.0
    %1023 = vmatpush1.msra.mxu0 0.0
    %1024 = vmatprep.subr.mxu0 0.0
    %1025 = vmatpush1.msra.mxu0 0.0
    %1026 = vmatprep.subr.mxu0 0.0
    %1027 = vmatpush1.msra.mxu0 0.0
    %1028 = vmatprep.subr.mxu0 0.0
    %1029 = vmatpush1.msra.mxu0 0.0
    %1030 = vmatprep.subr.mxu0 0.0
    %1031 = vmatpush1.msra.mxu0 0.0
    %1032 = vmatprep.subr.mxu0 0.0
    %1033 = vmatpush1.msra.mxu0 0.0
    %1034 = vmatprep.subr.mxu0 0.0
    %1035 = vmatpush1.msra.mxu0 0.0
    %1036 = vmatprep.subr.mxu0 0.0
    %1037 = vmatpush1.msra.mxu0 0.0
    %1038 = vmatprep.subr.mxu0 0.0
    %1039 = vmatpush1.msra.mxu0 0.0
    %1040 = vmatprep.subr.mxu0 0.0
    %1041 = vmatpush1.msra.mxu0 0.0
    %1042 = vmatprep.subr.mxu0 0.0
    %1043 = vmatpush1.msra.mxu0 0.0
    %1044 = vmatprep.subr.mxu0 0.0
    %1045 = vmatpush1.msra.mxu0 0.0
    %1046 = vmatprep.subr.mxu0 0.0
    %1047 = vmatpush1.msra.mxu0 0.0
    %1048 = vmatprep.subr.mxu0 0.0
    %1049 = vmatpush1.msra.mxu0 0.0
    %1050 = vmatprep.subr.mxu0 0.0
    %1051 = vmatpush1.msra.mxu0 0.0
    %1052 = vmatprep.mubr.f32.mxu0 0.0
    %1053 = vmatmul.mubr.f32.gmra.mrb[0].mxu0 %v986
    %v1054 = vpop.f32.mrb[0].mxu0
    %v1055 = vadd.f32 0.0, %v1054
    %v1056 = vpop.f32.mrb[0].mxu0
    %1057 = vdwg.mxu0
    %v1058 = vpack.c.bf16 %v1055, %v1055
    %v1059 = vpack.c.bf16 %v215, %v215
    %v1061 = vsel %vm461, %v1058, 0
    %v1064 = vsel %vm630, %v1059, 0
    %1066 = vmatprep.subr.bf16.mxu0 0
    %1067 = vmatpush1.bf16.msra.mxu0 %v1064
    %1068 = vmatprep.subr.bf16.mxu0 0
    %1069 = vmatpush1.bf16.msra.mxu0 0
    %1070 = vmatprep.subr.bf16.mxu0 0
    %1071 = vmatpush1.bf16.msra.mxu0 0
    %1072 = vmatprep.subr.bf16.mxu0 0
    %1073 = vmatpush1.bf16.msra.mxu0 0
    %1074 = vmatprep.subr.bf16.mxu0 0
    %1075 = vmatpush1.bf16.msra.mxu0 0
    %1076 = vmatprep.subr.bf16.mxu0 0
    %1077 = vmatpush1.bf16.msra.mxu0 0
    %1078 = vmatprep.subr.bf16.mxu0 0
    %1079 = vmatpush1.bf16.msra.mxu0 0
    %1080 = vmatprep.subr.bf16.mxu0 0
    %1081 = vmatpush1.bf16.msra.mxu0 0
    %1082 = vmatprep.subr.bf16.mxu0 0
    %1083 = vmatpush1.bf16.msra.mxu0 0
    %1084 = vmatprep.subr.bf16.mxu0 0
    %1085 = vmatpush1.bf16.msra.mxu0 0
    %1086 = vmatprep.subr.bf16.mxu0 0
    %1087 = vmatpush1.bf16.msra.mxu0 0
    %1088 = vmatprep.subr.bf16.mxu0 0
    %1089 = vmatpush1.bf16.msra.mxu0 0
    %1090 = vmatprep.subr.bf16.mxu0 0
    %1091 = vmatpush1.bf16.msra.mxu0 0
    %1092 = vmatprep.subr.bf16.mxu0 0
    %1093 = vmatpush1.bf16.msra.mxu0 0
    %1094 = vmatprep.subr.bf16.mxu0 0
    %1095 = vmatpush1.bf16.msra.mxu0 0
    %1096 = vmatprep.subr.bf16.mxu0 0
    %1097 = vmatpush1.bf16.msra.mxu0 0
    %1098 = vmatprep.mubr.bf16.mxu0 0
    %1099 = vmatmul.mubr.bf16.gmra.mrb[0].mxu0 %v1061
    %v1100 = vpop.f32.mrb[0].mxu0
    %v1101 = vadd.f32 0.0, %v1100
    %v1102 = vpop.f32.mrb[0].mxu0
    %v1103 = vpop.f32.mrb[0].mxu0
    %v1104 = vpop.f32.mrb[0].mxu0
    %1105 = vdwg.mxu0
    %v1106 = vadd.f32 %v890, %v1101
    %1107 = vrot.lane.b32.xlu0 %v301, 104
    %v1108 = vpop.permute.xlu0 %1107
    %1109 = vrot.lane.b32.xlu0 %v301, 72
    %v1110 = vpop.permute.xlu0 %1109
    %v1111 = vsel %vm461, %v1108, 0
    %v1113 = vsel %vm461, %v1110, 0
    %1115 = vmatprep.subr.mxu0 0.0
    %1116 = vmatpush1.xpose.msra.mxu0 %v1113
    %1117 = vmatprep.subr.mxu0 0.0
    %1118 = vmatpush1.xpose.msra.mxu0 0.0
    %1119 = vmatprep.subr.mxu0 0.0
    %1120 = vmatpush1.xpose.msra.mxu0 0.0
    %1121 = vmatprep.subr.mxu0 0.0
    %1122 = vmatpush1.xpose.msra.mxu0 0.0
    %1123 = vmatprep.subr.mxu0 0.0
    %1124 = vmatpush1.xpose.msra.mxu0 0.0
    %1125 = vmatprep.subr.mxu0 0.0
    %1126 = vmatpush1.xpose.msra.mxu0 0.0
    %1127 = vmatprep.subr.mxu0 0.0
    %1128 = vmatpush1.xpose.msra.mxu0 0.0
    %1129 = vmatprep.subr.mxu0 0.0
    %1130 = vmatpush1.xpose.msra.mxu0 0.0
    %1131 = vmatprep.subr.mxu0 0.0
    %1132 = vmatpush1.xpose.msra.mxu0 0.0
    %1133 = vmatprep.subr.mxu0 0.0
    %1134 = vmatpush1.xpose.msra.mxu0 0.0
    %1135 = vmatprep.subr.mxu0 0.0
    %1136 = vmatpush1.xpose.msra.mxu0 0.0
    %1137 = vmatprep.subr.mxu0 0.0
    %1138 = vmatpush1.xpose.msra.mxu0 0.0
    %1139 = vmatprep.subr.mxu0 0.0
    %1140 = vmatpush1.xpose.msra.mxu0 0.0
    %1141 = vmatprep.subr.mxu0 0.0
    %1142 = vmatpush1.xpose.msra.mxu0 0.0
    %1143 = vmatprep.subr.mxu0 0.0
    %1144 = vmatpush1.xpose.msra.mxu0 0.0
    %1145 = vmatprep.subr.mxu0 0.0
    %1146 = vmatpush1.xpose.msra.mxu0 0.0
    %1147 = vmatprep.subr.mxu0 0.0
    %1148 = vmatpush1.xpose.msra.mxu0 0.0
    %1149 = vmatprep.subr.mxu0 0.0
    %1150 = vmatpush1.xpose.msra.mxu0 0.0
    %1151 = vmatprep.subr.mxu0 0.0
    %1152 = vmatpush1.xpose.msra.mxu0 0.0
    %1153 = vmatprep.subr.mxu0 0.0
    %1154 = vmatpush1.xpose.msra.mxu0 0.0
    %1155 = vmatprep.subr.mxu0 0.0
    %1156 = vmatpush1.xpose.msra.mxu0 0.0
    %1157 = vmatprep.subr.mxu0 0.0
    %1158 = vmatpush1.xpose.msra.mxu0 0.0
    %1159 = vmatprep.subr.mxu0 0.0
    %1160 = vmatpush1.xpose.msra.mxu0 0.0
    %1161 = vmatprep.subr.mxu0 0.0
    %1162 = vmatpush1.xpose.msra.mxu0 0.0
    %1163 = vmatprep.subr.mxu0 0.0
    %1164 = vmatpush1.xpose.msra.mxu0 0.0
    %1165 = vmatprep.subr.mxu0 0.0
    %1166 = vmatpush1.xpose.msra.mxu0 0.0
    %1167 = vmatprep.subr.mxu0 0.0
    %1168 = vmatpush1.xpose.msra.mxu0 0.0
    %1169 = vmatprep.subr.mxu0 0.0
    %1170 = vmatpush1.xpose.msra.mxu0 0.0
    %1171 = vmatprep.subr.mxu0 0.0
    %1172 = vmatpush1.xpose.msra.mxu0 0.0
    %1173 = vmatprep.subr.mxu0 0.0
    %1174 = vmatpush1.xpose.msra.mxu0 0.0
    %1175 = vmatprep.subr.mxu0 0.0
    %1176 = vmatpush1.xpose.msra.mxu0 0.0
    %1177 = vmatprep.subr.mxu0 0.0
    %1178 = vmatpush1.xpose.msra.mxu0 0.0
    %1179 = vmatprep.mubr.f32.mxu0 0.0
    %1180 = vmatmul.mubr.f32.gmra.mrb[0].mxu0 %v1111
    %v1181 = vpop.f32.mrb[0].mxu0
    %v1182 = vadd.f32 0.0, %v1181
    %v1183 = vpop.f32.mrb[0].mxu0
    %1184 = vdwg.mxu0
    %v1185 = vmul.f32 %v1182, 0.35355338
    %v1186 = vadd.f32 %v1185, %v450
    %v1187 = vsel %vm461, %v1186, -inf
    %1188 = vmax.xlane.f32.xlu0 %v1187
    %v1189 = vpop.xlane.xlu0 %1188
    %v1190 = vsub.f32 %v1186, %v1189
    %v1191 = vmul.f32 %v1190, 1.442695
    %v1192 = vpow.pop %v1191
    %v1193 = vsel %vm461, %v1192, 0.0
    %1194 = vadd.xlane.f32.xlu0 %v1193
    %v1195 = vpop.xlane.xlu0 %1194
    %v1196 = vrcp.pop %v1195
    %v1197 = vmul.f32 %v1192, %v1196
    %1198 = vrot.lane.b32.xlu0 %v301, 40
    %v1199 = vpop.permute.xlu0 %1198
    %v1202 = vsel %vm461, %v1197, 0
    %1204 = vmatprep.subr.mxu0 0.0
    %1205 = vmatpush1.msra.mxu0 %v1199
    %1206 = vmatprep.subr.mxu0 0.0
    %1207 = vmatpush1.msra.mxu0 0.0
    %1208 = vmatprep.subr.mxu0 0.0
    %1209 = vmatpush1.msra.mxu0 0.0
    %1210 = vmatprep.subr.mxu0 0.0
    %1211 = vmatpush1.msra.mxu0 0.0
    %1212 = vmatprep.subr.mxu0 0.0
    %1213 = vmatpush1.msra.mxu0 0.0
    %1214 = vmatprep.subr.mxu0 0.0
    %1215 = vmatpush1.msra.mxu0 0.0
    %1216 = vmatprep.subr.mxu0 0.0
    %1217 = vmatpush1.msra.mxu0 0.0
    %1218 = vmatprep.subr.mxu0 0.0
    %1219 = vmatpush1.msra.mxu0 0.0
    %1220 = vmatprep.subr.mxu0 0.0
    %1221 = vmatpush1.msra.mxu0 0.0
    %1222 = vmatprep.subr.mxu0 0.0
    %1223 = vmatpush1.msra.mxu0 0.0
    %1224 = vmatprep.subr.mxu0 0.0
    %1225 = vmatpush1.msra.mxu0 0.0
    %1226 = vmatprep.subr.mxu0 0.0
    %1227 = vmatpush1.msra.mxu0 0.0
    %1228 = vmatprep.subr.mxu0 0.0
    %1229 = vmatpush1.msra.mxu0 0.0
    %1230 = vmatprep.subr.mxu0 0.0
    %1231 = vmatpush1.msra.mxu0 0.0
    %1232 = vmatprep.subr.mxu0 0.0
    %1233 = vmatpush1.msra.mxu0 0.0
    %1234 = vmatprep.subr.mxu0 0.0
    %1235 = vmatpush1.msra.mxu0 0.0
    %1236 = vmatprep.subr.mxu0 0.0
    %1237 = vmatpush1.msra.mxu0 0.0
    %1238 = vmatprep.subr.mxu0 0.0
    %1239 = vmatpush1.msra.mxu0 0.0
    %1240 = vmatprep.subr.mxu0 0.0
    %1241 = vmatpush1.msra.mxu0 0.0
    %1242 = vmatprep.subr.mxu0 0.0
    %1243 = vmatpush1.msra.mxu0 0.0
    %1244 = vmatprep.subr.mxu0 0.0
    %1245 = vmatpush1.msra.mxu0 0.0
    %1246 = vmatprep.subr.mxu0 0.0
    %1247 = vmatpush1.msra.mxu0 0.0
    %1248 = vmatprep.subr.mxu0 0.0
    %1249 = vmatpush1.msra.mxu0 0.0
    %1250 = vmatprep.subr.mxu0 0.0
    %1251 = vmatpush1.msra.mxu0 0.0
    %1252 = vmatprep.subr.mxu0 0.0
    %1253 = vmatpush1.msra.mxu0 0.0
    %1254 = vmatprep.subr.mxu0 0.0
    %1255 = vmatpush1.msra.mxu0 0.0
    %1256 = vmatprep.subr.mxu0 0.0
    %1257 = vmatpush1.msra.mxu0 0.0
    %1258 = vmatprep.subr.mxu0 0.0
    %1259 = vmatpush1.msra.mxu0 0.0
    %1260 = vmatprep.subr.mxu0 0.0
    %1261 = vmatpush1.msra.mxu0 0.0
    %1262 = vmatprep.subr.mxu0 0.0
    %1263 = vmatpush1.msra.mxu0 0.0
    %1264 = vmatprep.subr.mxu0 0.0
    %1265 = vmatpush1.msra.mxu0 0.0
    %1266 = vmatprep.subr.mxu0 0.0
    %1267 = vmatpush1.msra.mxu0 0.0
    %1268 = vmatprep.mubr.f32.mxu0 0.0
    %1269 = vmatmul.mubr.f32.gmra.mrb[0].mxu0 %v1202
    %v1270 = vpop.f32.mrb[0].mxu0
    %v1271 = vadd.f32 0.0, %v1270
    %v1272 = vpop.f32.mrb[0].mxu0
    %1273 = vdwg.mxu0
    %v1274 = vpack.c.bf16 %v1271, %v1271
    %v1275 = vpack.c.bf16 %v216, %v216
    %v1277 = vsel %vm461, %v1274, 0
    %v1280 = vsel %vm630, %v1275, 0
    %1282 = vmatprep.subr.bf16.mxu0 0
    %1283 = vmatpush1.bf16.msra.mxu0 %v1280
    %1284 = vmatprep.subr.bf16.mxu0 0
    %1285 = vmatpush1.bf16.msra.mxu0 0
    %1286 = vmatprep.subr.bf16.mxu0 0
    %1287 = vmatpush1.bf16.msra.mxu0 0
    %1288 = vmatprep.subr.bf16.mxu0 0
    %1289 = vmatpush1.bf16.msra.mxu0 0
    %1290 = vmatprep.subr.bf16.mxu0 0
    %1291 = vmatpush1.bf16.msra.mxu0 0
    %1292 = vmatprep.subr.bf16.mxu0 0
    %1293 = vmatpush1.bf16.msra.mxu0 0
    %1294 = vmatprep.subr.bf16.mxu0 0
    %1295 = vmatpush1.bf16.msra.mxu0 0
    %1296 = vmatprep.subr.bf16.mxu0 0
    %1297 = vmatpush1.bf16.msra.mxu0 0
    %1298 = vmatprep.subr.bf16.mxu0 0
    %1299 = vmatpush1.bf16.msra.mxu0 0
    %1300 = vmatprep.subr.bf16.mxu0 0
    %1301 = vmatpush1.bf16.msra.mxu0 0
    %1302 = vmatprep.subr.bf16.mxu0 0
    %1303 = vmatpush1.bf16.msra.mxu0 0
    %1304 = vmatprep.subr.bf16.mxu0 0
    %1305 = vmatpush1.bf16.msra.mxu0 0
    %1306 = vmatprep.subr.bf16.mxu0 0
    %1307 = vmatpush1.bf16.msra.mxu0 0
    %1308 = vmatprep.subr.bf16.mxu0 0
    %1309 = vmatpush1.bf16.msra.mxu0 0
    %1310 = vmatprep.subr.bf16.mxu0 0
    %1311 = vmatpush1.bf16.msra.mxu0 0
    %1312 = vmatprep.subr.bf16.mxu0 0
    %1313 = vmatpush1.bf16.msra.mxu0 0
    %1314 = vmatprep.mubr.bf16.mxu0 0
    %1315 = vmatmul.mubr.bf16.gmra.mrb[0].mxu0 %v1277
    %v1316 = vpop.f32.mrb[0].mxu0
    %v1317 = vadd.f32 0.0, %v1316
    %v1318 = vpop.f32.mrb[0].mxu0
    %v1319 = vpop.f32.mrb[0].mxu0
    %v1320 = vpop.f32.mrb[0].mxu0
    %1321 = vdwg.mxu0
    %v1322 = vadd.f32 %v1106, %v1317
    %v1323 = vsel %vm262, %v1322, 0.0
    %1324 = vadd.xlane.f32.xlu0 %v1323
    %v1325 = vpop.xlane.xlu0 %1324
    %v1326 = vrcp.pop 32.0
    %v1327 = vmul.f32 %v1325, %v1326
    %v1328 = vsub.f32 %v1322, %v1327
    %v1329 = vmul.f32 %v1328, %v1328
    %v1330 = vsel %vm262, %v1329, 0.0
    %1331 = vadd.xlane.f32.xlu0 %v1330
    %v1332 = vpop.xlane.xlu0 %1331
    %v1333 = vmul.f32 %v1332, %v1326
    %v1334 = vadd.f32 %v1333, 1e-05
    %v1335 = vrsqrt.pop %v1334
    %v1336 = vmul.f32 %v1328, %v1335
    %v1338 = vlaneseq
    %v1339 = vshrl.u32 %v1338, 7
    %v1340 = vsub.s32 0, %v1339
    %v1341 = vrot.slane %v223, %v1340
    %v1343 = vmul.f32 %v1336, %v1341
    %v1345 = vlaneseq
    %v1346 = vshrl.u32 %v1345, 7
    %v1347 = vsub.s32 0, %v1346
    %v1348 = vrot.slane %v224, %v1347
    %v1350 = vadd.f32 %v1343, %v1348
    %v1351 = vpack.c.bf16 %v1350, %v1350
    %v1352 = vpack.c.bf16 %v230, %v229
    %v1353 = vpack.c.bf16 %v232, %v231
    %v1355 = vlaneseq
    %v1356 = vshrl.u32 %v1355, 7
    %v1357 = vsub.s32 0, %v1356
    %v1358 = vrot.slane %v233, %v1357
    %v1361 = vsel %vm262, %v1351, 0
    %1363 = vmatprep.subr.bf16.mxu0 0
    %1364 = vmatpush1.bf16.msra.mxu0 %v1352
    %1365 = vmatprep.subr.bf16.mxu0 0
    %1366 = vmatpush1.bf16.msra.mxu0 %v1353
    %1367 = vmatprep.subr.bf16.mxu0 0
    %1368 = vmatpush1.bf16.msra.mxu0 0
    %1369 = vmatprep.subr.bf16.mxu0 0
    %1370 = vmatpush1.bf16.msra.mxu0 0
    %1371 = vmatprep.subr.bf16.mxu0 0
    %1372 = vmatpush1.bf16.msra.mxu0 0
    %1373 = vmatprep.subr.bf16.mxu0 0
    %1374 = vmatpush1.bf16.msra.mxu0 0
    %1375 = vmatprep.subr.bf16.mxu0 0
    %1376 = vmatpush1.bf16.msra.mxu0 0
    %1377 = vmatprep.subr.bf16.mxu0 0
    %1378 = vmatpush1.bf16.msra.mxu0 0
    %1379 = vmatprep.subr.bf16.mxu0 0
    %1380 = vmatpush1.bf16.msra.mxu0 0
    %1381 = vmatprep.subr.bf16.mxu0 0
    %1382 = vmatpush1.bf16.msra.mxu0 0
    %1383 = vmatprep.subr.bf16.mxu0 0
    %1384 = vmatpush1.bf16.msra.mxu0 0
    %1385 = vmatprep.subr.bf16.mxu0 0
    %1386 = vmatpush1.bf16.msra.mxu0 0
    %1387 = vmatprep.subr.bf16.mxu0 0
    %1388 = vmatpush1.bf16.msra.mxu0 0
    %1389 = vmatprep.subr.bf16.mxu0 0
    %1390 = vmatpush1.bf16.msra.mxu0 0
    %1391 = vmatprep.subr.bf16.mxu0 0
    %1392 = vmatpush1.bf16.msra.mxu0 0
    %1393 = vmatprep.subr.bf16.mxu0 0
    %1394 = vmatpush1.bf16.msra.mxu0 0
    %1395 = vmatprep.mubr.bf16.mxu0 0
    %1396 = vmatmul.mubr.bf16.gmra.mrb[0].mxu0 %v1361
    %v1397 = vpop.f32.mrb[0].mxu0
    %v1398 = vadd.f32 %v1358, %v1397
    %v1399 = vpop.f32.mrb[0].mxu0
    %v1400 = vpop.f32.mrb[0].mxu0
    %v1401 = vpop.f32.mrb[0].mxu0
    %1402 = vdwg.mxu0
    %v1404 = vsel %vm461, %v1398, 0
    %v1407 = vsel %vm461, %v441, 0
    %1409 = vmatprep.subr.mxu0 0.0
    %1410 = vmatpush1.xpose.msra.mxu0 %v1407
    %1411 = vmatprep.subr.mxu0 0.0
    %1412 = vmatpush1.xpose.msra.mxu0 0.0
    %1413 = vmatprep.subr.mxu0 0.0
    %1414 = vmatpush1.xpose.msra.mxu0 0.0
    %1415 = vmatprep.subr.mxu0 0.0
    %1416 = vmatpush1.xpose.msra.mxu0 0.0
    %1417 = vmatprep.subr.mxu0 0.0
    %1418 = vmatpush1.xpose.msra.mxu0 0.0
    %1419 = vmatprep.subr.mxu0 0.0
    %1420 = vmatpush1.xpose.msra.mxu0 0.0
    %1421 = vmatprep.subr.mxu0 0.0
    %1422 = vmatpush1.xpose.msra.mxu0 0.0
    %1423 = vmatprep.subr.mxu0 0.0
    %1424 = vmatpush1.xpose.msra.mxu0 0.0
    %1425 = vmatprep.subr.mxu0 0.0
    %1426 = vmatpush1.xpose.msra.mxu0 0.0
    %1427 = vmatprep.subr.mxu0 0.0
    %1428 = vmatpush1.xpose.msra.mxu0 0.0
    %1429 = vmatprep.subr.mxu0 0.0
    %1430 = vmatpush1.xpose.msra.mxu0 0.0
    %1431 = vmatprep.subr.mxu0 0.0
    %1432 = vmatpush1.xpose.msra.mxu0 0.0
    %1433 = vmatprep.subr.mxu0 0.0
    %1434 = vmatpush1.xpose.msra.mxu0 0.0
    %1435 = vmatprep.subr.mxu0 0.0
    %1436 = vmatpush1.xpose.msra.mxu0 0.0
    %1437 = vmatprep.subr.mxu0 0.0
    %1438 = vmatpush1.xpose.msra.mxu0 0.0
    %1439 = vmatprep.subr.mxu0 0.0
    %1440 = vmatpush1.xpose.msra.mxu0 0.0
    %1441 = vmatprep.subr.mxu0 0.0
    %1442 = vmatpush1.xpose.msra.mxu0 0.0
    %1443 = vmatprep.subr.mxu0 0.0
    %1444 = vmatpush1.xpose.msra.mxu0 0.0
    %1445 = vmatprep.subr.mxu0 0.0
    %1446 = vmatpush1.xpose.msra.mxu0 0.0
    %1447 = vmatprep.subr.mxu0 0.0
    %1448 = vmatpush1.xpose.msra.mxu0 0.0
    %1449 = vmatprep.subr.mxu0 0.0
    %1450 = vmatpush1.xpose.msra.mxu0 0.0
    %1451 = vmatprep.subr.mxu0 0.0
    %1452 = vmatpush1.xpose.msra.mxu0 0.0
    %1453 = vmatprep.subr.mxu0 0.0
    %1454 = vmatpush1.xpose.msra.mxu0 0.0
    %1455 = vmatprep.subr.mxu0 0.0
    %1456 = vmatpush1.xpose.msra.mxu0 0.0
    %1457 = vmatprep.subr.mxu0 0.0
    %1458 = vmatpush1.xpose.msra.mxu0 0.0
    %1459 = vmatprep.subr.mxu0 0.0
    %1460 = vmatpush1.xpose.msra.mxu0 0.0
    %1461 = vmatprep.subr.mxu0 0.0
    %1462 = vmatpush1.xpose.msra.mxu0 0.0
    %1463 = vmatprep.subr.mxu0 0.0
    %1464 = vmatpush1.xpose.msra.mxu0 0.0
    %1465 = vmatprep.subr.mxu0 0.0
    %1466 = vmatpush1.xpose.msra.mxu0 0.0
    %1467 = vmatprep.subr.mxu0 0.0
    %1468 = vmatpush1.xpose.msra.mxu0 0.0
    %1469 = vmatprep.subr.mxu0 0.0
    %1470 = vmatpush1.xpose.msra.mxu0 0.0
    %1471 = vmatprep.subr.mxu0 0.0
    %1472 = vmatpush1.xpose.msra.mxu0 0.0
    %1473 = vmatprep.mubr.f32.mxu0 0.0
    %1474 = vmatmul.mubr.f32.gmra.mrb[0].mxu0 %v1404
    %v1475 = vpop.f32.mrb[0].mxu0
    %v1476 = vadd.f32 0.0, %v1475
    %v1477 = vpop.f32.mrb[0].mxu0
    %1478 = vdwg.mxu0
    %v1479 = vmul.f32 %v1476, 0.35355338
    %v1480 = vlaneseq
    %v1481 = vshrl.u32 %v1480, 7
    %v1482 = vsub.s32 0, %v1481
    %v1483 = vrot.slane %v210, %v1482
    %v1484 = vadd.f32 %v1479, %v1483
    %vm1485 = vcmask 23552
    %v1486 = vsel %vm1485, %v1484, -inf
    %1487 = vmax.xlane.f32.xlu0 %v1486
    %v1488 = vpop.xlane.xlu0 %1487
    %v1489 = vsub.f32 %v1484, %v1488
    %v1490 = vmul.f32 %v1489, 1.442695
    %v1491 = vpow.pop %v1490
    %v1492 = vsel %vm1485, %v1491, 0.0
    %1493 = vadd.xlane.f32.xlu0 %v1492
    %v1494 = vpop.xlane.xlu0 %1493
    %v1495 = vrcp.pop %v1494
    %v1496 = vmul.f32 %v1491, %v1495
    %v1497 = vadd.f32 %v1496, 0.0
    %1498 = vrot.lane.b32.xlu0 %v1398, 120
    %v1499 = vpop.permute.xlu0 %1498
    %1500 = vrot.lane.b32.xlu0 %v441, 120
    %v1501 = vpop.permute.xlu0 %1500
    %v1502 = vsel %vm461, %v1499, 0
    %v1504 = vsel %vm461, %v1501, 0
    %1506 = vmatprep.subr.mxu0 0.0
    %1507 = vmatpush1.xpose.msra.mxu0 %v1504
    %1508 = vmatprep.subr.mxu0 0.0
    %1509 = vmatpush1.xpose.msra.mxu0 0.0
    %1510 = vmatprep.subr.mxu0 0.0
    %1511 = vmatpush1.xpose.msra.mxu0 0.0
    %1512 = vmatprep.subr.mxu0 0.0
    %1513 = vmatpush1.xpose.msra.mxu0 0.0
    %1514 = vmatprep.subr.mxu0 0.0
    %1515 = vmatpush1.xpose.msra.mxu0 0.0
    %1516 = vmatprep.subr.mxu0 0.0
    %1517 = vmatpush1.xpose.msra.mxu0 0.0
    %1518 = vmatprep.subr.mxu0 0.0
    %1519 = vmatpush1.xpose.msra.mxu0 0.0
    %1520 = vmatprep.subr.mxu0 0.0
    %1521 = vmatpush1.xpose.msra.mxu0 0.0
    %1522 = vmatprep.subr.mxu0 0.0
    %1523 = vmatpush1.xpose.msra.mxu0 0.0
    %1524 = vmatprep.subr.mxu0 0.0
    %1525 = vmatpush1.xpose.msra.mxu0 0.0
    %1526 = vmatprep.subr.mxu0 0.0
    %1527 = vmatpush1.xpose.msra.mxu0 0.0
    %1528 = vmatprep.subr.mxu0 0.0
    %1529 = vmatpush1.xpose.msra.mxu0 0.0
    %1530 = vmatprep.subr.mxu0 0.0
    %1531 = vmatpush1.xpose.msra.mxu0 0.0
    %1532 = vmatprep.subr.mxu0 0.0
    %1533 = vmatpush1.xpose.msra.mxu0 0.0
    %1534 = vmatprep.subr.mxu0 0.0
    %1535 = vmatpush1.xpose.msra.mxu0 0.0
    %1536 = vmatprep.subr.mxu0 0.0
    %1537 = vmatpush1.xpose.msra.mxu0 0.0
    %1538 = vmatprep.subr.mxu0 0.0
    %1539 = vmatpush1.xpose.msra.mxu0 0.0
    %1540 = vmatprep.subr.mxu0 0.0
    %1541 = vmatpush1.xpose.msra.mxu0 0.0
    %1542 = vmatprep.subr.mxu0 0.0
    %1543 = vmatpush1.xpose.msra.mxu0 0.0
    %1544 = vmatprep.subr.mxu0 0.0
    %1545 = vmatpush1.xpose.msra.mxu0 0.0
    %1546 = vmatprep.subr.mxu0 0.0
    %1547 = vmatpush1.xpose.msra.mxu0 0.0
    %1548 = vmatprep.subr.mxu0 0.0
    %1549 = vmatpush1.xpose.msra.mxu0 0.0
    %1550 = vmatprep.subr.mxu0 0.0
    %1551 = vmatpush1.xpose.msra.mxu0 0.0
    %1552 = vmatprep.subr.mxu0 0.0
    %1553 = vmatpush1.xpose.msra.mxu0 0.0
    %1554 = vmatprep.subr.mxu0 0.0
    %1555 = vmatpush1.xpose.msra.mxu0 0.0
    %1556 = vmatprep.subr.mxu0 0.0
    %1557 = vmatpush1.xpose.msra.mxu0 0.0
    %1558 = vmatprep.subr.mxu0 0.0
    %1559 = vmatpush1.xpose.msra.mxu0 0.0
    %1560 = vmatprep.subr.mxu0 0.0
    %1561 = vmatpush1.xpose.msra.mxu0 0.0
    %1562 = vmatprep.subr.mxu0 0.0
    %1563 = vmatpush1.xpose.msra.mxu0 0.0
    %1564 = vmatprep.subr.mxu0 0.0
    %1565 = vmatpush1.xpose.msra.mxu0 0.0
    %1566 = vmatprep.subr.mxu0 0.0
    %1567 = vmatpush1.xpose.msra.mxu0 0.0
    %1568 = vmatprep.subr.mxu0 0.0
    %1569 = vmatpush1.xpose.msra.mxu0 0.0
    %1570 = vmatprep.mubr.f32.mxu0 0.0
    %1571 = vmatmul.mubr.f32.gmra.mrb[0].mxu0 %v1502
    %v1572 = vpop.f32.mrb[0].mxu0
    %v1573 = vadd.f32 0.0, %v1572
    %v1574 = vpop.f32.mrb[0].mxu0
    %1575 = vdwg.mxu0
    %v1576 = vmul.f32 %v1573, 0.35355338
    %v1577 = vadd.f32 %v1576, %v1483
    %v1578 = vsel %vm1485, %v1577, -inf
    %1579 = vmax.xlane.f32.xlu0 %v1578
    %v1580 = vpop.xlane.xlu0 %1579
    %v1581 = vsub.f32 %v1577, %v1580
    %v1582 = vmul.f32 %v1581, 1.442695
    %v1583 = vpow.pop %v1582
    %v1584 = vsel %vm1485, %v1583, 0.0
    %1585 = vadd.xlane.f32.xlu0 %v1584
    %v1586 = vpop.xlane.xlu0 %1585
    %v1587 = vrcp.pop %v1586
    %v1588 = vmul.f32 %v1583, %v1587
    %v1589 = vadd.f32 %v1497, %v1588
    %1590 = vrot.lane.b32.xlu0 %v1398, 112
    %v1591 = vpop.permute.xlu0 %1590
    %1592 = vrot.lane.b32.xlu0 %v441, 112
    %v1593 = vpop.permute.xlu0 %1592
    %v1594 = vsel %vm461, %v1591, 0
    %v1596 = vsel %vm461, %v1593, 0
    %1598 = vmatprep.subr.mxu0 0.0
    %1599 = vmatpush1.xpose.msra.mxu0 %v1596
    %1600 = vmatprep.subr.mxu0 0.0
    %1601 = vmatpush1.xpose.msra.mxu0 0.0
    %1602 = vmatprep.subr.mxu0 0.0
    %1603 = vmatpush1.xpose.msra.mxu0 0.0
    %1604 = vmatprep.subr.mxu0 0.0
    %1605 = vmatpush1.xpose.msra.mxu0 0.0
    %1606 = vmatprep.subr.mxu0 0.0
    %1607 = vmatpush1.xpose.msra.mxu0 0.0
    %1608 = vmatprep.subr.mxu0 0.0
    %1609 = vmatpush1.xpose.msra.mxu0 0.0
    %1610 = vmatprep.subr.mxu0 0.0
    %1611 = vmatpush1.xpose.msra.mxu0 0.0
    %1612 = vmatprep.subr.mxu0 0.0
    %1613 = vmatpush1.xpose.msra.mxu0 0.0
    %1614 = vmatprep.subr.mxu0 0.0
    %1615 = vmatpush1.xpose.msra.mxu0 0.0
    %1616 = vmatprep.subr.mxu0 0.0
    %1617 = vmatpush1.xpose.msra.mxu0 0.0
    %1618 = vmatprep.subr.mxu0 0.0
    %1619 = vmatpush1.xpose.msra.mxu0 0.0
    %1620 = vmatprep.subr.mxu0 0.0
    %1621 = vmatpush1.xpose.msra.mxu0 0.0
    %1622 = vmatprep.subr.mxu0 0.0
    %1623 = vmatpush1.xpose.msra.mxu0 0.0
    %1624 = vmatprep.subr.mxu0 0.0
    %1625 = vmatpush1.xpose.msra.mxu0 0.0
    %1626 = vmatprep.subr.mxu0 0.0
    %1627 = vmatpush1.xpose.msra.mxu0 0.0
    %1628 = vmatprep.subr.mxu0 0.0
    %1629 = vmatpush1.xpose.msra.mxu0 0.0
    %1630 = vmatprep.subr.mxu0 0.0
    %1631 = vmatpush1.xpose.msra.mxu0 0.0
    %1632 = vmatprep.subr.mxu0 0.0
    %1633 = vmatpush1.xpose.msra.mxu0 0.0
    %1634 = vmatprep.subr.mxu0 0.0
    %1635 = vmatpush1.xpose.msra.mxu0 0.0
    %1636 = vmatprep.subr.mxu0 0.0
    %1637 = vmatpush1.xpose.msra.mxu0 0.0
    %1638 = vmatprep.subr.mxu0 0.0
    %1639 = vmatpush1.xpose.msra.mxu0 0.0
    %1640 = vmatprep.subr.mxu0 0.0
    %1641 = vmatpush1.xpose.msra.mxu0 0.0
    %1642 = vmatprep.subr.mxu0 0.0
    %1643 = vmatpush1.xpose.msra.mxu0 0.0
    %1644 = vmatprep.subr.mxu0 0.0
    %1645 = vmatpush1.xpose.msra.mxu0 0.0
    %1646 = vmatprep.subr.mxu0 0.0
    %1647 = vmatpush1.xpose.msra.mxu0 0.0
    %1648 = vmatprep.subr.mxu0 0.0
    %1649 = vmatpush1.xpose.msra.mxu0 0.0
    %1650 = vmatprep.subr.mxu0 0.0
    %1651 = vmatpush1.xpose.msra.mxu0 0.0
    %1652 = vmatprep.subr.mxu0 0.0
    %1653 = vmatpush1.xpose.msra.mxu0 0.0
    %1654 = vmatprep.subr.mxu0 0.0
    %1655 = vmatpush1.xpose.msra.mxu0 0.0
    %1656 = vmatprep.subr.mxu0 0.0
    %1657 = vmatpush1.xpose.msra.mxu0 0.0
    %1658 = vmatprep.subr.mxu0 0.0
    %1659 = vmatpush1.xpose.msra.mxu0 0.0
    %1660 = vmatprep.subr.mxu0 0.0
    %1661 = vmatpush1.xpose.msra.mxu0 0.0
    %1662 = vmatprep.mubr.f32.mxu0 0.0
    %1663 = vmatmul.mubr.f32.gmra.mrb[0].mxu0 %v1594
    %v1664 = vpop.f32.mrb[0].mxu0
    %v1665 = vadd.f32 0.0, %v1664
    %v1666 = vpop.f32.mrb[0].mxu0
    %1667 = vdwg.mxu0
    %v1668 = vmul.f32 %v1665, 0.35355338
    %v1669 = vadd.f32 %v1668, %v1483
    %v1670 = vsel %vm1485, %v1669, -inf
    %1671 = vmax.xlane.f32.xlu0 %v1670
    %v1672 = vpop.xlane.xlu0 %1671
    %v1673 = vsub.f32 %v1669, %v1672
    %v1674 = vmul.f32 %v1673, 1.442695
    %v1675 = vpow.pop %v1674
    %v1676 = vsel %vm1485, %v1675, 0.0
    %1677 = vadd.xlane.f32.xlu0 %v1676
    %v1678 = vpop.xlane.xlu0 %1677
    %v1679 = vrcp.pop %v1678
    %v1680 = vmul.f32 %v1675, %v1679
    %v1681 = vadd.f32 %v1589, %v1680
    %1682 = vrot.lane.b32.xlu0 %v1398, 104
    %v1683 = vpop.permute.xlu0 %1682
    %1684 = vrot.lane.b32.xlu0 %v441, 104
    %v1685 = vpop.permute.xlu0 %1684
    %v1686 = vsel %vm461, %v1683, 0
    %v1688 = vsel %vm461, %v1685, 0
    %1690 = vmatprep.subr.mxu0 0.0
    %1691 = vmatpush1.xpose.msra.mxu0 %v1688
    %1692 = vmatprep.subr.mxu0 0.0
    %1693 = vmatpush1.xpose.msra.mxu0 0.0
    %1694 = vmatprep.subr.mxu0 0.0
    %1695 = vmatpush1.xpose.msra.mxu0 0.0
    %1696 = vmatprep.subr.mxu0 0.0
    %1697 = vmatpush1.xpose.msra.mxu0 0.0
    %1698 = vmatprep.subr.mxu0 0.0
    %1699 = vmatpush1.xpose.msra.mxu0 0.0
    %1700 = vmatprep.subr.mxu0 0.0
    %1701 = vmatpush1.xpose.msra.mxu0 0.0
    %1702 = vmatprep.subr.mxu0 0.0
    %1703 = vmatpush1.xpose.msra.mxu0 0.0
    %1704 = vmatprep.subr.mxu0 0.0
    %1705 = vmatpush1.xpose.msra.mxu0 0.0
    %1706 = vmatprep.subr.mxu0 0.0
    %1707 = vmatpush1.xpose.msra.mxu0 0.0
    %1708 = vmatprep.subr.mxu0 0.0
    %1709 = vmatpush1.xpose.msra.mxu0 0.0
    %1710 = vmatprep.subr.mxu0 0.0
    %1711 = vmatpush1.xpose.msra.mxu0 0.0
    %1712 = vmatprep.subr.mxu0 0.0
    %1713 = vmatpush1.xpose.msra.mxu0 0.0
    %1714 = vmatprep.subr.mxu0 0.0
    %1715 = vmatpush1.xpose.msra.mxu0 0.0
    %1716 = vmatprep.subr.mxu0 0.0
    %1717 = vmatpush1.xpose.msra.mxu0 0.0
    %1718 = vmatprep.subr.mxu0 0.0
    %1719 = vmatpush1.xpose.msra.mxu0 0.0
    %1720 = vmatprep.subr.mxu0 0.0
    %1721 = vmatpush1.xpose.msra.mxu0 0.0
    %1722 = vmatprep.subr.mxu0 0.0
    %1723 = vmatpush1.xpose.msra.mxu0 0.0
    %1724 = vmatprep.subr.mxu0 0.0
    %1725 = vmatpush1.xpose.msra.mxu0 0.0
    %1726 = vmatprep.subr.mxu0 0.0
    %1727 = vmatpush1.xpose.msra.mxu0 0.0
    %1728 = vmatprep.subr.mxu0 0.0
    %1729 = vmatpush1.xpose.msra.mxu0 0.0
    %1730 = vmatprep.subr.mxu0 0.0
    %1731 = vmatpush1.xpose.msra.mxu0 0.0
    %1732 = vmatprep.subr.mxu0 0.0
    %1733 = vmatpush1.xpose.msra.mxu0 0.0
    %1734 = vmatprep.subr.mxu0 0.0
    %1735 = vmatpush1.xpose.msra.mxu0 0.0
    %1736 = vmatprep.subr.mxu0 0.0
    %1737 = vmatpush1.xpose.msra.mxu0 0.0
    %1738 = vmatprep.subr.mxu0 0.0
    %1739 = vmatpush1.xpose.msra.mxu0 0.0
    %1740 = vmatprep.subr.mxu0 0.0
    %1741 = vmatpush1.xpose.msra.mxu0 0.0
    %1742 = vmatprep.subr.mxu0 0.0
    %1743 = vmatpush1.xpose.msra.mxu0 0.0
    %1744 = vmatprep.subr.mxu0 0.0
    %1745 = vmatpush1.xpose.msra.mxu0 0.0
    %1746 = vmatprep.subr.mxu0 0.0
    %1747 = vmatpush1.xpose.msra.mxu0 0.0
    %1748 = vmatprep.subr.mxu0 0.0
    %1749 = vmatpush1.xpose.msra.mxu0 0.0
    %1750 = vmatprep.subr.mxu0 0.0
    %1751 = vmatpush1.xpose.msra.mxu0 0.0
    %1752 = vmatprep.subr.mxu0 0.0
    %1753 = vmatpush1.xpose.msra.mxu0 0.0
    %1754 = vmatprep.mubr.f32.mxu0 0.0
    %1755 = vmatmul.mubr.f32.gmra.mrb[0].mxu0 %v1686
    %v1756 = vpop.f32.mrb[0].mxu0
    %v1757 = vadd.f32 0.0, %v1756
    %v1758 = vpop.f32.mrb[0].mxu0
    %1759 = vdwg.mxu0
    %v1760 = vmul.f32 %v1757, 0.35355338
    %v1761 = vadd.f32 %v1760, %v1483
    %v1762 = vsel %vm1485, %v1761, -inf
    %1763 = vmax.xlane.f32.xlu0 %v1762
    %v1764 = vpop.xlane.xlu0 %1763
    %v1765 = vsub.f32 %v1761, %v1764
    %v1766 = vmul.f32 %v1765, 1.442695
    %v1767 = vpow.pop %v1766
    %v1768 = vsel %vm1485, %v1767, 0.0
    %1769 = vadd.xlane.f32.xlu0 %v1768
    %v1770 = vpop.xlane.xlu0 %1769
    %v1771 = vrcp.pop %v1770
    %v1772 = vmul.f32 %v1767, %v1771
    %v1773 = vadd.f32 %v1681, %v1772
    %v1774 = vmul.f32 %v1773, 0.25
    %v1775 = vlaneseq
    %v1776 = vshrl.u32 %v1775, 7
    %v1777 = vsub.s32 0, %v1776
    %v1778 = vrot.slane %v212, %v1777
    %v1779 = vmul.f32 %v1774, %v1778
    %v1780 = vadd.f32 %v1779, 0.0
    %1781 = vrot.lane.b32.xlu0 %v1398, 96
    %v1782 = vpop.permute.xlu0 %1781
    %v1783 = vsel %vm461, %v1782, 0
    %v1786 = vsel %vm461, %v367, 0
    %1788 = vmatprep.subr.mxu0 0.0
    %1789 = vmatpush1.xpose.msra.mxu0 %v1786
    %1790 = vmatprep.subr.mxu0 0.0
    %1791 = vmatpush1.xpose.msra.mxu0 0.0
    %1792 = vmatprep.subr.mxu0 0.0
    %1793 = vmatpush1.xpose.msra.mxu0 0.0
    %1794 = vmatprep.subr.mxu0 0.0
    %1795 = vmatpush1.xpose.msra.mxu0 0.0
    %1796 = vmatprep.subr.mxu0 0.0
    %1797 = vmatpush1.xpose.msra.mxu0 0.0
    %1798 = vmatprep.subr.mxu0 0.0
    %1799 = vmatpush1.xpose.msra.mxu0 0.0
    %1800 = vmatprep.subr.mxu0 0.0
    %1801 = vmatpush1.xpose.msra.mxu0 0.0
    %1802 = vmatprep.subr.mxu0 0.0
    %1803 = vmatpush1.xpose.msra.mxu0 0.0
    %1804 = vmatprep.subr.mxu0 0.0
    %1805 = vmatpush1.xpose.msra.mxu0 0.0
    %1806 = vmatprep.subr.mxu0 0.0
    %1807 = vmatpush1.xpose.msra.mxu0 0.0
    %1808 = vmatprep.subr.mxu0 0.0
    %1809 = vmatpush1.xpose.msra.mxu0 0.0
    %1810 = vmatprep.subr.mxu0 0.0
    %1811 = vmatpush1.xpose.msra.mxu0 0.0
    %1812 = vmatprep.subr.mxu0 0.0
    %1813 = vmatpush1.xpose.msra.mxu0 0.0
    %1814 = vmatprep.subr.mxu0 0.0
    %1815 = vmatpush1.xpose.msra.mxu0 0.0
    %1816 = vmatprep.subr.mxu0 0.0
    %1817 = vmatpush1.xpose.msra.mxu0 0.0
    %1818 = vmatprep.subr.mxu0 0.0
    %1819 = vmatpush1.xpose.msra.mxu0 0.0
    %1820 = vmatprep.subr.mxu0 0.0
    %1821 = vmatpush1.xpose.msra.mxu0 0.0
    %1822 = vmatprep.subr.mxu0 0.0
    %1823 = vmatpush1.xpose.msra.mxu0 0.0
    %1824 = vmatprep.subr.mxu0 0.0
    %1825 = vmatpush1.xpose.msra.mxu0 0.0
    %1826 = vmatprep.subr.mxu0 0.0
    %1827 = vmatpush1.xpose.msra.mxu0 0.0
    %1828 = vmatprep.subr.mxu0 0.0
    %1829 = vmatpush1.xpose.msra.mxu0 0.0
    %1830 = vmatprep.subr.mxu0 0.0
    %1831 = vmatpush1.xpose.msra.mxu0 0.0
    %1832 = vmatprep.subr.mxu0 0.0
    %1833 = vmatpush1.xpose.msra.mxu0 0.0
    %1834 = vmatprep.subr.mxu0 0.0
    %1835 = vmatpush1.xpose.msra.mxu0 0.0
    %1836 = vmatprep.subr.mxu0 0.0
    %1837 = vmatpush1.xpose.msra.mxu0 0.0
    %1838 = vmatprep.subr.mxu0 0.0
    %1839 = vmatpush1.xpose.msra.mxu0 0.0
    %1840 = vmatprep.subr.mxu0 0.0
    %1841 = vmatpush1.xpose.msra.mxu0 0.0
    %1842 = vmatprep.subr.mxu0 0.0
    %1843 = vmatpush1.xpose.msra.mxu0 0.0
    %1844 = vmatprep.subr.mxu0 0.0
    %1845 = vmatpush1.xpose.msra.mxu0 0.0
    %1846 = vmatprep.subr.mxu0 0.0
    %1847 = vmatpush1.xpose.msra.mxu0 0.0
    %1848 = vmatprep.subr.mxu0 0.0
    %1849 = vmatpush1.xpose.msra.mxu0 0.0
    %1850 = vmatprep.subr.mxu0 0.0
    %1851 = vmatpush1.xpose.msra.mxu0 0.0
    %1852 = vmatprep.mubr.f32.mxu0 0.0
    %1853 = vmatmul.mubr.f32.gmra.mrb[0].mxu0 %v1783
    %v1854 = vpop.f32.mrb[0].mxu0
    %v1855 = vadd.f32 0.0, %v1854
    %v1856 = vpop.f32.mrb[0].mxu0
    %1857 = vdwg.mxu0
    %v1858 = vmul.f32 %v1855, 0.35355338
    %v1859 = vlaneseq
    %v1860 = vshrl.u32 %v1859, 7
    %v1861 = vsub.s32 0, %v1860
    %v1862 = vrot.slane %v211, %v1861
    %v1863 = vadd.f32 %v1858, %v1862
    %v1864 = vsel %vm461, %v1863, -inf
    %1865 = vmax.xlane.f32.xlu0 %v1864
    %v1866 = vpop.xlane.xlu0 %1865
    %v1867 = vsub.f32 %v1863, %v1866
    %v1868 = vmul.f32 %v1867, 1.442695
    %v1869 = vpow.pop %v1868
    %v1870 = vsel %vm461, %v1869, 0.0
    %1871 = vadd.xlane.f32.xlu0 %v1870
    %v1872 = vpop.xlane.xlu0 %1871
    %v1873 = vrcp.pop %v1872
    %v1874 = vmul.f32 %v1869, %v1873
    %1875 = vrot.lane.b32.xlu0 %v367, 96
    %v1876 = vpop.permute.xlu0 %1875
    %v1879 = vsel %vm461, %v1874, 0
    %1881 = vmatprep.subr.mxu0 0.0
    %1882 = vmatpush1.msra.mxu0 %v1876
    %1883 = vmatprep.subr.mxu0 0.0
    %1884 = vmatpush1.msra.mxu0 0.0
    %1885 = vmatprep.subr.mxu0 0.0
    %1886 = vmatpush1.msra.mxu0 0.0
    %1887 = vmatprep.subr.mxu0 0.0
    %1888 = vmatpush1.msra.mxu0 0.0
    %1889 = vmatprep.subr.mxu0 0.0
    %1890 = vmatpush1.msra.mxu0 0.0
    %1891 = vmatprep.subr.mxu0 0.0
    %1892 = vmatpush1.msra.mxu0 0.0
    %1893 = vmatprep.subr.mxu0 0.0
    %1894 = vmatpush1.msra.mxu0 0.0
    %1895 = vmatprep.subr.mxu0 0.0
    %1896 = vmatpush1.msra.mxu0 0.0
    %1897 = vmatprep.subr.mxu0 0.0
    %1898 = vmatpush1.msra.mxu0 0.0
    %1899 = vmatprep.subr.mxu0 0.0
    %1900 = vmatpush1.msra.mxu0 0.0
    %1901 = vmatprep.subr.mxu0 0.0
    %1902 = vmatpush1.msra.mxu0 0.0
    %1903 = vmatprep.subr.mxu0 0.0
    %1904 = vmatpush1.msra.mxu0 0.0
    %1905 = vmatprep.subr.mxu0 0.0
    %1906 = vmatpush1.msra.mxu0 0.0
    %1907 = vmatprep.subr.mxu0 0.0
    %1908 = vmatpush1.msra.mxu0 0.0
    %1909 = vmatprep.subr.mxu0 0.0
    %1910 = vmatpush1.msra.mxu0 0.0
    %1911 = vmatprep.subr.mxu0 0.0
    %1912 = vmatpush1.msra.mxu0 0.0
    %1913 = vmatprep.subr.mxu0 0.0
    %1914 = vmatpush1.msra.mxu0 0.0
    %1915 = vmatprep.subr.mxu0 0.0
    %1916 = vmatpush1.msra.mxu0 0.0
    %1917 = vmatprep.subr.mxu0 0.0
    %1918 = vmatpush1.msra.mxu0 0.0
    %1919 = vmatprep.subr.mxu0 0.0
    %1920 = vmatpush1.msra.mxu0 0.0
    %1921 = vmatprep.subr.mxu0 0.0
    %1922 = vmatpush1.msra.mxu0 0.0
    %1923 = vmatprep.subr.mxu0 0.0
    %1924 = vmatpush1.msra.mxu0 0.0
    %1925 = vmatprep.subr.mxu0 0.0
    %1926 = vmatpush1.msra.mxu0 0.0
    %1927 = vmatprep.subr.mxu0 0.0
    %1928 = vmatpush1.msra.mxu0 0.0
    %1929 = vmatprep.subr.mxu0 0.0
    %1930 = vmatpush1.msra.mxu0 0.0
    %1931 = vmatprep.subr.mxu0 0.0
    %1932 = vmatpush1.msra.mxu0 0.0
    %1933 = vmatprep.subr.mxu0 0.0
    %1934 = vmatpush1.msra.mxu0 0.0
    %1935 = vmatprep.subr.mxu0 0.0
    %1936 = vmatpush1.msra.mxu0 0.0
    %1937 = vmatprep.subr.mxu0 0.0
    %1938 = vmatpush1.msra.mxu0 0.0
    %1939 = vmatprep.subr.mxu0 0.0
    %1940 = vmatpush1.msra.mxu0 0.0
    %1941 = vmatprep.subr.mxu0 0.0
    %1942 = vmatpush1.msra.mxu0 0.0
    %1943 = vmatprep.subr.mxu0 0.0
    %1944 = vmatpush1.msra.mxu0 0.0
    %1945 = vmatprep.mubr.f32.mxu0 0.0
    %1946 = vmatmul.mubr.f32.gmra.mrb[0].mxu0 %v1879
    %v1947 = vpop.f32.mrb[0].mxu0
    %v1948 = vadd.f32 0.0, %v1947
    %v1949 = vpop.f32.mrb[0].mxu0
    %1950 = vdwg.mxu0
    %1952 = vset.pattern.permute.xlu0 0
    %1953 = vperm.xlu0 %1952, %v1779
    %v1954 = vpop.permute.xlu0 %1953
    %v1956 = vmul.f32 %v1954, %v1948
    %v1957 = vadd.f32 %v1956, 0.0
    %1958 = vrot.lane.b32.xlu0 %v1398, 88
    %v1959 = vpop.permute.xlu0 %1958
    %1960 = vrot.lane.b32.xlu0 %v367, 120
    %v1961 = vpop.permute.xlu0 %1960
    %v1962 = vsel %vm461, %v1959, 0
    %v1964 = vsel %vm461, %v1961, 0
    %1966 = vmatprep.subr.mxu0 0.0
    %1967 = vmatpush1.xpose.msra.mxu0 %v1964
    %1968 = vmatprep.subr.mxu0 0.0
    %1969 = vmatpush1.xpose.msra.mxu0 0.0
    %1970 = vmatprep.subr.mxu0 0.0
    %1971 = vmatpush1.xpose.msra.mxu0 0.0
    %1972 = vmatprep.subr.mxu0 0.0
    %1973 = vmatpush1.xpose.msra.mxu0 0.0
    %1974 = vmatprep.subr.mxu0 0.0
    %1975 = vmatpush1.xpose.msra.mxu0 0.0
    %1976 = vmatprep.subr.mxu0 0.0
    %1977 = vmatpush1.xpose.msra.mxu0 0.0
    %1978 = vmatprep.subr.mxu0 0.0
    %1979 = vmatpush1.xpose.msra.mxu0 0.0
    %1980 = vmatprep.subr.mxu0 0.0
    %1981 = vmatpush1.xpose.msra.mxu0 0.0
    %1982 = vmatprep.subr.mxu0 0.0
    %1983 = vmatpush1.xpose.msra.mxu0 0.0
    %1984 = vmatprep.subr.mxu0 0.0
    %1985 = vmatpush1.xpose.msra.mxu0 0.0
    %1986 = vmatprep.subr.mxu0 0.0
    %1987 = vmatpush1.xpose.msra.mxu0 0.0
    %1988 = vmatprep.subr.mxu0 0.0
    %1989 = vmatpush1.xpose.msra.mxu0 0.0
    %1990 = vmatprep.subr.mxu0 0.0
    %1991 = vmatpush1.xpose.msra.mxu0 0.0
    %1992 = vmatprep.subr.mxu0 0.0
    %1993 = vmatpush1.xpose.msra.mxu0 0.0
    %1994 = vmatprep.subr.mxu0 0.0
    %1995 = vmatpush1.xpose.msra.mxu0 0.0
    %1996 = vmatprep.subr.mxu0 0.0
    %1997 = vmatpush1.xpose.msra.mxu0 0.0
    %1998 = vmatprep.subr.mxu0 0.0
    %1999 = vmatpush1.xpose.msra.mxu0 0.0
    %2000 = vmatprep.subr.mxu0 0.0
    %2001 = vmatpush1.xpose.msra.mxu0 0.0
    %2002 = vmatprep.subr.mxu0 0.0
    %2003 = vmatpush1.xpose.msra.mxu0 0.0
    %2004 = vmatprep.subr.mxu0 0.0
    %2005 = vmatpush1.xpose.msra.mxu0 0.0
    %2006 = vmatprep.subr.mxu0 0.0
    %2007 = vmatpush1.xpose.msra.mxu0 0.0
    %2008 = vmatprep.subr.mxu0 0.0
    %2009 = vmatpush1.xpose.msra.mxu0 0.0
    %2010 = vmatprep.subr.mxu0 0.0
    %2011 = vmatpush1.xpose.msra.mxu0 0.0
    %2012 = vmatprep.subr.mxu0 0.0
    %2013 = vmatpush1.xpose.msra.mxu0 0.0
    %2014 = vmatprep.subr.mxu0 0.0
    %2015 = vmatpush1.xpose.msra.mxu0 0.0
    %2016 = vmatprep.subr.mxu0 0.0
    %2017 = vmatpush1.xpose.msra.mxu0 0.0
    %2018 = vmatprep.subr.mxu0 0.0
    %2019 = vmatpush1.xpose.msra.mxu0 0.0
    %2020 = vmatprep.subr.mxu0 0.0
    %2021 = vmatpush1.xpose.msra.mxu0 0.0
    %2022 = vmatprep.subr.mxu0 0.0
    %2023 = vmatpush1.xpose.msra.mxu0 0.0
    %2024 = vmatprep.subr.mxu0 0.0
    %2025 = vmatpush1.xpose.msra.mxu0 0.0
    %2026 = vmatprep.subr.mxu0 0.0
    %2027 = vmatpush1.xpose.msra.mxu0 0.0
    %2028 = vmatprep.subr.mxu0 0.0
    %2029 = vmatpush1.xpose.msra.mxu0 0.0
    %2030 = vmatprep.mubr.f32.mxu0 0.0
    %2031 = vmatmul.mubr.f32.gmra.mrb[0].mxu0 %v1962
    %v2032 = vpop.f32.mrb[0].mxu0
    %v2033 = vadd.f32 0.0, %v2032
    %v2034 = vpop.f32.mrb[0].mxu0
    %2035 = vdwg.mxu0
    %v2036 = vmul.f32 %v2033, 0.35355338
    %v2037 = vadd.f32 %v2036, %v1862
    %v2038 = vsel %vm461, %v2037, -inf
    %2039 = vmax.xlane.f32.xlu0 %v2038
    %v2040 = vpop.xlane.xlu0 %2039
    %v2041 = vsub.f32 %v2037, %v2040
    %v2042 = vmul.f32 %v2041, 1.442695
    %v2043 = vpow.pop %v2042
    %v2044 = vsel %vm461, %v2043, 0.0
    %2045 = vadd.xlane.f32.xlu0 %v2044
    %v2046 = vpop.xlane.xlu0 %2045
    %v2047 = vrcp.pop %v2046
    %v2048 = vmul.f32 %v2043, %v2047
    %2049 = vrot.lane.b32.xlu0 %v367, 88
    %v2050 = vpop.permute.xlu0 %2049
    %v2053 = vsel %vm461, %v2048, 0
    %2055 = vmatprep.subr.mxu0 0.0
    %2056 = vmatpush1.msra.mxu0 %v2050
    %2057 = vmatprep.subr.mxu0 0.0
    %2058 = vmatpush1.msra.mxu0 0.0
    %2059 = vmatprep.subr.mxu0 0.0
    %2060 = vmatpush1.msra.mxu0 0.0
    %2061 = vmatprep.subr.mxu0 0.0
    %2062 = vmatpush1.msra.mxu0 0.0
    %2063 = vmatprep.subr.mxu0 0.0
    %2064 = vmatpush1.msra.mxu0 0.0
    %2065 = vmatprep.subr.mxu0 0.0
    %2066 = vmatpush1.msra.mxu0 0.0
    %2067 = vmatprep.subr.mxu0 0.0
    %2068 = vmatpush1.msra.mxu0 0.0
    %2069 = vmatprep.subr.mxu0 0.0
    %2070 = vmatpush1.msra.mxu0 0.0
    %2071 = vmatprep.subr.mxu0 0.0
    %2072 = vmatpush1.msra.mxu0 0.0
    %2073 = vmatprep.subr.mxu0 0.0
    %2074 = vmatpush1.msra.mxu0 0.0
    %2075 = vmatprep.subr.mxu0 0.0
    %2076 = vmatpush1.msra.mxu0 0.0
    %2077 = vmatprep.subr.mxu0 0.0
    %2078 = vmatpush1.msra.mxu0 0.0
    %2079 = vmatprep.subr.mxu0 0.0
    %2080 = vmatpush1.msra.mxu0 0.0
    %2081 = vmatprep.subr.mxu0 0.0
    %2082 = vmatpush1.msra.mxu0 0.0
    %2083 = vmatprep.subr.mxu0 0.0
    %2084 = vmatpush1.msra.mxu0 0.0
    %2085 = vmatprep.subr.mxu0 0.0
    %2086 = vmatpush1.msra.mxu0 0.0
    %2087 = vmatprep.subr.mxu0 0.0
    %2088 = vmatpush1.msra.mxu0 0.0
    %2089 = vmatprep.subr.mxu0 0.0
    %2090 = vmatpush1.msra.mxu0 0.0
    %2091 = vmatprep.subr.mxu0 0.0
    %2092 = vmatpush1.msra.mxu0 0.0
    %2093 = vmatprep.subr.mxu0 0.0
    %2094 = vmatpush1.msra.mxu0 0.0
    %2095 = vmatprep.subr.mxu0 0.0
    %2096 = vmatpush1.msra.mxu0 0.0
    %2097 = vmatprep.subr.mxu0 0.0
    %2098 = vmatpush1.msra.mxu0 0.0
    %2099 = vmatprep.subr.mxu0 0.0
    %2100 = vmatpush1.msra.mxu0 0.0
    %2101 = vmatprep.subr.mxu0 0.0
    %2102 = vmatpush1.msra.mxu0 0.0
    %2103 = vmatprep.subr.mxu0 0.0
    %2104 = vmatpush1.msra.mxu0 0.0
    %2105 = vmatprep.subr.mxu0 0.0
    %2106 = vmatpush1.msra.mxu0 0.0
    %2107 = vmatprep.subr.mxu0 0.0
    %2108 = vmatpush1.msra.mxu0 0.0
    %2109 = vmatprep.subr.mxu0 0.0
    %2110 = vmatpush1.msra.mxu0 0.0
    %2111 = vmatprep.subr.mxu0 0.0
    %2112 = vmatpush1.msra.mxu0 0.0
    %2113 = vmatprep.subr.mxu0 0.0
    %2114 = vmatpush1.msra.mxu0 0.0
    %2115 = vmatprep.subr.mxu0 0.0
    %2116 = vmatpush1.msra.mxu0 0.0
    %2117 = vmatprep.subr.mxu0 0.0
    %2118 = vmatpush1.msra.mxu0 0.0
    %2119 = vmatprep.mubr.f32.mxu0 0.0
    %2120 = vmatmul.mubr.f32.gmra.mrb[0].mxu0 %v2053
    %v2121 = vpop.f32.mrb[0].mxu0
    %v2122 = vadd.f32 0.0, %v2121
    %v2123 = vpop.f32.mrb[0].mxu0
    %2124 = vdwg.mxu0
    %v2125 = vmul.f32 %v1954, %v2122
    %v2126 = vadd.f32 %v2125, 0.0
    %2127 = vrot.lane.b32.xlu0 %v1398, 80
    %v2128 = vpop.permute.xlu0 %2127
    %2129 = vrot.lane.b32.xlu0 %v367, 112
    %v2130 = vpop.permute.xlu0 %2129
    %v2131 = vsel %vm461, %v2128, 0
    %v2133 = vsel %vm461, %v2130, 0
    %2135 = vmatprep.subr.mxu0 0.0
    %2136 = vmatpush1.xpose.msra.mxu0 %v2133
    %2137 = vmatprep.subr.mxu0 0.0
    %2138 = vmatpush1.xpose.msra.mxu0 0.0
    %2139 = vmatprep.subr.mxu0 0.0
    %2140 = vmatpush1.xpose.msra.mxu0 0.0
    %2141 = vmatprep.subr.mxu0 0.0
    %2142 = vmatpush1.xpose.msra.mxu0 0.0
    %2143 = vmatprep.subr.mxu0 0.0
    %2144 = vmatpush1.xpose.msra.mxu0 0.0
    %2145 = vmatprep.subr.mxu0 0.0
    %2146 = vmatpush1.xpose.msra.mxu0 0.0
    %2147 = vmatprep.subr.mxu0 0.0
    %2148 = vmatpush1.xpose.msra.mxu0 0.0
    %2149 = vmatprep.subr.mxu0 0.0
    %2150 = vmatpush1.xpose.msra.mxu0 0.0
    %2151 = vmatprep.subr.mxu0 0.0
    %2152 = vmatpush1.xpose.msra.mxu0 0.0
    %2153 = vmatprep.subr.mxu0 0.0
    %2154 = vmatpush1.xpose.msra.mxu0 0.0
    %2155 = vmatprep.subr.mxu0 0.0
    %2156 = vmatpush1.xpose.msra.mxu0 0.0
    %2157 = vmatprep.subr.mxu0 0.0
    %2158 = vmatpush1.xpose.msra.mxu0 0.0
    %2159 = vmatprep.subr.mxu0 0.0
    %2160 = vmatpush1.xpose.msra.mxu0 0.0
    %2161 = vmatprep.subr.mxu0 0.0
    %2162 = vmatpush1.xpose.msra.mxu0 0.0
    %2163 = vmatprep.subr.mxu0 0.0
    %2164 = vmatpush1.xpose.msra.mxu0 0.0
    %2165 = vmatprep.subr.mxu0 0.0
    %2166 = vmatpush1.xpose.msra.mxu0 0.0
    %2167 = vmatprep.subr.mxu0 0.0
    %2168 = vmatpush1.xpose.msra.mxu0 0.0
    %2169 = vmatprep.subr.mxu0 0.0
    %2170 = vmatpush1.xpose.msra.mxu0 0.0
    %2171 = vmatprep.subr.mxu0 0.0
    %2172 = vmatpush1.xpose.msra.mxu0 0.0
    %2173 = vmatprep.subr.mxu0 0.0
    %2174 = vmatpush1.xpose.msra.mxu0 0.0
    %2175 = vmatprep.subr.mxu0 0.0
    %2176 = vmatpush1.xpose.msra.mxu0 0.0
    %2177 = vmatprep.subr.mxu0 0.0
    %2178 = vmatpush1.xpose.msra.mxu0 0.0
    %2179 = vmatprep.subr.mxu0 0.0
    %2180 = vmatpush1.xpose.msra.mxu0 0.0
    %2181 = vmatprep.subr.mxu0 0.0
    %2182 = vmatpush1.xpose.msra.mxu0 0.0
    %2183 = vmatprep.subr.mxu0 0.0
    %2184 = vmatpush1.xpose.msra.mxu0 0.0
    %2185 = vmatprep.subr.mxu0 0.0
    %2186 = vmatpush1.xpose.msra.mxu0 0.0
    %2187 = vmatprep.subr.mxu0 0.0
    %2188 = vmatpush1.xpose.msra.mxu0 0.0
    %2189 = vmatprep.subr.mxu0 0.0
    %2190 = vmatpush1.xpose.msra.mxu0 0.0
    %2191 = vmatprep.subr.mxu0 0.0
    %2192 = vmatpush1.xpose.msra.mxu0 0.0
    %2193 = vmatprep.subr.mxu0 0.0
    %2194 = vmatpush1.xpose.msra.mxu0 0.0
    %2195 = vmatprep.subr.mxu0 0.0
    %2196 = vmatpush1.xpose.msra.mxu0 0.0
    %2197 = vmatprep.subr.mxu0 0.0
    %2198 = vmatpush1.xpose.msra.mxu0 0.0
    %2199 = vmatprep.mubr.f32.mxu0 0.0
    %2200 = vmatmul.mubr.f32.gmra.mrb[0].mxu0 %v2131
    %v2201 = vpop.f32.mrb[0].mxu0
    %v2202 = vadd.f32 0.0, %v2201
    %v2203 = vpop.f32.mrb[0].mxu0
    %2204 = vdwg.mxu0
    %v2205 = vmul.f32 %v2202, 0.35355338
    %v2206 = vadd.f32 %v2205, %v1862
    %v2207 = vsel %vm461, %v2206, -inf
    %2208 = vmax.xlane.f32.xlu0 %v2207
    %v2209 = vpop.xlane.xlu0 %2208
    %v2210 = vsub.f32 %v2206, %v2209
    %v2211 = vmul.f32 %v2210, 1.442695
    %v2212 = vpow.pop %v2211
    %v2213 = vsel %vm461, %v2212, 0.0
    %2214 = vadd.xlane.f32.xlu0 %v2213
    %v2215 = vpop.xlane.xlu0 %2214
    %v2216 = vrcp.pop %v2215
    %v2217 = vmul.f32 %v2212, %v2216
    %2218 = vrot.lane.b32.xlu0 %v367, 80
    %v2219 = vpop.permute.xlu0 %2218
    %v2222 = vsel %vm461, %v2217, 0
    %2224 = vmatprep.subr.mxu0 0.0
    %2225 = vmatpush1.msra.mxu0 %v2219
    %2226 = vmatprep.subr.mxu0 0.0
    %2227 = vmatpush1.msra.mxu0 0.0
    %2228 = vmatprep.subr.mxu0 0.0
    %2229 = vmatpush1.msra.mxu0 0.0
    %2230 = vmatprep.subr.mxu0 0.0
    %2231 = vmatpush1.msra.mxu0 0.0
    %2232 = vmatprep.subr.mxu0 0.0
    %2233 = vmatpush1.msra.mxu0 0.0
    %2234 = vmatprep.subr.mxu0 0.0
    %2235 = vmatpush1.msra.mxu0 0.0
    %2236 = vmatprep.subr.mxu0 0.0
    %2237 = vmatpush1.msra.mxu0 0.0
    %2238 = vmatprep.subr.mxu0 0.0
    %2239 = vmatpush1.msra.mxu0 0.0
    %2240 = vmatprep.subr.mxu0 0.0
    %2241 = vmatpush1.msra.mxu0 0.0
    %2242 = vmatprep.subr.mxu0 0.0
    %2243 = vmatpush1.msra.mxu0 0.0
    %2244 = vmatprep.subr.mxu0 0.0
    %2245 = vmatpush1.msra.mxu0 0.0
    %2246 = vmatprep.subr.mxu0 0.0
    %2247 = vmatpush1.msra.mxu0 0.0
    %2248 = vmatprep.subr.mxu0 0.0
    %2249 = vmatpush1.msra.mxu0 0.0
    %2250 = vmatprep.subr.mxu0 0.0
    %2251 = vmatpush1.msra.mxu0 0.0
    %2252 = vmatprep.subr.mxu0 0.0
    %2253 = vmatpush1.msra.mxu0 0.0
    %2254 = vmatprep.subr.mxu0 0.0
    %2255 = vmatpush1.msra.mxu0 0.0
    %2256 = vmatprep.subr.mxu0 0.0
    %2257 = vmatpush1.msra.mxu0 0.0
    %2258 = vmatprep.subr.mxu0 0.0
    %2259 = vmatpush1.msra.mxu0 0.0
    %2260 = vmatprep.subr.mxu0 0.0
    %2261 = vmatpush1.msra.mxu0 0.0
    %2262 = vmatprep.subr.mxu0 0.0
    %2263 = vmatpush1.msra.mxu0 0.0
    %2264 = vmatprep.subr.mxu0 0.0
    %2265 = vmatpush1.msra.mxu0 0.0
    %2266 = vmatprep.subr.mxu0 0.0
    %2267 = vmatpush1.msra.mxu0 0.0
    %2268 = vmatprep.subr.mxu0 0.0
    %2269 = vmatpush1.msra.mxu0 0.0
    %2270 = vmatprep.subr.mxu0 0.0
    %2271 = vmatpush1.msra.mxu0 0.0
    %2272 = vmatprep.subr.mxu0 0.0
    %2273 = vmatpush1.msra.mxu0 0.0
    %2274 = vmatprep.subr.mxu0 0.0
    %2275 = vmatpush1.msra.mxu0 0.0
    %2276 = vmatprep.subr.mxu0 0.0
    %2277 = vmatpush1.msra.mxu0 0.0
    %2278 = vmatprep.subr.mxu0 0.0
    %2279 = vmatpush1.msra.mxu0 0.0
    %2280 = vmatprep.subr.mxu0 0.0
    %2281 = vmatpush1.msra.mxu0 0.0
    %2282 = vmatprep.subr.mxu0 0.0
    %2283 = vmatpush1.msra.mxu0 0.0
    %2284 = vmatprep.subr.mxu0 0.0
    %2285 = vmatpush1.msra.mxu0 0.0
    %2286 = vmatprep.subr.mxu0 0.0
    %2287 = vmatpush1.msra.mxu0 0.0
    %2288 = vmatprep.mubr.f32.mxu0 0.0
    %2289 = vmatmul.mubr.f32.gmra.mrb[0].mxu0 %v2222
    %v2290 = vpop.f32.mrb[0].mxu0
    %v2291 = vadd.f32 0.0, %v2290
    %v2292 = vpop.f32.mrb[0].mxu0
    %2293 = vdwg.mxu0
    %v2294 = vmul.f32 %v1954, %v2291
    %v2295 = vadd.f32 %v2294, 0.0
    %2296 = vrot.lane.b32.xlu0 %v1398, 72
    %v2297 = vpop.permute.xlu0 %2296
    %2298 = vrot.lane.b32.xlu0 %v367, 104
    %v2299 = vpop.permute.xlu0 %2298
    %v2300 = vsel %vm461, %v2297, 0
    %v2302 = vsel %vm461, %v2299, 0
    %2304 = vmatprep.subr.mxu0 0.0
    %2305 = vmatpush1.xpose.msra.mxu0 %v2302
    %2306 = vmatprep.subr.mxu0 0.0
    %2307 = vmatpush1.xpose.msra.mxu0 0.0
    %2308 = vmatprep.subr.mxu0 0.0
    %2309 = vmatpush1.xpose.msra.mxu0 0.0
    %2310 = vmatprep.subr.mxu0 0.0
    %2311 = vmatpush1.xpose.msra.mxu0 0.0
    %2312 = vmatprep.subr.mxu0 0.0
    %2313 = vmatpush1.xpose.msra.mxu0 0.0
    %2314 = vmatprep.subr.mxu0 0.0
    %2315 = vmatpush1.xpose.msra.mxu0 0.0
    %2316 = vmatprep.subr.mxu0 0.0
    %2317 = vmatpush1.xpose.msra.mxu0 0.0
    %2318 = vmatprep.subr.mxu0 0.0
    %2319 = vmatpush1.xpose.msra.mxu0 0.0
    %2320 = vmatprep.subr.mxu0 0.0
    %2321 = vmatpush1.xpose.msra.mxu0 0.0
    %2322 = vmatprep.subr.mxu0 0.0
    %2323 = vmatpush1.xpose.msra.mxu0 0.0
    %2324 = vmatprep.subr.mxu0 0.0
    %2325 = vmatpush1.xpose.msra.mxu0 0.0
    %2326 = vmatprep.subr.mxu0 0.0
    %2327 = vmatpush1.xpose.msra.mxu0 0.0
    %2328 = vmatprep.subr.mxu0 0.0
    %2329 = vmatpush1.xpose.msra.mxu0 0.0
    %2330 = vmatprep.subr.mxu0 0.0
    %2331 = vmatpush1.xpose.msra.mxu0 0.0
    %2332 = vmatprep.subr.mxu0 0.0
    %2333 = vmatpush1.xpose.msra.mxu0 0.0
    %2334 = vmatprep.subr.mxu0 0.0
    %2335 = vmatpush1.xpose.msra.mxu0 0.0
    %2336 = vmatprep.subr.mxu0 0.0
    %2337 = vmatpush1.xpose.msra.mxu0 0.0
    %2338 = vmatprep.subr.mxu0 0.0
    %2339 = vmatpush1.xpose.msra.mxu0 0.0
    %2340 = vmatprep.subr.mxu0 0.0
    %2341 = vmatpush1.xpose.msra.mxu0 0.0
    %2342 = vmatprep.subr.mxu0 0.0
    %2343 = vmatpush1.xpose.msra.mxu0 0.0
    %2344 = vmatprep.subr.mxu0 0.0
    %2345 = vmatpush1.xpose.msra.mxu0 0.0
    %2346 = vmatprep.subr.mxu0 0.0
    %2347 = vmatpush1.xpose.msra.mxu0 0.0
    %2348 = vmatprep.subr.mxu0 0.0
    %2349 = vmatpush1.xpose.msra.mxu0 0.0
    %2350 = vmatprep.subr.mxu0 0.0
    %2351 = vmatpush1.xpose.msra.mxu0 0.0
    %2352 = vmatprep.subr.mxu0 0.0
    %2353 = vmatpush1.xpose.msra.mxu0 0.0
    %2354 = vmatprep.subr.mxu0 0.0
    %2355 = vmatpush1.xpose.msra.mxu0 0.0
    %2356 = vmatprep.subr.mxu0 0.0
    %2357 = vmatpush1.xpose.msra.mxu0 0.0
    %2358 = vmatprep.subr.mxu0 0.0
    %2359 = vmatpush1.xpose.msra.mxu0 0.0
    %2360 = vmatprep.subr.mxu0 0.0
    %2361 = vmatpush1.xpose.msra.mxu0 0.0
    %2362 = vmatprep.subr.mxu0 0.0
    %2363 = vmatpush1.xpose.msra.mxu0 0.0
    %2364 = vmatprep.subr.mxu0 0.0
    %2365 = vmatpush1.xpose.msra.mxu0 0.0
    %2366 = vmatprep.subr.mxu0 0.0
    %2367 = vmatpush1.xpose.msra.mxu0 0.0
    %2368 = vmatprep.mubr.f32.mxu0 0.0
    %2369 = vmatmul.mubr.f32.gmra.mrb[0].mxu0 %v2300
    %v2370 = vpop.f32.mrb[0].mxu0
    %v2371 = vadd.f32 0.0, %v2370
    %v2372 = vpop.f32.mrb[0].mxu0
    %2373 = vdwg.mxu0
    %v2374 = vmul.f32 %v2371, 0.35355338
    %v2375 = vadd.f32 %v2374, %v1862
    %v2376 = vsel %vm461, %v2375, -inf
    %2377 = vmax.xlane.f32.xlu0 %v2376
    %v2378 = vpop.xlane.xlu0 %2377
    %v2379 = vsub.f32 %v2375, %v2378
    %v2380 = vmul.f32 %v2379, 1.442695
    %v2381 = vpow.pop %v2380
    %v2382 = vsel %vm461, %v2381, 0.0
    %2383 = vadd.xlane.f32.xlu0 %v2382
    %v2384 = vpop.xlane.xlu0 %2383
    %v2385 = vrcp.pop %v2384
    %v2386 = vmul.f32 %v2381, %v2385
    %2387 = vrot.lane.b32.xlu0 %v367, 72
    %v2388 = vpop.permute.xlu0 %2387
    %v2391 = vsel %vm461, %v2386, 0
    %2393 = vmatprep.subr.mxu0 0.0
    %2394 = vmatpush1.msra.mxu0 %v2388
    %2395 = vmatprep.subr.mxu0 0.0
    %2396 = vmatpush1.msra.mxu0 0.0
    %2397 = vmatprep.subr.mxu0 0.0
    %2398 = vmatpush1.msra.mxu0 0.0
    %2399 = vmatprep.subr.mxu0 0.0
    %2400 = vmatpush1.msra.mxu0 0.0
    %2401 = vmatprep.subr.mxu0 0.0
    %2402 = vmatpush1.msra.mxu0 0.0
    %2403 = vmatprep.subr.mxu0 0.0
    %2404 = vmatpush1.msra.mxu0 0.0
    %2405 = vmatprep.subr.mxu0 0.0
    %2406 = vmatpush1.msra.mxu0 0.0
    %2407 = vmatprep.subr.mxu0 0.0
    %2408 = vmatpush1.msra.mxu0 0.0
    %2409 = vmatprep.subr.mxu0 0.0
    %2410 = vmatpush1.msra.mxu0 0.0
    %2411 = vmatprep.subr.mxu0 0.0
    %2412 = vmatpush1.msra.mxu0 0.0
    %2413 = vmatprep.subr.mxu0 0.0
    %2414 = vmatpush1.msra.mxu0 0.0
    %2415 = vmatprep.subr.mxu0 0.0
    %2416 = vmatpush1.msra.mxu0 0.0
    %2417 = vmatprep.subr.mxu0 0.0
    %2418 = vmatpush1.msra.mxu0 0.0
    %2419 = vmatprep.subr.mxu0 0.0
    %2420 = vmatpush1.msra.mxu0 0.0
    %2421 = vmatprep.subr.mxu0 0.0
    %2422 = vmatpush1.msra.mxu0 0.0
    %2423 = vmatprep.subr.mxu0 0.0
    %2424 = vmatpush1.msra.mxu0 0.0
    %2425 = vmatprep.subr.mxu0 0.0
    %2426 = vmatpush1.msra.mxu0 0.0
    %2427 = vmatprep.subr.mxu0 0.0
    %2428 = vmatpush1.msra.mxu0 0.0
    %2429 = vmatprep.subr.mxu0 0.0
    %2430 = vmatpush1.msra.mxu0 0.0
    %2431 = vmatprep.subr.mxu0 0.0
    %2432 = vmatpush1.msra.mxu0 0.0
    %2433 = vmatprep.subr.mxu0 0.0
    %2434 = vmatpush1.msra.mxu0 0.0
    %2435 = vmatprep.subr.mxu0 0.0
    %2436 = vmatpush1.msra.mxu0 0.0
    %2437 = vmatprep.subr.mxu0 0.0
    %2438 = vmatpush1.msra.mxu0 0.0
    %2439 = vmatprep.subr.mxu0 0.0
    %2440 = vmatpush1.msra.mxu0 0.0
    %2441 = vmatprep.subr.mxu0 0.0
    %2442 = vmatpush1.msra.mxu0 0.0
    %2443 = vmatprep.subr.mxu0 0.0
    %2444 = vmatpush1.msra.mxu0 0.0
    %2445 = vmatprep.subr.mxu0 0.0
    %2446 = vmatpush1.msra.mxu0 0.0
    %2447 = vmatprep.subr.mxu0 0.0
    %2448 = vmatpush1.msra.mxu0 0.0
    %2449 = vmatprep.subr.mxu0 0.0
    %2450 = vmatpush1.msra.mxu0 0.0
    %2451 = vmatprep.subr.mxu0 0.0
    %2452 = vmatpush1.msra.mxu0 0.0
    %2453 = vmatprep.subr.mxu0 0.0
    %2454 = vmatpush1.msra.mxu0 0.0
    %2455 = vmatprep.subr.mxu0 0.0
    %2456 = vmatpush1.msra.mxu0 0.0
    %2457 = vmatprep.mubr.f32.mxu0 0.0
    %2458 = vmatmul.mubr.f32.gmra.mrb[0].mxu0 %v2391
    %v2459 = vpop.f32.mrb[0].mxu0
    %v2460 = vadd.f32 0.0, %v2459
    %v2461 = vpop.f32.mrb[0].mxu0
    %2462 = vdwg.mxu0
    %v2463 = vmul.f32 %v1954, %v2460
    %v2464 = vadd.f32 %v2463, 0.0
    %2465 = vrot.lane.b32.xlu0 %v1779, 127
    %v2466 = vpop.permute.xlu0 %2465
    %v2468 = vadd.f32 %v1780, %v2466
    %v2470 = vsel %vm461, %v370, 0
    %2472 = vmatprep.subr.mxu0 0.0
    %2473 = vmatpush1.xpose.msra.mxu0 %v2470
    %2474 = vmatprep.subr.mxu0 0.0
    %2475 = vmatpush1.xpose.msra.mxu0 0.0
    %2476 = vmatprep.subr.mxu0 0.0
    %2477 = vmatpush1.xpose.msra.mxu0 0.0
    %2478 = vmatprep.subr.mxu0 0.0
    %2479 = vmatpush1.xpose.msra.mxu0 0.0
    %2480 = vmatprep.subr.mxu0 0.0
    %2481 = vmatpush1.xpose.msra.mxu0 0.0
    %2482 = vmatprep.subr.mxu0 0.0
    %2483 = vmatpush1.xpose.msra.mxu0 0.0
    %2484 = vmatprep.subr.mxu0 0.0
    %2485 = vmatpush1.xpose.msra.mxu0 0.0
    %2486 = vmatprep.subr.mxu0 0.0
    %2487 = vmatpush1.xpose.msra.mxu0 0.0
    %2488 = vmatprep.subr.mxu0 0.0
    %2489 = vmatpush1.xpose.msra.mxu0 0.0
    %2490 = vmatprep.subr.mxu0 0.0
    %2491 = vmatpush1.xpose.msra.mxu0 0.0
    %2492 = vmatprep.subr.mxu0 0.0
    %2493 = vmatpush1.xpose.msra.mxu0 0.0
    %2494 = vmatprep.subr.mxu0 0.0
    %2495 = vmatpush1.xpose.msra.mxu0 0.0
    %2496 = vmatprep.subr.mxu0 0.0
    %2497 = vmatpush1.xpose.msra.mxu0 0.0
    %2498 = vmatprep.subr.mxu0 0.0
    %2499 = vmatpush1.xpose.msra.mxu0 0.0
    %2500 = vmatprep.subr.mxu0 0.0
    %2501 = vmatpush1.xpose.msra.mxu0 0.0
    %2502 = vmatprep.subr.mxu0 0.0
    %2503 = vmatpush1.xpose.msra.mxu0 0.0
    %2504 = vmatprep.subr.mxu0 0.0
    %2505 = vmatpush1.xpose.msra.mxu0 0.0
    %2506 = vmatprep.subr.mxu0 0.0
    %2507 = vmatpush1.xpose.msra.mxu0 0.0
    %2508 = vmatprep.subr.mxu0 0.0
    %2509 = vmatpush1.xpose.msra.mxu0 0.0
    %2510 = vmatprep.subr.mxu0 0.0
    %2511 = vmatpush1.xpose.msra.mxu0 0.0
    %2512 = vmatprep.subr.mxu0 0.0
    %2513 = vmatpush1.xpose.msra.mxu0 0.0
    %2514 = vmatprep.subr.mxu0 0.0
    %2515 = vmatpush1.xpose.msra.mxu0 0.0
    %2516 = vmatprep.subr.mxu0 0.0
    %2517 = vmatpush1.xpose.msra.mxu0 0.0
    %2518 = vmatprep.subr.mxu0 0.0
    %2519 = vmatpush1.xpose.msra.mxu0 0.0
    %2520 = vmatprep.subr.mxu0 0.0
    %2521 = vmatpush1.xpose.msra.mxu0 0.0
    %2522 = vmatprep.subr.mxu0 0.0
    %2523 = vmatpush1.xpose.msra.mxu0 0.0
    %2524 = vmatprep.subr.mxu0 0.0
    %2525 = vmatpush1.xpose.msra.mxu0 0.0
    %2526 = vmatprep.subr.mxu0 0.0
    %2527 = vmatpush1.xpose.msra.mxu0 0.0
    %2528 = vmatprep.subr.mxu0 0.0
    %2529 = vmatpush1.xpose.msra.mxu0 0.0
    %2530 = vmatprep.subr.mxu0 0.0
    %2531 = vmatpush1.xpose.msra.mxu0 0.0
    %2532 = vmatprep.subr.mxu0 0.0
    %2533 = vmatpush1.xpose.msra.mxu0 0.0
    %2534 = vmatprep.subr.mxu0 0.0
    %2535 = vmatpush1.xpose.msra.mxu0 0.0
    %2536 = vmatprep.mubr.f32.mxu0 0.0
    %2537 = vmatmul.mubr.f32.gmra.mrb[0].mxu0 %v1783
    %v2538 = vpop.f32.mrb[0].mxu0
    %v2539 = vadd.f32 0.0, %v2538
    %v2540 = vpop.f32.mrb[0].mxu0
    %2541 = vdwg.mxu0
    %v2542 = vmul.f32 %v2539, 0.35355338
    %v2543 = vlaneseq
    %v2544 = vshrl.u32 %v2543, 7
    %v2545 = vsub.s32 1, %v2544
    %v2546 = vrot.slane %v211, %v2545
    %v2547 = vadd.f32 %v2542, %v2546
    %v2548 = vsel %vm461, %v2547, -inf
    %2549 = vmax.xlane.f32.xlu0 %v2548
    %v2550 = vpop.xlane.xlu0 %2549
    %v2551 = vsub.f32 %v2547, %v2550
    %v2552 = vmul.f32 %v2551, 1.442695
    %v2553 = vpow.pop %v2552
    %v2554 = vsel %vm461, %v2553, 0.0
    %2555 = vadd.xlane.f32.xlu0 %v2554
    %v2556 = vpop.xlane.xlu0 %2555
    %v2557 = vrcp.pop %v2556
    %v2558 = vmul.f32 %v2553, %v2557
    %2559 = vrot.lane.b32.xlu0 %v370, 96
    %v2560 = vpop.permute.xlu0 %2559
    %v2563 = vsel %vm461, %v2558, 0
    %2565 = vmatprep.subr.mxu0 0.0
    %2566 = vmatpush1.msra.mxu0 %v2560
    %2567 = vmatprep.subr.mxu0 0.0
    %2568 = vmatpush1.msra.mxu0 0.0
    %2569 = vmatprep.subr.mxu0 0.0
    %2570 = vmatpush1.msra.mxu0 0.0
    %2571 = vmatprep.subr.mxu0 0.0
    %2572 = vmatpush1.msra.mxu0 0.0
    %2573 = vmatprep.subr.mxu0 0.0
    %2574 = vmatpush1.msra.mxu0 0.0
    %2575 = vmatprep.subr.mxu0 0.0
    %2576 = vmatpush1.msra.mxu0 0.0
    %2577 = vmatprep.subr.mxu0 0.0
    %2578 = vmatpush1.msra.mxu0 0.0
    %2579 = vmatprep.subr.mxu0 0.0
    %2580 = vmatpush1.msra.mxu0 0.0
    %2581 = vmatprep.subr.mxu0 0.0
    %2582 = vmatpush1.msra.mxu0 0.0
    %2583 = vmatprep.subr.mxu0 0.0
    %2584 = vmatpush1.msra.mxu0 0.0
    %2585 = vmatprep.subr.mxu0 0.0
    %2586 = vmatpush1.msra.mxu0 0.0
    %2587 = vmatprep.subr.mxu0 0.0
    %2588 = vmatpush1.msra.mxu0 0.0
    %2589 = vmatprep.subr.mxu0 0.0
    %2590 = vmatpush1.msra.mxu0 0.0
    %2591 = vmatprep.subr.mxu0 0.0
    %2592 = vmatpush1.msra.mxu0 0.0
    %2593 = vmatprep.subr.mxu0 0.0
    %2594 = vmatpush1.msra.mxu0 0.0
    %2595 = vmatprep.subr.mxu0 0.0
    %2596 = vmatpush1.msra.mxu0 0.0
    %2597 = vmatprep.subr.mxu0 0.0
    %2598 = vmatpush1.msra.mxu0 0.0
    %2599 = vmatprep.subr.mxu0 0.0
    %2600 = vmatpush1.msra.mxu0 0.0
    %2601 = vmatprep.subr.mxu0 0.0
    %2602 = vmatpush1.msra.mxu0 0.0
    %2603 = vmatprep.subr.mxu0 0.0
    %2604 = vmatpush1.msra.mxu0 0.0
    %2605 = vmatprep.subr.mxu0 0.0
    %2606 = vmatpush1.msra.mxu0 0.0
    %2607 = vmatprep.subr.mxu0 0.0
    %2608 = vmatpush1.msra.mxu0 0.0
    %2609 = vmatprep.subr.mxu0 0.0
    %2610 = vmatpush1.msra.mxu0 0.0
    %2611 = vmatprep.subr.mxu0 0.0
    %2612 = vmatpush1.msra.mxu0 0.0
    %2613 = vmatprep.subr.mxu0 0.0
    %2614 = vmatpush1.msra.mxu0 0.0
    %2615 = vmatprep.subr.mxu0 0.0
    %2616 = vmatpush1.msra.mxu0 0.0
    %2617 = vmatprep.subr.mxu0 0.0
    %2618 = vmatpush1.msra.mxu0 0.0
    %2619 = vmatprep.subr.mxu0 0.0
    %2620 = vmatpush1.msra.mxu0 0.0
    %2621 = vmatprep.subr.mxu0 0.0
    %2622 = vmatpush1.msra.mxu0 0.0
    %2623 = vmatprep.subr.mxu0 0.0
    %2624 = vmatpush1.msra.mxu0 0.0
    %2625 = vmatprep.subr.mxu0 0.0
    %2626 = vmatpush1.msra.mxu0 0.0
    %2627 = vmatprep.subr.mxu0 0.0
    %2628 = vmatpush1.msra.mxu0 0.0
    %2629 = vmatprep.mubr.f32.mxu0 0.0
    %2630 = vmatmul.mubr.f32.gmra.mrb[0].mxu0 %v2563
    %v2631 = vpop.f32.mrb[0].mxu0
    %v2632 = vadd.f32 0.0, %v2631
    %v2633 = vpop.f32.mrb[0].mxu0
    %2634 = vdwg.mxu0
    %2635 = vset.pattern.permute.xlu0 1
    %2636 = vperm.xlu0 %2635, %v1779
    %v2637 = vpop.permute.xlu0 %2636
    %v2639 = vmul.f32 %v2637, %v2632
    %v2640 = vadd.f32 %v1957, %v2639
    %2641 = vrot.lane.b32.xlu0 %v370, 120
    %v2642 = vpop.permute.xlu0 %2641
    %v2643 = vsel %vm461, %v2642, 0
    %2645 = vmatprep.subr.mxu0 0.0
    %2646 = vmatpush1.xpose.msra.mxu0 %v2643
    %2647 = vmatprep.subr.mxu0 0.0
    %2648 = vmatpush1.xpose.msra.mxu0 0.0
    %2649 = vmatprep.subr.mxu0 0.0
    %2650 = vmatpush1.xpose.msra.mxu0 0.0
    %2651 = vmatprep.subr.mxu0 0.0
    %2652 = vmatpush1.xpose.msra.mxu0 0.0
    %2653 = vmatprep.subr.mxu0 0.0
    %2654 = vmatpush1.xpose.msra.mxu0 0.0
    %2655 = vmatprep.subr.mxu0 0.0
    %2656 = vmatpush1.xpose.msra.mxu0 0.0
    %2657 = vmatprep.subr.mxu0 0.0
    %2658 = vmatpush1.xpose.msra.mxu0 0.0
    %2659 = vmatprep.subr.mxu0 0.0
    %2660 = vmatpush1.xpose.msra.mxu0 0.0
    %2661 = vmatprep.subr.mxu0 0.0
    %2662 = vmatpush1.xpose.msra.mxu0 0.0
    %2663 = vmatprep.subr.mxu0 0.0
    %2664 = vmatpush1.xpose.msra.mxu0 0.0
    %2665 = vmatprep.subr.mxu0 0.0
    %2666 = vmatpush1.xpose.msra.mxu0 0.0
    %2667 = vmatprep.subr.mxu0 0.0
    %2668 = vmatpush1.xpose.msra.mxu0 0.0
    %2669 = vmatprep.subr.mxu0 0.0
    %2670 = vmatpush1.xpose.msra.mxu0 0.0
    %2671 = vmatprep.subr.mxu0 0.0
    %2672 = vmatpush1.xpose.msra.mxu0 0.0
    %2673 = vmatprep.subr.mxu0 0.0
    %2674 = vmatpush1.xpose.msra.mxu0 0.0
    %2675 = vmatprep.subr.mxu0 0.0
    %2676 = vmatpush1.xpose.msra.mxu0 0.0
    %2677 = vmatprep.subr.mxu0 0.0
    %2678 = vmatpush1.xpose.msra.mxu0 0.0
    %2679 = vmatprep.subr.mxu0 0.0
    %2680 = vmatpush1.xpose.msra.mxu0 0.0
    %2681 = vmatprep.subr.mxu0 0.0
    %2682 = vmatpush1.xpose.msra.mxu0 0.0
    %2683 = vmatprep.subr.mxu0 0.0
    %2684 = vmatpush1.xpose.msra.mxu0 0.0
    %2685 = vmatprep.subr.mxu0 0.0
    %2686 = vmatpush1.xpose.msra.mxu0 0.0
    %2687 = vmatprep.subr.mxu0 0.0
    %2688 = vmatpush1.xpose.msra.mxu0 0.0
    %2689 = vmatprep.subr.mxu0 0.0
    %2690 = vmatpush1.xpose.msra.mxu0 0.0
    %2691 = vmatprep.subr.mxu0 0.0
    %2692 = vmatpush1.xpose.msra.mxu0 0.0
    %2693 = vmatprep.subr.mxu0 0.0
    %2694 = vmatpush1.xpose.msra.mxu0 0.0
    %2695 = vmatprep.subr.mxu0 0.0
    %2696 = vmatpush1.xpose.msra.mxu0 0.0
    %2697 = vmatprep.subr.mxu0 0.0
    %2698 = vmatpush1.xpose.msra.mxu0 0.0
    %2699 = vmatprep.subr.mxu0 0.0
    %2700 = vmatpush1.xpose.msra.mxu0 0.0
    %2701 = vmatprep.subr.mxu0 0.0
    %2702 = vmatpush1.xpose.msra.mxu0 0.0
    %2703 = vmatprep.subr.mxu0 0.0
    %2704 = vmatpush1.xpose.msra.mxu0 0.0
    %2705 = vmatprep.subr.mxu0 0.0
    %2706 = vmatpush1.xpose.msra.mxu0 0.0
    %2707 = vmatprep.subr.mxu0 0.0
    %2708 = vmatpush1.xpose.msra.mxu0 0.0
    %2709 = vmatprep.mubr.f32.mxu0 0.0
    %2710 = vmatmul.mubr.f32.gmra.mrb[0].mxu0 %v1962
    %v2711 = vpop.f32.mrb[0].mxu0
    %v2712 = vadd.f32 0.0, %v2711
    %v2713 = vpop.f32.mrb[0].mxu0
    %2714 = vdwg.mxu0
    %v2715 = vmul.f32 %v2712, 0.35355338
    %v2716 = vadd.f32 %v2715, %v2546
    %v2717 = vsel %vm461, %v2716, -inf
    %2718 = vmax.xlane.f32.xlu0 %v2717
    %v2719 = vpop.xlane.xlu0 %2718
    %v2720 = vsub.f32 %v2716, %v2719
    %v2721 = vmul.f32 %v2720, 1.442695
    %v2722 = vpow.pop %v2721
    %v2723 = vsel %vm461, %v2722, 0.0
    %2724 = vadd.xlane.f32.xlu0 %v2723
    %v2725 = vpop.xlane.xlu0 %2724
    %v2726 = vrcp.pop %v2725
    %v2727 = vmul.f32 %v2722, %v2726
    %2728 = vrot.lane.b32.xlu0 %v370, 88
    %v2729 = vpop.permute.xlu0 %2728
    %v2732 = vsel %vm461, %v2727, 0
    %2734 = vmatprep.subr.mxu0 0.0
    %2735 = vmatpush1.msra.mxu0 %v2729
    %2736 = vmatprep.subr.mxu0 0.0
    %2737 = vmatpush1.msra.mxu0 0.0
    %2738 = vmatprep.subr.mxu0 0.0
    %2739 = vmatpush1.msra.mxu0 0.0
    %2740 = vmatprep.subr.mxu0 0.0
    %2741 = vmatpush1.msra.mxu0 0.0
    %2742 = vmatprep.subr.mxu0 0.0
    %2743 = vmatpush1.msra.mxu0 0.0
    %2744 = vmatprep.subr.mxu0 0.0
    %2745 = vmatpush1.msra.mxu0 0.0
    %2746 = vmatprep.subr.mxu0 0.0
    %2747 = vmatpush1.msra.mxu0 0.0
    %2748 = vmatprep.subr.mxu0 0.0
    %2749 = vmatpush1.msra.mxu0 0.0
    %2750 = vmatprep.subr.mxu0 0.0
    %2751 = vmatpush1.msra.mxu0 0.0
    %2752 = vmatprep.subr.mxu0 0.0
    %2753 = vmatpush1.msra.mxu0 0.0
    %2754 = vmatprep.subr.mxu0 0.0
    %2755 = vmatpush1.msra.mxu0 0.0
    %2756 = vmatprep.subr.mxu0 0.0
    %2757 = vmatpush1.msra.mxu0 0.0
    %2758 = vmatprep.subr.mxu0 0.0
    %2759 = vmatpush1.msra.mxu0 0.0
    %2760 = vmatprep.subr.mxu0 0.0
    %2761 = vmatpush1.msra.mxu0 0.0
    %2762 = vmatprep.subr.mxu0 0.0
    %2763 = vmatpush1.msra.mxu0 0.0
    %2764 = vmatprep.subr.mxu0 0.0
    %2765 = vmatpush1.msra.mxu0 0.0
    %2766 = vmatprep.subr.mxu0 0.0
    %2767 = vmatpush1.msra.mxu0 0.0
    %2768 = vmatprep.subr.mxu0 0.0
    %2769 = vmatpush1.msra.mxu0 0.0
    %2770 = vmatprep.subr.mxu0 0.0
    %2771 = vmatpush1.msra.mxu0 0.0
    %2772 = vmatprep.subr.mxu0 0.0
    %2773 = vmatpush1.msra.mxu0 0.0
    %2774 = vmatprep.subr.mxu0 0.0
    %2775 = vmatpush1.msra.mxu0 0.0
    %2776 = vmatprep.subr.mxu0 0.0
    %2777 = vmatpush1.msra.mxu0 0.0
    %2778 = vmatprep.subr.mxu0 0.0
    %2779 = vmatpush1.msra.mxu0 0.0
    %2780 = vmatprep.subr.mxu0 0.0
    %2781 = vmatpush1.msra.mxu0 0.0
    %2782 = vmatprep.subr.mxu0 0.0
    %2783 = vmatpush1.msra.mxu0 0.0
    %2784 = vmatprep.subr.mxu0 0.0
    %2785 = vmatpush1.msra.mxu0 0.0
    %2786 = vmatprep.subr.mxu0 0.0
    %2787 = vmatpush1.msra.mxu0 0.0
    %2788 = vmatprep.subr.mxu0 0.0
    %2789 = vmatpush1.msra.mxu0 0.0
    %2790 = vmatprep.subr.mxu0 0.0
    %2791 = vmatpush1.msra.mxu0 0.0
    %2792 = vmatprep.subr.mxu0 0.0
    %2793 = vmatpush1.msra.mxu0 0.0
    %2794 = vmatprep.subr.mxu0 0.0
    %2795 = vmatpush1.msra.mxu0 0.0
    %2796 = vmatprep.subr.mxu0 0.0
    %2797 = vmatpush1.msra.mxu0 0.0
    %2798 = vmatprep.mubr.f32.mxu0 0.0
    %2799 = vmatmul.mubr.f32.gmra.mrb[0].mxu0 %v2732
    %v2800 = vpop.f32.mrb[0].mxu0
    %v2801 = vadd.f32 0.0, %v2800
    %v2802 = vpop.f32.mrb[0].mxu0
    %2803 = vdwg.mxu0
    %v2804 = vmul.f32 %v2637, %v2801
    %v2805 = vadd.f32 %v2126, %v2804
    %2806 = vrot.lane.b32.xlu0 %v370, 112
    %v2807 = vpop.permute.xlu0 %2806
    %v2808 = vsel %vm461, %v2807, 0
    %2810 = vmatprep.subr.mxu0 0.0
    %2811 = vmatpush1.xpose.msra.mxu0 %v2808
    %2812 = vmatprep.subr.mxu0 0.0
    %2813 = vmatpush1.xpose.msra.mxu0 0.0
    %2814 = vmatprep.subr.mxu0 0.0
    %2815 = vmatpush1.xpose.msra.mxu0 0.0
    %2816 = vmatprep.subr.mxu0 0.0
    %2817 = vmatpush1.xpose.msra.mxu0 0.0
    %2818 = vmatprep.subr.mxu0 0.0
    %2819 = vmatpush1.xpose.msra.mxu0 0.0
    %2820 = vmatprep.subr.mxu0 0.0
    %2821 = vmatpush1.xpose.msra.mxu0 0.0
    %2822 = vmatprep.subr.mxu0 0.0
    %2823 = vmatpush1.xpose.msra.mxu0 0.0
    %2824 = vmatprep.subr.mxu0 0.0
    %2825 = vmatpush1.xpose.msra.mxu0 0.0
    %2826 = vmatprep.subr.mxu0 0.0
    %2827 = vmatpush1.xpose.msra.mxu0 0.0
    %2828 = vmatprep.subr.mxu0 0.0
    %2829 = vmatpush1.xpose.msra.mxu0 0.0
    %2830 = vmatprep.subr.mxu0 0.0
    %2831 = vmatpush1.xpose.msra.mxu0 0.0
    %2832 = vmatprep.subr.mxu0 0.0
    %2833 = vmatpush1.xpose.msra.mxu0 0.0
    %2834 = vmatprep.subr.mxu0 0.0
    %2835 = vmatpush1.xpose.msra.mxu0 0.0
    %2836 = vmatprep.subr.mxu0 0.0
    %2837 = vmatpush1.xpose.msra.mxu0 0.0
    %2838 = vmatprep.subr.mxu0 0.0
    %2839 = vmatpush1.xpose.msra.mxu0 0.0
    %2840 = vmatprep.subr.mxu0 0.0
    %2841 = vmatpush1.xpose.msra.mxu0 0.0
    %2842 = vmatprep.subr.mxu0 0.0
    %2843 = vmatpush1.xpose.msra.mxu0 0.0
    %2844 = vmatprep.subr.mxu0 0.0
    %2845 = vmatpush1.xpose.msra.mxu0 0.0
    %2846 = vmatprep.subr.mxu0 0.0
    %2847 = vmatpush1.xpose.msra.mxu0 0.0
    %2848 = vmatprep.subr.mxu0 0.0
    %2849 = vmatpush1.xpose.msra.mxu0 0.0
    %2850 = vmatprep.subr.mxu0 0.0
    %2851 = vmatpush1.xpose.msra.mxu0 0.0
    %2852 = vmatprep.subr.mxu0 0.0
    %2853 = vmatpush1.xpose.msra.mxu0 0.0
    %2854 = vmatprep.subr.mxu0 0.0
    %2855 = vmatpush1.xpose.msra.mxu0 0.0
    %2856 = vmatprep.subr.mxu0 0.0
    %2857 = vmatpush1.xpose.msra.mxu0 0.0
    %2858 = vmatprep.subr.mxu0 0.0
    %2859 = vmatpush1.xpose.msra.mxu0 0.0
    %2860 = vmatprep.subr.mxu0 0.0
    %2861 = vmatpush1.xpose.msra.mxu0 0.0
    %2862 = vmatprep.subr.mxu0 0.0
    %2863 = vmatpush1.xpose.msra.mxu0 0.0
    %2864 = vmatprep.subr.mxu0 0.0
    %2865 = vmatpush1.xpose.msra.mxu0 0.0
    %2866 = vmatprep.subr.mxu0 0.0
    %2867 = vmatpush1.xpose.msra.mxu0 0.0
    %2868 = vmatprep.subr.mxu0 0.0
    %2869 = vmatpush1.xpose.msra.mxu0 0.0
    %2870 = vmatprep.subr.mxu0 0.0
    %2871 = vmatpush1.xpose.msra.mxu0 0.0
    %2872 = vmatprep.subr.mxu0 0.0
    %2873 = vmatpush1.xpose.msra.mxu0 0.0
    %2874 = vmatprep.mubr.f32.mxu0 0.0
    %2875 = vmatmul.mubr.f32.gmra.mrb[0].mxu0 %v2131
    %v2876 = vpop.f32.mrb[0].mxu0
    %v2877 = vadd.f32 0.0, %v2876
    %v2878 = vpop.f32.mrb[0].mxu0
    %2879 = vdwg.mxu0
    %v2880 = vmul.f32 %v2877, 0.35355338
    %v2881 = vadd.f32 %v2880, %v2546
    %v2882 = vsel %vm461, %v2881, -inf
    %2883 = vmax.xlane.f32.xlu0 %v2882
    %v2884 = vpop.xlane.xlu0 %2883
    %v2885 = vsub.f32 %v2881, %v2884
    %v2886 = vmul.f32 %v2885, 1.442695
    %v2887 = vpow.pop %v2886
    %v2888 = vsel %vm461, %v2887, 0.0
    %2889 = vadd.xlane.f32.xlu0 %v2888
    %v2890 = vpop.xlane.xlu0 %2889
    %v2891 = vrcp.pop %v2890
    %v2892 = vmul.f32 %v2887, %v2891
    %2893 = vrot.lane.b32.xlu0 %v370, 80
    %v2894 = vpop.permute.xlu0 %2893
    %v2897 = vsel %vm461, %v2892, 0
    %2899 = vmatprep.subr.mxu0 0.0
    %2900 = vmatpush1.msra.mxu0 %v2894
    %2901 = vmatprep.subr.mxu0 0.0
    %2902 = vmatpush1.msra.mxu0 0.0
    %2903 = vmatprep.subr.mxu0 0.0
    %2904 = vmatpush1.msra.mxu0 0.0
    %2905 = vmatprep.subr.mxu0 0.0
    %2906 = vmatpush1.msra.mxu0 0.0
    %2907 = vmatprep.subr.mxu0 0.0
    %2908 = vmatpush1.msra.mxu0 0.0
    %2909 = vmatprep.subr.mxu0 0.0
    %2910 = vmatpush1.msra.mxu0 0.0
    %2911 = vmatprep.subr.mxu0 0.0
    %2912 = vmatpush1.msra.mxu0 0.0
    %2913 = vmatprep.subr.mxu0 0.0
    %2914 = vmatpush1.msra.mxu0 0.0
    %2915 = vmatprep.subr.mxu0 0.0
    %2916 = vmatpush1.msra.mxu0 0.0
    %2917 = vmatprep.subr.mxu0 0.0
    %2918 = vmatpush1.msra.mxu0 0.0
    %2919 = vmatprep.subr.mxu0 0.0
    %2920 = vmatpush1.msra.mxu0 0.0
    %2921 = vmatprep.subr.mxu0 0.0
    %2922 = vmatpush1.msra.mxu0 0.0
    %2923 = vmatprep.subr.mxu0 0.0
    %2924 = vmatpush1.msra.mxu0 0.0
    %2925 = vmatprep.subr.mxu0 0.0
    %2926 = vmatpush1.msra.mxu0 0.0
    %2927 = vmatprep.subr.mxu0 0.0
    %2928 = vmatpush1.msra.mxu0 0.0
    %2929 = vmatprep.subr.mxu0 0.0
    %2930 = vmatpush1.msra.mxu0 0.0
    %2931 = vmatprep.subr.mxu0 0.0
    %2932 = vmatpush1.msra.mxu0 0.0
    %2933 = vmatprep.subr.mxu0 0.0
    %2934 = vmatpush1.msra.mxu0 0.0
    %2935 = vmatprep.subr.mxu0 0.0
    %2936 = vmatpush1.msra.mxu0 0.0
    %2937 = vmatprep.subr.mxu0 0.0
    %2938 = vmatpush1.msra.mxu0 0.0
    %2939 = vmatprep.subr.mxu0 0.0
    %2940 = vmatpush1.msra.mxu0 0.0
    %2941 = vmatprep.subr.mxu0 0.0
    %2942 = vmatpush1.msra.mxu0 0.0
    %2943 = vmatprep.subr.mxu0 0.0
    %2944 = vmatpush1.msra.mxu0 0.0
    %2945 = vmatprep.subr.mxu0 0.0
    %2946 = vmatpush1.msra.mxu0 0.0
    %2947 = vmatprep.subr.mxu0 0.0
    %2948 = vmatpush1.msra.mxu0 0.0
    %2949 = vmatprep.subr.mxu0 0.0
    %2950 = vmatpush1.msra.mxu0 0.0
    %2951 = vmatprep.subr.mxu0 0.0
    %2952 = vmatpush1.msra.mxu0 0.0
    %2953 = vmatprep.subr.mxu0 0.0
    %2954 = vmatpush1.msra.mxu0 0.0
    %2955 = vmatprep.subr.mxu0 0.0
    %2956 = vmatpush1.msra.mxu0 0.0
    %2957 = vmatprep.subr.mxu0 0.0
    %2958 = vmatpush1.msra.mxu0 0.0
    %2959 = vmatprep.subr.mxu0 0.0
    %2960 = vmatpush1.msra.mxu0 0.0
    %2961 = vmatprep.subr.mxu0 0.0
    %2962 = vmatpush1.msra.mxu0 0.0
    %2963 = vmatprep.mubr.f32.mxu0 0.0
    %2964 = vmatmul.mubr.f32.gmra.mrb[0].mxu0 %v2897
    %v2965 = vpop.f32.mrb[0].mxu0
    %v2966 = vadd.f32 0.0, %v2965
    %v2967 = vpop.f32.mrb[0].mxu0
    %2968 = vdwg.mxu0
    %v2969 = vmul.f32 %v2637, %v2966
    %v2970 = vadd.f32 %v2295, %v2969
    %2971 = vrot.lane.b32.xlu0 %v370, 104
    %v2972 = vpop.permute.xlu0 %2971
    %v2973 = vsel %vm461, %v2972, 0
    %2975 = vmatprep.subr.mxu0 0.0
    %2976 = vmatpush1.xpose.msra.mxu0 %v2973
    %2977 = vmatprep.subr.mxu0 0.0
    %2978 = vmatpush1.xpose.msra.mxu0 0.0
    %2979 = vmatprep.subr.mxu0 0.0
    %2980 = vmatpush1.xpose.msra.mxu0 0.0
    %2981 = vmatprep.subr.mxu0 0.0
    %2982 = vmatpush1.xpose.msra.mxu0 0.0
    %2983 = vmatprep.subr.mxu0 0.0
    %2984 = vmatpush1.xpose.msra.mxu0 0.0
    %2985 = vmatprep.subr.mxu0 0.0
    %2986 = vmatpush1.xpose.msra.mxu0 0.0
    %2987 = vmatprep.subr.mxu0 0.0
    %2988 = vmatpush1.xpose.msra.mxu0 0.0
    %2989 = vmatprep.subr.mxu0 0.0
    %2990 = vmatpush1.xpose.msra.mxu0 0.0
    %2991 = vmatprep.subr.mxu0 0.0
    %2992 = vmatpush1.xpose.msra.mxu0 0.0
    %2993 = vmatprep.subr.mxu0 0.0
    %2994 = vmatpush1.xpose.msra.mxu0 0.0
    %2995 = vmatprep.subr.mxu0 0.0
    %2996 = vmatpush1.xpose.msra.mxu0 0.0
    %2997 = vmatprep.subr.mxu0 0.0
    %2998 = vmatpush1.xpose.msra.mxu0 0.0
    %2999 = vmatprep.subr.mxu0 0.0
    %3000 = vmatpush1.xpose.msra.mxu0 0.0
    %3001 = vmatprep.subr.mxu0 0.0
    %3002 = vmatpush1.xpose.msra.mxu0 0.0
    %3003 = vmatprep.subr.mxu0 0.0
    %3004 = vmatpush1.xpose.msra.mxu0 0.0
    %3005 = vmatprep.subr.mxu0 0.0
    %3006 = vmatpush1.xpose.msra.mxu0 0.0
    %3007 = vmatprep.subr.mxu0 0.0
    %3008 = vmatpush1.xpose.msra.mxu0 0.0
    %3009 = vmatprep.subr.mxu0 0.0
    %3010 = vmatpush1.xpose.msra.mxu0 0.0
    %3011 = vmatprep.subr.mxu0 0.0
    %3012 = vmatpush1.xpose.msra.mxu0 0.0
    %3013 = vmatprep.subr.mxu0 0.0
    %3014 = vmatpush1.xpose.msra.mxu0 0.0
    %3015 = vmatprep.subr.mxu0 0.0
    %3016 = vmatpush1.xpose.msra.mxu0 0.0
    %3017 = vmatprep.subr.mxu0 0.0
    %3018 = vmatpush1.xpose.msra.mxu0 0.0
    %3019 = vmatprep.subr.mxu0 0.0
    %3020 = vmatpush1.xpose.msra.mxu0 0.0
    %3021 = vmatprep.subr.mxu0 0.0
    %3022 = vmatpush1.xpose.msra.mxu0 0.0
    %3023 = vmatprep.subr.mxu0 0.0
    %3024 = vmatpush1.xpose.msra.mxu0 0.0
    %3025 = vmatprep.subr.mxu0 0.0
    %3026 = vmatpush1.xpose.msra.mxu0 0.0
    %3027 = vmatprep.subr.mxu0 0.0
    %3028 = vmatpush1.xpose.msra.mxu0 0.0
    %3029 = vmatprep.subr.mxu0 0.0
    %3030 = vmatpush1.xpose.msra.mxu0 0.0
    %3031 = vmatprep.subr.mxu0 0.0
    %3032 = vmatpush1.xpose.msra.mxu0 0.0
    %3033 = vmatprep.subr.mxu0 0.0
    %3034 = vmatpush1.xpose.msra.mxu0 0.0
    %3035 = vmatprep.subr.mxu0 0.0
    %3036 = vmatpush1.xpose.msra.mxu0 0.0
    %3037 = vmatprep.subr.mxu0 0.0
    %3038 = vmatpush1.xpose.msra.mxu0 0.0
    %3039 = vmatprep.mubr.f32.mxu0 0.0
    %3040 = vmatmul.mubr.f32.gmra.mrb[0].mxu0 %v2300
    %v3041 = vpop.f32.mrb[0].mxu0
    %v3042 = vadd.f32 0.0, %v3041
    %v3043 = vpop.f32.mrb[0].mxu0
    %3044 = vdwg.mxu0
    %v3045 = vmul.f32 %v3042, 0.35355338
    %v3046 = vadd.f32 %v3045, %v2546
    %v3047 = vsel %vm461, %v3046, -inf
    %3048 = vmax.xlane.f32.xlu0 %v3047
    %v3049 = vpop.xlane.xlu0 %3048
    %v3050 = vsub.f32 %v3046, %v3049
    %v3051 = vmul.f32 %v3050, 1.442695
    %v3052 = vpow.pop %v3051
    %v3053 = vsel %vm461, %v3052, 0.0
    %3054 = vadd.xlane.f32.xlu0 %v3053
    %v3055 = vpop.xlane.xlu0 %3054
    %v3056 = vrcp.pop %v3055
    %v3057 = vmul.f32 %v3052, %v3056
    %3058 = vrot.lane.b32.xlu0 %v370, 72
    %v3059 = vpop.permute.xlu0 %3058
    %v3062 = vsel %vm461, %v3057, 0
    %3064 = vmatprep.subr.mxu0 0.0
    %3065 = vmatpush1.msra.mxu0 %v3059
    %3066 = vmatprep.subr.mxu0 0.0
    %3067 = vmatpush1.msra.mxu0 0.0
    %3068 = vmatprep.subr.mxu0 0.0
    %3069 = vmatpush1.msra.mxu0 0.0
    %3070 = vmatprep.subr.mxu0 0.0
    %3071 = vmatpush1.msra.mxu0 0.0
    %3072 = vmatprep.subr.mxu0 0.0
    %3073 = vmatpush1.msra.mxu0 0.0
    %3074 = vmatprep.subr.mxu0 0.0
    %3075 = vmatpush1.msra.mxu0 0.0
    %3076 = vmatprep.subr.mxu0 0.0
    %3077 = vmatpush1.msra.mxu0 0.0
    %3078 = vmatprep.subr.mxu0 0.0
    %3079 = vmatpush1.msra.mxu0 0.0
    %3080 = vmatprep.subr.mxu0 0.0
    %3081 = vmatpush1.msra.mxu0 0.0
    %3082 = vmatprep.subr.mxu0 0.0
    %3083 = vmatpush1.msra.mxu0 0.0
    %3084 = vmatprep.subr.mxu0 0.0
    %3085 = vmatpush1.msra.mxu0 0.0
    %3086 = vmatprep.subr.mxu0 0.0
    %3087 = vmatpush1.msra.mxu0 0.0
    %3088 = vmatprep.subr.mxu0 0.0
    %3089 = vmatpush1.msra.mxu0 0.0
    %3090 = vmatprep.subr.mxu0 0.0
    %3091 = vmatpush1.msra.mxu0 0.0
    %3092 = vmatprep.subr.mxu0 0.0
    %3093 = vmatpush1.msra.mxu0 0.0
    %3094 = vmatprep.subr.mxu0 0.0
    %3095 = vmatpush1.msra.mxu0 0.0
    %3096 = vmatprep.subr.mxu0 0.0
    %3097 = vmatpush1.msra.mxu0 0.0
    %3098 = vmatprep.subr.mxu0 0.0
    %3099 = vmatpush1.msra.mxu0 0.0
    %3100 = vmatprep.subr.mxu0 0.0
    %3101 = vmatpush1.msra.mxu0 0.0
    %3102 = vmatprep.subr.mxu0 0.0
    %3103 = vmatpush1.msra.mxu0 0.0
    %3104 = vmatprep.subr.mxu0 0.0
    %3105 = vmatpush1.msra.mxu0 0.0
    %3106 = vmatprep.subr.mxu0 0.0
    %3107 = vmatpush1.msra.mxu0 0.0
    %3108 = vmatprep.subr.mxu0 0.0
    %3109 = vmatpush1.msra.mxu0 0.0
    %3110 = vmatprep.subr.mxu0 0.0
    %3111 = vmatpush1.msra.mxu0 0.0
    %3112 = vmatprep.subr.mxu0 0.0
    %3113 = vmatpush1.msra.mxu0 0.0
    %3114 = vmatprep.subr.mxu0 0.0
    %3115 = vmatpush1.msra.mxu0 0.0
    %3116 = vmatprep.subr.mxu0 0.0
    %3117 = vmatpush1.msra.mxu0 0.0
    %3118 = vmatprep.subr.mxu0 0.0
    %3119 = vmatpush1.msra.mxu0 0.0
    %3120 = vmatprep.subr.mxu0 0.0
    %3121 = vmatpush1.msra.mxu0 0.0
    %3122 = vmatprep.subr.mxu0 0.0
    %3123 = vmatpush1.msra.mxu0 0.0
    %3124 = vmatprep.subr.mxu0 0.0
    %3125 = vmatpush1.msra.mxu0 0.0
    %3126 = vmatprep.subr.mxu0 0.0
    %3127 = vmatpush1.msra.mxu0 0.0
    %3128 = vmatprep.mubr.f32.mxu0 0.0
    %3129 = vmatmul.mubr.f32.gmra.mrb[0].mxu0 %v3062
    %v3130 = vpop.f32.mrb[0].mxu0
    %v3131 = vadd.f32 0.0, %v3130
    %v3132 = vpop.f32.mrb[0].mxu0
    %3133 = vdwg.mxu0
    %v3134 = vmul.f32 %v2637, %v3131
    %v3135 = vadd.f32 %v2464, %v3134
    %3136 = vrot.lane.b32.xlu0 %v1779, 126
    %v3137 = vpop.permute.xlu0 %3136
    %v3139 = vadd.f32 %v2468, %v3137
    %v3141 = vsel %vm461, %v375, 0
    %3143 = vmatprep.subr.mxu0 0.0
    %3144 = vmatpush1.xpose.msra.mxu0 %v3141
    %3145 = vmatprep.subr.mxu0 0.0
    %3146 = vmatpush1.xpose.msra.mxu0 0.0
    %3147 = vmatprep.subr.mxu0 0.0
    %3148 = vmatpush1.xpose.msra.mxu0 0.0
    %3149 = vmatprep.subr.mxu0 0.0
    %3150 = vmatpush1.xpose.msra.mxu0 0.0
    %3151 = vmatprep.subr.mxu0 0.0
    %3152 = vmatpush1.xpose.msra.mxu0 0.0
    %3153 = vmatprep.subr.mxu0 0.0
    %3154 = vmatpush1.xpose.msra.mxu0 0.0
    %3155 = vmatprep.subr.mxu0 0.0
    %3156 = vmatpush1.xpose.msra.mxu0 0.0
    %3157 = vmatprep.subr.mxu0 0.0
    %3158 = vmatpush1.xpose.msra.mxu0 0.0
    %3159 = vmatprep.subr.mxu0 0.0
    %3160 = vmatpush1.xpose.msra.mxu0 0.0
    %3161 = vmatprep.subr.mxu0 0.0
    %3162 = vmatpush1.xpose.msra.mxu0 0.0
    %3163 = vmatprep.subr.mxu0 0.0
    %3164 = vmatpush1.xpose.msra.mxu0 0.0
    %3165 = vmatprep.subr.mxu0 0.0
    %3166 = vmatpush1.xpose.msra.mxu0 0.0
    %3167 = vmatprep.subr.mxu0 0.0
    %3168 = vmatpush1.xpose.msra.mxu0 0.0
    %3169 = vmatprep.subr.mxu0 0.0
    %3170 = vmatpush1.xpose.msra.mxu0 0.0
    %3171 = vmatprep.subr.mxu0 0.0
    %3172 = vmatpush1.xpose.msra.mxu0 0.0
    %3173 = vmatprep.subr.mxu0 0.0
    %3174 = vmatpush1.xpose.msra.mxu0 0.0
    %3175 = vmatprep.subr.mxu0 0.0
    %3176 = vmatpush1.xpose.msra.mxu0 0.0
    %3177 = vmatprep.subr.mxu0 0.0
    %3178 = vmatpush1.xpose.msra.mxu0 0.0
    %3179 = vmatprep.subr.mxu0 0.0
    %3180 = vmatpush1.xpose.msra.mxu0 0.0
    %3181 = vmatprep.subr.mxu0 0.0
    %3182 = vmatpush1.xpose.msra.mxu0 0.0
    %3183 = vmatprep.subr.mxu0 0.0
    %3184 = vmatpush1.xpose.msra.mxu0 0.0
    %3185 = vmatprep.subr.mxu0 0.0
    %3186 = vmatpush1.xpose.msra.mxu0 0.0
    %3187 = vmatprep.subr.mxu0 0.0
    %3188 = vmatpush1.xpose.msra.mxu0 0.0
    %3189 = vmatprep.subr.mxu0 0.0
    %3190 = vmatpush1.xpose.msra.mxu0 0.0
    %3191 = vmatprep.subr.mxu0 0.0
    %3192 = vmatpush1.xpose.msra.mxu0 0.0
    %3193 = vmatprep.subr.mxu0 0.0
    %3194 = vmatpush1.xpose.msra.mxu0 0.0
    %3195 = vmatprep.subr.mxu0 0.0
    %3196 = vmatpush1.xpose.msra.mxu0 0.0
    %3197 = vmatprep.subr.mxu0 0.0
    %3198 = vmatpush1.xpose.msra.mxu0 0.0
    %3199 = vmatprep.subr.mxu0 0.0
    %3200 = vmatpush1.xpose.msra.mxu0 0.0
    %3201 = vmatprep.subr.mxu0 0.0
    %3202 = vmatpush1.xpose.msra.mxu0 0.0
    %3203 = vmatprep.subr.mxu0 0.0
    %3204 = vmatpush1.xpose.msra.mxu0 0.0
    %3205 = vmatprep.subr.mxu0 0.0
    %3206 = vmatpush1.xpose.msra.mxu0 0.0
    %3207 = vmatprep.mubr.f32.mxu0 0.0
    %3208 = vmatmul.mubr.f32.gmra.mrb[0].mxu0 %v1783
    %v3209 = vpop.f32.mrb[0].mxu0
    %v3210 = vadd.f32 0.0, %v3209
    %v3211 = vpop.f32.mrb[0].mxu0
    %3212 = vdwg.mxu0
    %v3213 = vmul.f32 %v3210, 0.35355338
    %v3214 = vlaneseq
    %v3215 = vshrl.u32 %v3214, 7
    %v3216 = vsub.s32 2, %v3215
    %v3217 = vrot.slane %v211, %v3216
    %v3218 = vadd.f32 %v3213, %v3217
    %v3219 = vsel %vm461, %v3218, -inf
    %3220 = vmax.xlane.f32.xlu0 %v3219
    %v3221 = vpop.xlane.xlu0 %3220
    %v3222 = vsub.f32 %v3218, %v3221
    %v3223 = vmul.f32 %v3222, 1.442695
    %v3224 = vpow.pop %v3223
    %v3225 = vsel %vm461, %v3224, 0.0
    %3226 = vadd.xlane.f32.xlu0 %v3225
    %v3227 = vpop.xlane.xlu0 %3226
    %v3228 = vrcp.pop %v3227
    %v3229 = vmul.f32 %v3224, %v3228
    %3230 = vrot.lane.b32.xlu0 %v375, 96
    %v3231 = vpop.permute.xlu0 %3230
    %v3234 = vsel %vm461, %v3229, 0
    %3236 = vmatprep.subr.mxu0 0.0
    %3237 = vmatpush1.msra.mxu0 %v3231
    %3238 = vmatprep.subr.mxu0 0.0
    %3239 = vmatpush1.msra.mxu0 0.0
    %3240 = vmatprep.subr.mxu0 0.0
    %3241 = vmatpush1.msra.mxu0 0.0
    %3242 = vmatprep.subr.mxu0 0.0
    %3243 = vmatpush1.msra.mxu0 0.0
    %3244 = vmatprep.subr.mxu0 0.0
    %3245 = vmatpush1.msra.mxu0 0.0
    %3246 = vmatprep.subr.mxu0 0.0
    %3247 = vmatpush1.msra.mxu0 0.0
    %3248 = vmatprep.subr.mxu0 0.0
    %3249 = vmatpush1.msra.mxu0 0.0
    %3250 = vmatprep.subr.mxu0 0.0
    %3251 = vmatpush1.msra.mxu0 0.0
    %3252 = vmatprep.subr.mxu0 0.0
    %3253 = vmatpush1.msra.mxu0 0.0
    %3254 = vmatprep.subr.mxu0 0.0
    %3255 = vmatpush1.msra.mxu0 0.0
    %3256 = vmatprep.subr.mxu0 0.0
    %3257 = vmatpush1.msra.mxu0 0.0
    %3258 = vmatprep.subr.mxu0 0.0
    %3259 = vmatpush1.msra.mxu0 0.0
    %3260 = vmatprep.subr.mxu0 0.0
    %3261 = vmatpush1.msra.mxu0 0.0
    %3262 = vmatprep.subr.mxu0 0.0
    %3263 = vmatpush1.msra.mxu0 0.0
    %3264 = vmatprep.subr.mxu0 0.0
    %3265 = vmatpush1.msra.mxu0 0.0
    %3266 = vmatprep.subr.mxu0 0.0
    %3267 = vmatpush1.msra.mxu0 0.0
    %3268 = vmatprep.subr.mxu0 0.0
    %3269 = vmatpush1.msra.mxu0 0.0
    %3270 = vmatprep.subr.mxu0 0.0
    %3271 = vmatpush1.msra.mxu0 0.0
    %3272 = vmatprep.subr.mxu0 0.0
    %3273 = vmatpush1.msra.mxu0 0.0
    %3274 = vmatprep.subr.mxu0 0.0
    %3275 = vmatpush1.msra.mxu0 0.0
    %3276 = vmatprep.subr.mxu0 0.0
    %3277 = vmatpush1.msra.mxu0 0.0
    %3278 = vmatprep.subr.mxu0 0.0
    %3279 = vmatpush1.msra.mxu0 0.0
    %3280 = vmatprep.subr.mxu0 0.0
    %3281 = vmatpush1.msra.mxu0 0.0
    %3282 = vmatprep.subr.mxu0 0.0
    %3283 = vmatpush1.msra.mxu0 0.0
    %3284 = vmatprep.subr.mxu0 0.0
    %3285 = vmatpush1.msra.mxu0 0.0
    %3286 = vmatprep.subr.mxu0 0.0
    %3287 = vmatpush1.msra.mxu0 0.0
    %3288 = vmatprep.subr.mxu0 0.0
    %3289 = vmatpush1.msra.mxu0 0.0
    %3290 = vmatprep.subr.mxu0 0.0
    %3291 = vmatpush1.msra.mxu0 0.0
    %3292 = vmatprep.subr.mxu0 0.0
    %3293 = vmatpush1.msra.mxu0 0.0
    %3294 = vmatprep.subr.mxu0 0.0
    %3295 = vmatpush1.msra.mxu0 0.0
    %3296 = vmatprep.subr.mxu0 0.0
    %3297 = vmatpush1.msra.mxu0 0.0
    %3298 = vmatprep.subr.mxu0 0.0
    %3299 = vmatpush1.msra.mxu0 0.0
    %3300 = vmatprep.mubr.f32.mxu0 0.0
    %3301 = vmatmul.mubr.f32.gmra.mrb[0].mxu0 %v3234
    %v3302 = vpop.f32.mrb[0].mxu0
    %v3303 = vadd.f32 0.0, %v3302
    %v3304 = vpop.f32.mrb[0].mxu0
    %3305 = vdwg.mxu0
    %3306 = vset.pattern.permute.xlu0 2
    %3307 = vperm.xlu0 %3306, %v1779
    %v3308 = vpop.permute.xlu0 %3307
    %v3310 = vmul.f32 %v3308, %v3303
    %v3311 = vadd.f32 %v2640, %v3310
    %3312 = vrot.lane.b32.xlu0 %v375, 120
    %v3313 = vpop.permute.xlu0 %3312
    %v3314 = vsel %vm461, %v3313, 0
    %3316 = vmatprep.subr.mxu0 0.0
    %3317 = vmatpush1.xpose.msra.mxu0 %v3314
    %3318 = vmatprep.subr.mxu0 0.0
    %3319 = vmatpush1.xpose.msra.mxu0 0.0
    %3320 = vmatprep.subr.mxu0 0.0
    %3321 = vmatpush1.xpose.msra.mxu0 0.0
    %3322 = vmatprep.subr.mxu0 0.0
    %3323 = vmatpush1.xpose.msra.mxu0 0.0
    %3324 = vmatprep.subr.mxu0 0.0
    %3325 = vmatpush1.xpose.msra.mxu0 0.0
    %3326 = vmatprep.subr.mxu0 0.0
    %3327 = vmatpush1.xpose.msra.mxu0 0.0
    %3328 = vmatprep.subr.mxu0 0.0
    %3329 = vmatpush1.xpose.msra.mxu0 0.0
    %3330 = vmatprep.subr.mxu0 0.0
    %3331 = vmatpush1.xpose.msra.mxu0 0.0
    %3332 = vmatprep.subr.mxu0 0.0
    %3333 = vmatpush1.xpose.msra.mxu0 0.0
    %3334 = vmatprep.subr.mxu0 0.0
    %3335 = vmatpush1.xpose.msra.mxu0 0.0
    %3336 = vmatprep.subr.mxu0 0.0
    %3337 = vmatpush1.xpose.msra.mxu0 0.0
    %3338 = vmatprep.subr.mxu0 0.0
    %3339 = vmatpush1.xpose.msra.mxu0 0.0
    %3340 = vmatprep.subr.mxu0 0.0
    %3341 = vmatpush1.xpose.msra.mxu0 0.0
    %3342 = vmatprep.subr.mxu0 0.0
    %3343 = vmatpush1.xpose.msra.mxu0 0.0
    %3344 = vmatprep.subr.mxu0 0.0
    %3345 = vmatpush1.xpose.msra.mxu0 0.0
    %3346 = vmatprep.subr.mxu0 0.0
    %3347 = vmatpush1.xpose.msra.mxu0 0.0
    %3348 = vmatprep.subr.mxu0 0.0
    %3349 = vmatpush1.xpose.msra.mxu0 0.0
    %3350 = vmatprep.subr.mxu0 0.0
    %3351 = vmatpush1.xpose.msra.mxu0 0.0
    %3352 = vmatprep.subr.mxu0 0.0
    %3353 = vmatpush1.xpose.msra.mxu0 0.0
    %3354 = vmatprep.subr.mxu0 0.0
    %3355 = vmatpush1.xpose.msra.mxu0 0.0
    %3356 = vmatprep.subr.mxu0 0.0
    %3357 = vmatpush1.xpose.msra.mxu0 0.0
    %3358 = vmatprep.subr.mxu0 0.0
    %3359 = vmatpush1.xpose.msra.mxu0 0.0
    %3360 = vmatprep.subr.mxu0 0.0
    %3361 = vmatpush1.xpose.msra.mxu0 0.0
    %3362 = vmatprep.subr.mxu0 0.0
    %3363 = vmatpush1.xpose.msra.mxu0 0.0
    %3364 = vmatprep.subr.mxu0 0.0
    %3365 = vmatpush1.xpose.msra.mxu0 0.0
    %3366 = vmatprep.subr.mxu0 0.0
    %3367 = vmatpush1.xpose.msra.mxu0 0.0
    %3368 = vmatprep.subr.mxu0 0.0
    %3369 = vmatpush1.xpose.msra.mxu0 0.0
    %3370 = vmatprep.subr.mxu0 0.0
    %3371 = vmatpush1.xpose.msra.mxu0 0.0
    %3372 = vmatprep.subr.mxu0 0.0
    %3373 = vmatpush1.xpose.msra.mxu0 0.0
    %3374 = vmatprep.subr.mxu0 0.0
    %3375 = vmatpush1.xpose.msra.mxu0 0.0
    %3376 = vmatprep.subr.mxu0 0.0
    %3377 = vmatpush1.xpose.msra.mxu0 0.0
    %3378 = vmatprep.subr.mxu0 0.0
    %3379 = vmatpush1.xpose.msra.mxu0 0.0
    %3380 = vmatprep.mubr.f32.mxu0 0.0
    %3381 = vmatmul.mubr.f32.gmra.mrb[0].mxu0 %v1962
    %v3382 = vpop.f32.mrb[0].mxu0
    %v3383 = vadd.f32 0.0, %v3382
    %v3384 = vpop.f32.mrb[0].mxu0
    %3385 = vdwg.mxu0
    %v3386 = vmul.f32 %v3383, 0.35355338
    %v3387 = vadd.f32 %v3386, %v3217
    %v3388 = vsel %vm461, %v3387, -inf
    %3389 = vmax.xlane.f32.xlu0 %v3388
    %v3390 = vpop.xlane.xlu0 %3389
    %v3391 = vsub.f32 %v3387, %v3390
    %v3392 = vmul.f32 %v3391, 1.442695
    %v3393 = vpow.pop %v3392
    %v3394 = vsel %vm461, %v3393, 0.0
    %3395 = vadd.xlane.f32.xlu0 %v3394
    %v3396 = vpop.xlane.xlu0 %3395
    %v3397 = vrcp.pop %v3396
    %v3398 = vmul.f32 %v3393, %v3397
    %3399 = vrot.lane.b32.xlu0 %v375, 88
    %v3400 = vpop.permute.xlu0 %3399
    %v3403 = vsel %vm461, %v3398, 0
    %3405 = vmatprep.subr.mxu0 0.0
    %3406 = vmatpush1.msra.mxu0 %v3400
    %3407 = vmatprep.subr.mxu0 0.0
    %3408 = vmatpush1.msra.mxu0 0.0
    %3409 = vmatprep.subr.mxu0 0.0
    %3410 = vmatpush1.msra.mxu0 0.0
    %3411 = vmatprep.subr.mxu0 0.0
    %3412 = vmatpush1.msra.mxu0 0.0
    %3413 = vmatprep.subr.mxu0 0.0
    %3414 = vmatpush1.msra.mxu0 0.0
    %3415 = vmatprep.subr.mxu0 0.0
    %3416 = vmatpush1.msra.mxu0 0.0
    %3417 = vmatprep.subr.mxu0 0.0
    %3418 = vmatpush1.msra.mxu0 0.0
    %3419 = vmatprep.subr.mxu0 0.0
    %3420 = vmatpush1.msra.mxu0 0.0
    %3421 = vmatprep.subr.mxu0 0.0
    %3422 = vmatpush1.msra.mxu0 0.0
    %3423 = vmatprep.subr.mxu0 0.0
    %3424 = vmatpush1.msra.mxu0 0.0
    %3425 = vmatprep.subr.mxu0 0.0
    %3426 = vmatpush1.msra.mxu0 0.0
    %3427 = vmatprep.subr.mxu0 0.0
    %3428 = vmatpush1.msra.mxu0 0.0
    %3429 = vmatprep.subr.mxu0 0.0
    %3430 = vmatpush1.msra.mxu0 0.0
    %3431 = vmatprep.subr.mxu0 0.0
    %3432 = vmatpush1.msra.mxu0 0.0
    %3433 = vmatprep.subr.mxu0 0.0
    %3434 = vmatpush1.msra.mxu0 0.0
    %3435 = vmatprep.subr.mxu0 0.0
    %3436 = vmatpush1.msra.mxu0 0.0
    %3437 = vmatprep.subr.mxu0 0.0
    %3438 = vmatpush1.msra.mxu0 0.0
    %3439 = vmatprep.subr.mxu0 0.0
    %3440 = vmatpush1.msra.mxu0 0.0
    %3441 = vmatprep.subr.mxu0 0.0
    %3442 = vmatpush1.msra.mxu0 0.0
    %3443 = vmatprep.subr.mxu0 0.0
    %3444 = vmatpush1.msra.mxu0 0.0
    %3445 = vmatprep.subr.mxu0 0.0
    %3446 = vmatpush1.msra.mxu0 0.0
    %3447 = vmatprep.subr.mxu0 0.0
    %3448 = vmatpush1.msra.mxu0 0.0
    %3449 = vmatprep.subr.mxu0 0.0
    %3450 = vmatpush1.msra.mxu0 0.0
    %3451 = vmatprep.subr.mxu0 0.0
    %3452 = vmatpush1.msra.mxu0 0.0
    %3453 = vmatprep.subr.mxu0 0.0
    %3454 = vmatpush1.msra.mxu0 0.0
    %3455 = vmatprep.subr.mxu0 0.0
    %3456 = vmatpush1.msra.mxu0 0.0
    %3457 = vmatprep.subr.mxu0 0.0
    %3458 = vmatpush1.msra.mxu0 0.0
    %3459 = vmatprep.subr.mxu0 0.0
    %3460 = vmatpush1.msra.mxu0 0.0
    %3461 = vmatprep.subr.mxu0 0.0
    %3462 = vmatpush1.msra.mxu0 0.0
    %3463 = vmatprep.subr.mxu0 0.0
    %3464 = vmatpush1.msra.mxu0 0.0
    %3465 = vmatprep.subr.mxu0 0.0
    %3466 = vmatpush1.msra.mxu0 0.0
    %3467 = vmatprep.subr.mxu0 0.0
    %3468 = vmatpush1.msra.mxu0 0.0
    %3469 = vmatprep.mubr.f32.mxu0 0.0
    %3470 = vmatmul.mubr.f32.gmra.mrb[0].mxu0 %v3403
    %v3471 = vpop.f32.mrb[0].mxu0
    %v3472 = vadd.f32 0.0, %v3471
    %v3473 = vpop.f32.mrb[0].mxu0
    %3474 = vdwg.mxu0
    %v3475 = vmul.f32 %v3308, %v3472
    %v3476 = vadd.f32 %v2805, %v3475
    %3477 = vrot.lane.b32.xlu0 %v375, 112
    %v3478 = vpop.permute.xlu0 %3477
    %v3479 = vsel %vm461, %v3478, 0
    %3481 = vmatprep.subr.mxu0 0.0
    %3482 = vmatpush1.xpose.msra.mxu0 %v3479
    %3483 = vmatprep.subr.mxu0 0.0
    %3484 = vmatpush1.xpose.msra.mxu0 0.0
    %3485 = vmatprep.subr.mxu0 0.0
    %3486 = vmatpush1.xpose.msra.mxu0 0.0
    %3487 = vmatprep.subr.mxu0 0.0
    %3488 = vmatpush1.xpose.msra.mxu0 0.0
    %3489 = vmatprep.subr.mxu0 0.0
    %3490 = vmatpush1.xpose.msra.mxu0 0.0
    %3491 = vmatprep.subr.mxu0 0.0
    %3492 = vmatpush1.xpose.msra.mxu0 0.0
    %3493 = vmatprep.subr.mxu0 0.0
    %3494 = vmatpush1.xpose.msra.mxu0 0.0
    %3495 = vmatprep.subr.mxu0 0.0
    %3496 = vmatpush1.xpose.msra.mxu0 0.0
    %3497 = vmatprep.subr.mxu0 0.0
    %3498 = vmatpush1.xpose.msra.mxu0 0.0
    %3499 = vmatprep.subr.mxu0 0.0
    %3500 = vmatpush1.xpose.msra.mxu0 0.0
    %3501 = vmatprep.subr.mxu0 0.0
    %3502 = vmatpush1.xpose.msra.mxu0 0.0
    %3503 = vmatprep.subr.mxu0 0.0
    %3504 = vmatpush1.xpose.msra.mxu0 0.0
    %3505 = vmatprep.subr.mxu0 0.0
    %3506 = vmatpush1.xpose.msra.mxu0 0.0
    %3507 = vmatprep.subr.mxu0 0.0
    %3508 = vmatpush1.xpose.msra.mxu0 0.0
    %3509 = vmatprep.subr.mxu0 0.0
    %3510 = vmatpush1.xpose.msra.mxu0 0.0
    %3511 = vmatprep.subr.mxu0 0.0
    %3512 = vmatpush1.xpose.msra.mxu0 0.0
    %3513 = vmatprep.subr.mxu0 0.0
    %3514 = vmatpush1.xpose.msra.mxu0 0.0
    %3515 = vmatprep.subr.mxu0 0.0
    %3516 = vmatpush1.xpose.msra.mxu0 0.0
    %3517 = vmatprep.subr.mxu0 0.0
    %3518 = vmatpush1.xpose.msra.mxu0 0.0
    %3519 = vmatprep.subr.mxu0 0.0
    %3520 = vmatpush1.xpose.msra.mxu0 0.0
    %3521 = vmatprep.subr.mxu0 0.0
    %3522 = vmatpush1.xpose.msra.mxu0 0.0
    %3523 = vmatprep.subr.mxu0 0.0
    %3524 = vmatpush1.xpose.msra.mxu0 0.0
    %3525 = vmatprep.subr.mxu0 0.0
    %3526 = vmatpush1.xpose.msra.mxu0 0.0
    %3527 = vmatprep.subr.mxu0 0.0
    %3528 = vmatpush1.xpose.msra.mxu0 0.0
    %3529 = vmatprep.subr.mxu0 0.0
    %3530 = vmatpush1.xpose.msra.mxu0 0.0
    %3531 = vmatprep.subr.mxu0 0.0
    %3532 = vmatpush1.xpose.msra.mxu0 0.0
    %3533 = vmatprep.subr.mxu0 0.0
    %3534 = vmatpush1.xpose.msra.mxu0 0.0
    %3535 = vmatprep.subr.mxu0 0.0
    %3536 = vmatpush1.xpose.msra.mxu0 0.0
    %3537 = vmatprep.subr.mxu0 0.0
    %3538 = vmatpush1.xpose.msra.mxu0 0.0
    %3539 = vmatprep.subr.mxu0 0.0
    %3540 = vmatpush1.xpose.msra.mxu0 0.0
    %3541 = vmatprep.subr.mxu0 0.0
    %3542 = vmatpush1.xpose.msra.mxu0 0.0
    %3543 = vmatprep.subr.mxu0 0.0
    %3544 = vmatpush1.xpose.msra.mxu0 0.0
    %3545 = vmatprep.mubr.f32.mxu0 0.0
    %3546 = vmatmul.mubr.f32.gmra.mrb[0].mxu0 %v2131
    %v3547 = vpop.f32.mrb[0].mxu0
    %v3548 = vadd.f32 0.0, %v3547
    %v3549 = vpop.f32.mrb[0].mxu0
    %3550 = vdwg.mxu0
    %v3551 = vmul.f32 %v3548, 0.35355338
    %v3552 = vadd.f32 %v3551, %v3217
    %v3553 = vsel %vm461, %v3552, -inf
    %3554 = vmax.xlane.f32.xlu0 %v3553
    %v3555 = vpop.xlane.xlu0 %3554
    %v3556 = vsub.f32 %v3552, %v3555
    %v3557 = vmul.f32 %v3556, 1.442695
    %v3558 = vpow.pop %v3557
    %v3559 = vsel %vm461, %v3558, 0.0
    %3560 = vadd.xlane.f32.xlu0 %v3559
    %v3561 = vpop.xlane.xlu0 %3560
    %v3562 = vrcp.pop %v3561
    %v3563 = vmul.f32 %v3558, %v3562
    %3564 = vrot.lane.b32.xlu0 %v375, 80
    %v3565 = vpop.permute.xlu0 %3564
    %v3568 = vsel %vm461, %v3563, 0
    %3570 = vmatprep.subr.mxu0 0.0
    %3571 = vmatpush1.msra.mxu0 %v3565
    %3572 = vmatprep.subr.mxu0 0.0
    %3573 = vmatpush1.msra.mxu0 0.0
    %3574 = vmatprep.subr.mxu0 0.0
    %3575 = vmatpush1.msra.mxu0 0.0
    %3576 = vmatprep.subr.mxu0 0.0
    %3577 = vmatpush1.msra.mxu0 0.0
    %3578 = vmatprep.subr.mxu0 0.0
    %3579 = vmatpush1.msra.mxu0 0.0
    %3580 = vmatprep.subr.mxu0 0.0
    %3581 = vmatpush1.msra.mxu0 0.0
    %3582 = vmatprep.subr.mxu0 0.0
    %3583 = vmatpush1.msra.mxu0 0.0
    %3584 = vmatprep.subr.mxu0 0.0
    %3585 = vmatpush1.msra.mxu0 0.0
    %3586 = vmatprep.subr.mxu0 0.0
    %3587 = vmatpush1.msra.mxu0 0.0
    %3588 = vmatprep.subr.mxu0 0.0
    %3589 = vmatpush1.msra.mxu0 0.0
    %3590 = vmatprep.subr.mxu0 0.0
    %3591 = vmatpush1.msra.mxu0 0.0
    %3592 = vmatprep.subr.mxu0 0.0
    %3593 = vmatpush1.msra.mxu0 0.0
    %3594 = vmatprep.subr.mxu0 0.0
    %3595 = vmatpush1.msra.mxu0 0.0
    %3596 = vmatprep.subr.mxu0 0.0
    %3597 = vmatpush1.msra.mxu0 0.0
    %3598 = vmatprep.subr.mxu0 0.0
    %3599 = vmatpush1.msra.mxu0 0.0
    %3600 = vmatprep.subr.mxu0 0.0
    %3601 = vmatpush1.msra.mxu0 0.0
    %3602 = vmatprep.subr.mxu0 0.0
    %3603 = vmatpush1.msra.mxu0 0.0
    %3604 = vmatprep.subr.mxu0 0.0
    %3605 = vmatpush1.msra.mxu0 0.0
    %3606 = vmatprep.subr.mxu0 0.0
    %3607 = vmatpush1.msra.mxu0 0.0
    %3608 = vmatprep.subr.mxu0 0.0
    %3609 = vmatpush1.msra.mxu0 0.0
    %3610 = vmatprep.subr.mxu0 0.0
    %3611 = vmatpush1.msra.mxu0 0.0
    %3612 = vmatprep.subr.mxu0 0.0
    %3613 = vmatpush1.msra.mxu0 0.0
    %3614 = vmatprep.subr.mxu0 0.0
    %3615 = vmatpush1.msra.mxu0 0.0
    %3616 = vmatprep.subr.mxu0 0.0
    %3617 = vmatpush1.msra.mxu0 0.0
    %3618 = vmatprep.subr.mxu0 0.0
    %3619 = vmatpush1.msra.mxu0 0.0
    %3620 = vmatprep.subr.mxu0 0.0
    %3621 = vmatpush1.msra.mxu0 0.0
    %3622 = vmatprep.subr.mxu0 0.0
    %3623 = vmatpush1.msra.mxu0 0.0
    %3624 = vmatprep.subr.mxu0 0.0
    %3625 = vmatpush1.msra.mxu0 0.0
    %3626 = vmatprep.subr.mxu0 0.0
    %3627 = vmatpush1.msra.mxu0 0.0
    %3628 = vmatprep.subr.mxu0 0.0
    %3629 = vmatpush1.msra.mxu0 0.0
    %3630 = vmatprep.subr.mxu0 0.0
    %3631 = vmatpush1.msra.mxu0 0.0
    %3632 = vmatprep.subr.mxu0 0.0
    %3633 = vmatpush1.msra.mxu0 0.0
    %3634 = vmatprep.mubr.f32.mxu0 0.0
    %3635 = vmatmul.mubr.f32.gmra.mrb[0].mxu0 %v3568
    %v3636 = vpop.f32.mrb[0].mxu0
    %v3637 = vadd.f32 0.0, %v3636
    %v3638 = vpop.f32.mrb[0].mxu0
    %3639 = vdwg.mxu0
    %v3640 = vmul.f32 %v3308, %v3637
    %v3641 = vadd.f32 %v2970, %v3640
    %3642 = vrot.lane.b32.xlu0 %v375, 104
    %v3643 = vpop.permute.xlu0 %3642
    %v3644 = vsel %vm461, %v3643, 0
    %3646 = vmatprep.subr.mxu0 0.0
    %3647 = vmatpush1.xpose.msra.mxu0 %v3644
    %3648 = vmatprep.subr.mxu0 0.0
    %3649 = vmatpush1.xpose.msra.mxu0 0.0
    %3650 = vmatprep.subr.mxu0 0.0
    %3651 = vmatpush1.xpose.msra.mxu0 0.0
    %3652 = vmatprep.subr.mxu0 0.0
    %3653 = vmatpush1.xpose.msra.mxu0 0.0
    %3654 = vmatprep.subr.mxu0 0.0
    %3655 = vmatpush1.xpose.msra.mxu0 0.0
    %3656 = vmatprep.subr.mxu0 0.0
    %3657 = vmatpush1.xpose.msra.mxu0 0.0
    %3658 = vmatprep.subr.mxu0 0.0
    %3659 = vmatpush1.xpose.msra.mxu0 0.0
    %3660 = vmatprep.subr.mxu0 0.0
    %3661 = vmatpush1.xpose.msra.mxu0 0.0
    %3662 = vmatprep.subr.mxu0 0.0
    %3663 = vmatpush1.xpose.msra.mxu0 0.0
    %3664 = vmatprep.subr.mxu0 0.0
    %3665 = vmatpush1.xpose.msra.mxu0 0.0
    %3666 = vmatprep.subr.mxu0 0.0
    %3667 = vmatpush1.xpose.msra.mxu0 0.0
    %3668 = vmatprep.subr.mxu0 0.0
    %3669 = vmatpush1.xpose.msra.mxu0 0.0
    %3670 = vmatprep.subr.mxu0 0.0
    %3671 = vmatpush1.xpose.msra.mxu0 0.0
    %3672 = vmatprep.subr.mxu0 0.0
    %3673 = vmatpush1.xpose.msra.mxu0 0.0
    %3674 = vmatprep.subr.mxu0 0.0
    %3675 = vmatpush1.xpose.msra.mxu0 0.0
    %3676 = vmatprep.subr.mxu0 0.0
    %3677 = vmatpush1.xpose.msra.mxu0 0.0
    %3678 = vmatprep.subr.mxu0 0.0
    %3679 = vmatpush1.xpose.msra.mxu0 0.0
    %3680 = vmatprep.subr.mxu0 0.0
    %3681 = vmatpush1.xpose.msra.mxu0 0.0
    %3682 = vmatprep.subr.mxu0 0.0
    %3683 = vmatpush1.xpose.msra.mxu0 0.0
    %3684 = vmatprep.subr.mxu0 0.0
    %3685 = vmatpush1.xpose.msra.mxu0 0.0
    %3686 = vmatprep.subr.mxu0 0.0
    %3687 = vmatpush1.xpose.msra.mxu0 0.0
    %3688 = vmatprep.subr.mxu0 0.0
    %3689 = vmatpush1.xpose.msra.mxu0 0.0
    %3690 = vmatprep.subr.mxu0 0.0
    %3691 = vmatpush1.xpose.msra.mxu0 0.0
    %3692 = vmatprep.subr.mxu0 0.0
    %3693 = vmatpush1.xpose.msra.mxu0 0.0
    %3694 = vmatprep.subr.mxu0 0.0
    %3695 = vmatpush1.xpose.msra.mxu0 0.0
    %3696 = vmatprep.subr.mxu0 0.0
    %3697 = vmatpush1.xpose.msra.mxu0 0.0
    %3698 = vmatprep.subr.mxu0 0.0
    %3699 = vmatpush1.xpose.msra.mxu0 0.0
    %3700 = vmatprep.subr.mxu0 0.0
    %3701 = vmatpush1.xpose.msra.mxu0 0.0
    %3702 = vmatprep.subr.mxu0 0.0
    %3703 = vmatpush1.xpose.msra.mxu0 0.0
    %3704 = vmatprep.subr.mxu0 0.0
    %3705 = vmatpush1.xpose.msra.mxu0 0.0
    %3706 = vmatprep.subr.mxu0 0.0
    %3707 = vmatpush1.xpose.msra.mxu0 0.0
    %3708 = vmatprep.subr.mxu0 0.0
    %3709 = vmatpush1.xpose.msra.mxu0 0.0
    %3710 = vmatprep.mubr.f32.mxu0 0.0
    %3711 = vmatmul.mubr.f32.gmra.mrb[0].mxu0 %v2300
    %v3712 = vpop.f32.mrb[0].mxu0
    %v3713 = vadd.f32 0.0, %v3712
    %v3714 = vpop.f32.mrb[0].mxu0
    %3715 = vdwg.mxu0
    %v3716 = vmul.f32 %v3713, 0.35355338
    %v3717 = vadd.f32 %v3716, %v3217
    %v3718 = vsel %vm461, %v3717, -inf
    %3719 = vmax.xlane.f32.xlu0 %v3718
    %v3720 = vpop.xlane.xlu0 %3719
    %v3721 = vsub.f32 %v3717, %v3720
    %v3722 = vmul.f32 %v3721, 1.442695
    %v3723 = vpow.pop %v3722
    %v3724 = vsel %vm461, %v3723, 0.0
    %3725 = vadd.xlane.f32.xlu0 %v3724
    %v3726 = vpop.xlane.xlu0 %3725
    %v3727 = vrcp.pop %v3726
    %v3728 = vmul.f32 %v3723, %v3727
    %3729 = vrot.lane.b32.xlu0 %v375, 72
    %v3730 = vpop.permute.xlu0 %3729
    %v3733 = vsel %vm461, %v3728, 0
    %3735 = vmatprep.subr.mxu0 0.0
    %3736 = vmatpush1.msra.mxu0 %v3730
    %3737 = vmatprep.subr.mxu0 0.0
    %3738 = vmatpush1.msra.mxu0 0.0
    %3739 = vmatprep.subr.mxu0 0.0
    %3740 = vmatpush1.msra.mxu0 0.0
    %3741 = vmatprep.subr.mxu0 0.0
    %3742 = vmatpush1.msra.mxu0 0.0
    %3743 = vmatprep.subr.mxu0 0.0
    %3744 = vmatpush1.msra.mxu0 0.0
    %3745 = vmatprep.subr.mxu0 0.0
    %3746 = vmatpush1.msra.mxu0 0.0
    %3747 = vmatprep.subr.mxu0 0.0
    %3748 = vmatpush1.msra.mxu0 0.0
    %3749 = vmatprep.subr.mxu0 0.0
    %3750 = vmatpush1.msra.mxu0 0.0
    %3751 = vmatprep.subr.mxu0 0.0
    %3752 = vmatpush1.msra.mxu0 0.0
    %3753 = vmatprep.subr.mxu0 0.0
    %3754 = vmatpush1.msra.mxu0 0.0
    %3755 = vmatprep.subr.mxu0 0.0
    %3756 = vmatpush1.msra.mxu0 0.0
    %3757 = vmatprep.subr.mxu0 0.0
    %3758 = vmatpush1.msra.mxu0 0.0
    %3759 = vmatprep.subr.mxu0 0.0
    %3760 = vmatpush1.msra.mxu0 0.0
    %3761 = vmatprep.subr.mxu0 0.0
    %3762 = vmatpush1.msra.mxu0 0.0
    %3763 = vmatprep.subr.mxu0 0.0
    %3764 = vmatpush1.msra.mxu0 0.0
    %3765 = vmatprep.subr.mxu0 0.0
    %3766 = vmatpush1.msra.mxu0 0.0
    %3767 = vmatprep.subr.mxu0 0.0
    %3768 = vmatpush1.msra.mxu0 0.0
    %3769 = vmatprep.subr.mxu0 0.0
    %3770 = vmatpush1.msra.mxu0 0.0
    %3771 = vmatprep.subr.mxu0 0.0
    %3772 = vmatpush1.msra.mxu0 0.0
    %3773 = vmatprep.subr.mxu0 0.0
    %3774 = vmatpush1.msra.mxu0 0.0
    %3775 = vmatprep.subr.mxu0 0.0
    %3776 = vmatpush1.msra.mxu0 0.0
    %3777 = vmatprep.subr.mxu0 0.0
    %3778 = vmatpush1.msra.mxu0 0.0
    %3779 = vmatprep.subr.mxu0 0.0
    %3780 = vmatpush1.msra.mxu0 0.0
    %3781 = vmatprep.subr.mxu0 0.0
    %3782 = vmatpush1.msra.mxu0 0.0
    %3783 = vmatprep.subr.mxu0 0.0
    %3784 = vmatpush1.msra.mxu0 0.0
    %3785 = vmatprep.subr.mxu0 0.0
    %3786 = vmatpush1.msra.mxu0 0.0
    %3787 = vmatprep.subr.mxu0 0.0
    %3788 = vmatpush1.msra.mxu0 0.0
    %3789 = vmatprep.subr.mxu0 0.0
    %3790 = vmatpush1.msra.mxu0 0.0
    %3791 = vmatprep.subr.mxu0 0.0
    %3792 = vmatpush1.msra.mxu0 0.0
    %3793 = vmatprep.subr.mxu0 0.0
    %3794 = vmatpush1.msra.mxu0 0.0
    %3795 = vmatprep.subr.mxu0 0.0
    %3796 = vmatpush1.msra.mxu0 0.0
    %3797 = vmatprep.subr.mxu0 0.0
    %3798 = vmatpush1.msra.mxu0 0.0
    %3799 = vmatprep.mubr.f32.mxu0 0.0
    %3800 = vmatmul.mubr.f32.gmra.mrb[0].mxu0 %v3733
    %v3801 = vpop.f32.mrb[0].mxu0
    %v3802 = vadd.f32 0.0, %v3801
    %v3803 = vpop.f32.mrb[0].mxu0
    %3804 = vdwg.mxu0
    %v3805 = vmul.f32 %v3308, %v3802
    %v3806 = vadd.f32 %v3135, %v3805
    %3808 = vset.pattern.permute.xlu0 0
    %3809 = vperm.xlu0 %3808, %v3139
    %v3810 = vpop.permute.xlu0 %3809
    %v3813 = vlaneseq
    %v3814 = vshrl.u32 %v3813, 7
    %v3815 = vsub.s32 0, %v3814
    %v3816 = vrot.slane %v222, %v3815
    %v3818 = vmul.f32 %v3810, %v3816
    %v3819 = vadd.f32 %v3818, %v1350
    %v3820 = vpack.c.bf16 %v3311, %v3311
    %v3821 = vpack.c.bf16 %v218, %v218
    %v3823 = vsel %vm461, %v3820, 0
    %v3826 = vsel %vm630, %v3821, 0
    %3828 = vmatprep.subr.bf16.mxu0 0
    %3829 = vmatpush1.bf16.msra.mxu0 %v3826
    %3830 = vmatprep.subr.bf16.mxu0 0
    %3831 = vmatpush1.bf16.msra.mxu0 0
    %3832 = vmatprep.subr.bf16.mxu0 0
    %3833 = vmatpush1.bf16.msra.mxu0 0
    %3834 = vmatprep.subr.bf16.mxu0 0
    %3835 = vmatpush1.bf16.msra.mxu0 0
    %3836 = vmatprep.subr.bf16.mxu0 0
    %3837 = vmatpush1.bf16.msra.mxu0 0
    %3838 = vmatprep.subr.bf16.mxu0 0
    %3839 = vmatpush1.bf16.msra.mxu0 0
    %3840 = vmatprep.subr.bf16.mxu0 0
    %3841 = vmatpush1.bf16.msra.mxu0 0
    %3842 = vmatprep.subr.bf16.mxu0 0
    %3843 = vmatpush1.bf16.msra.mxu0 0
    %3844 = vmatprep.subr.bf16.mxu0 0
    %3845 = vmatpush1.bf16.msra.mxu0 0
    %3846 = vmatprep.subr.bf16.mxu0 0
    %3847 = vmatpush1.bf16.msra.mxu0 0
    %3848 = vmatprep.subr.bf16.mxu0 0
    %3849 = vmatpush1.bf16.msra.mxu0 0
    %3850 = vmatprep.subr.bf16.mxu0 0
    %3851 = vmatpush1.bf16.msra.mxu0 0
    %3852 = vmatprep.subr.bf16.mxu0 0
    %3853 = vmatpush1.bf16.msra.mxu0 0
    %3854 = vmatprep.subr.bf16.mxu0 0
    %3855 = vmatpush1.bf16.msra.mxu0 0
    %3856 = vmatprep.subr.bf16.mxu0 0
    %3857 = vmatpush1.bf16.msra.mxu0 0
    %3858 = vmatprep.subr.bf16.mxu0 0
    %3859 = vmatpush1.bf16.msra.mxu0 0
    %3860 = vmatprep.mubr.bf16.mxu0 0
    %3861 = vmatmul.mubr.bf16.gmra.mrb[0].mxu0 %v3823
    %v3862 = vpop.f32.mrb[0].mxu0
    %v3863 = vadd.f32 0.0, %v3862
    %v3864 = vpop.f32.mrb[0].mxu0
    %v3865 = vpop.f32.mrb[0].mxu0
    %v3866 = vpop.f32.mrb[0].mxu0
    %3867 = vdwg.mxu0
    %v3868 = vadd.f32 %v3819, %v3863
    %v3869 = vpack.c.bf16 %v3476, %v3476
    %v3870 = vpack.c.bf16 %v219, %v219
    %v3872 = vsel %vm461, %v3869, 0
    %v3875 = vsel %vm630, %v3870, 0
    %3877 = vmatprep.subr.bf16.mxu0 0
    %3878 = vmatpush1.bf16.msra.mxu0 %v3875
    %3879 = vmatprep.subr.bf16.mxu0 0
    %3880 = vmatpush1.bf16.msra.mxu0 0
    %3881 = vmatprep.subr.bf16.mxu0 0
    %3882 = vmatpush1.bf16.msra.mxu0 0
    %3883 = vmatprep.subr.bf16.mxu0 0
    %3884 = vmatpush1.bf16.msra.mxu0 0
    %3885 = vmatprep.subr.bf16.mxu0 0
    %3886 = vmatpush1.bf16.msra.mxu0 0
    %3887 = vmatprep.subr.bf16.mxu0 0
    %3888 = vmatpush1.bf16.msra.mxu0 0
    %3889 = vmatprep.subr.bf16.mxu0 0
    %3890 = vmatpush1.bf16.msra.mxu0 0
    %3891 = vmatprep.subr.bf16.mxu0 0
    %3892 = vmatpush1.bf16.msra.mxu0 0
    %3893 = vmatprep.subr.bf16.mxu0 0
    %3894 = vmatpush1.bf16.msra.mxu0 0
    %3895 = vmatprep.subr.bf16.mxu0 0
    %3896 = vmatpush1.bf16.msra.mxu0 0
    %3897 = vmatprep.subr.bf16.mxu0 0
    %3898 = vmatpush1.bf16.msra.mxu0 0
    %3899 = vmatprep.subr.bf16.mxu0 0
    %3900 = vmatpush1.bf16.msra.mxu0 0
    %3901 = vmatprep.subr.bf16.mxu0 0
    %3902 = vmatpush1.bf16.msra.mxu0 0
    %3903 = vmatprep.subr.bf16.mxu0 0
    %3904 = vmatpush1.bf16.msra.mxu0 0
    %3905 = vmatprep.subr.bf16.mxu0 0
    %3906 = vmatpush1.bf16.msra.mxu0 0
    %3907 = vmatprep.subr.bf16.mxu0 0
    %3908 = vmatpush1.bf16.msra.mxu0 0
    %3909 = vmatprep.mubr.bf16.mxu0 0
    %3910 = vmatmul.mubr.bf16.gmra.mrb[0].mxu0 %v3872
    %v3911 = vpop.f32.mrb[0].mxu0
    %v3912 = vadd.f32 0.0, %v3911
    %v3913 = vpop.f32.mrb[0].mxu0
    %v3914 = vpop.f32.mrb[0].mxu0
    %v3915 = vpop.f32.mrb[0].mxu0
    %3916 = vdwg.mxu0
    %v3917 = vadd.f32 %v3868, %v3912
    %v3918 = vpack.c.bf16 %v3641, %v3641
    %v3919 = vpack.c.bf16 %v220, %v220
    %v3921 = vsel %vm461, %v3918, 0
    %v3924 = vsel %vm630, %v3919, 0
    %3926 = vmatprep.subr.bf16.mxu0 0
    %3927 = vmatpush1.bf16.msra.mxu0 %v3924
    %3928 = vmatprep.subr.bf16.mxu0 0
    %3929 = vmatpush1.bf16.msra.mxu0 0
    %3930 = vmatprep.subr.bf16.mxu0 0
    %3931 = vmatpush1.bf16.msra.mxu0 0
    %3932 = vmatprep.subr.bf16.mxu0 0
    %3933 = vmatpush1.bf16.msra.mxu0 0
    %3934 = vmatprep.subr.bf16.mxu0 0
    %3935 = vmatpush1.bf16.msra.mxu0 0
    %3936 = vmatprep.subr.bf16.mxu0 0
    %3937 = vmatpush1.bf16.msra.mxu0 0
    %3938 = vmatprep.subr.bf16.mxu0 0
    %3939 = vmatpush1.bf16.msra.mxu0 0
    %3940 = vmatprep.subr.bf16.mxu0 0
    %3941 = vmatpush1.bf16.msra.mxu0 0
    %3942 = vmatprep.subr.bf16.mxu0 0
    %3943 = vmatpush1.bf16.msra.mxu0 0
    %3944 = vmatprep.subr.bf16.mxu0 0
    %3945 = vmatpush1.bf16.msra.mxu0 0
    %3946 = vmatprep.subr.bf16.mxu0 0
    %3947 = vmatpush1.bf16.msra.mxu0 0
    %3948 = vmatprep.subr.bf16.mxu0 0
    %3949 = vmatpush1.bf16.msra.mxu0 0
    %3950 = vmatprep.subr.bf16.mxu0 0
    %3951 = vmatpush1.bf16.msra.mxu0 0
    %3952 = vmatprep.subr.bf16.mxu0 0
    %3953 = vmatpush1.bf16.msra.mxu0 0
    %3954 = vmatprep.subr.bf16.mxu0 0
    %3955 = vmatpush1.bf16.msra.mxu0 0
    %3956 = vmatprep.subr.bf16.mxu0 0
    %3957 = vmatpush1.bf16.msra.mxu0 0
    %3958 = vmatprep.mubr.bf16.mxu0 0
    %3959 = vmatmul.mubr.bf16.gmra.mrb[0].mxu0 %v3921
    %v3960 = vpop.f32.mrb[0].mxu0
    %v3961 = vadd.f32 0.0, %v3960
    %v3962 = vpop.f32.mrb[0].mxu0
    %v3963 = vpop.f32.mrb[0].mxu0
    %v3964 = vpop.f32.mrb[0].mxu0
    %3965 = vdwg.mxu0
    %v3966 = vadd.f32 %v3917, %v3961
    %v3967 = vpack.c.bf16 %v3806, %v3806
    %v3968 = vpack.c.bf16 %v221, %v221
    %v3970 = vsel %vm461, %v3967, 0
    %v3973 = vsel %vm630, %v3968, 0
    %3975 = vmatprep.subr.bf16.mxu0 0
    %3976 = vmatpush1.bf16.msra.mxu0 %v3973
    %3977 = vmatprep.subr.bf16.mxu0 0
    %3978 = vmatpush1.bf16.msra.mxu0 0
    %3979 = vmatprep.subr.bf16.mxu0 0
    %3980 = vmatpush1.bf16.msra.mxu0 0
    %3981 = vmatprep.subr.bf16.mxu0 0
    %3982 = vmatpush1.bf16.msra.mxu0 0
    %3983 = vmatprep.subr.bf16.mxu0 0
    %3984 = vmatpush1.bf16.msra.mxu0 0
    %3985 = vmatprep.subr.bf16.mxu0 0
    %3986 = vmatpush1.bf16.msra.mxu0 0
    %3987 = vmatprep.subr.bf16.mxu0 0
    %3988 = vmatpush1.bf16.msra.mxu0 0
    %3989 = vmatprep.subr.bf16.mxu0 0
    %3990 = vmatpush1.bf16.msra.mxu0 0
    %3991 = vmatprep.subr.bf16.mxu0 0
    %3992 = vmatpush1.bf16.msra.mxu0 0
    %3993 = vmatprep.subr.bf16.mxu0 0
    %3994 = vmatpush1.bf16.msra.mxu0 0
    %3995 = vmatprep.subr.bf16.mxu0 0
    %3996 = vmatpush1.bf16.msra.mxu0 0
    %3997 = vmatprep.subr.bf16.mxu0 0
    %3998 = vmatpush1.bf16.msra.mxu0 0
    %3999 = vmatprep.subr.bf16.mxu0 0
    %4000 = vmatpush1.bf16.msra.mxu0 0
    %4001 = vmatprep.subr.bf16.mxu0 0
    %4002 = vmatpush1.bf16.msra.mxu0 0
    %4003 = vmatprep.subr.bf16.mxu0 0
    %4004 = vmatpush1.bf16.msra.mxu0 0
    %4005 = vmatprep.subr.bf16.mxu0 0
    %4006 = vmatpush1.bf16.msra.mxu0 0
    %4007 = vmatprep.mubr.bf16.mxu0 0
    %4008 = vmatmul.mubr.bf16.gmra.mrb[0].mxu0 %v3970
    %v4009 = vpop.f32.mrb[0].mxu0
    %v4010 = vadd.f32 0.0, %v4009
    %v4011 = vpop.f32.mrb[0].mxu0
    %v4012 = vpop.f32.mrb[0].mxu0
    %v4013 = vpop.f32.mrb[0].mxu0
    %4014 = vdwg.mxu0
    %v4015 = vadd.f32 %v3966, %v4010
    %v4016 = vsel %vm262, %v4015, 0.0
    %4017 = vadd.xlane.f32.xlu0 %v4016
    %v4018 = vpop.xlane.xlu0 %4017
    %v4019 = vmul.f32 %v4018, %v1326
    %v4020 = vsub.f32 %v4015, %v4019
    %v4021 = vmul.f32 %v4020, %v4020
    %v4022 = vsel %vm262, %v4021, 0.0
    %4023 = vadd.xlane.f32.xlu0 %v4022
    %v4024 = vpop.xlane.xlu0 %4023
    %v4025 = vmul.f32 %v4024, %v1326
    %v4026 = vadd.f32 %v4025, 1e-05
    %v4027 = vrsqrt.pop %v4026
    %v4028 = vmul.f32 %v4020, %v4027
    %v4030 = vlaneseq
    %v4031 = vshrl.u32 %v4030, 7
    %v4032 = vsub.s32 0, %v4031
    %v4033 = vrot.slane %v225, %v4032
    %v4035 = vmul.f32 %v4028, %v4033
    %v4037 = vlaneseq
    %v4038 = vshrl.u32 %v4037, 7
    %v4039 = vsub.s32 0, %v4038
    %v4040 = vrot.slane %v226, %v4039
    %v4042 = vadd.f32 %v4035, %v4040
    %v4043 = vpack.c.bf16 %v4042, %v4042
    %v4044 = vpack.c.bf16 %v235, %v234
    %v4045 = vpack.c.bf16 %v237, %v236
    %v4047 = vlaneseq
    %v4048 = vshrl.u32 %v4047, 7
    %v4049 = vsub.s32 0, %v4048
    %v4050 = vrot.slane %v238, %v4049
    %v4053 = vsel %vm262, %v4043, 0
    %4055 = vmatprep.subr.bf16.mxu0 0
    %4056 = vmatpush1.bf16.msra.mxu0 %v4044
    %4057 = vmatprep.subr.bf16.mxu0 0
    %4058 = vmatpush1.bf16.msra.mxu0 %v4045
    %4059 = vmatprep.subr.bf16.mxu0 0
    %4060 = vmatpush1.bf16.msra.mxu0 0
    %4061 = vmatprep.subr.bf16.mxu0 0
    %4062 = vmatpush1.bf16.msra.mxu0 0
    %4063 = vmatprep.subr.bf16.mxu0 0
    %4064 = vmatpush1.bf16.msra.mxu0 0
    %4065 = vmatprep.subr.bf16.mxu0 0
    %4066 = vmatpush1.bf16.msra.mxu0 0
    %4067 = vmatprep.subr.bf16.mxu0 0
    %4068 = vmatpush1.bf16.msra.mxu0 0
    %4069 = vmatprep.subr.bf16.mxu0 0
    %4070 = vmatpush1.bf16.msra.mxu0 0
    %4071 = vmatprep.subr.bf16.mxu0 0
    %4072 = vmatpush1.bf16.msra.mxu0 0
    %4073 = vmatprep.subr.bf16.mxu0 0
    %4074 = vmatpush1.bf16.msra.mxu0 0
    %4075 = vmatprep.subr.bf16.mxu0 0
    %4076 = vmatpush1.bf16.msra.mxu0 0
    %4077 = vmatprep.subr.bf16.mxu0 0
    %4078 = vmatpush1.bf16.msra.mxu0 0
    %4079 = vmatprep.subr.bf16.mxu0 0
    %4080 = vmatpush1.bf16.msra.mxu0 0
    %4081 = vmatprep.subr.bf16.mxu0 0
    %4082 = vmatpush1.bf16.msra.mxu0 0
    %4083 = vmatprep.subr.bf16.mxu0 0
    %4084 = vmatpush1.bf16.msra.mxu0 0
    %4085 = vmatprep.subr.bf16.mxu0 0
    %4086 = vmatpush1.bf16.msra.mxu0 0
    %4087 = vmatprep.mubr.bf16.mxu0 0
    %4088 = vmatmul.mubr.bf16.gmra.mrb[0].mxu0 %v4053
    %v4089 = vpop.f32.mrb[0].mxu0
    %v4090 = vadd.f32 %v4050, %v4089
    %v4091 = vpop.f32.mrb[0].mxu0
    %v4092 = vpop.f32.mrb[0].mxu0
    %v4093 = vpop.f32.mrb[0].mxu0
    %4094 = vdwg.mxu0
    %v4095 = vmax.f32 %v4090, 0.0
    %v4096 = vpack.c.bf16 %v4095, %v4095
    %v4097 = vpack.c.bf16 %v240, %v239
    %v4098 = vpack.c.bf16 %v242, %v241
    %v4099 = vpack.c.bf16 %v244, %v243
    %v4100 = vpack.c.bf16 %v246, %v245
    %v4102 = vlaneseq
    %v4103 = vshrl.u32 %v4102, 7
    %v4104 = vsub.s32 0, %v4103
    %v4105 = vrot.slane %v247, %v4104
    %vm4107 = vcmask 523264
    %v4109 = vsel %vm4107, %v4096, 0
    %4111 = vmatprep.subr.bf16.mxu0 0
    %4112 = vmatpush1.bf16.msra.mxu0 %v4097
    %4113 = vmatprep.subr.bf16.mxu0 0
    %4114 = vmatpush1.bf16.msra.mxu0 %v4098
    %4115 = vmatprep.subr.bf16.mxu0 0
    %4116 = vmatpush1.bf16.msra.mxu0 %v4099
    %4117 = vmatprep.subr.bf16.mxu0 0
    %4118 = vmatpush1.bf16.msra.mxu0 %v4100
    %4119 = vmatprep.subr.bf16.mxu0 0
    %4120 = vmatpush1.bf16.msra.mxu0 0
    %4121 = vmatprep.subr.bf16.mxu0 0
    %4122 = vmatpush1.bf16.msra.mxu0 0
    %4123 = vmatprep.subr.bf16.mxu0 0
    %4124 = vmatpush1.bf16.msra.mxu0 0
    %4125 = vmatprep.subr.bf16.mxu0 0
    %4126 = vmatpush1.bf16.msra.mxu0 0
    %4127 = vmatprep.subr.bf16.mxu0 0
    %4128 = vmatpush1.bf16.msra.mxu0 0
    %4129 = vmatprep.subr.bf16.mxu0 0
    %4130 = vmatpush1.bf16.msra.mxu0 0
    %4131 = vmatprep.subr.bf16.mxu0 0
    %4132 = vmatpush1.bf16.msra.mxu0 0
    %4133 = vmatprep.subr.bf16.mxu0 0
    %4134 = vmatpush1.bf16.msra.mxu0 0
    %4135 = vmatprep.subr.bf16.mxu0 0
    %4136 = vmatpush1.bf16.msra.mxu0 0
    %4137 = vmatprep.subr.bf16.mxu0 0
    %4138 = vmatpush1.bf16.msra.mxu0 0
    %4139 = vmatprep.subr.bf16.mxu0 0
    %4140 = vmatpush1.bf16.msra.mxu0 0
    %4141 = vmatprep.subr.bf16.mxu0 0
    %4142 = vmatpush1.bf16.msra.mxu0 0
    %4143 = vmatprep.mubr.bf16.mxu0 0
    %4144 = vmatmul.mubr.bf16.gmra.mrb[0].mxu0 %v4109
    %v4145 = vpop.f32.mrb[0].mxu0
    %v4146 = vadd.f32 %v4105, %v4145
    %v4147 = vpop.f32.mrb[0].mxu0
    %v4148 = vpop.f32.mrb[0].mxu0
    %v4149 = vpop.f32.mrb[0].mxu0
    %4150 = vdwg.mxu0
    %v4151 = vadd.f32 %v4146, %v4042
    %v4152 = vsel %vm262, %v4151, 0.0
    %4153 = vadd.xlane.f32.xlu0 %v4152
    %v4154 = vpop.xlane.xlu0 %4153
    %v4155 = vmul.f32 %v4154, %v1326
    %v4156 = vsub.f32 %v4151, %v4155
    %v4157 = vmul.f32 %v4156, %v4156
    %v4158 = vsel %vm262, %v4157, 0.0
    %4159 = vadd.xlane.f32.xlu0 %v4158
    %v4160 = vpop.xlane.xlu0 %4159
    %v4161 = vmul.f32 %v4160, %v1326
    %v4162 = vadd.f32 %v4161, 1e-05
    %v4163 = vrsqrt.pop %v4162
    %v4164 = vmul.f32 %v4156, %v4163
    %v4166 = vlaneseq
    %v4167 = vshrl.u32 %v4166, 7
    %v4168 = vsub.s32 0, %v4167
    %v4169 = vrot.slane %v227, %v4168
    %v4171 = vmul.f32 %v4164, %v4169
    %v4173 = vlaneseq
    %v4174 = vshrl.u32 %v4173, 7
    %v4175 = vsub.s32 0, %v4174
    %v4176 = vrot.slane %v228, %v4175
    %v4178 = vadd.f32 %v4171, %v4176
    %4179 = vst.msk [vmem:[%s61] sm:$0xff] %vm262, %v4178
    %v4180 = vlaneseq
    %v4181 = vshrl.u32 %v4180, 7
    %v4182 = vsub.s32 1, %v4181
    %v4183 = vrot.slane %v209, %v4182
    %v4184 = vadd.f32 %v208, %v4183
    %v4185 = vadd.f32 %v455, %v200
    %4187 = vrot.lane.b32.xlu0 %v304, 96
    %v4188 = vpop.permute.xlu0 %4187
    %v4189 = vsel %vm461, %v304, 0
    %v4191 = vsel %vm461, %v4188, 0
    %4193 = vmatprep.subr.mxu0 0.0
    %4194 = vmatpush1.xpose.msra.mxu0 %v4191
    %4195 = vmatprep.subr.mxu0 0.0
    %4196 = vmatpush1.xpose.msra.mxu0 0.0
    %4197 = vmatprep.subr.mxu0 0.0
    %4198 = vmatpush1.xpose.msra.mxu0 0.0
    %4199 = vmatprep.subr.mxu0 0.0
    %4200 = vmatpush1.xpose.msra.mxu0 0.0
    %4201 = vmatprep.subr.mxu0 0.0
    %4202 = vmatpush1.xpose.msra.mxu0 0.0
    %4203 = vmatprep.subr.mxu0 0.0
    %4204 = vmatpush1.xpose.msra.mxu0 0.0
    %4205 = vmatprep.subr.mxu0 0.0
    %4206 = vmatpush1.xpose.msra.mxu0 0.0
    %4207 = vmatprep.subr.mxu0 0.0
    %4208 = vmatpush1.xpose.msra.mxu0 0.0
    %4209 = vmatprep.subr.mxu0 0.0
    %4210 = vmatpush1.xpose.msra.mxu0 0.0
    %4211 = vmatprep.subr.mxu0 0.0
    %4212 = vmatpush1.xpose.msra.mxu0 0.0
    %4213 = vmatprep.subr.mxu0 0.0
    %4214 = vmatpush1.xpose.msra.mxu0 0.0
    %4215 = vmatprep.subr.mxu0 0.0
    %4216 = vmatpush1.xpose.msra.mxu0 0.0
    %4217 = vmatprep.subr.mxu0 0.0
    %4218 = vmatpush1.xpose.msra.mxu0 0.0
    %4219 = vmatprep.subr.mxu0 0.0
    %4220 = vmatpush1.xpose.msra.mxu0 0.0
    %4221 = vmatprep.subr.mxu0 0.0
    %4222 = vmatpush1.xpose.msra.mxu0 0.0
    %4223 = vmatprep.subr.mxu0 0.0
    %4224 = vmatpush1.xpose.msra.mxu0 0.0
    %4225 = vmatprep.subr.mxu0 0.0
    %4226 = vmatpush1.xpose.msra.mxu0 0.0
    %4227 = vmatprep.subr.mxu0 0.0
    %4228 = vmatpush1.xpose.msra.mxu0 0.0
    %4229 = vmatprep.subr.mxu0 0.0
    %4230 = vmatpush1.xpose.msra.mxu0 0.0
    %4231 = vmatprep.subr.mxu0 0.0
    %4232 = vmatpush1.xpose.msra.mxu0 0.0
    %4233 = vmatprep.subr.mxu0 0.0
    %4234 = vmatpush1.xpose.msra.mxu0 0.0
    %4235 = vmatprep.subr.mxu0 0.0
    %4236 = vmatpush1.xpose.msra.mxu0 0.0
    %4237 = vmatprep.subr.mxu0 0.0
    %4238 = vmatpush1.xpose.msra.mxu0 0.0
    %4239 = vmatprep.subr.mxu0 0.0
    %4240 = vmatpush1.xpose.msra.mxu0 0.0
    %4241 = vmatprep.subr.mxu0 0.0
    %4242 = vmatpush1.xpose.msra.mxu0 0.0
    %4243 = vmatprep.subr.mxu0 0.0
    %4244 = vmatpush1.xpose.msra.mxu0 0.0
    %4245 = vmatprep.subr.mxu0 0.0
    %4246 = vmatpush1.xpose.msra.mxu0 0.0
    %4247 = vmatprep.subr.mxu0 0.0
    %4248 = vmatpush1.xpose.msra.mxu0 0.0
    %4249 = vmatprep.subr.mxu0 0.0
    %4250 = vmatpush1.xpose.msra.mxu0 0.0
    %4251 = vmatprep.subr.mxu0 0.0
    %4252 = vmatpush1.xpose.msra.mxu0 0.0
    %4253 = vmatprep.subr.mxu0 0.0
    %4254 = vmatpush1.xpose.msra.mxu0 0.0
    %4255 = vmatprep.subr.mxu0 0.0
    %4256 = vmatpush1.xpose.msra.mxu0 0.0
    %4257 = vmatprep.mubr.f32.mxu0 0.0
    %4258 = vmatmul.mubr.f32.gmra.mrb[0].mxu0 %v4189
    %v4259 = vpop.f32.mrb[0].mxu0
    %v4260 = vadd.f32 0.0, %v4259
    %v4261 = vpop.f32.mrb[0].mxu0
    %4262 = vdwg.mxu0
    %v4263 = vmul.f32 %v4260, 0.35355338
    %v4264 = vadd.f32 %v4263, %v4184
    %v4265 = vsel %vm461, %v4264, -inf
    %4266 = vmax.xlane.f32.xlu0 %v4265
    %v4267 = vpop.xlane.xlu0 %4266
    %v4268 = vsub.f32 %v4264, %v4267
    %v4269 = vmul.f32 %v4268, 1.442695
    %v4270 = vpow.pop %v4269
    %v4271 = vsel %vm461, %v4270, 0.0
    %4272 = vadd.xlane.f32.xlu0 %v4271
    %v4273 = vpop.xlane.xlu0 %4272
    %v4274 = vrcp.pop %v4273
    %v4275 = vmul.f32 %v4270, %v4274
    %4276 = vrot.lane.b32.xlu0 %v304, 64
    %v4277 = vpop.permute.xlu0 %4276
    %v4280 = vsel %vm461, %v4275, 0
    %4282 = vmatprep.subr.mxu0 0.0
    %4283 = vmatpush1.msra.mxu0 %v4277
    %4284 = vmatprep.subr.mxu0 0.0
    %4285 = vmatpush1.msra.mxu0 0.0
    %4286 = vmatprep.subr.mxu0 0.0
    %4287 = vmatpush1.msra.mxu0 0.0
    %4288 = vmatprep.subr.mxu0 0.0
    %4289 = vmatpush1.msra.mxu0 0.0
    %4290 = vmatprep.subr.mxu0 0.0
    %4291 = vmatpush1.msra.mxu0 0.0
    %4292 = vmatprep.subr.mxu0 0.0
    %4293 = vmatpush1.msra.mxu0 0.0
    %4294 = vmatprep.subr.mxu0 0.0
    %4295 = vmatpush1.msra.mxu0 0.0
    %4296 = vmatprep.subr.mxu0 0.0
    %4297 = vmatpush1.msra.mxu0 0.0
    %4298 = vmatprep.subr.mxu0 0.0
    %4299 = vmatpush1.msra.mxu0 0.0
    %4300 = vmatprep.subr.mxu0 0.0
    %4301 = vmatpush1.msra.mxu0 0.0
    %4302 = vmatprep.subr.mxu0 0.0
    %4303 = vmatpush1.msra.mxu0 0.0
    %4304 = vmatprep.subr.mxu0 0.0
    %4305 = vmatpush1.msra.mxu0 0.0
    %4306 = vmatprep.subr.mxu0 0.0
    %4307 = vmatpush1.msra.mxu0 0.0
    %4308 = vmatprep.subr.mxu0 0.0
    %4309 = vmatpush1.msra.mxu0 0.0
    %4310 = vmatprep.subr.mxu0 0.0
    %4311 = vmatpush1.msra.mxu0 0.0
    %4312 = vmatprep.subr.mxu0 0.0
    %4313 = vmatpush1.msra.mxu0 0.0
    %4314 = vmatprep.subr.mxu0 0.0
    %4315 = vmatpush1.msra.mxu0 0.0
    %4316 = vmatprep.subr.mxu0 0.0
    %4317 = vmatpush1.msra.mxu0 0.0
    %4318 = vmatprep.subr.mxu0 0.0
    %4319 = vmatpush1.msra.mxu0 0.0
    %4320 = vmatprep.subr.mxu0 0.0
    %4321 = vmatpush1.msra.mxu0 0.0
    %4322 = vmatprep.subr.mxu0 0.0
    %4323 = vmatpush1.msra.mxu0 0.0
    %4324 = vmatprep.subr.mxu0 0.0
    %4325 = vmatpush1.msra.mxu0 0.0
    %4326 = vmatprep.subr.mxu0 0.0
    %4327 = vmatpush1.msra.mxu0 0.0
    %4328 = vmatprep.subr.mxu0 0.0
    %4329 = vmatpush1.msra.mxu0 0.0
    %4330 = vmatprep.subr.mxu0 0.0
    %4331 = vmatpush1.msra.mxu0 0.0
    %4332 = vmatprep.subr.mxu0 0.0
    %4333 = vmatpush1.msra.mxu0 0.0
    %4334 = vmatprep.subr.mxu0 0.0
    %4335 = vmatpush1.msra.mxu0 0.0
    %4336 = vmatprep.subr.mxu0 0.0
    %4337 = vmatpush1.msra.mxu0 0.0
    %4338 = vmatprep.subr.mxu0 0.0
    %4339 = vmatpush1.msra.mxu0 0.0
    %4340 = vmatprep.subr.mxu0 0.0
    %4341 = vmatpush1.msra.mxu0 0.0
    %4342 = vmatprep.subr.mxu0 0.0
    %4343 = vmatpush1.msra.mxu0 0.0
    %4344 = vmatprep.subr.mxu0 0.0
    %4345 = vmatpush1.msra.mxu0 0.0
    %4346 = vmatprep.mubr.f32.mxu0 0.0
    %4347 = vmatmul.mubr.f32.gmra.mrb[0].mxu0 %v4280
    %v4348 = vpop.f32.mrb[0].mxu0
    %v4349 = vadd.f32 0.0, %v4348
    %v4350 = vpop.f32.mrb[0].mxu0
    %4351 = vdwg.mxu0
    %v4352 = vpack.c.bf16 %v4349, %v4349
    %v4354 = vsel %vm461, %v4352, 0
    %4356 = vmatprep.subr.bf16.mxu0 0
    %4357 = vmatpush1.bf16.msra.mxu0 %v632
    %4358 = vmatprep.subr.bf16.mxu0 0
    %4359 = vmatpush1.bf16.msra.mxu0 0
    %4360 = vmatprep.subr.bf16.mxu0 0
    %4361 = vmatpush1.bf16.msra.mxu0 0
    %4362 = vmatprep.subr.bf16.mxu0 0
    %4363 = vmatpush1.bf16.msra.mxu0 0
    %4364 = vmatprep.subr.bf16.mxu0 0
    %4365 = vmatpush1.bf16.msra.mxu0 0
    %4366 = vmatprep.subr.bf16.mxu0 0
    %4367 = vmatpush1.bf16.msra.mxu0 0
    %4368 = vmatprep.subr.bf16.mxu0 0
    %4369 = vmatpush1.bf16.msra.mxu0 0
    %4370 = vmatprep.subr.bf16.mxu0 0
    %4371 = vmatpush1.bf16.msra.mxu0 0
    %4372 = vmatprep.subr.bf16.mxu0 0
    %4373 = vmatpush1.bf16.msra.mxu0 0
    %4374 = vmatprep.subr.bf16.mxu0 0
    %4375 = vmatpush1.bf16.msra.mxu0 0
    %4376 = vmatprep.subr.bf16.mxu0 0
    %4377 = vmatpush1.bf16.msra.mxu0 0
    %4378 = vmatprep.subr.bf16.mxu0 0
    %4379 = vmatpush1.bf16.msra.mxu0 0
    %4380 = vmatprep.subr.bf16.mxu0 0
    %4381 = vmatpush1.bf16.msra.mxu0 0
    %4382 = vmatprep.subr.bf16.mxu0 0
    %4383 = vmatpush1.bf16.msra.mxu0 0
    %4384 = vmatprep.subr.bf16.mxu0 0
    %4385 = vmatpush1.bf16.msra.mxu0 0
    %4386 = vmatprep.subr.bf16.mxu0 0
    %4387 = vmatpush1.bf16.msra.mxu0 0
    %4388 = vmatprep.mubr.bf16.mxu0 0
    %4389 = vmatmul.mubr.bf16.gmra.mrb[0].mxu0 %v4354
    %v4390 = vpop.f32.mrb[0].mxu0
    %v4391 = vadd.f32 0.0, %v4390
    %v4392 = vpop.f32.mrb[0].mxu0
    %v4393 = vpop.f32.mrb[0].mxu0
    %v4394 = vpop.f32.mrb[0].mxu0
    %4395 = vdwg.mxu0
    %v4396 = vadd.f32 %v4185, %v4391
    %4397 = vrot.lane.b32.xlu0 %v304, 120
    %v4398 = vpop.permute.xlu0 %4397
    %4399 = vrot.lane.b32.xlu0 %v304, 88
    %v4400 = vpop.permute.xlu0 %4399
    %v4401 = vsel %vm461, %v4398, 0
    %v4403 = vsel %vm461, %v4400, 0
    %4405 = vmatprep.subr.mxu0 0.0
    %4406 = vmatpush1.xpose.msra.mxu0 %v4403
    %4407 = vmatprep.subr.mxu0 0.0
    %4408 = vmatpush1.xpose.msra.mxu0 0.0
    %4409 = vmatprep.subr.mxu0 0.0
    %4410 = vmatpush1.xpose.msra.mxu0 0.0
    %4411 = vmatprep.subr.mxu0 0.0
    %4412 = vmatpush1.xpose.msra.mxu0 0.0
    %4413 = vmatprep.subr.mxu0 0.0
    %4414 = vmatpush1.xpose.msra.mxu0 0.0
    %4415 = vmatprep.subr.mxu0 0.0
    %4416 = vmatpush1.xpose.msra.mxu0 0.0
    %4417 = vmatprep.subr.mxu0 0.0
    %4418 = vmatpush1.xpose.msra.mxu0 0.0
    %4419 = vmatprep.subr.mxu0 0.0
    %4420 = vmatpush1.xpose.msra.mxu0 0.0
    %4421 = vmatprep.subr.mxu0 0.0
    %4422 = vmatpush1.xpose.msra.mxu0 0.0
    %4423 = vmatprep.subr.mxu0 0.0
    %4424 = vmatpush1.xpose.msra.mxu0 0.0
    %4425 = vmatprep.subr.mxu0 0.0
    %4426 = vmatpush1.xpose.msra.mxu0 0.0
    %4427 = vmatprep.subr.mxu0 0.0
    %4428 = vmatpush1.xpose.msra.mxu0 0.0
    %4429 = vmatprep.subr.mxu0 0.0
    %4430 = vmatpush1.xpose.msra.mxu0 0.0
    %4431 = vmatprep.subr.mxu0 0.0
    %4432 = vmatpush1.xpose.msra.mxu0 0.0
    %4433 = vmatprep.subr.mxu0 0.0
    %4434 = vmatpush1.xpose.msra.mxu0 0.0
    %4435 = vmatprep.subr.mxu0 0.0
    %4436 = vmatpush1.xpose.msra.mxu0 0.0
    %4437 = vmatprep.subr.mxu0 0.0
    %4438 = vmatpush1.xpose.msra.mxu0 0.0
    %4439 = vmatprep.subr.mxu0 0.0
    %4440 = vmatpush1.xpose.msra.mxu0 0.0
    %4441 = vmatprep.subr.mxu0 0.0
    %4442 = vmatpush1.xpose.msra.mxu0 0.0
    %4443 = vmatprep.subr.mxu0 0.0
    %4444 = vmatpush1.xpose.msra.mxu0 0.0
    %4445 = vmatprep.subr.mxu0 0.0
    %4446 = vmatpush1.xpose.msra.mxu0 0.0
    %4447 = vmatprep.subr.mxu0 0.0
    %4448 = vmatpush1.xpose.msra.mxu0 0.0
    %4449 = vmatprep.subr.mxu0 0.0
    %4450 = vmatpush1.xpose.msra.mxu0 0.0
    %4451 = vmatprep.subr.mxu0 0.0
    %4452 = vmatpush1.xpose.msra.mxu0 0.0
    %4453 = vmatprep.subr.mxu0 0.0
    %4454 = vmatpush1.xpose.msra.mxu0 0.0
    %4455 = vmatprep.subr.mxu0 0.0
    %4456 = vmatpush1.xpose.msra.mxu0 0.0
    %4457 = vmatprep.subr.mxu0 0.0
    %4458 = vmatpush1.xpose.msra.mxu0 0.0
    %4459 = vmatprep.subr.mxu0 0.0
    %4460 = vmatpush1.xpose.msra.mxu0 0.0
    %4461 = vmatprep.subr.mxu0 0.0
    %4462 = vmatpush1.xpose.msra.mxu0 0.0
    %4463 = vmatprep.subr.mxu0 0.0
    %4464 = vmatpush1.xpose.msra.mxu0 0.0
    %4465 = vmatprep.subr.mxu0 0.0
    %4466 = vmatpush1.xpose.msra.mxu0 0.0
    %4467 = vmatprep.subr.mxu0 0.0
    %4468 = vmatpush1.xpose.msra.mxu0 0.0
    %4469 = vmatprep.mubr.f32.mxu0 0.0
    %4470 = vmatmul.mubr.f32.gmra.mrb[0].mxu0 %v4401
    %v4471 = vpop.f32.mrb[0].mxu0
    %v4472 = vadd.f32 0.0, %v4471
    %v4473 = vpop.f32.mrb[0].mxu0
    %4474 = vdwg.mxu0
    %v4475 = vmul.f32 %v4472, 0.35355338
    %v4476 = vadd.f32 %v4475, %v4184
    %v4477 = vsel %vm461, %v4476, -inf
    %4478 = vmax.xlane.f32.xlu0 %v4477
    %v4479 = vpop.xlane.xlu0 %4478
    %v4480 = vsub.f32 %v4476, %v4479
    %v4481 = vmul.f32 %v4480, 1.442695
    %v4482 = vpow.pop %v4481
    %v4483 = vsel %vm461, %v4482, 0.0
    %4484 = vadd.xlane.f32.xlu0 %v4483
    %v4485 = vpop.xlane.xlu0 %4484
    %v4486 = vrcp.pop %v4485
    %v4487 = vmul.f32 %v4482, %v4486
    %4488 = vrot.lane.b32.xlu0 %v304, 56
    %v4489 = vpop.permute.xlu0 %4488
    %v4492 = vsel %vm461, %v4487, 0
    %4494 = vmatprep.subr.mxu0 0.0
    %4495 = vmatpush1.msra.mxu0 %v4489
    %4496 = vmatprep.subr.mxu0 0.0
    %4497 = vmatpush1.msra.mxu0 0.0
    %4498 = vmatprep.subr.mxu0 0.0
    %4499 = vmatpush1.msra.mxu0 0.0
    %4500 = vmatprep.subr.mxu0 0.0
    %4501 = vmatpush1.msra.mxu0 0.0
    %4502 = vmatprep.subr.mxu0 0.0
    %4503 = vmatpush1.msra.mxu0 0.0
    %4504 = vmatprep.subr.mxu0 0.0
    %4505 = vmatpush1.msra.mxu0 0.0
    %4506 = vmatprep.subr.mxu0 0.0
    %4507 = vmatpush1.msra.mxu0 0.0
    %4508 = vmatprep.subr.mxu0 0.0
    %4509 = vmatpush1.msra.mxu0 0.0
    %4510 = vmatprep.subr.mxu0 0.0
    %4511 = vmatpush1.msra.mxu0 0.0
    %4512 = vmatprep.subr.mxu0 0.0
    %4513 = vmatpush1.msra.mxu0 0.0
    %4514 = vmatprep.subr.mxu0 0.0
    %4515 = vmatpush1.msra.mxu0 0.0
    %4516 = vmatprep.subr.mxu0 0.0
    %4517 = vmatpush1.msra.mxu0 0.0
    %4518 = vmatprep.subr.mxu0 0.0
    %4519 = vmatpush1.msra.mxu0 0.0
    %4520 = vmatprep.subr.mxu0 0.0
    %4521 = vmatpush1.msra.mxu0 0.0
    %4522 = vmatprep.subr.mxu0 0.0
    %4523 = vmatpush1.msra.mxu0 0.0
    %4524 = vmatprep.subr.mxu0 0.0
    %4525 = vmatpush1.msra.mxu0 0.0
    %4526 = vmatprep.subr.mxu0 0.0
    %4527 = vmatpush1.msra.mxu0 0.0
    %4528 = vmatprep.subr.mxu0 0.0
    %4529 = vmatpush1.msra.mxu0 0.0
    %4530 = vmatprep.subr.mxu0 0.0
    %4531 = vmatpush1.msra.mxu0 0.0
    %4532 = vmatprep.subr.mxu0 0.0
    %4533 = vmatpush1.msra.mxu0 0.0
    %4534 = vmatprep.subr.mxu0 0.0
    %4535 = vmatpush1.msra.mxu0 0.0
    %4536 = vmatprep.subr.mxu0 0.0
    %4537 = vmatpush1.msra.mxu0 0.0
    %4538 = vmatprep.subr.mxu0 0.0
    %4539 = vmatpush1.msra.mxu0 0.0
    %4540 = vmatprep.subr.mxu0 0.0
    %4541 = vmatpush1.msra.mxu0 0.0
    %4542 = vmatprep.subr.mxu0 0.0
    %4543 = vmatpush1.msra.mxu0 0.0
    %4544 = vmatprep.subr.mxu0 0.0
    %4545 = vmatpush1.msra.mxu0 0.0
    %4546 = vmatprep.subr.mxu0 0.0
    %4547 = vmatpush1.msra.mxu0 0.0
    %4548 = vmatprep.subr.mxu0 0.0
    %4549 = vmatpush1.msra.mxu0 0.0
    %4550 = vmatprep.subr.mxu0 0.0
    %4551 = vmatpush1.msra.mxu0 0.0
    %4552 = vmatprep.subr.mxu0 0.0
    %4553 = vmatpush1.msra.mxu0 0.0
    %4554 = vmatprep.subr.mxu0 0.0
    %4555 = vmatpush1.msra.mxu0 0.0
    %4556 = vmatprep.subr.mxu0 0.0
    %4557 = vmatpush1.msra.mxu0 0.0
    %4558 = vmatprep.mubr.f32.mxu0 0.0
    %4559 = vmatmul.mubr.f32.gmra.mrb[0].mxu0 %v4492
    %v4560 = vpop.f32.mrb[0].mxu0
    %v4561 = vadd.f32 0.0, %v4560
    %v4562 = vpop.f32.mrb[0].mxu0
    %4563 = vdwg.mxu0
    %v4564 = vpack.c.bf16 %v4561, %v4561
    %v4566 = vsel %vm461, %v4564, 0
    %4568 = vmatprep.subr.bf16.mxu0 0
    %4569 = vmatpush1.bf16.msra.mxu0 %v848
    %4570 = vmatprep.subr.bf16.mxu0 0
    %4571 = vmatpush1.bf16.msra.mxu0 0
    %4572 = vmatprep.subr.bf16.mxu0 0
    %4573 = vmatpush1.bf16.msra.mxu0 0
    %4574 = vmatprep.subr.bf16.mxu0 0
    %4575 = vmatpush1.bf16.msra.mxu0 0
    %4576 = vmatprep.subr.bf16.mxu0 0
    %4577 = vmatpush1.bf16.msra.mxu0 0
    %4578 = vmatprep.subr.bf16.mxu0 0
    %4579 = vmatpush1.bf16.msra.mxu0 0
    %4580 = vmatprep.subr.bf16.mxu0 0
    %4581 = vmatpush1.bf16.msra.mxu0 0
    %4582 = vmatprep.subr.bf16.mxu0 0
    %4583 = vmatpush1.bf16.msra.mxu0 0
    %4584 = vmatprep.subr.bf16.mxu0 0
    %4585 = vmatpush1.bf16.msra.mxu0 0
    %4586 = vmatprep.subr.bf16.mxu0 0
    %4587 = vmatpush1.bf16.msra.mxu0 0
    %4588 = vmatprep.subr.bf16.mxu0 0
    %4589 = vmatpush1.bf16.msra.mxu0 0
    %4590 = vmatprep.subr.bf16.mxu0 0
    %4591 = vmatpush1.bf16.msra.mxu0 0
    %4592 = vmatprep.subr.bf16.mxu0 0
    %4593 = vmatpush1.bf16.msra.mxu0 0
    %4594 = vmatprep.subr.bf16.mxu0 0
    %4595 = vmatpush1.bf16.msra.mxu0 0
    %4596 = vmatprep.subr.bf16.mxu0 0
    %4597 = vmatpush1.bf16.msra.mxu0 0
    %4598 = vmatprep.subr.bf16.mxu0 0
    %4599 = vmatpush1.bf16.msra.mxu0 0
    %4600 = vmatprep.mubr.bf16.mxu0 0
    %4601 = vmatmul.mubr.bf16.gmra.mrb[0].mxu0 %v4566
    %v4602 = vpop.f32.mrb[0].mxu0
    %v4603 = vadd.f32 0.0, %v4602
    %v4604 = vpop.f32.mrb[0].mxu0
    %v4605 = vpop.f32.mrb[0].mxu0
    %v4606 = vpop.f32.mrb[0].mxu0
    %4607 = vdwg.mxu0
    %v4608 = vadd.f32 %v4396, %v4603
    %4609 = vrot.lane.b32.xlu0 %v304, 112
    %v4610 = vpop.permute.xlu0 %4609
    %4611 = vrot.lane.b32.xlu0 %v304, 80
    %v4612 = vpop.permute.xlu0 %4611
    %v4613 = vsel %vm461, %v4610, 0
    %v4615 = vsel %vm461, %v4612, 0
    %4617 = vmatprep.subr.mxu0 0.0
    %4618 = vmatpush1.xpose.msra.mxu0 %v4615
    %4619 = vmatprep.subr.mxu0 0.0
    %4620 = vmatpush1.xpose.msra.mxu0 0.0
    %4621 = vmatprep.subr.mxu0 0.0
    %4622 = vmatpush1.xpose.msra.mxu0 0.0
    %4623 = vmatprep.subr.mxu0 0.0
    %4624 = vmatpush1.xpose.msra.mxu0 0.0
    %4625 = vmatprep.subr.mxu0 0.0
    %4626 = vmatpush1.xpose.msra.mxu0 0.0
    %4627 = vmatprep.subr.mxu0 0.0
    %4628 = vmatpush1.xpose.msra.mxu0 0.0
    %4629 = vmatprep.subr.mxu0 0.0
    %4630 = vmatpush1.xpose.msra.mxu0 0.0
    %4631 = vmatprep.subr.mxu0 0.0
    %4632 = vmatpush1.xpose.msra.mxu0 0.0
    %4633 = vmatprep.subr.mxu0 0.0
    %4634 = vmatpush1.xpose.msra.mxu0 0.0
    %4635 = vmatprep.subr.mxu0 0.0
    %4636 = vmatpush1.xpose.msra.mxu0 0.0
    %4637 = vmatprep.subr.mxu0 0.0
    %4638 = vmatpush1.xpose.msra.mxu0 0.0
    %4639 = vmatprep.subr.mxu0 0.0
    %4640 = vmatpush1.xpose.msra.mxu0 0.0
    %4641 = vmatprep.subr.mxu0 0.0
    %4642 = vmatpush1.xpose.msra.mxu0 0.0
    %4643 = vmatprep.subr.mxu0 0.0
    %4644 = vmatpush1.xpose.msra.mxu0 0.0
    %4645 = vmatprep.subr.mxu0 0.0
    %4646 = vmatpush1.xpose.msra.mxu0 0.0
    %4647 = vmatprep.subr.mxu0 0.0
    %4648 = vmatpush1.xpose.msra.mxu0 0.0
    %4649 = vmatprep.subr.mxu0 0.0
    %4650 = vmatpush1.xpose.msra.mxu0 0.0
    %4651 = vmatprep.subr.mxu0 0.0
    %4652 = vmatpush1.xpose.msra.mxu0 0.0
    %4653 = vmatprep.subr.mxu0 0.0
    %4654 = vmatpush1.xpose.msra.mxu0 0.0
    %4655 = vmatprep.subr.mxu0 0.0
    %4656 = vmatpush1.xpose.msra.mxu0 0.0
    %4657 = vmatprep.subr.mxu0 0.0
    %4658 = vmatpush1.xpose.msra.mxu0 0.0
    %4659 = vmatprep.subr.mxu0 0.0
    %4660 = vmatpush1.xpose.msra.mxu0 0.0
    %4661 = vmatprep.subr.mxu0 0.0
    %4662 = vmatpush1.xpose.msra.mxu0 0.0
    %4663 = vmatprep.subr.mxu0 0.0
    %4664 = vmatpush1.xpose.msra.mxu0 0.0
    %4665 = vmatprep.subr.mxu0 0.0
    %4666 = vmatpush1.xpose.msra.mxu0 0.0
    %4667 = vmatprep.subr.mxu0 0.0
    %4668 = vmatpush1.xpose.msra.mxu0 0.0
    %4669 = vmatprep.subr.mxu0 0.0
    %4670 = vmatpush1.xpose.msra.mxu0 0.0
    %4671 = vmatprep.subr.mxu0 0.0
    %4672 = vmatpush1.xpose.msra.mxu0 0.0
    %4673 = vmatprep.subr.mxu0 0.0
    %4674 = vmatpush1.xpose.msra.mxu0 0.0
    %4675 = vmatprep.subr.mxu0 0.0
    %4676 = vmatpush1.xpose.msra.mxu0 0.0
    %4677 = vmatprep.subr.mxu0 0.0
    %4678 = vmatpush1.xpose.msra.mxu0 0.0
    %4679 = vmatprep.subr.mxu0 0.0
    %4680 = vmatpush1.xpose.msra.mxu0 0.0
    %4681 = vmatprep.mubr.f32.mxu0 0.0
    %4682 = vmatmul.mubr.f32.gmra.mrb[0].mxu0 %v4613
    %v4683 = vpop.f32.mrb[0].mxu0
    %v4684 = vadd.f32 0.0, %v4683
    %v4685 = vpop.f32.mrb[0].mxu0
    %4686 = vdwg.mxu0
    %v4687 = vmul.f32 %v4684, 0.35355338
    %v4688 = vadd.f32 %v4687, %v4184
    %v4689 = vsel %vm461, %v4688, -inf
    %4690 = vmax.xlane.f32.xlu0 %v4689
    %v4691 = vpop.xlane.xlu0 %4690
    %v4692 = vsub.f32 %v4688, %v4691
    %v4693 = vmul.f32 %v4692, 1.442695
    %v4694 = vpow.pop %v4693
    %v4695 = vsel %vm461, %v4694, 0.0
    %4696 = vadd.xlane.f32.xlu0 %v4695
    %v4697 = vpop.xlane.xlu0 %4696
    %v4698 = vrcp.pop %v4697
    %v4699 = vmul.f32 %v4694, %v4698
    %4700 = vrot.lane.b32.xlu0 %v304, 48
    %v4701 = vpop.permute.xlu0 %4700
    %v4704 = vsel %vm461, %v4699, 0
    %4706 = vmatprep.subr.mxu0 0.0
    %4707 = vmatpush1.msra.mxu0 %v4701
    %4708 = vmatprep.subr.mxu0 0.0
    %4709 = vmatpush1.msra.mxu0 0.0
    %4710 = vmatprep.subr.mxu0 0.0
    %4711 = vmatpush1.msra.mxu0 0.0
    %4712 = vmatprep.subr.mxu0 0.0
    %4713 = vmatpush1.msra.mxu0 0.0
    %4714 = vmatprep.subr.mxu0 0.0
    %4715 = vmatpush1.msra.mxu0 0.0
    %4716 = vmatprep.subr.mxu0 0.0
    %4717 = vmatpush1.msra.mxu0 0.0
    %4718 = vmatprep.subr.mxu0 0.0
    %4719 = vmatpush1.msra.mxu0 0.0
    %4720 = vmatprep.subr.mxu0 0.0
    %4721 = vmatpush1.msra.mxu0 0.0
    %4722 = vmatprep.subr.mxu0 0.0
    %4723 = vmatpush1.msra.mxu0 0.0
    %4724 = vmatprep.subr.mxu0 0.0
    %4725 = vmatpush1.msra.mxu0 0.0
    %4726 = vmatprep.subr.mxu0 0.0
    %4727 = vmatpush1.msra.mxu0 0.0
    %4728 = vmatprep.subr.mxu0 0.0
    %4729 = vmatpush1.msra.mxu0 0.0
    %4730 = vmatprep.subr.mxu0 0.0
    %4731 = vmatpush1.msra.mxu0 0.0
    %4732 = vmatprep.subr.mxu0 0.0
    %4733 = vmatpush1.msra.mxu0 0.0
    %4734 = vmatprep.subr.mxu0 0.0
    %4735 = vmatpush1.msra.mxu0 0.0
    %4736 = vmatprep.subr.mxu0 0.0
    %4737 = vmatpush1.msra.mxu0 0.0
    %4738 = vmatprep.subr.mxu0 0.0
    %4739 = vmatpush1.msra.mxu0 0.0
    %4740 = vmatprep.subr.mxu0 0.0
    %4741 = vmatpush1.msra.mxu0 0.0
    %4742 = vmatprep.subr.mxu0 0.0
    %4743 = vmatpush1.msra.mxu0 0.0
    %4744 = vmatprep.subr.mxu0 0.0
    %4745 = vmatpush1.msra.mxu0 0.0
    %4746 = vmatprep.subr.mxu0 0.0
    %4747 = vmatpush1.msra.mxu0 0.0
    %4748 = vmatprep.subr.mxu0 0.0
    %4749 = vmatpush1.msra.mxu0 0.0
    %4750 = vmatprep.subr.mxu0 0.0
    %4751 = vmatpush1.msra.mxu0 0.0
    %4752 = vmatprep.subr.mxu0 0.0
    %4753 = vmatpush1.msra.mxu0 0.0
    %4754 = vmatprep.subr.mxu0 0.0
    %4755 = vmatpush1.msra.mxu0 0.0
    %4756 = vmatprep.subr.mxu0 0.0
    %4757 = vmatpush1.msra.mxu0 0.0
    %4758 = vmatprep.subr.mxu0 0.0
    %4759 = vmatpush1.msra.mxu0 0.0
    %4760 = vmatprep.subr.mxu0 0.0
    %4761 = vmatpush1.msra.mxu0 0.0
    %4762 = vmatprep.subr.mxu0 0.0
    %4763 = vmatpush1.msra.mxu0 0.0
    %4764 = vmatprep.subr.mxu0 0.0
    %4765 = vmatpush1.msra.mxu0 0.0
    %4766 = vmatprep.subr.mxu0 0.0
    %4767 = vmatpush1.msra.mxu0 0.0
    %4768 = vmatprep.subr.mxu0 0.0
    %4769 = vmatpush1.msra.mxu0 0.0
    %4770 = vmatprep.mubr.f32.mxu0 0.0
    %4771 = vmatmul.mubr.f32.gmra.mrb[0].mxu0 %v4704
    %v4772 = vpop.f32.mrb[0].mxu0
    %v4773 = vadd.f32 0.0, %v4772
    %v4774 = vpop.f32.mrb[0].mxu0
    %4775 = vdwg.mxu0
    %v4776 = vpack.c.bf16 %v4773, %v4773
    %v4778 = vsel %vm461, %v4776, 0
    %4780 = vmatprep.subr.bf16.mxu0 0
    %4781 = vmatpush1.bf16.msra.mxu0 %v1064
    %4782 = vmatprep.subr.bf16.mxu0 0
    %4783 = vmatpush1.bf16.msra.mxu0 0
    %4784 = vmatprep.subr.bf16.mxu0 0
    %4785 = vmatpush1.bf16.msra.mxu0 0
    %4786 = vmatprep.subr.bf16.mxu0 0
    %4787 = vmatpush1.bf16.msra.mxu0 0
    %4788 = vmatprep.subr.bf16.mxu0 0
    %4789 = vmatpush1.bf16.msra.mxu0 0
    %4790 = vmatprep.subr.bf16.mxu0 0
    %4791 = vmatpush1.bf16.msra.mxu0 0
    %4792 = vmatprep.subr.bf16.mxu0 0
    %4793 = vmatpush1.bf16.msra.mxu0 0
    %4794 = vmatprep.subr.bf16.mxu0 0
    %4795 = vmatpush1.bf16.msra.mxu0 0
    %4796 = vmatprep.subr.bf16.mxu0 0
    %4797 = vmatpush1.bf16.msra.mxu0 0
    %4798 = vmatprep.subr.bf16.mxu0 0
    %4799 = vmatpush1.bf16.msra.mxu0 0
    %4800 = vmatprep.subr.bf16.mxu0 0
    %4801 = vmatpush1.bf16.msra.mxu0 0
    %4802 = vmatprep.subr.bf16.mxu0 0
    %4803 = vmatpush1.bf16.msra.mxu0 0
    %4804 = vmatprep.subr.bf16.mxu0 0
    %4805 = vmatpush1.bf16.msra.mxu0 0
    %4806 = vmatprep.subr.bf16.mxu0 0
    %4807 = vmatpush1.bf16.msra.mxu0 0
    %4808 = vmatprep.subr.bf16.mxu0 0
    %4809 = vmatpush1.bf16.msra.mxu0 0
    %4810 = vmatprep.subr.bf16.mxu0 0
    %4811 = vmatpush1.bf16.msra.mxu0 0
    %4812 = vmatprep.mubr.bf16.mxu0 0
    %4813 = vmatmul.mubr.bf16.gmra.mrb[0].mxu0 %v4778
    %v4814 = vpop.f32.mrb[0].mxu0
    %v4815 = vadd.f32 0.0, %v4814
    %v4816 = vpop.f32.mrb[0].mxu0
    %v4817 = vpop.f32.mrb[0].mxu0
    %v4818 = vpop.f32.mrb[0].mxu0
    %4819 = vdwg.mxu0
    %v4820 = vadd.f32 %v4608, %v4815
    %4821 = vrot.lane.b32.xlu0 %v304, 104
    %v4822 = vpop.permute.xlu0 %4821
    %4823 = vrot.lane.b32.xlu0 %v304, 72
    %v4824 = vpop.permute.xlu0 %4823
    %v4825 = vsel %vm461, %v4822, 0
    %v4827 = vsel %vm461, %v4824, 0
    %4829 = vmatprep.subr.mxu0 0.0
    %4830 = vmatpush1.xpose.msra.mxu0 %v4827
    %4831 = vmatprep.subr.mxu0 0.0
    %4832 = vmatpush1.xpose.msra.mxu0 0.0
    %4833 = vmatprep.subr.mxu0 0.0
    %4834 = vmatpush1.xpose.msra.mxu0 0.0
    %4835 = vmatprep.subr.mxu0 0.0
    %4836 = vmatpush1.xpose.msra.mxu0 0.0
    %4837 = vmatprep.subr.mxu0 0.0
    %4838 = vmatpush1.xpose.msra.mxu0 0.0
    %4839 = vmatprep.subr.mxu0 0.0
    %4840 = vmatpush1.xpose.msra.mxu0 0.0
    %4841 = vmatprep.subr.mxu0 0.0
    %4842 = vmatpush1.xpose.msra.mxu0 0.0
    %4843 = vmatprep.subr.mxu0 0.0
    %4844 = vmatpush1.xpose.msra.mxu0 0.0
    %4845 = vmatprep.subr.mxu0 0.0
    %4846 = vmatpush1.xpose.msra.mxu0 0.0
    %4847 = vmatprep.subr.mxu0 0.0
    %4848 = vmatpush1.xpose.msra.mxu0 0.0
    %4849 = vmatprep.subr.mxu0 0.0
    %4850 = vmatpush1.xpose.msra.mxu0 0.0
    %4851 = vmatprep.subr.mxu0 0.0
    %4852 = vmatpush1.xpose.msra.mxu0 0.0
    %4853 = vmatprep.subr.mxu0 0.0
    %4854 = vmatpush1.xpose.msra.mxu0 0.0
    %4855 = vmatprep.subr.mxu0 0.0
    %4856 = vmatpush1.xpose.msra.mxu0 0.0
    %4857 = vmatprep.subr.mxu0 0.0
    %4858 = vmatpush1.xpose.msra.mxu0 0.0
    %4859 = vmatprep.subr.mxu0 0.0
    %4860 = vmatpush1.xpose.msra.mxu0 0.0
    %4861 = vmatprep.subr.mxu0 0.0
    %4862 = vmatpush1.xpose.msra.mxu0 0.0
    %4863 = vmatprep.subr.mxu0 0.0
    %4864 = vmatpush1.xpose.msra.mxu0 0.0
    %4865 = vmatprep.subr.mxu0 0.0
    %4866 = vmatpush1.xpose.msra.mxu0 0.0
    %4867 = vmatprep.subr.mxu0 0.0
    %4868 = vmatpush1.xpose.msra.mxu0 0.0
    %4869 = vmatprep.subr.mxu0 0.0
    %4870 = vmatpush1.xpose.msra.mxu0 0.0
    %4871 = vmatprep.subr.mxu0 0.0
    %4872 = vmatpush1.xpose.msra.mxu0 0.0
    %4873 = vmatprep.subr.mxu0 0.0
    %4874 = vmatpush1.xpose.msra.mxu0 0.0
    %4875 = vmatprep.subr.mxu0 0.0
    %4876 = vmatpush1.xpose.msra.mxu0 0.0
    %4877 = vmatprep.subr.mxu0 0.0
    %4878 = vmatpush1.xpose.msra.mxu0 0.0
    %4879 = vmatprep.subr.mxu0 0.0
    %4880 = vmatpush1.xpose.msra.mxu0 0.0
    %4881 = vmatprep.subr.mxu0 0.0
    %4882 = vmatpush1.xpose.msra.mxu0 0.0
    %4883 = vmatprep.subr.mxu0 0.0
    %4884 = vmatpush1.xpose.msra.mxu0 0.0
    %4885 = vmatprep.subr.mxu0 0.0
    %4886 = vmatpush1.xpose.msra.mxu0 0.0
    %4887 = vmatprep.subr.mxu0 0.0
    %4888 = vmatpush1.xpose.msra.mxu0 0.0
    %4889 = vmatprep.subr.mxu0 0.0
    %4890 = vmatpush1.xpose.msra.mxu0 0.0
    %4891 = vmatprep.subr.mxu0 0.0
    %4892 = vmatpush1.xpose.msra.mxu0 0.0
    %4893 = vmatprep.mubr.f32.mxu0 0.0
    %4894 = vmatmul.mubr.f32.gmra.mrb[0].mxu0 %v4825
    %v4895 = vpop.f32.mrb[0].mxu0
    %v4896 = vadd.f32 0.0, %v4895
    %v4897 = vpop.f32.mrb[0].mxu0
    %4898 = vdwg.mxu0
    %v4899 = vmul.f32 %v4896, 0.35355338
    %v4900 = vadd.f32 %v4899, %v4184
    %v4901 = vsel %vm461, %v4900, -inf
    %4902 = vmax.xlane.f32.xlu0 %v4901
    %v4903 = vpop.xlane.xlu0 %4902
    %v4904 = vsub.f32 %v4900, %v4903
    %v4905 = vmul.f32 %v4904, 1.442695
    %v4906 = vpow.pop %v4905
    %v4907 = vsel %vm461, %v4906, 0.0
    %4908 = vadd.xlane.f32.xlu0 %v4907
    %v4909 = vpop.xlane.xlu0 %4908
    %v4910 = vrcp.pop %v4909
    %v4911 = vmul.f32 %v4906, %v4910
    %4912 = vrot.lane.b32.xlu0 %v304, 40
    %v4913 = vpop.permute.xlu0 %4912
    %v4916 = vsel %vm461, %v4911, 0
    %4918 = vmatprep.subr.mxu0 0.0
    %4919 = vmatpush1.msra.mxu0 %v4913
    %4920 = vmatprep.subr.mxu0 0.0
    %4921 = vmatpush1.msra.mxu0 0.0
    %4922 = vmatprep.subr.mxu0 0.0
    %4923 = vmatpush1.msra.mxu0 0.0
    %4924 = vmatprep.subr.mxu0 0.0
    %4925 = vmatpush1.msra.mxu0 0.0
    %4926 = vmatprep.subr.mxu0 0.0
    %4927 = vmatpush1.msra.mxu0 0.0
    %4928 = vmatprep.subr.mxu0 0.0
    %4929 = vmatpush1.msra.mxu0 0.0
    %4930 = vmatprep.subr.mxu0 0.0
    %4931 = vmatpush1.msra.mxu0 0.0
    %4932 = vmatprep.subr.mxu0 0.0
    %4933 = vmatpush1.msra.mxu0 0.0
    %4934 = vmatprep.subr.mxu0 0.0
    %4935 = vmatpush1.msra.mxu0 0.0
    %4936 = vmatprep.subr.mxu0 0.0
    %4937 = vmatpush1.msra.mxu0 0.0
    %4938 = vmatprep.subr.mxu0 0.0
    %4939 = vmatpush1.msra.mxu0 0.0
    %4940 = vmatprep.subr.mxu0 0.0
    %4941 = vmatpush1.msra.mxu0 0.0
    %4942 = vmatprep.subr.mxu0 0.0
    %4943 = vmatpush1.msra.mxu0 0.0
    %4944 = vmatprep.subr.mxu0 0.0
    %4945 = vmatpush1.msra.mxu0 0.0
    %4946 = vmatprep.subr.mxu0 0.0
    %4947 = vmatpush1.msra.mxu0 0.0
    %4948 = vmatprep.subr.mxu0 0.0
    %4949 = vmatpush1.msra.mxu0 0.0
    %4950 = vmatprep.subr.mxu0 0.0
    %4951 = vmatpush1.msra.mxu0 0.0
    %4952 = vmatprep.subr.mxu0 0.0
    %4953 = vmatpush1.msra.mxu0 0.0
    %4954 = vmatprep.subr.mxu0 0.0
    %4955 = vmatpush1.msra.mxu0 0.0
    %4956 = vmatprep.subr.mxu0 0.0
    %4957 = vmatpush1.msra.mxu0 0.0
    %4958 = vmatprep.subr.mxu0 0.0
    %4959 = vmatpush1.msra.mxu0 0.0
    %4960 = vmatprep.subr.mxu0 0.0
    %4961 = vmatpush1.msra.mxu0 0.0
    %4962 = vmatprep.subr.mxu0 0.0
    %4963 = vmatpush1.msra.mxu0 0.0
    %4964 = vmatprep.subr.mxu0 0.0
    %4965 = vmatpush1.msra.mxu0 0.0
    %4966 = vmatprep.subr.mxu0 0.0
    %4967 = vmatpush1.msra.mxu0 0.0
    %4968 = vmatprep.subr.mxu0 0.0
    %4969 = vmatpush1.msra.mxu0 0.0
    %4970 = vmatprep.subr.mxu0 0.0
    %4971 = vmatpush1.msra.mxu0 0.0
    %4972 = vmatprep.subr.mxu0 0.0
    %4973 = vmatpush1.msra.mxu0 0.0
    %4974 = vmatprep.subr.mxu0 0.0
    %4975 = vmatpush1.msra.mxu0 0.0
    %4976 = vmatprep.subr.mxu0 0.0
    %4977 = vmatpush1.msra.mxu0 0.0
    %4978 = vmatprep.subr.mxu0 0.0
    %4979 = vmatpush1.msra.mxu0 0.0
    %4980 = vmatprep.subr.mxu0 0.0
    %4981 = vmatpush1.msra.mxu0 0.0
    %4982 = vmatprep.mubr.f32.mxu0 0.0
    %4983 = vmatmul.mubr.f32.gmra.mrb[0].mxu0 %v4916
    %v4984 = vpop.f32.mrb[0].mxu0
    %v4985 = vadd.f32 0.0, %v4984
    %v4986 = vpop.f32.mrb[0].mxu0
    %4987 = vdwg.mxu0
    %v4988 = vpack.c.bf16 %v4985, %v4985
    %v4990 = vsel %vm461, %v4988, 0
    %4992 = vmatprep.subr.bf16.mxu0 0
    %4993 = vmatpush1.bf16.msra.mxu0 %v1280
    %4994 = vmatprep.subr.bf16.mxu0 0
    %4995 = vmatpush1.bf16.msra.mxu0 0
    %4996 = vmatprep.subr.bf16.mxu0 0
    %4997 = vmatpush1.bf16.msra.mxu0 0
    %4998 = vmatprep.subr.bf16.mxu0 0
    %4999 = vmatpush1.bf16.msra.mxu0 0
    %5000 = vmatprep.subr.bf16.mxu0 0
    %5001 = vmatpush1.bf16.msra.mxu0 0
    %5002 = vmatprep.subr.bf16.mxu0 0
    %5003 = vmatpush1.bf16.msra.mxu0 0
    %5004 = vmatprep.subr.bf16.mxu0 0
    %5005 = vmatpush1.bf16.msra.mxu0 0
    %5006 = vmatprep.subr.bf16.mxu0 0
    %5007 = vmatpush1.bf16.msra.mxu0 0
    %5008 = vmatprep.subr.bf16.mxu0 0
    %5009 = vmatpush1.bf16.msra.mxu0 0
    %5010 = vmatprep.subr.bf16.mxu0 0
    %5011 = vmatpush1.bf16.msra.mxu0 0
    %5012 = vmatprep.subr.bf16.mxu0 0
    %5013 = vmatpush1.bf16.msra.mxu0 0
    %5014 = vmatprep.subr.bf16.mxu0 0
    %5015 = vmatpush1.bf16.msra.mxu0 0
    %5016 = vmatprep.subr.bf16.mxu0 0
    %5017 = vmatpush1.bf16.msra.mxu0 0
    %5018 = vmatprep.subr.bf16.mxu0 0
    %5019 = vmatpush1.bf16.msra.mxu0 0
    %5020 = vmatprep.subr.bf16.mxu0 0
    %5021 = vmatpush1.bf16.msra.mxu0 0
    %5022 = vmatprep.subr.bf16.mxu0 0
    %5023 = vmatpush1.bf16.msra.mxu0 0
    %5024 = vmatprep.mubr.bf16.mxu0 0
    %5025 = vmatmul.mubr.bf16.gmra.mrb[0].mxu0 %v4990
    %v5026 = vpop.f32.mrb[0].mxu0
    %v5027 = vadd.f32 0.0, %v5026
    %v5028 = vpop.f32.mrb[0].mxu0
    %v5029 = vpop.f32.mrb[0].mxu0
    %v5030 = vpop.f32.mrb[0].mxu0
    %5031 = vdwg.mxu0
    %v5032 = vadd.f32 %v4820, %v5027
    %v5033 = vsel %vm262, %v5032, 0.0
    %5034 = vadd.xlane.f32.xlu0 %v5033
    %v5035 = vpop.xlane.xlu0 %5034
    %v5036 = vmul.f32 %v5035, %v1326
    %v5037 = vsub.f32 %v5032, %v5036
    %v5038 = vmul.f32 %v5037, %v5037
    %v5039 = vsel %vm262, %v5038, 0.0
    %5040 = vadd.xlane.f32.xlu0 %v5039
    %v5041 = vpop.xlane.xlu0 %5040
    %v5042 = vmul.f32 %v5041, %v1326
    %v5043 = vadd.f32 %v5042, 1e-05
    %v5044 = vrsqrt.pop %v5043
    %v5045 = vmul.f32 %v5037, %v5044
    %v5046 = vmul.f32 %v5045, %v1341
    %v5047 = vadd.f32 %v5046, %v1348
    %v5048 = vpack.c.bf16 %v5047, %v5047
    %v5050 = vsel %vm262, %v5048, 0
    %5052 = vmatprep.subr.bf16.mxu0 0
    %5053 = vmatpush1.bf16.msra.mxu0 %v1352
    %5054 = vmatprep.subr.bf16.mxu0 0
    %5055 = vmatpush1.bf16.msra.mxu0 %v1353
    %5056 = vmatprep.subr.bf16.mxu0 0
    %5057 = vmatpush1.bf16.msra.mxu0 0
    %5058 = vmatprep.subr.bf16.mxu0 0
    %5059 = vmatpush1.bf16.msra.mxu0 0
    %5060 = vmatprep.subr.bf16.mxu0 0
    %5061 = vmatpush1.bf16.msra.mxu0 0
    %5062 = vmatprep.subr.bf16.mxu0 0
    %5063 = vmatpush1.bf16.msra.mxu0 0
    %5064 = vmatprep.subr.bf16.mxu0 0
    %5065 = vmatpush1.bf16.msra.mxu0 0
    %5066 = vmatprep.subr.bf16.mxu0 0
    %5067 = vmatpush1.bf16.msra.mxu0 0
    %5068 = vmatprep.subr.bf16.mxu0 0
    %5069 = vmatpush1.bf16.msra.mxu0 0
    %5070 = vmatprep.subr.bf16.mxu0 0
    %5071 = vmatpush1.bf16.msra.mxu0 0
    %5072 = vmatprep.subr.bf16.mxu0 0
    %5073 = vmatpush1.bf16.msra.mxu0 0
    %5074 = vmatprep.subr.bf16.mxu0 0
    %5075 = vmatpush1.bf16.msra.mxu0 0
    %5076 = vmatprep.subr.bf16.mxu0 0
    %5077 = vmatpush1.bf16.msra.mxu0 0
    %5078 = vmatprep.subr.bf16.mxu0 0
    %5079 = vmatpush1.bf16.msra.mxu0 0
    %5080 = vmatprep.subr.bf16.mxu0 0
    %5081 = vmatpush1.bf16.msra.mxu0 0
    %5082 = vmatprep.subr.bf16.mxu0 0
    %5083 = vmatpush1.bf16.msra.mxu0 0
    %5084 = vmatprep.mubr.bf16.mxu0 0
    %5085 = vmatmul.mubr.bf16.gmra.mrb[0].mxu0 %v5050
    %v5086 = vpop.f32.mrb[0].mxu0
    %v5087 = vadd.f32 %v1358, %v5086
    %v5088 = vpop.f32.mrb[0].mxu0
    %v5089 = vpop.f32.mrb[0].mxu0
    %v5090 = vpop.f32.mrb[0].mxu0
    %5091 = vdwg.mxu0
    %v5092 = vrot.slane %v441, 3
    %v5094 = vsel %vm461, %v5087, 0
    %v5096 = vsel %vm461, %v5092, 0
    %5098 = vmatprep.subr.mxu0 0.0
    %5099 = vmatpush1.xpose.msra.mxu0 %v5096
    %5100 = vmatprep.subr.mxu0 0.0
    %5101 = vmatpush1.xpose.msra.mxu0 0.0
    %5102 = vmatprep.subr.mxu0 0.0
    %5103 = vmatpush1.xpose.msra.mxu0 0.0
    %5104 = vmatprep.subr.mxu0 0.0
    %5105 = vmatpush1.xpose.msra.mxu0 0.0
    %5106 = vmatprep.subr.mxu0 0.0
    %5107 = vmatpush1.xpose.msra.mxu0 0.0
    %5108 = vmatprep.subr.mxu0 0.0
    %5109 = vmatpush1.xpose.msra.mxu0 0.0
    %5110 = vmatprep.subr.mxu0 0.0
    %5111 = vmatpush1.xpose.msra.mxu0 0.0
    %5112 = vmatprep.subr.mxu0 0.0
    %5113 = vmatpush1.xpose.msra.mxu0 0.0
    %5114 = vmatprep.subr.mxu0 0.0
    %5115 = vmatpush1.xpose.msra.mxu0 0.0
    %5116 = vmatprep.subr.mxu0 0.0
    %5117 = vmatpush1.xpose.msra.mxu0 0.0
    %5118 = vmatprep.subr.mxu0 0.0
    %5119 = vmatpush1.xpose.msra.mxu0 0.0
    %5120 = vmatprep.subr.mxu0 0.0
    %5121 = vmatpush1.xpose.msra.mxu0 0.0
    %5122 = vmatprep.subr.mxu0 0.0
    %5123 = vmatpush1.xpose.msra.mxu0 0.0
    %5124 = vmatprep.subr.mxu0 0.0
    %5125 = vmatpush1.xpose.msra.mxu0 0.0
    %5126 = vmatprep.subr.mxu0 0.0
    %5127 = vmatpush1.xpose.msra.mxu0 0.0
    %5128 = vmatprep.subr.mxu0 0.0
    %5129 = vmatpush1.xpose.msra.mxu0 0.0
    %5130 = vmatprep.subr.mxu0 0.0
    %5131 = vmatpush1.xpose.msra.mxu0 0.0
    %5132 = vmatprep.subr.mxu0 0.0
    %5133 = vmatpush1.xpose.msra.mxu0 0.0
    %5134 = vmatprep.subr.mxu0 0.0
    %5135 = vmatpush1.xpose.msra.mxu0 0.0
    %5136 = vmatprep.subr.mxu0 0.0
    %5137 = vmatpush1.xpose.msra.mxu0 0.0
    %5138 = vmatprep.subr.mxu0 0.0
    %5139 = vmatpush1.xpose.msra.mxu0 0.0
    %5140 = vmatprep.subr.mxu0 0.0
    %5141 = vmatpush1.xpose.msra.mxu0 0.0
    %5142 = vmatprep.subr.mxu0 0.0
    %5143 = vmatpush1.xpose.msra.mxu0 0.0
    %5144 = vmatprep.subr.mxu0 0.0
    %5145 = vmatpush1.xpose.msra.mxu0 0.0
    %5146 = vmatprep.subr.mxu0 0.0
    %5147 = vmatpush1.xpose.msra.mxu0 0.0
    %5148 = vmatprep.subr.mxu0 0.0
    %5149 = vmatpush1.xpose.msra.mxu0 0.0
    %5150 = vmatprep.subr.mxu0 0.0
    %5151 = vmatpush1.xpose.msra.mxu0 0.0
    %5152 = vmatprep.subr.mxu0 0.0
    %5153 = vmatpush1.xpose.msra.mxu0 0.0
    %5154 = vmatprep.subr.mxu0 0.0
    %5155 = vmatpush1.xpose.msra.mxu0 0.0
    %5156 = vmatprep.subr.mxu0 0.0
    %5157 = vmatpush1.xpose.msra.mxu0 0.0
    %5158 = vmatprep.subr.mxu0 0.0
    %5159 = vmatpush1.xpose.msra.mxu0 0.0
    %5160 = vmatprep.subr.mxu0 0.0
    %5161 = vmatpush1.xpose.msra.mxu0 0.0
    %5162 = vmatprep.mubr.f32.mxu0 0.0
    %5163 = vmatmul.mubr.f32.gmra.mrb[0].mxu0 %v5094
    %v5164 = vpop.f32.mrb[0].mxu0
    %v5165 = vadd.f32 0.0, %v5164
    %v5166 = vpop.f32.mrb[0].mxu0
    %5167 = vdwg.mxu0
    %v5168 = vmul.f32 %v5165, 0.35355338
    %v5169 = vlaneseq
    %v5170 = vshrl.u32 %v5169, 7
    %v5171 = vsub.s32 1, %v5170
    %v5172 = vrot.slane %v210, %v5171
    %v5173 = vadd.f32 %v5168, %v5172
    %v5174 = vsel %vm1485, %v5173, -inf
    %5175 = vmax.xlane.f32.xlu0 %v5174
    %v5176 = vpop.xlane.xlu0 %5175
    %v5177 = vsub.f32 %v5173, %v5176
    %v5178 = vmul.f32 %v5177, 1.442695
    %v5179 = vpow.pop %v5178
    %v5180 = vsel %vm1485, %v5179, 0.0
    %5181 = vadd.xlane.f32.xlu0 %v5180
    %v5182 = vpop.xlane.xlu0 %5181
    %v5183 = vrcp.pop %v5182
    %v5184 = vmul.f32 %v5179, %v5183
    %v5185 = vadd.f32 %v5184, 0.0
    %5186 = vrot.lane.b32.xlu0 %v5087, 120
    %v5187 = vpop.permute.xlu0 %5186
    %5188 = vrot.lane.b32.xlu0 %v5092, 120
    %v5189 = vpop.permute.xlu0 %5188
    %v5190 = vsel %vm461, %v5187, 0
    %v5192 = vsel %vm461, %v5189, 0
    %5194 = vmatprep.subr.mxu0 0.0
    %5195 = vmatpush1.xpose.msra.mxu0 %v5192
    %5196 = vmatprep.subr.mxu0 0.0
    %5197 = vmatpush1.xpose.msra.mxu0 0.0
    %5198 = vmatprep.subr.mxu0 0.0
    %5199 = vmatpush1.xpose.msra.mxu0 0.0
    %5200 = vmatprep.subr.mxu0 0.0
    %5201 = vmatpush1.xpose.msra.mxu0 0.0
    %5202 = vmatprep.subr.mxu0 0.0
    %5203 = vmatpush1.xpose.msra.mxu0 0.0
    %5204 = vmatprep.subr.mxu0 0.0
    %5205 = vmatpush1.xpose.msra.mxu0 0.0
    %5206 = vmatprep.subr.mxu0 0.0
    %5207 = vmatpush1.xpose.msra.mxu0 0.0
    %5208 = vmatprep.subr.mxu0 0.0
    %5209 = vmatpush1.xpose.msra.mxu0 0.0
    %5210 = vmatprep.subr.mxu0 0.0
    %5211 = vmatpush1.xpose.msra.mxu0 0.0
    %5212 = vmatprep.subr.mxu0 0.0
    %5213 = vmatpush1.xpose.msra.mxu0 0.0
    %5214 = vmatprep.subr.mxu0 0.0
    %5215 = vmatpush1.xpose.msra.mxu0 0.0
    %5216 = vmatprep.subr.mxu0 0.0
    %5217 = vmatpush1.xpose.msra.mxu0 0.0
    %5218 = vmatprep.subr.mxu0 0.0
    %5219 = vmatpush1.xpose.msra.mxu0 0.0
    %5220 = vmatprep.subr.mxu0 0.0
    %5221 = vmatpush1.xpose.msra.mxu0 0.0
    %5222 = vmatprep.subr.mxu0 0.0
    %5223 = vmatpush1.xpose.msra.mxu0 0.0
    %5224 = vmatprep.subr.mxu0 0.0
    %5225 = vmatpush1.xpose.msra.mxu0 0.0
    %5226 = vmatprep.subr.mxu0 0.0
    %5227 = vmatpush1.xpose.msra.mxu0 0.0
    %5228 = vmatprep.subr.mxu0 0.0
    %5229 = vmatpush1.xpose.msra.mxu0 0.0
    %5230 = vmatprep.subr.mxu0 0.0
    %5231 = vmatpush1.xpose.msra.mxu0 0.0
    %5232 = vmatprep.subr.mxu0 0.0
    %5233 = vmatpush1.xpose.msra.mxu0 0.0
    %5234 = vmatprep.subr.mxu0 0.0
    %5235 = vmatpush1.xpose.msra.mxu0 0.0
    %5236 = vmatprep.subr.mxu0 0.0
    %5237 = vmatpush1.xpose.msra.mxu0 0.0
    %5238 = vmatprep.subr.mxu0 0.0
    %5239 = vmatpush1.xpose.msra.mxu0 0.0
    %5240 = vmatprep.subr.mxu0 0.0
    %5241 = vmatpush1.xpose.msra.mxu0 0.0
    %5242 = vmatprep.subr.mxu0 0.0
    %5243 = vmatpush1.xpose.msra.mxu0 0.0
    %5244 = vmatprep.subr.mxu0 0.0
    %5245 = vmatpush1.xpose.msra.mxu0 0.0
    %5246 = vmatprep.subr.mxu0 0.0
    %5247 = vmatpush1.xpose.msra.mxu0 0.0
    %5248 = vmatprep.subr.mxu0 0.0
    %5249 = vmatpush1.xpose.msra.mxu0 0.0
    %5250 = vmatprep.subr.mxu0 0.0
    %5251 = vmatpush1.xpose.msra.mxu0 0.0
    %5252 = vmatprep.subr.mxu0 0.0
    %5253 = vmatpush1.xpose.msra.mxu0 0.0
    %5254 = vmatprep.subr.mxu0 0.0
    %5255 = vmatpush1.xpose.msra.mxu0 0.0
    %5256 = vmatprep.subr.mxu0 0.0
    %5257 = vmatpush1.xpose.msra.mxu0 0.0
    %5258 = vmatprep.mubr.f32.mxu0 0.0
    %5259 = vmatmul.mubr.f32.gmra.mrb[0].mxu0 %v5190
    %v5260 = vpop.f32.mrb[0].mxu0
    %v5261 = vadd.f32 0.0, %v5260
    %v5262 = vpop.f32.mrb[0].mxu0
    %5263 = vdwg.mxu0
    %v5264 = vmul.f32 %v5261, 0.35355338
    %v5265 = vadd.f32 %v5264, %v5172
    %v5266 = vsel %vm1485, %v5265, -inf
    %5267 = vmax.xlane.f32.xlu0 %v5266
    %v5268 = vpop.xlane.xlu0 %5267
    %v5269 = vsub.f32 %v5265, %v5268
    %v5270 = vmul.f32 %v5269, 1.442695
    %v5271 = vpow.pop %v5270
    %v5272 = vsel %vm1485, %v5271, 0.0
    %5273 = vadd.xlane.f32.xlu0 %v5272
    %v5274 = vpop.xlane.xlu0 %5273
    %v5275 = vrcp.pop %v5274
    %v5276 = vmul.f32 %v5271, %v5275
    %v5277 = vadd.f32 %v5185, %v5276
    %5278 = vrot.lane.b32.xlu0 %v5087, 112
    %v5279 = vpop.permute.xlu0 %5278
    %5280 = vrot.lane.b32.xlu0 %v5092, 112
    %v5281 = vpop.permute.xlu0 %5280
    %v5282 = vsel %vm461, %v5279, 0
    %v5284 = vsel %vm461, %v5281, 0
    %5286 = vmatprep.subr.mxu0 0.0
    %5287 = vmatpush1.xpose.msra.mxu0 %v5284
    %5288 = vmatprep.subr.mxu0 0.0
    %5289 = vmatpush1.xpose.msra.mxu0 0.0
    %5290 = vmatprep.subr.mxu0 0.0
    %5291 = vmatpush1.xpose.msra.mxu0 0.0
    %5292 = vmatprep.subr.mxu0 0.0
    %5293 = vmatpush1.xpose.msra.mxu0 0.0
    %5294 = vmatprep.subr.mxu0 0.0
    %5295 = vmatpush1.xpose.msra.mxu0 0.0
    %5296 = vmatprep.subr.mxu0 0.0
    %5297 = vmatpush1.xpose.msra.mxu0 0.0
    %5298 = vmatprep.subr.mxu0 0.0
    %5299 = vmatpush1.xpose.msra.mxu0 0.0
    %5300 = vmatprep.subr.mxu0 0.0
    %5301 = vmatpush1.xpose.msra.mxu0 0.0
    %5302 = vmatprep.subr.mxu0 0.0
    %5303 = vmatpush1.xpose.msra.mxu0 0.0
    %5304 = vmatprep.subr.mxu0 0.0
    %5305 = vmatpush1.xpose.msra.mxu0 0.0
    %5306 = vmatprep.subr.mxu0 0.0
    %5307 = vmatpush1.xpose.msra.mxu0 0.0
    %5308 = vmatprep.subr.mxu0 0.0
    %5309 = vmatpush1.xpose.msra.mxu0 0.0
    %5310 = vmatprep.subr.mxu0 0.0
    %5311 = vmatpush1.xpose.msra.mxu0 0.0
    %5312 = vmatprep.subr.mxu0 0.0
    %5313 = vmatpush1.xpose.msra.mxu0 0.0
    %5314 = vmatprep.subr.mxu0 0.0
    %5315 = vmatpush1.xpose.msra.mxu0 0.0
    %5316 = vmatprep.subr.mxu0 0.0
    %5317 = vmatpush1.xpose.msra.mxu0 0.0
    %5318 = vmatprep.subr.mxu0 0.0
    %5319 = vmatpush1.xpose.msra.mxu0 0.0
    %5320 = vmatprep.subr.mxu0 0.0
    %5321 = vmatpush1.xpose.msra.mxu0 0.0
    %5322 = vmatprep.subr.mxu0 0.0
    %5323 = vmatpush1.xpose.msra.mxu0 0.0
    %5324 = vmatprep.subr.mxu0 0.0
    %5325 = vmatpush1.xpose.msra.mxu0 0.0
    %5326 = vmatprep.subr.mxu0 0.0
    %5327 = vmatpush1.xpose.msra.mxu0 0.0
    %5328 = vmatprep.subr.mxu0 0.0
    %5329 = vmatpush1.xpose.msra.mxu0 0.0
    %5330 = vmatprep.subr.mxu0 0.0
    %5331 = vmatpush1.xpose.msra.mxu0 0.0
    %5332 = vmatprep.subr.mxu0 0.0
    %5333 = vmatpush1.xpose.msra.mxu0 0.0
    %5334 = vmatprep.subr.mxu0 0.0
    %5335 = vmatpush1.xpose.msra.mxu0 0.0
    %5336 = vmatprep.subr.mxu0 0.0
    %5337 = vmatpush1.xpose.msra.mxu0 0.0
    %5338 = vmatprep.subr.mxu0 0.0
    %5339 = vmatpush1.xpose.msra.mxu0 0.0
    %5340 = vmatprep.subr.mxu0 0.0
    %5341 = vmatpush1.xpose.msra.mxu0 0.0
    %5342 = vmatprep.subr.mxu0 0.0
    %5343 = vmatpush1.xpose.msra.mxu0 0.0
    %5344 = vmatprep.subr.mxu0 0.0
    %5345 = vmatpush1.xpose.msra.mxu0 0.0
    %5346 = vmatprep.subr.mxu0 0.0
    %5347 = vmatpush1.xpose.msra.mxu0 0.0
    %5348 = vmatprep.subr.mxu0 0.0
    %5349 = vmatpush1.xpose.msra.mxu0 0.0
    %5350 = vmatprep.mubr.f32.mxu0 0.0
    %5351 = vmatmul.mubr.f32.gmra.mrb[0].mxu0 %v5282
    %v5352 = vpop.f32.mrb[0].mxu0
    %v5353 = vadd.f32 0.0, %v5352
    %v5354 = vpop.f32.mrb[0].mxu0
    %5355 = vdwg.mxu0
    %v5356 = vmul.f32 %v5353, 0.35355338
    %v5357 = vadd.f32 %v5356, %v5172
    %v5358 = vsel %vm1485, %v5357, -inf
    %5359 = vmax.xlane.f32.xlu0 %v5358
    %v5360 = vpop.xlane.xlu0 %5359
    %v5361 = vsub.f32 %v5357, %v5360
    %v5362 = vmul.f32 %v5361, 1.442695
    %v5363 = vpow.pop %v5362
    %v5364 = vsel %vm1485, %v5363, 0.0
    %5365 = vadd.xlane.f32.xlu0 %v5364
    %v5366 = vpop.xlane.xlu0 %5365
    %v5367 = vrcp.pop %v5366
    %v5368 = vmul.f32 %v5363, %v5367
    %v5369 = vadd.f32 %v5277, %v5368
    %5370 = vrot.lane.b32.xlu0 %v5087, 104
    %v5371 = vpop.permute.xlu0 %5370
    %5372 = vrot.lane.b32.xlu0 %v5092, 104
    %v5373 = vpop.permute.xlu0 %5372
    %v5374 = vsel %vm461, %v5371, 0
    %v5376 = vsel %vm461, %v5373, 0
    %5378 = vmatprep.subr.mxu0 0.0
    %5379 = vmatpush1.xpose.msra.mxu0 %v5376
    %5380 = vmatprep.subr.mxu0 0.0
    %5381 = vmatpush1.xpose.msra.mxu0 0.0
    %5382 = vmatprep.subr.mxu0 0.0
    %5383 = vmatpush1.xpose.msra.mxu0 0.0
    %5384 = vmatprep.subr.mxu0 0.0
    %5385 = vmatpush1.xpose.msra.mxu0 0.0
    %5386 = vmatprep.subr.mxu0 0.0
    %5387 = vmatpush1.xpose.msra.mxu0 0.0
    %5388 = vmatprep.subr.mxu0 0.0
    %5389 = vmatpush1.xpose.msra.mxu0 0.0
    %5390 = vmatprep.subr.mxu0 0.0
    %5391 = vmatpush1.xpose.msra.mxu0 0.0
    %5392 = vmatprep.subr.mxu0 0.0
    %5393 = vmatpush1.xpose.msra.mxu0 0.0
    %5394 = vmatprep.subr.mxu0 0.0
    %5395 = vmatpush1.xpose.msra.mxu0 0.0
    %5396 = vmatprep.subr.mxu0 0.0
    %5397 = vmatpush1.xpose.msra.mxu0 0.0
    %5398 = vmatprep.subr.mxu0 0.0
    %5399 = vmatpush1.xpose.msra.mxu0 0.0
    %5400 = vmatprep.subr.mxu0 0.0
    %5401 = vmatpush1.xpose.msra.mxu0 0.0
    %5402 = vmatprep.subr.mxu0 0.0
    %5403 = vmatpush1.xpose.msra.mxu0 0.0
    %5404 = vmatprep.subr.mxu0 0.0
    %5405 = vmatpush1.xpose.msra.mxu0 0.0
    %5406 = vmatprep.subr.mxu0 0.0
    %5407 = vmatpush1.xpose.msra.mxu0 0.0
    %5408 = vmatprep.subr.mxu0 0.0
    %5409 = vmatpush1.xpose.msra.mxu0 0.0
    %5410 = vmatprep.subr.mxu0 0.0
    %5411 = vmatpush1.xpose.msra.mxu0 0.0
    %5412 = vmatprep.subr.mxu0 0.0
    %5413 = vmatpush1.xpose.msra.mxu0 0.0
    %5414 = vmatprep.subr.mxu0 0.0
    %5415 = vmatpush1.xpose.msra.mxu0 0.0
    %5416 = vmatprep.subr.mxu0 0.0
    %5417 = vmatpush1.xpose.msra.mxu0 0.0
    %5418 = vmatprep.subr.mxu0 0.0
    %5419 = vmatpush1.xpose.msra.mxu0 0.0
    %5420 = vmatprep.subr.mxu0 0.0
    %5421 = vmatpush1.xpose.msra.mxu0 0.0
    %5422 = vmatprep.subr.mxu0 0.0
    %5423 = vmatpush1.xpose.msra.mxu0 0.0
    %5424 = vmatprep.subr.mxu0 0.0
    %5425 = vmatpush1.xpose.msra.mxu0 0.0
    %5426 = vmatprep.subr.mxu0 0.0
    %5427 = vmatpush1.xpose.msra.mxu0 0.0
    %5428 = vmatprep.subr.mxu0 0.0
    %5429 = vmatpush1.xpose.msra.mxu0 0.0
    %5430 = vmatprep.subr.mxu0 0.0
    %5431 = vmatpush1.xpose.msra.mxu0 0.0
    %5432 = vmatprep.subr.mxu0 0.0
    %5433 = vmatpush1.xpose.msra.mxu0 0.0
    %5434 = vmatprep.subr.mxu0 0.0
    %5435 = vmatpush1.xpose.msra.mxu0 0.0
    %5436 = vmatprep.subr.mxu0 0.0
    %5437 = vmatpush1.xpose.msra.mxu0 0.0
    %5438 = vmatprep.subr.mxu0 0.0
    %5439 = vmatpush1.xpose.msra.mxu0 0.0
    %5440 = vmatprep.subr.mxu0 0.0
    %5441 = vmatpush1.xpose.msra.mxu0 0.0
    %5442 = vmatprep.mubr.f32.mxu0 0.0
    %5443 = vmatmul.mubr.f32.gmra.mrb[0].mxu0 %v5374
    %v5444 = vpop.f32.mrb[0].mxu0
    %v5445 = vadd.f32 0.0, %v5444
    %v5446 = vpop.f32.mrb[0].mxu0
    %5447 = vdwg.mxu0
    %v5448 = vmul.f32 %v5445, 0.35355338
    %v5449 = vadd.f32 %v5448, %v5172
    %v5450 = vsel %vm1485, %v5449, -inf
    %5451 = vmax.xlane.f32.xlu0 %v5450
    %v5452 = vpop.xlane.xlu0 %5451
    %v5453 = vsub.f32 %v5449, %v5452
    %v5454 = vmul.f32 %v5453, 1.442695
    %v5455 = vpow.pop %v5454
    %v5456 = vsel %vm1485, %v5455, 0.0
    %5457 = vadd.xlane.f32.xlu0 %v5456
    %v5458 = vpop.xlane.xlu0 %5457
    %v5459 = vrcp.pop %v5458
    %v5460 = vmul.f32 %v5455, %v5459
    %v5461 = vadd.f32 %v5369, %v5460
    %v5462 = vmul.f32 %v5461, 0.25
    %v5463 = vlaneseq
    %v5464 = vshrl.u32 %v5463, 7
    %v5465 = vsub.s32 1, %v5464
    %v5466 = vrot.slane %v212, %v5465
    %v5467 = vmul.f32 %v5462, %v5466
    %v5468 = vadd.f32 %v5467, 0.0
    %5469 = vrot.lane.b32.xlu0 %v5087, 96
    %v5470 = vpop.permute.xlu0 %5469
    %v5471 = vsel %vm461, %v5470, 0
    %v5474 = vsel %vm461, %v378, 0
    %5476 = vmatprep.subr.mxu0 0.0
    %5477 = vmatpush1.xpose.msra.mxu0 %v5474
    %5478 = vmatprep.subr.mxu0 0.0
    %5479 = vmatpush1.xpose.msra.mxu0 0.0
    %5480 = vmatprep.subr.mxu0 0.0
    %5481 = vmatpush1.xpose.msra.mxu0 0.0
    %5482 = vmatprep.subr.mxu0 0.0
    %5483 = vmatpush1.xpose.msra.mxu0 0.0
    %5484 = vmatprep.subr.mxu0 0.0
    %5485 = vmatpush1.xpose.msra.mxu0 0.0
    %5486 = vmatprep.subr.mxu0 0.0
    %5487 = vmatpush1.xpose.msra.mxu0 0.0
    %5488 = vmatprep.subr.mxu0 0.0
    %5489 = vmatpush1.xpose.msra.mxu0 0.0
    %5490 = vmatprep.subr.mxu0 0.0
    %5491 = vmatpush1.xpose.msra.mxu0 0.0
    %5492 = vmatprep.subr.mxu0 0.0
    %5493 = vmatpush1.xpose.msra.mxu0 0.0
    %5494 = vmatprep.subr.mxu0 0.0
    %5495 = vmatpush1.xpose.msra.mxu0 0.0
    %5496 = vmatprep.subr.mxu0 0.0
    %5497 = vmatpush1.xpose.msra.mxu0 0.0
    %5498 = vmatprep.subr.mxu0 0.0
    %5499 = vmatpush1.xpose.msra.mxu0 0.0
    %5500 = vmatprep.subr.mxu0 0.0
    %5501 = vmatpush1.xpose.msra.mxu0 0.0
    %5502 = vmatprep.subr.mxu0 0.0
    %5503 = vmatpush1.xpose.msra.mxu0 0.0
    %5504 = vmatprep.subr.mxu0 0.0
    %5505 = vmatpush1.xpose.msra.mxu0 0.0
    %5506 = vmatprep.subr.mxu0 0.0
    %5507 = vmatpush1.xpose.msra.mxu0 0.0
    %5508 = vmatprep.subr.mxu0 0.0
    %5509 = vmatpush1.xpose.msra.mxu0 0.0
    %5510 = vmatprep.subr.mxu0 0.0
    %5511 = vmatpush1.xpose.msra.mxu0 0.0
    %5512 = vmatprep.subr.mxu0 0.0
    %5513 = vmatpush1.xpose.msra.mxu0 0.0
    %5514 = vmatprep.subr.mxu0 0.0
    %5515 = vmatpush1.xpose.msra.mxu0 0.0
    %5516 = vmatprep.subr.mxu0 0.0
    %5517 = vmatpush1.xpose.msra.mxu0 0.0
    %5518 = vmatprep.subr.mxu0 0.0
    %5519 = vmatpush1.xpose.msra.mxu0 0.0
    %5520 = vmatprep.subr.mxu0 0.0
    %5521 = vmatpush1.xpose.msra.mxu0 0.0
    %5522 = vmatprep.subr.mxu0 0.0
    %5523 = vmatpush1.xpose.msra.mxu0 0.0
    %5524 = vmatprep.subr.mxu0 0.0
    %5525 = vmatpush1.xpose.msra.mxu0 0.0
    %5526 = vmatprep.subr.mxu0 0.0
    %5527 = vmatpush1.xpose.msra.mxu0 0.0
    %5528 = vmatprep.subr.mxu0 0.0
    %5529 = vmatpush1.xpose.msra.mxu0 0.0
    %5530 = vmatprep.subr.mxu0 0.0
    %5531 = vmatpush1.xpose.msra.mxu0 0.0
    %5532 = vmatprep.subr.mxu0 0.0
    %5533 = vmatpush1.xpose.msra.mxu0 0.0
    %5534 = vmatprep.subr.mxu0 0.0
    %5535 = vmatpush1.xpose.msra.mxu0 0.0
    %5536 = vmatprep.subr.mxu0 0.0
    %5537 = vmatpush1.xpose.msra.mxu0 0.0
    %5538 = vmatprep.subr.mxu0 0.0
    %5539 = vmatpush1.xpose.msra.mxu0 0.0
    %5540 = vmatprep.mubr.f32.mxu0 0.0
    %5541 = vmatmul.mubr.f32.gmra.mrb[0].mxu0 %v5471
    %v5542 = vpop.f32.mrb[0].mxu0
    %v5543 = vadd.f32 0.0, %v5542
    %v5544 = vpop.f32.mrb[0].mxu0
    %5545 = vdwg.mxu0
    %v5546 = vmul.f32 %v5543, 0.35355338
    %v5547 = vlaneseq
    %v5548 = vshrl.u32 %v5547, 7
    %v5549 = vsub.s32 3, %v5548
    %v5550 = vrot.slane %v211, %v5549
    %v5551 = vadd.f32 %v5546, %v5550
    %v5552 = vsel %vm461, %v5551, -inf
    %5553 = vmax.xlane.f32.xlu0 %v5552
    %v5554 = vpop.xlane.xlu0 %5553
    %v5555 = vsub.f32 %v5551, %v5554
    %v5556 = vmul.f32 %v5555, 1.442695
    %v5557 = vpow.pop %v5556
    %v5558 = vsel %vm461, %v5557, 0.0
    %5559 = vadd.xlane.f32.xlu0 %v5558
    %v5560 = vpop.xlane.xlu0 %5559
    %v5561 = vrcp.pop %v5560
    %v5562 = vmul.f32 %v5557, %v5561
    %5563 = vrot.lane.b32.xlu0 %v378, 96
    %v5564 = vpop.permute.xlu0 %5563
    %v5567 = vsel %vm461, %v5562, 0
    %5569 = vmatprep.subr.mxu0 0.0
    %5570 = vmatpush1.msra.mxu0 %v5564
    %5571 = vmatprep.subr.mxu0 0.0
    %5572 = vmatpush1.msra.mxu0 0.0
    %5573 = vmatprep.subr.mxu0 0.0
    %5574 = vmatpush1.msra.mxu0 0.0
    %5575 = vmatprep.subr.mxu0 0.0
    %5576 = vmatpush1.msra.mxu0 0.0
    %5577 = vmatprep.subr.mxu0 0.0
    %5578 = vmatpush1.msra.mxu0 0.0
    %5579 = vmatprep.subr.mxu0 0.0
    %5580 = vmatpush1.msra.mxu0 0.0
    %5581 = vmatprep.subr.mxu0 0.0
    %5582 = vmatpush1.msra.mxu0 0.0
    %5583 = vmatprep.subr.mxu0 0.0
    %5584 = vmatpush1.msra.mxu0 0.0
    %5585 = vmatprep.subr.mxu0 0.0
    %5586 = vmatpush1.msra.mxu0 0.0
    %5587 = vmatprep.subr.mxu0 0.0
    %5588 = vmatpush1.msra.mxu0 0.0
    %5589 = vmatprep.subr.mxu0 0.0
    %5590 = vmatpush1.msra.mxu0 0.0
    %5591 = vmatprep.subr.mxu0 0.0
    %5592 = vmatpush1.msra.mxu0 0.0
    %5593 = vmatprep.subr.mxu0 0.0
    %5594 = vmatpush1.msra.mxu0 0.0
    %5595 = vmatprep.subr.mxu0 0.0
    %5596 = vmatpush1.msra.mxu0 0.0
    %5597 = vmatprep.subr.mxu0 0.0
    %5598 = vmatpush1.msra.mxu0 0.0
    %5599 = vmatprep.subr.mxu0 0.0
    %5600 = vmatpush1.msra.mxu0 0.0
    %5601 = vmatprep.subr.mxu0 0.0
    %5602 = vmatpush1.msra.mxu0 0.0
    %5603 = vmatprep.subr.mxu0 0.0
    %5604 = vmatpush1.msra.mxu0 0.0
    %5605 = vmatprep.subr.mxu0 0.0
    %5606 = vmatpush1.msra.mxu0 0.0
    %5607 = vmatprep.subr.mxu0 0.0
    %5608 = vmatpush1.msra.mxu0 0.0
    %5609 = vmatprep.subr.mxu0 0.0
    %5610 = vmatpush1.msra.mxu0 0.0
    %5611 = vmatprep.subr.mxu0 0.0
    %5612 = vmatpush1.msra.mxu0 0.0
    %5613 = vmatprep.subr.mxu0 0.0
    %5614 = vmatpush1.msra.mxu0 0.0
    %5615 = vmatprep.subr.mxu0 0.0
    %5616 = vmatpush1.msra.mxu0 0.0
    %5617 = vmatprep.subr.mxu0 0.0
    %5618 = vmatpush1.msra.mxu0 0.0
    %5619 = vmatprep.subr.mxu0 0.0
    %5620 = vmatpush1.msra.mxu0 0.0
    %5621 = vmatprep.subr.mxu0 0.0
    %5622 = vmatpush1.msra.mxu0 0.0
    %5623 = vmatprep.subr.mxu0 0.0
    %5624 = vmatpush1.msra.mxu0 0.0
    %5625 = vmatprep.subr.mxu0 0.0
    %5626 = vmatpush1.msra.mxu0 0.0
    %5627 = vmatprep.subr.mxu0 0.0
    %5628 = vmatpush1.msra.mxu0 0.0
    %5629 = vmatprep.subr.mxu0 0.0
    %5630 = vmatpush1.msra.mxu0 0.0
    %5631 = vmatprep.subr.mxu0 0.0
    %5632 = vmatpush1.msra.mxu0 0.0
    %5633 = vmatprep.mubr.f32.mxu0 0.0
    %5634 = vmatmul.mubr.f32.gmra.mrb[0].mxu0 %v5567
    %v5635 = vpop.f32.mrb[0].mxu0
    %v5636 = vadd.f32 0.0, %v5635
    %v5637 = vpop.f32.mrb[0].mxu0
    %5638 = vdwg.mxu0
    %5640 = vset.pattern.permute.xlu0 0
    %5641 = vperm.xlu0 %5640, %v5467
    %v5642 = vpop.permute.xlu0 %5641
    %v5644 = vmul.f32 %v5642, %v5636
    %v5645 = vadd.f32 %v5644, 0.0
    %5646 = vrot.lane.b32.xlu0 %v5087, 88
    %v5647 = vpop.permute.xlu0 %5646
    %5648 = vrot.lane.b32.xlu0 %v378, 120
    %v5649 = vpop.permute.xlu0 %5648
    %v5650 = vsel %vm461, %v5647, 0
    %v5652 = vsel %vm461, %v5649, 0
    %5654 = vmatprep.subr.mxu0 0.0
    %5655 = vmatpush1.xpose.msra.mxu0 %v5652
    %5656 = vmatprep.subr.mxu0 0.0
    %5657 = vmatpush1.xpose.msra.mxu0 0.0
    %5658 = vmatprep.subr.mxu0 0.0
    %5659 = vmatpush1.xpose.msra.mxu0 0.0
    %5660 = vmatprep.subr.mxu0 0.0
    %5661 = vmatpush1.xpose.msra.mxu0 0.0
    %5662 = vmatprep.subr.mxu0 0.0
    %5663 = vmatpush1.xpose.msra.mxu0 0.0
    %5664 = vmatprep.subr.mxu0 0.0
    %5665 = vmatpush1.xpose.msra.mxu0 0.0
    %5666 = vmatprep.subr.mxu0 0.0
    %5667 = vmatpush1.xpose.msra.mxu0 0.0
    %5668 = vmatprep.subr.mxu0 0.0
    %5669 = vmatpush1.xpose.msra.mxu0 0.0
    %5670 = vmatprep.subr.mxu0 0.0
    %5671 = vmatpush1.xpose.msra.mxu0 0.0
    %5672 = vmatprep.subr.mxu0 0.0
    %5673 = vmatpush1.xpose.msra.mxu0 0.0
    %5674 = vmatprep.subr.mxu0 0.0
    %5675 = vmatpush1.xpose.msra.mxu0 0.0
    %5676 = vmatprep.subr.mxu0 0.0
    %5677 = vmatpush1.xpose.msra.mxu0 0.0
    %5678 = vmatprep.subr.mxu0 0.0
    %5679 = vmatpush1.xpose.msra.mxu0 0.0
    %5680 = vmatprep.subr.mxu0 0.0
    %5681 = vmatpush1.xpose.msra.mxu0 0.0
    %5682 = vmatprep.subr.mxu0 0.0
    %5683 = vmatpush1.xpose.msra.mxu0 0.0
    %5684 = vmatprep.subr.mxu0 0.0
    %5685 = vmatpush1.xpose.msra.mxu0 0.0
    %5686 = vmatprep.subr.mxu0 0.0
    %5687 = vmatpush1.xpose.msra.mxu0 0.0
    %5688 = vmatprep.subr.mxu0 0.0
    %5689 = vmatpush1.xpose.msra.mxu0 0.0
    %5690 = vmatprep.subr.mxu0 0.0
    %5691 = vmatpush1.xpose.msra.mxu0 0.0
    %5692 = vmatprep.subr.mxu0 0.0
    %5693 = vmatpush1.xpose.msra.mxu0 0.0
    %5694 = vmatprep.subr.mxu0 0.0
    %5695 = vmatpush1.xpose.msra.mxu0 0.0
    %5696 = vmatprep.subr.mxu0 0.0
    %5697 = vmatpush1.xpose.msra.mxu0 0.0
    %5698 = vmatprep.subr.mxu0 0.0
    %5699 = vmatpush1.xpose.msra.mxu0 0.0
    %5700 = vmatprep.subr.mxu0 0.0
    %5701 = vmatpush1.xpose.msra.mxu0 0.0
    %5702 = vmatprep.subr.mxu0 0.0
    %5703 = vmatpush1.xpose.msra.mxu0 0.0
    %5704 = vmatprep.subr.mxu0 0.0
    %5705 = vmatpush1.xpose.msra.mxu0 0.0
    %5706 = vmatprep.subr.mxu0 0.0
    %5707 = vmatpush1.xpose.msra.mxu0 0.0
    %5708 = vmatprep.subr.mxu0 0.0
    %5709 = vmatpush1.xpose.msra.mxu0 0.0
    %5710 = vmatprep.subr.mxu0 0.0
    %5711 = vmatpush1.xpose.msra.mxu0 0.0
    %5712 = vmatprep.subr.mxu0 0.0
    %5713 = vmatpush1.xpose.msra.mxu0 0.0
    %5714 = vmatprep.subr.mxu0 0.0
    %5715 = vmatpush1.xpose.msra.mxu0 0.0
    %5716 = vmatprep.subr.mxu0 0.0
    %5717 = vmatpush1.xpose.msra.mxu0 0.0
    %5718 = vmatprep.mubr.f32.mxu0 0.0
    %5719 = vmatmul.mubr.f32.gmra.mrb[0].mxu0 %v5650
    %v5720 = vpop.f32.mrb[0].mxu0
    %v5721 = vadd.f32 0.0, %v5720
    %v5722 = vpop.f32.mrb[0].mxu0
    %5723 = vdwg.mxu0
    %v5724 = vmul.f32 %v5721, 0.35355338
    %v5725 = vadd.f32 %v5724, %v5550
    %v5726 = vsel %vm461, %v5725, -inf
    %5727 = vmax.xlane.f32.xlu0 %v5726
    %v5728 = vpop.xlane.xlu0 %5727
    %v5729 = vsub.f32 %v5725, %v5728
    %v5730 = vmul.f32 %v5729, 1.442695
    %v5731 = vpow.pop %v5730
    %v5732 = vsel %vm461, %v5731, 0.0
    %5733 = vadd.xlane.f32.xlu0 %v5732
    %v5734 = vpop.xlane.xlu0 %5733
    %v5735 = vrcp.pop %v5734
    %v5736 = vmul.f32 %v5731, %v5735
    %5737 = vrot.lane.b32.xlu0 %v378, 88
    %v5738 = vpop.permute.xlu0 %5737
    %v5741 = vsel %vm461, %v5736, 0
    %5743 = vmatprep.subr.mxu0 0.0
    %5744 = vmatpush1.msra.mxu0 %v5738
    %5745 = vmatprep.subr.mxu0 0.0
    %5746 = vmatpush1.msra.mxu0 0.0
    %5747 = vmatprep.subr.mxu0 0.0
    %5748 = vmatpush1.msra.mxu0 0.0
    %5749 = vmatprep.subr.mxu0 0.0
    %5750 = vmatpush1.msra.mxu0 0.0
    %5751 = vmatprep.subr.mxu0 0.0
    %5752 = vmatpush1.msra.mxu0 0.0
    %5753 = vmatprep.subr.mxu0 0.0
    %5754 = vmatpush1.msra.mxu0 0.0
    %5755 = vmatprep.subr.mxu0 0.0
    %5756 = vmatpush1.msra.mxu0 0.0
    %5757 = vmatprep.subr.mxu0 0.0
    %5758 = vmatpush1.msra.mxu0 0.0
    %5759 = vmatprep.subr.mxu0 0.0
    %5760 = vmatpush1.msra.mxu0 0.0
    %5761 = vmatprep.subr.mxu0 0.0
    %5762 = vmatpush1.msra.mxu0 0.0
    %5763 = vmatprep.subr.mxu0 0.0
    %5764 = vmatpush1.msra.mxu0 0.0
    %5765 = vmatprep.subr.mxu0 0.0
    %5766 = vmatpush1.msra.mxu0 0.0
    %5767 = vmatprep.subr.mxu0 0.0
    %5768 = vmatpush1.msra.mxu0 0.0
    %5769 = vmatprep.subr.mxu0 0.0
    %5770 = vmatpush1.msra.mxu0 0.0
    %5771 = vmatprep.subr.mxu0 0.0
    %5772 = vmatpush1.msra.mxu0 0.0
    %5773 = vmatprep.subr.mxu0 0.0
    %5774 = vmatpush1.msra.mxu0 0.0
    %5775 = vmatprep.subr.mxu0 0.0
    %5776 = vmatpush1.msra.mxu0 0.0
    %5777 = vmatprep.subr.mxu0 0.0
    %5778 = vmatpush1.msra.mxu0 0.0
    %5779 = vmatprep.subr.mxu0 0.0
    %5780 = vmatpush1.msra.mxu0 0.0
    %5781 = vmatprep.subr.mxu0 0.0
    %5782 = vmatpush1.msra.mxu0 0.0
    %5783 = vmatprep.subr.mxu0 0.0
    %5784 = vmatpush1.msra.mxu0 0.0
    %5785 = vmatprep.subr.mxu0 0.0
    %5786 = vmatpush1.msra.mxu0 0.0
    %5787 = vmatprep.subr.mxu0 0.0
    %5788 = vmatpush1.msra.mxu0 0.0
    %5789 = vmatprep.subr.mxu0 0.0
    %5790 = vmatpush1.msra.mxu0 0.0
    %5791 = vmatprep.subr.mxu0 0.0
    %5792 = vmatpush1.msra.mxu0 0.0
    %5793 = vmatprep.subr.mxu0 0.0
    %5794 = vmatpush1.msra.mxu0 0.0
    %5795 = vmatprep.subr.mxu0 0.0
    %5796 = vmatpush1.msra.mxu0 0.0
    %5797 = vmatprep.subr.mxu0 0.0
    %5798 = vmatpush1.msra.mxu0 0.0
    %5799 = vmatprep.subr.mxu0 0.0
    %5800 = vmatpush1.msra.mxu0 0.0
    %5801 = vmatprep.subr.mxu0 0.0
    %5802 = vmatpush1.msra.mxu0 0.0
    %5803 = vmatprep.subr.mxu0 0.0
    %5804 = vmatpush1.msra.mxu0 0.0
    %5805 = vmatprep.subr.mxu0 0.0
    %5806 = vmatpush1.msra.mxu0 0.0
    %5807 = vmatprep.mubr.f32.mxu0 0.0
    %5808 = vmatmul.mubr.f32.gmra.mrb[0].mxu0 %v5741
    %v5809 = vpop.f32.mrb[0].mxu0
    %v5810 = vadd.f32 0.0, %v5809
    %v5811 = vpop.f32.mrb[0].mxu0
    %5812 = vdwg.mxu0
    %v5813 = vmul.f32 %v5642, %v5810
    %v5814 = vadd.f32 %v5813, 0.0
    %5815 = vrot.lane.b32.xlu0 %v5087, 80
    %v5816 = vpop.permute.xlu0 %5815
    %5817 = vrot.lane.b32.xlu0 %v378, 112
    %v5818 = vpop.permute.xlu0 %5817
    %v5819 = vsel %vm461, %v5816, 0
    %v5821 = vsel %vm461, %v5818, 0
    %5823 = vmatprep.subr.mxu0 0.0
    %5824 = vmatpush1.xpose.msra.mxu0 %v5821
    %5825 = vmatprep.subr.mxu0 0.0
    %5826 = vmatpush1.xpose.msra.mxu0 0.0
    %5827 = vmatprep.subr.mxu0 0.0
    %5828 = vmatpush1.xpose.msra.mxu0 0.0
    %5829 = vmatprep.subr.mxu0 0.0
    %5830 = vmatpush1.xpose.msra.mxu0 0.0
    %5831 = vmatprep.subr.mxu0 0.0
    %5832 = vmatpush1.xpose.msra.mxu0 0.0
    %5833 = vmatprep.subr.mxu0 0.0
    %5834 = vmatpush1.xpose.msra.mxu0 0.0
    %5835 = vmatprep.subr.mxu0 0.0
    %5836 = vmatpush1.xpose.msra.mxu0 0.0
    %5837 = vmatprep.subr.mxu0 0.0
    %5838 = vmatpush1.xpose.msra.mxu0 0.0
    %5839 = vmatprep.subr.mxu0 0.0
    %5840 = vmatpush1.xpose.msra.mxu0 0.0
    %5841 = vmatprep.subr.mxu0 0.0
    %5842 = vmatpush1.xpose.msra.mxu0 0.0
    %5843 = vmatprep.subr.mxu0 0.0
    %5844 = vmatpush1.xpose.msra.mxu0 0.0
    %5845 = vmatprep.subr.mxu0 0.0
    %5846 = vmatpush1.xpose.msra.mxu0 0.0
    %5847 = vmatprep.subr.mxu0 0.0
    %5848 = vmatpush1.xpose.msra.mxu0 0.0
    %5849 = vmatprep.subr.mxu0 0.0
    %5850 = vmatpush1.xpose.msra.mxu0 0.0
    %5851 = vmatprep.subr.mxu0 0.0
    %5852 = vmatpush1.xpose.msra.mxu0 0.0
    %5853 = vmatprep.subr.mxu0 0.0
    %5854 = vmatpush1.xpose.msra.mxu0 0.0
    %5855 = vmatprep.subr.mxu0 0.0
    %5856 = vmatpush1.xpose.msra.mxu0 0.0
    %5857 = vmatprep.subr.mxu0 0.0
    %5858 = vmatpush1.xpose.msra.mxu0 0.0
    %5859 = vmatprep.subr.mxu0 0.0
    %5860 = vmatpush1.xpose.msra.mxu0 0.0
    %5861 = vmatprep.subr.mxu0 0.0
    %5862 = vmatpush1.xpose.msra.mxu0 0.0
    %5863 = vmatprep.subr.mxu0 0.0
    %5864 = vmatpush1.xpose.msra.mxu0 0.0
    %5865 = vmatprep.subr.mxu0 0.0
    %5866 = vmatpush1.xpose.msra.mxu0 0.0
    %5867 = vmatprep.subr.mxu0 0.0
    %5868 = vmatpush1.xpose.msra.mxu0 0.0
    %5869 = vmatprep.subr.mxu0 0.0
    %5870 = vmatpush1.xpose.msra.mxu0 0.0
    %5871 = vmatprep.subr.mxu0 0.0
    %5872 = vmatpush1.xpose.msra.mxu0 0.0
    %5873 = vmatprep.subr.mxu0 0.0
    %5874 = vmatpush1.xpose.msra.mxu0 0.0
    %5875 = vmatprep.subr.mxu0 0.0
    %5876 = vmatpush1.xpose.msra.mxu0 0.0
    %5877 = vmatprep.subr.mxu0 0.0
    %5878 = vmatpush1.xpose.msra.mxu0 0.0
    %5879 = vmatprep.subr.mxu0 0.0
    %5880 = vmatpush1.xpose.msra.mxu0 0.0
    %5881 = vmatprep.subr.mxu0 0.0
    %5882 = vmatpush1.xpose.msra.mxu0 0.0
    %5883 = vmatprep.subr.mxu0 0.0
    %5884 = vmatpush1.xpose.msra.mxu0 0.0
    %5885 = vmatprep.subr.mxu0 0.0
    %5886 = vmatpush1.xpose.msra.mxu0 0.0
    %5887 = vmatprep.mubr.f32.mxu0 0.0
    %5888 = vmatmul.mubr.f32.gmra.mrb[0].mxu0 %v5819
    %v5889 = vpop.f32.mrb[0].mxu0
    %v5890 = vadd.f32 0.0, %v5889
    %v5891 = vpop.f32.mrb[0].mxu0
    %5892 = vdwg.mxu0
    %v5893 = vmul.f32 %v5890, 0.35355338
    %v5894 = vadd.f32 %v5893, %v5550
    %v5895 = vsel %vm461, %v5894, -inf
    %5896 = vmax.xlane.f32.xlu0 %v5895
    %v5897 = vpop.xlane.xlu0 %5896
    %v5898 = vsub.f32 %v5894, %v5897
    %v5899 = vmul.f32 %v5898, 1.442695
    %v5900 = vpow.pop %v5899
    %v5901 = vsel %vm461, %v5900, 0.0
    %5902 = vadd.xlane.f32.xlu0 %v5901
    %v5903 = vpop.xlane.xlu0 %5902
    %v5904 = vrcp.pop %v5903
    %v5905 = vmul.f32 %v5900, %v5904
    %5906 = vrot.lane.b32.xlu0 %v378, 80
    %v5907 = vpop.permute.xlu0 %5906
    %v5910 = vsel %vm461, %v5905, 0
    %5912 = vmatprep.subr.mxu0 0.0
    %5913 = vmatpush1.msra.mxu0 %v5907
    %5914 = vmatprep.subr.mxu0 0.0
    %5915 = vmatpush1.msra.mxu0 0.0
    %5916 = vmatprep.subr.mxu0 0.0
    %5917 = vmatpush1.msra.mxu0 0.0
    %5918 = vmatprep.subr.mxu0 0.0
    %5919 = vmatpush1.msra.mxu0 0.0
    %5920 = vmatprep.subr.mxu0 0.0
    %5921 = vmatpush1.msra.mxu0 0.0
    %5922 = vmatprep.subr.mxu0 0.0
    %5923 = vmatpush1.msra.mxu0 0.0
    %5924 = vmatprep.subr.mxu0 0.0
    %5925 = vmatpush1.msra.mxu0 0.0
    %5926 = vmatprep.subr.mxu0 0.0
    %5927 = vmatpush1.msra.mxu0 0.0
    %5928 = vmatprep.subr.mxu0 0.0
    %5929 = vmatpush1.msra.mxu0 0.0
    %5930 = vmatprep.subr.mxu0 0.0
    %5931 = vmatpush1.msra.mxu0 0.0
    %5932 = vmatprep.subr.mxu0 0.0
    %5933 = vmatpush1.msra.mxu0 0.0
    %5934 = vmatprep.subr.mxu0 0.0
    %5935 = vmatpush1.msra.mxu0 0.0
    %5936 = vmatprep.subr.mxu0 0.0
    %5937 = vmatpush1.msra.mxu0 0.0
    %5938 = vmatprep.subr.mxu0 0.0
    %5939 = vmatpush1.msra.mxu0 0.0
    %5940 = vmatprep.subr.mxu0 0.0
    %5941 = vmatpush1.msra.mxu0 0.0
    %5942 = vmatprep.subr.mxu0 0.0
    %5943 = vmatpush1.msra.mxu0 0.0
    %5944 = vmatprep.subr.mxu0 0.0
    %5945 = vmatpush1.msra.mxu0 0.0
    %5946 = vmatprep.subr.mxu0 0.0
    %5947 = vmatpush1.msra.mxu0 0.0
    %5948 = vmatprep.subr.mxu0 0.0
    %5949 = vmatpush1.msra.mxu0 0.0
    %5950 = vmatprep.subr.mxu0 0.0
    %5951 = vmatpush1.msra.mxu0 0.0
    %5952 = vmatprep.subr.mxu0 0.0
    %5953 = vmatpush1.msra.mxu0 0.0
    %5954 = vmatprep.subr.mxu0 0.0
    %5955 = vmatpush1.msra.mxu0 0.0
    %5956 = vmatprep.subr.mxu0 0.0
    %5957 = vmatpush1.msra.mxu0 0.0
    %5958 = vmatprep.subr.mxu0 0.0
    %5959 = vmatpush1.msra.mxu0 0.0
    %5960 = vmatprep.subr.mxu0 0.0
    %5961 = vmatpush1.msra.mxu0 0.0
    %5962 = vmatprep.subr.mxu0 0.0
    %5963 = vmatpush1.msra.mxu0 0.0
    %5964 = vmatprep.subr.mxu0 0.0
    %5965 = vmatpush1.msra.mxu0 0.0
    %5966 = vmatprep.subr.mxu0 0.0
    %5967 = vmatpush1.msra.mxu0 0.0
    %5968 = vmatprep.subr.mxu0 0.0
    %5969 = vmatpush1.msra.mxu0 0.0
    %5970 = vmatprep.subr.mxu0 0.0
    %5971 = vmatpush1.msra.mxu0 0.0
    %5972 = vmatprep.subr.mxu0 0.0
    %5973 = vmatpush1.msra.mxu0 0.0
    %5974 = vmatprep.subr.mxu0 0.0
    %5975 = vmatpush1.msra.mxu0 0.0
    %5976 = vmatprep.mubr.f32.mxu0 0.0
    %5977 = vmatmul.mubr.f32.gmra.mrb[0].mxu0 %v5910
    %v5978 = vpop.f32.mrb[0].mxu0
    %v5979 = vadd.f32 0.0, %v5978
    %v5980 = vpop.f32.mrb[0].mxu0
    %5981 = vdwg.mxu0
    %v5982 = vmul.f32 %v5642, %v5979
    %v5983 = vadd.f32 %v5982, 0.0
    %5984 = vrot.lane.b32.xlu0 %v5087, 72
    %v5985 = vpop.permute.xlu0 %5984
    %5986 = vrot.lane.b32.xlu0 %v378, 104
    %v5987 = vpop.permute.xlu0 %5986
    %v5988 = vsel %vm461, %v5985, 0
    %v5990 = vsel %vm461, %v5987, 0
    %5992 = vmatprep.subr.mxu0 0.0
    %5993 = vmatpush1.xpose.msra.mxu0 %v5990
    %5994 = vmatprep.subr.mxu0 0.0
    %5995 = vmatpush1.xpose.msra.mxu0 0.0
    %5996 = vmatprep.subr.mxu0 0.0
    %5997 = vmatpush1.xpose.msra.mxu0 0.0
    %5998 = vmatprep.subr.mxu0 0.0
    %5999 = vmatpush1.xpose.msra.mxu0 0.0
    %6000 = vmatprep.subr.mxu0 0.0
    %6001 = vmatpush1.xpose.msra.mxu0 0.0
    %6002 = vmatprep.subr.mxu0 0.0
    %6003 = vmatpush1.xpose.msra.mxu0 0.0
    %6004 = vmatprep.subr.mxu0 0.0
    %6005 = vmatpush1.xpose.msra.mxu0 0.0
    %6006 = vmatprep.subr.mxu0 0.0
    %6007 = vmatpush1.xpose.msra.mxu0 0.0
    %6008 = vmatprep.subr.mxu0 0.0
    %6009 = vmatpush1.xpose.msra.mxu0 0.0
    %6010 = vmatprep.subr.mxu0 0.0
    %6011 = vmatpush1.xpose.msra.mxu0 0.0
    %6012 = vmatprep.subr.mxu0 0.0
    %6013 = vmatpush1.xpose.msra.mxu0 0.0
    %6014 = vmatprep.subr.mxu0 0.0
    %6015 = vmatpush1.xpose.msra.mxu0 0.0
    %6016 = vmatprep.subr.mxu0 0.0
    %6017 = vmatpush1.xpose.msra.mxu0 0.0
    %6018 = vmatprep.subr.mxu0 0.0
    %6019 = vmatpush1.xpose.msra.mxu0 0.0
    %6020 = vmatprep.subr.mxu0 0.0
    %6021 = vmatpush1.xpose.msra.mxu0 0.0
    %6022 = vmatprep.subr.mxu0 0.0
    %6023 = vmatpush1.xpose.msra.mxu0 0.0
    %6024 = vmatprep.subr.mxu0 0.0
    %6025 = vmatpush1.xpose.msra.mxu0 0.0
    %6026 = vmatprep.subr.mxu0 0.0
    %6027 = vmatpush1.xpose.msra.mxu0 0.0
    %6028 = vmatprep.subr.mxu0 0.0
    %6029 = vmatpush1.xpose.msra.mxu0 0.0
    %6030 = vmatprep.subr.mxu0 0.0
    %6031 = vmatpush1.xpose.msra.mxu0 0.0
    %6032 = vmatprep.subr.mxu0 0.0
    %6033 = vmatpush1.xpose.msra.mxu0 0.0
    %6034 = vmatprep.subr.mxu0 0.0
    %6035 = vmatpush1.xpose.msra.mxu0 0.0
    %6036 = vmatprep.subr.mxu0 0.0
    %6037 = vmatpush1.xpose.msra.mxu0 0.0
    %6038 = vmatprep.subr.mxu0 0.0
    %6039 = vmatpush1.xpose.msra.mxu0 0.0
    %6040 = vmatprep.subr.mxu0 0.0
    %6041 = vmatpush1.xpose.msra.mxu0 0.0
    %6042 = vmatprep.subr.mxu0 0.0
    %6043 = vmatpush1.xpose.msra.mxu0 0.0
    %6044 = vmatprep.subr.mxu0 0.0
    %6045 = vmatpush1.xpose.msra.mxu0 0.0
    %6046 = vmatprep.subr.mxu0 0.0
    %6047 = vmatpush1.xpose.msra.mxu0 0.0
    %6048 = vmatprep.subr.mxu0 0.0
    %6049 = vmatpush1.xpose.msra.mxu0 0.0
    %6050 = vmatprep.subr.mxu0 0.0
    %6051 = vmatpush1.xpose.msra.mxu0 0.0
    %6052 = vmatprep.subr.mxu0 0.0
    %6053 = vmatpush1.xpose.msra.mxu0 0.0
    %6054 = vmatprep.subr.mxu0 0.0
    %6055 = vmatpush1.xpose.msra.mxu0 0.0
    %6056 = vmatprep.mubr.f32.mxu0 0.0
    %6057 = vmatmul.mubr.f32.gmra.mrb[0].mxu0 %v5988
    %v6058 = vpop.f32.mrb[0].mxu0
    %v6059 = vadd.f32 0.0, %v6058
    %v6060 = vpop.f32.mrb[0].mxu0
    %6061 = vdwg.mxu0
    %v6062 = vmul.f32 %v6059, 0.35355338
    %v6063 = vadd.f32 %v6062, %v5550
    %v6064 = vsel %vm461, %v6063, -inf
    %6065 = vmax.xlane.f32.xlu0 %v6064
    %v6066 = vpop.xlane.xlu0 %6065
    %v6067 = vsub.f32 %v6063, %v6066
    %v6068 = vmul.f32 %v6067, 1.442695
    %v6069 = vpow.pop %v6068
    %v6070 = vsel %vm461, %v6069, 0.0
    %6071 = vadd.xlane.f32.xlu0 %v6070
    %v6072 = vpop.xlane.xlu0 %6071
    %v6073 = vrcp.pop %v6072
    %v6074 = vmul.f32 %v6069, %v6073
    %6075 = vrot.lane.b32.xlu0 %v378, 72
    %v6076 = vpop.permute.xlu0 %6075
    %v6079 = vsel %vm461, %v6074, 0
    %6081 = vmatprep.subr.mxu0 0.0
    %6082 = vmatpush1.msra.mxu0 %v6076
    %6083 = vmatprep.subr.mxu0 0.0
    %6084 = vmatpush1.msra.mxu0 0.0
    %6085 = vmatprep.subr.mxu0 0.0
    %6086 = vmatpush1.msra.mxu0 0.0
    %6087 = vmatprep.subr.mxu0 0.0
    %6088 = vmatpush1.msra.mxu0 0.0
    %6089 = vmatprep.subr.mxu0 0.0
    %6090 = vmatpush1.msra.mxu0 0.0
    %6091 = vmatprep.subr.mxu0 0.0
    %6092 = vmatpush1.msra.mxu0 0.0
    %6093 = vmatprep.subr.mxu0 0.0
    %6094 = vmatpush1.msra.mxu0 0.0
    %6095 = vmatprep.subr.mxu0 0.0
    %6096 = vmatpush1.msra.mxu0 0.0
    %6097 = vmatprep.subr.mxu0 0.0
    %6098 = vmatpush1.msra.mxu0 0.0
    %6099 = vmatprep.subr.mxu0 0.0
    %6100 = vmatpush1.msra.mxu0 0.0
    %6101 = vmatprep.subr.mxu0 0.0
    %6102 = vmatpush1.msra.mxu0 0.0
    %6103 = vmatprep.subr.mxu0 0.0
    %6104 = vmatpush1.msra.mxu0 0.0
    %6105 = vmatprep.subr.mxu0 0.0
    %6106 = vmatpush1.msra.mxu0 0.0
    %6107 = vmatprep.subr.mxu0 0.0
    %6108 = vmatpush1.msra.mxu0 0.0
    %6109 = vmatprep.subr.mxu0 0.0
    %6110 = vmatpush1.msra.mxu0 0.0
    %6111 = vmatprep.subr.mxu0 0.0
    %6112 = vmatpush1.msra.mxu0 0.0
    %6113 = vmatprep.subr.mxu0 0.0
    %6114 = vmatpush1.msra.mxu0 0.0
    %6115 = vmatprep.subr.mxu0 0.0
    %6116 = vmatpush1.msra.mxu0 0.0
    %6117 = vmatprep.subr.mxu0 0.0
    %6118 = vmatpush1.msra.mxu0 0.0
    %6119 = vmatprep.subr.mxu0 0.0
    %6120 = vmatpush1.msra.mxu0 0.0
    %6121 = vmatprep.subr.mxu0 0.0
    %6122 = vmatpush1.msra.mxu0 0.0
    %6123 = vmatprep.subr.mxu0 0.0
    %6124 = vmatpush1.msra.mxu0 0.0
    %6125 = vmatprep.subr.mxu0 0.0
    %6126 = vmatpush1.msra.mxu0 0.0
    %6127 = vmatprep.subr.mxu0 0.0
    %6128 = vmatpush1.msra.mxu0 0.0
    %6129 = vmatprep.subr.mxu0 0.0
    %6130 = vmatpush1.msra.mxu0 0.0
    %6131 = vmatprep.subr.mxu0 0.0
    %6132 = vmatpush1.msra.mxu0 0.0
    %6133 = vmatprep.subr.mxu0 0.0
    %6134 = vmatpush1.msra.mxu0 0.0
    %6135 = vmatprep.subr.mxu0 0.0
    %6136 = vmatpush1.msra.mxu0 0.0
    %6137 = vmatprep.subr.mxu0 0.0
    %6138 = vmatpush1.msra.mxu0 0.0
    %6139 = vmatprep.subr.mxu0 0.0
    %6140 = vmatpush1.msra.mxu0 0.0
    %6141 = vmatprep.subr.mxu0 0.0
    %6142 = vmatpush1.msra.mxu0 0.0
    %6143 = vmatprep.subr.mxu0 0.0
    %6144 = vmatpush1.msra.mxu0 0.0
    %6145 = vmatprep.mubr.f32.mxu0 0.0
    %6146 = vmatmul.mubr.f32.gmra.mrb[0].mxu0 %v6079
    %v6147 = vpop.f32.mrb[0].mxu0
    %v6148 = vadd.f32 0.0, %v6147
    %v6149 = vpop.f32.mrb[0].mxu0
    %6150 = vdwg.mxu0
    %v6151 = vmul.f32 %v5642, %v6148
    %v6152 = vadd.f32 %v6151, 0.0
    %6153 = vrot.lane.b32.xlu0 %v5467, 127
    %v6154 = vpop.permute.xlu0 %6153
    %v6156 = vadd.f32 %v5468, %v6154
    %v6158 = vsel %vm461, %v383, 0
    %6160 = vmatprep.subr.mxu0 0.0
    %6161 = vmatpush1.xpose.msra.mxu0 %v6158
    %6162 = vmatprep.subr.mxu0 0.0
    %6163 = vmatpush1.xpose.msra.mxu0 0.0
    %6164 = vmatprep.subr.mxu0 0.0
    %6165 = vmatpush1.xpose.msra.mxu0 0.0
    %6166 = vmatprep.subr.mxu0 0.0
    %6167 = vmatpush1.xpose.msra.mxu0 0.0
    %6168 = vmatprep.subr.mxu0 0.0
    %6169 = vmatpush1.xpose.msra.mxu0 0.0
    %6170 = vmatprep.subr.mxu0 0.0
    %6171 = vmatpush1.xpose.msra.mxu0 0.0
    %6172 = vmatprep.subr.mxu0 0.0
    %6173 = vmatpush1.xpose.msra.mxu0 0.0
    %6174 = vmatprep.subr.mxu0 0.0
    %6175 = vmatpush1.xpose.msra.mxu0 0.0
    %6176 = vmatprep.subr.mxu0 0.0
    %6177 = vmatpush1.xpose.msra.mxu0 0.0
    %6178 = vmatprep.subr.mxu0 0.0
    %6179 = vmatpush1.xpose.msra.mxu0 0.0
    %6180 = vmatprep.subr.mxu0 0.0
    %6181 = vmatpush1.xpose.msra.mxu0 0.0
    %6182 = vmatprep.subr.mxu0 0.0
    %6183 = vmatpush1.xpose.msra.mxu0 0.0
    %6184 = vmatprep.subr.mxu0 0.0
    %6185 = vmatpush1.xpose.msra.mxu0 0.0
    %6186 = vmatprep.subr.mxu0 0.0
    %6187 = vmatpush1.xpose.msra.mxu0 0.0
    %6188 = vmatprep.subr.mxu0 0.0
    %6189 = vmatpush1.xpose.msra.mxu0 0.0
    %6190 = vmatprep.subr.mxu0 0.0
    %6191 = vmatpush1.xpose.msra.mxu0 0.0
    %6192 = vmatprep.subr.mxu0 0.0
    %6193 = vmatpush1.xpose.msra.mxu0 0.0
    %6194 = vmatprep.subr.mxu0 0.0
    %6195 = vmatpush1.xpose.msra.mxu0 0.0
    %6196 = vmatprep.subr.mxu0 0.0
    %6197 = vmatpush1.xpose.msra.mxu0 0.0
    %6198 = vmatprep.subr.mxu0 0.0
    %6199 = vmatpush1.xpose.msra.mxu0 0.0
    %6200 = vmatprep.subr.mxu0 0.0
    %6201 = vmatpush1.xpose.msra.mxu0 0.0
    %6202 = vmatprep.subr.mxu0 0.0
    %6203 = vmatpush1.xpose.msra.mxu0 0.0
    %6204 = vmatprep.subr.mxu0 0.0
    %6205 = vmatpush1.xpose.msra.mxu0 0.0
    %6206 = vmatprep.subr.mxu0 0.0
    %6207 = vmatpush1.xpose.msra.mxu0 0.0
    %6208 = vmatprep.subr.mxu0 0.0
    %6209 = vmatpush1.xpose.msra.mxu0 0.0
    %6210 = vmatprep.subr.mxu0 0.0
    %6211 = vmatpush1.xpose.msra.mxu0 0.0
    %6212 = vmatprep.subr.mxu0 0.0
    %6213 = vmatpush1.xpose.msra.mxu0 0.0
    %6214 = vmatprep.subr.mxu0 0.0
    %6215 = vmatpush1.xpose.msra.mxu0 0.0
    %6216 = vmatprep.subr.mxu0 0.0
    %6217 = vmatpush1.xpose.msra.mxu0 0.0
    %6218 = vmatprep.subr.mxu0 0.0
    %6219 = vmatpush1.xpose.msra.mxu0 0.0
    %6220 = vmatprep.subr.mxu0 0.0
    %6221 = vmatpush1.xpose.msra.mxu0 0.0
    %6222 = vmatprep.subr.mxu0 0.0
    %6223 = vmatpush1.xpose.msra.mxu0 0.0
    %6224 = vmatprep.mubr.f32.mxu0 0.0
    %6225 = vmatmul.mubr.f32.gmra.mrb[0].mxu0 %v5471
    %v6226 = vpop.f32.mrb[0].mxu0
    %v6227 = vadd.f32 0.0, %v6226
    %v6228 = vpop.f32.mrb[0].mxu0
    %6229 = vdwg.mxu0
    %v6230 = vmul.f32 %v6227, 0.35355338
    %v6231 = vlaneseq
    %v6232 = vshrl.u32 %v6231, 7
    %v6233 = vsub.s32 4, %v6232
    %v6234 = vrot.slane %v211, %v6233
    %v6235 = vadd.f32 %v6230, %v6234
    %v6236 = vsel %vm461, %v6235, -inf
    %6237 = vmax.xlane.f32.xlu0 %v6236
    %v6238 = vpop.xlane.xlu0 %6237
    %v6239 = vsub.f32 %v6235, %v6238
    %v6240 = vmul.f32 %v6239, 1.442695
    %v6241 = vpow.pop %v6240
    %v6242 = vsel %vm461, %v6241, 0.0
    %6243 = vadd.xlane.f32.xlu0 %v6242
    %v6244 = vpop.xlane.xlu0 %6243
    %v6245 = vrcp.pop %v6244
    %v6246 = vmul.f32 %v6241, %v6245
    %6247 = vrot.lane.b32.xlu0 %v383, 96
    %v6248 = vpop.permute.xlu0 %6247
    %v6251 = vsel %vm461, %v6246, 0
    %6253 = vmatprep.subr.mxu0 0.0
    %6254 = vmatpush1.msra.mxu0 %v6248
    %6255 = vmatprep.subr.mxu0 0.0
    %6256 = vmatpush1.msra.mxu0 0.0
    %6257 = vmatprep.subr.mxu0 0.0
    %6258 = vmatpush1.msra.mxu0 0.0
    %6259 = vmatprep.subr.mxu0 0.0
    %6260 = vmatpush1.msra.mxu0 0.0
    %6261 = vmatprep.subr.mxu0 0.0
    %6262 = vmatpush1.msra.mxu0 0.0
    %6263 = vmatprep.subr.mxu0 0.0
    %6264 = vmatpush1.msra.mxu0 0.0
    %6265 = vmatprep.subr.mxu0 0.0
    %6266 = vmatpush1.msra.mxu0 0.0
    %6267 = vmatprep.subr.mxu0 0.0
    %6268 = vmatpush1.msra.mxu0 0.0
    %6269 = vmatprep.subr.mxu0 0.0
    %6270 = vmatpush1.msra.mxu0 0.0
    %6271 = vmatprep.subr.mxu0 0.0
    %6272 = vmatpush1.msra.mxu0 0.0
    %6273 = vmatprep.subr.mxu0 0.0
    %6274 = vmatpush1.msra.mxu0 0.0
    %6275 = vmatprep.subr.mxu0 0.0
    %6276 = vmatpush1.msra.mxu0 0.0
    %6277 = vmatprep.subr.mxu0 0.0
    %6278 = vmatpush1.msra.mxu0 0.0
    %6279 = vmatprep.subr.mxu0 0.0
    %6280 = vmatpush1.msra.mxu0 0.0
    %6281 = vmatprep.subr.mxu0 0.0
    %6282 = vmatpush1.msra.mxu0 0.0
    %6283 = vmatprep.subr.mxu0 0.0
    %6284 = vmatpush1.msra.mxu0 0.0
    %6285 = vmatprep.subr.mxu0 0.0
    %6286 = vmatpush1.msra.mxu0 0.0
    %6287 = vmatprep.subr.mxu0 0.0
    %6288 = vmatpush1.msra.mxu0 0.0
    %6289 = vmatprep.subr.mxu0 0.0
    %6290 = vmatpush1.msra.mxu0 0.0
    %6291 = vmatprep.subr.mxu0 0.0
    %6292 = vmatpush1.msra.mxu0 0.0
    %6293 = vmatprep.subr.mxu0 0.0
    %6294 = vmatpush1.msra.mxu0 0.0
    %6295 = vmatprep.subr.mxu0 0.0
    %6296 = vmatpush1.msra.mxu0 0.0
    %6297 = vmatprep.subr.mxu0 0.0
    %6298 = vmatpush1.msra.mxu0 0.0
    %6299 = vmatprep.subr.mxu0 0.0
    %6300 = vmatpush1.msra.mxu0 0.0
    %6301 = vmatprep.subr.mxu0 0.0
    %6302 = vmatpush1.msra.mxu0 0.0
    %6303 = vmatprep.subr.mxu0 0.0
    %6304 = vmatpush1.msra.mxu0 0.0
    %6305 = vmatprep.subr.mxu0 0.0
    %6306 = vmatpush1.msra.mxu0 0.0
    %6307 = vmatprep.subr.mxu0 0.0
    %6308 = vmatpush1.msra.mxu0 0.0
    %6309 = vmatprep.subr.mxu0 0.0
    %6310 = vmatpush1.msra.mxu0 0.0
    %6311 = vmatprep.subr.mxu0 0.0
    %6312 = vmatpush1.msra.mxu0 0.0
    %6313 = vmatprep.subr.mxu0 0.0
    %6314 = vmatpush1.msra.mxu0 0.0
    %6315 = vmatprep.subr.mxu0 0.0
    %6316 = vmatpush1.msra.mxu0 0.0
    %6317 = vmatprep.mubr.f32.mxu0 0.0
    %6318 = vmatmul.mubr.f32.gmra.mrb[0].mxu0 %v6251
    %v6319 = vpop.f32.mrb[0].mxu0
    %v6320 = vadd.f32 0.0, %v6319
    %v6321 = vpop.f32.mrb[0].mxu0
    %6322 = vdwg.mxu0
    %6323 = vset.pattern.permute.xlu0 1
    %6324 = vperm.xlu0 %6323, %v5467
    %v6325 = vpop.permute.xlu0 %6324
    %v6327 = vmul.f32 %v6325, %v6320
    %v6328 = vadd.f32 %v5645, %v6327
    %6329 = vrot.lane.b32.xlu0 %v383, 120
    %v6330 = vpop.permute.xlu0 %6329
    %v6331 = vsel %vm461, %v6330, 0
    %6333 = vmatprep.subr.mxu0 0.0
    %6334 = vmatpush1.xpose.msra.mxu0 %v6331
    %6335 = vmatprep.subr.mxu0 0.0
    %6336 = vmatpush1.xpose.msra.mxu0 0.0
    %6337 = vmatprep.subr.mxu0 0.0
    %6338 = vmatpush1.xpose.msra.mxu0 0.0
    %6339 = vmatprep.subr.mxu0 0.0
    %6340 = vmatpush1.xpose.msra.mxu0 0.0
    %6341 = vmatprep.subr.mxu0 0.0
    %6342 = vmatpush1.xpose.msra.mxu0 0.0
    %6343 = vmatprep.subr.mxu0 0.0
    %6344 = vmatpush1.xpose.msra.mxu0 0.0
    %6345 = vmatprep.subr.mxu0 0.0
    %6346 = vmatpush1.xpose.msra.mxu0 0.0
    %6347 = vmatprep.subr.mxu0 0.0
    %6348 = vmatpush1.xpose.msra.mxu0 0.0
    %6349 = vmatprep.subr.mxu0 0.0
    %6350 = vmatpush1.xpose.msra.mxu0 0.0
    %6351 = vmatprep.subr.mxu0 0.0
    %6352 = vmatpush1.xpose.msra.mxu0 0.0
    %6353 = vmatprep.subr.mxu0 0.0
    %6354 = vmatpush1.xpose.msra.mxu0 0.0
    %6355 = vmatprep.subr.mxu0 0.0
    %6356 = vmatpush1.xpose.msra.mxu0 0.0
    %6357 = vmatprep.subr.mxu0 0.0
    %6358 = vmatpush1.xpose.msra.mxu0 0.0
    %6359 = vmatprep.subr.mxu0 0.0
    %6360 = vmatpush1.xpose.msra.mxu0 0.0
    %6361 = vmatprep.subr.mxu0 0.0
    %6362 = vmatpush1.xpose.msra.mxu0 0.0
    %6363 = vmatprep.subr.mxu0 0.0
    %6364 = vmatpush1.xpose.msra.mxu0 0.0
    %6365 = vmatprep.subr.mxu0 0.0
    %6366 = vmatpush1.xpose.msra.mxu0 0.0
    %6367 = vmatprep.subr.mxu0 0.0
    %6368 = vmatpush1.xpose.msra.mxu0 0.0
    %6369 = vmatprep.subr.mxu0 0.0
    %6370 = vmatpush1.xpose.msra.mxu0 0.0
    %6371 = vmatprep.subr.mxu0 0.0
    %6372 = vmatpush1.xpose.msra.mxu0 0.0
    %6373 = vmatprep.subr.mxu0 0.0
    %6374 = vmatpush1.xpose.msra.mxu0 0.0
    %6375 = vmatprep.subr.mxu0 0.0
    %6376 = vmatpush1.xpose.msra.mxu0 0.0
    %6377 = vmatprep.subr.mxu0 0.0
    %6378 = vmatpush1.xpose.msra.mxu0 0.0
    %6379 = vmatprep.subr.mxu0 0.0
    %6380 = vmatpush1.xpose.msra.mxu0 0.0
    %6381 = vmatprep.subr.mxu0 0.0
    %6382 = vmatpush1.xpose.msra.mxu0 0.0
    %6383 = vmatprep.subr.mxu0 0.0
    %6384 = vmatpush1.xpose.msra.mxu0 0.0
    %6385 = vmatprep.subr.mxu0 0.0
    %6386 = vmatpush1.xpose.msra.mxu0 0.0
    %6387 = vmatprep.subr.mxu0 0.0
    %6388 = vmatpush1.xpose.msra.mxu0 0.0
    %6389 = vmatprep.subr.mxu0 0.0
    %6390 = vmatpush1.xpose.msra.mxu0 0.0
    %6391 = vmatprep.subr.mxu0 0.0
    %6392 = vmatpush1.xpose.msra.mxu0 0.0
    %6393 = vmatprep.subr.mxu0 0.0
    %6394 = vmatpush1.xpose.msra.mxu0 0.0
    %6395 = vmatprep.subr.mxu0 0.0
    %6396 = vmatpush1.xpose.msra.mxu0 0.0
    %6397 = vmatprep.mubr.f32.mxu0 0.0
    %6398 = vmatmul.mubr.f32.gmra.mrb[0].mxu0 %v5650
    %v6399 = vpop.f32.mrb[0].mxu0
    %v6400 = vadd.f32 0.0, %v6399
    %v6401 = vpop.f32.mrb[0].mxu0
    %6402 = vdwg.mxu0
    %v6403 = vmul.f32 %v6400, 0.35355338
    %v6404 = vadd.f32 %v6403, %v6234
    %v6405 = vsel %vm461, %v6404, -inf
    %6406 = vmax.xlane.f32.xlu0 %v6405
    %v6407 = vpop.xlane.xlu0 %6406
    %v6408 = vsub.f32 %v6404, %v6407
    %v6409 = vmul.f32 %v6408, 1.442695
    %v6410 = vpow.pop %v6409
    %v6411 = vsel %vm461, %v6410, 0.0
    %6412 = vadd.xlane.f32.xlu0 %v6411
    %v6413 = vpop.xlane.xlu0 %6412
    %v6414 = vrcp.pop %v6413
    %v6415 = vmul.f32 %v6410, %v6414
    %6416 = vrot.lane.b32.xlu0 %v383, 88
    %v6417 = vpop.permute.xlu0 %6416
    %v6420 = vsel %vm461, %v6415, 0
    %6422 = vmatprep.subr.mxu0 0.0
    %6423 = vmatpush1.msra.mxu0 %v6417
    %6424 = vmatprep.subr.mxu0 0.0
    %6425 = vmatpush1.msra.mxu0 0.0
    %6426 = vmatprep.subr.mxu0 0.0
    %6427 = vmatpush1.msra.mxu0 0.0
    %6428 = vmatprep.subr.mxu0 0.0
    %6429 = vmatpush1.msra.mxu0 0.0
    %6430 = vmatprep.subr.mxu0 0.0
    %6431 = vmatpush1.msra.mxu0 0.0
    %6432 = vmatprep.subr.mxu0 0.0
    %6433 = vmatpush1.msra.mxu0 0.0
    %6434 = vmatprep.subr.mxu0 0.0
    %6435 = vmatpush1.msra.mxu0 0.0
    %6436 = vmatprep.subr.mxu0 0.0
    %6437 = vmatpush1.msra.mxu0 0.0
    %6438 = vmatprep.subr.mxu0 0.0
    %6439 = vmatpush1.msra.mxu0 0.0
    %6440 = vmatprep.subr.mxu0 0.0
    %6441 = vmatpush1.msra.mxu0 0.0
    %6442 = vmatprep.subr.mxu0 0.0
    %6443 = vmatpush1.msra.mxu0 0.0
    %6444 = vmatprep.subr.mxu0 0.0
    %6445 = vmatpush1.msra.mxu0 0.0
    %6446 = vmatprep.subr.mxu0 0.0
    %6447 = vmatpush1.msra.mxu0 0.0
    %6448 = vmatprep.subr.mxu0 0.0
    %6449 = vmatpush1.msra.mxu0 0.0
    %6450 = vmatprep.subr.mxu0 0.0
    %6451 = vmatpush1.msra.mxu0 0.0
    %6452 = vmatprep.subr.mxu0 0.0
    %6453 = vmatpush1.msra.mxu0 0.0
    %6454 = vmatprep.subr.mxu0 0.0
    %6455 = vmatpush1.msra.mxu0 0.0
    %6456 = vmatprep.subr.mxu0 0.0
    %6457 = vmatpush1.msra.mxu0 0.0
    %6458 = vmatprep.subr.mxu0 0.0
    %6459 = vmatpush1.msra.mxu0 0.0
    %6460 = vmatprep.subr.mxu0 0.0
    %6461 = vmatpush1.msra.mxu0 0.0
    %6462 = vmatprep.subr.mxu0 0.0
    %6463 = vmatpush1.msra.mxu0 0.0
    %6464 = vmatprep.subr.mxu0 0.0
    %6465 = vmatpush1.msra.mxu0 0.0
    %6466 = vmatprep.subr.mxu0 0.0
    %6467 = vmatpush1.msra.mxu0 0.0
    %6468 = vmatprep.subr.mxu0 0.0
    %6469 = vmatpush1.msra.mxu0 0.0
    %6470 = vmatprep.subr.mxu0 0.0
    %6471 = vmatpush1.msra.mxu0 0.0
    %6472 = vmatprep.subr.mxu0 0.0
    %6473 = vmatpush1.msra.mxu0 0.0
    %6474 = vmatprep.subr.mxu0 0.0
    %6475 = vmatpush1.msra.mxu0 0.0
    %6476 = vmatprep.subr.mxu0 0.0
    %6477 = vmatpush1.msra.mxu0 0.0
    %6478 = vmatprep.subr.mxu0 0.0
    %6479 = vmatpush1.msra.mxu0 0.0
    %6480 = vmatprep.subr.mxu0 0.0
    %6481 = vmatpush1.msra.mxu0 0.0
    %6482 = vmatprep.subr.mxu0 0.0
    %6483 = vmatpush1.msra.mxu0 0.0
    %6484 = vmatprep.subr.mxu0 0.0
    %6485 = vmatpush1.msra.mxu0 0.0
    %6486 = vmatprep.mubr.f32.mxu0 0.0
    %6487 = vmatmul.mubr.f32.gmra.mrb[0].mxu0 %v6420
    %v6488 = vpop.f32.mrb[0].mxu0
    %v6489 = vadd.f32 0.0, %v6488
    %v6490 = vpop.f32.mrb[0].mxu0
    %6491 = vdwg.mxu0
    %v6492 = vmul.f32 %v6325, %v6489
    %v6493 = vadd.f32 %v5814, %v6492
    %6494 = vrot.lane.b32.xlu0 %v383, 112
    %v6495 = vpop.permute.xlu0 %6494
    %v6496 = vsel %vm461, %v6495, 0
    %6498 = vmatprep.subr.mxu0 0.0
    %6499 = vmatpush1.xpose.msra.mxu0 %v6496
    %6500 = vmatprep.subr.mxu0 0.0
    %6501 = vmatpush1.xpose.msra.mxu0 0.0
    %6502 = vmatprep.subr.mxu0 0.0
    %6503 = vmatpush1.xpose.msra.mxu0 0.0
    %6504 = vmatprep.subr.mxu0 0.0
    %6505 = vmatpush1.xpose.msra.mxu0 0.0
    %6506 = vmatprep.subr.mxu0 0.0
    %6507 = vmatpush1.xpose.msra.mxu0 0.0
    %6508 = vmatprep.subr.mxu0 0.0
    %6509 = vmatpush1.xpose.msra.mxu0 0.0
    %6510 = vmatprep.subr.mxu0 0.0
    %6511 = vmatpush1.xpose.msra.mxu0 0.0
    %6512 = vmatprep.subr.mxu0 0.0
    %6513 = vmatpush1.xpose.msra.mxu0 0.0
    %6514 = vmatprep.subr.mxu0 0.0
    %6515 = vmatpush1.xpose.msra.mxu0 0.0
    %6516 = vmatprep.subr.mxu0 0.0
    %6517 = vmatpush1.xpose.msra.mxu0 0.0
    %6518 = vmatprep.subr.mxu0 0.0
    %6519 = vmatpush1.xpose.msra.mxu0 0.0
    %6520 = vmatprep.subr.mxu0 0.0
    %6521 = vmatpush1.xpose.msra.mxu0 0.0
    %6522 = vmatprep.subr.mxu0 0.0
    %6523 = vmatpush1.xpose.msra.mxu0 0.0
    %6524 = vmatprep.subr.mxu0 0.0
    %6525 = vmatpush1.xpose.msra.mxu0 0.0
    %6526 = vmatprep.subr.mxu0 0.0
    %6527 = vmatpush1.xpose.msra.mxu0 0.0
    %6528 = vmatprep.subr.mxu0 0.0
    %6529 = vmatpush1.xpose.msra.mxu0 0.0
    %6530 = vmatprep.subr.mxu0 0.0
    %6531 = vmatpush1.xpose.msra.mxu0 0.0
    %6532 = vmatprep.subr.mxu0 0.0
    %6533 = vmatpush1.xpose.msra.mxu0 0.0
    %6534 = vmatprep.subr.mxu0 0.0
    %6535 = vmatpush1.xpose.msra.mxu0 0.0
    %6536 = vmatprep.subr.mxu0 0.0
    %6537 = vmatpush1.xpose.msra.mxu0 0.0
    %6538 = vmatprep.subr.mxu0 0.0
    %6539 = vmatpush1.xpose.msra.mxu0 0.0
    %6540 = vmatprep.subr.mxu0 0.0
    %6541 = vmatpush1.xpose.msra.mxu0 0.0
    %6542 = vmatprep.subr.mxu0 0.0
    %6543 = vmatpush1.xpose.msra.mxu0 0.0
    %6544 = vmatprep.subr.mxu0 0.0
    %6545 = vmatpush1.xpose.msra.mxu0 0.0
    %6546 = vmatprep.subr.mxu0 0.0
    %6547 = vmatpush1.xpose.msra.mxu0 0.0
    %6548 = vmatprep.subr.mxu0 0.0
    %6549 = vmatpush1.xpose.msra.mxu0 0.0
    %6550 = vmatprep.subr.mxu0 0.0
    %6551 = vmatpush1.xpose.msra.mxu0 0.0
    %6552 = vmatprep.subr.mxu0 0.0
    %6553 = vmatpush1.xpose.msra.mxu0 0.0
    %6554 = vmatprep.subr.mxu0 0.0
    %6555 = vmatpush1.xpose.msra.mxu0 0.0
    %6556 = vmatprep.subr.mxu0 0.0
    %6557 = vmatpush1.xpose.msra.mxu0 0.0
    %6558 = vmatprep.subr.mxu0 0.0
    %6559 = vmatpush1.xpose.msra.mxu0 0.0
    %6560 = vmatprep.subr.mxu0 0.0
    %6561 = vmatpush1.xpose.msra.mxu0 0.0
    %6562 = vmatprep.mubr.f32.mxu0 0.0
    %6563 = vmatmul.mubr.f32.gmra.mrb[0].mxu0 %v5819
    %v6564 = vpop.f32.mrb[0].mxu0
    %v6565 = vadd.f32 0.0, %v6564
    %v6566 = vpop.f32.mrb[0].mxu0
    %6567 = vdwg.mxu0
    %v6568 = vmul.f32 %v6565, 0.35355338
    %v6569 = vadd.f32 %v6568, %v6234
    %v6570 = vsel %vm461, %v6569, -inf
    %6571 = vmax.xlane.f32.xlu0 %v6570
    %v6572 = vpop.xlane.xlu0 %6571
    %v6573 = vsub.f32 %v6569, %v6572
    %v6574 = vmul.f32 %v6573, 1.442695
    %v6575 = vpow.pop %v6574
    %v6576 = vsel %vm461, %v6575, 0.0
    %6577 = vadd.xlane.f32.xlu0 %v6576
    %v6578 = vpop.xlane.xlu0 %6577
    %v6579 = vrcp.pop %v6578
    %v6580 = vmul.f32 %v6575, %v6579
    %6581 = vrot.lane.b32.xlu0 %v383, 80
    %v6582 = vpop.permute.xlu0 %6581
    %v6585 = vsel %vm461, %v6580, 0
    %6587 = vmatprep.subr.mxu0 0.0
    %6588 = vmatpush1.msra.mxu0 %v6582
    %6589 = vmatprep.subr.mxu0 0.0
    %6590 = vmatpush1.msra.mxu0 0.0
    %6591 = vmatprep.subr.mxu0 0.0
    %6592 = vmatpush1.msra.mxu0 0.0
    %6593 = vmatprep.subr.mxu0 0.0
    %6594 = vmatpush1.msra.mxu0 0.0
    %6595 = vmatprep.subr.mxu0 0.0
    %6596 = vmatpush1.msra.mxu0 0.0
    %6597 = vmatprep.subr.mxu0 0.0
    %6598 = vmatpush1.msra.mxu0 0.0
    %6599 = vmatprep.subr.mxu0 0.0
    %6600 = vmatpush1.msra.mxu0 0.0
    %6601 = vmatprep.subr.mxu0 0.0
    %6602 = vmatpush1.msra.mxu0 0.0
    %6603 = vmatprep.subr.mxu0 0.0
    %6604 = vmatpush1.msra.mxu0 0.0
    %6605 = vmatprep.subr.mxu0 0.0
    %6606 = vmatpush1.msra.mxu0 0.0
    %6607 = vmatprep.subr.mxu0 0.0
    %6608 = vmatpush1.msra.mxu0 0.0
    %6609 = vmatprep.subr.mxu0 0.0
    %6610 = vmatpush1.msra.mxu0 0.0
    %6611 = vmatprep.subr.mxu0 0.0
    %6612 = vmatpush1.msra.mxu0 0.0
    %6613 = vmatprep.subr.mxu0 0.0
    %6614 = vmatpush1.msra.mxu0 0.0
    %6615 = vmatprep.subr.mxu0 0.0
    %6616 = vmatpush1.msra.mxu0 0.0
    %6617 = vmatprep.subr.mxu0 0.0
    %6618 = vmatpush1.msra.mxu0 0.0
    %6619 = vmatprep.subr.mxu0 0.0
    %6620 = vmatpush1.msra.mxu0 0.0
    %6621 = vmatprep.subr.mxu0 0.0
    %6622 = vmatpush1.msra.mxu0 0.0
    %6623 = vmatprep.subr.mxu0 0.0
    %6624 = vmatpush1.msra.mxu0 0.0
    %6625 = vmatprep.subr.mxu0 0.0
    %6626 = vmatpush1.msra.mxu0 0.0
    %6627 = vmatprep.subr.mxu0 0.0
    %6628 = vmatpush1.msra.mxu0 0.0
    %6629 = vmatprep.subr.mxu0 0.0
    %6630 = vmatpush1.msra.mxu0 0.0
    %6631 = vmatprep.subr.mxu0 0.0
    %6632 = vmatpush1.msra.mxu0 0.0
    %6633 = vmatprep.subr.mxu0 0.0
    %6634 = vmatpush1.msra.mxu0 0.0
    %6635 = vmatprep.subr.mxu0 0.0
    %6636 = vmatpush1.msra.mxu0 0.0
    %6637 = vmatprep.subr.mxu0 0.0
    %6638 = vmatpush1.msra.mxu0 0.0
    %6639 = vmatprep.subr.mxu0 0.0
    %6640 = vmatpush1.msra.mxu0 0.0
    %6641 = vmatprep.subr.mxu0 0.0
    %6642 = vmatpush1.msra.mxu0 0.0
    %6643 = vmatprep.subr.mxu0 0.0
    %6644 = vmatpush1.msra.mxu0 0.0
    %6645 = vmatprep.subr.mxu0 0.0
    %6646 = vmatpush1.msra.mxu0 0.0
    %6647 = vmatprep.subr.mxu0 0.0
    %6648 = vmatpush1.msra.mxu0 0.0
    %6649 = vmatprep.subr.mxu0 0.0
    %6650 = vmatpush1.msra.mxu0 0.0
    %6651 = vmatprep.mubr.f32.mxu0 0.0
    %6652 = vmatmul.mubr.f32.gmra.mrb[0].mxu0 %v6585
    %v6653 = vpop.f32.mrb[0].mxu0
    %v6654 = vadd.f32 0.0, %v6653
    %v6655 = vpop.f32.mrb[0].mxu0
    %6656 = vdwg.mxu0
    %v6657 = vmul.f32 %v6325, %v6654
    %v6658 = vadd.f32 %v5983, %v6657
    %6659 = vrot.lane.b32.xlu0 %v383, 104
    %v6660 = vpop.permute.xlu0 %6659
    %v6661 = vsel %vm461, %v6660, 0
    %6663 = vmatprep.subr.mxu0 0.0
    %6664 = vmatpush1.xpose.msra.mxu0 %v6661
    %6665 = vmatprep.subr.mxu0 0.0
    %6666 = vmatpush1.xpose.msra.mxu0 0.0
    %6667 = vmatprep.subr.mxu0 0.0
    %6668 = vmatpush1.xpose.msra.mxu0 0.0
    %6669 = vmatprep.subr.mxu0 0.0
    %6670 = vmatpush1.xpose.msra.mxu0 0.0
    %6671 = vmatprep.subr.mxu0 0.0
    %6672 = vmatpush1.xpose.msra.mxu0 0.0
    %6673 = vmatprep.subr.mxu0 0.0
    %6674 = vmatpush1.xpose.msra.mxu0 0.0
    %6675 = vmatprep.subr.mxu0 0.0
    %6676 = vmatpush1.xpose.msra.mxu0 0.0
    %6677 = vmatprep.subr.mxu0 0.0
    %6678 = vmatpush1.xpose.msra.mxu0 0.0
    %6679 = vmatprep.subr.mxu0 0.0
    %6680 = vmatpush1.xpose.msra.mxu0 0.0
    %6681 = vmatprep.subr.mxu0 0.0
    %6682 = vmatpush1.xpose.msra.mxu0 0.0
    %6683 = vmatprep.subr.mxu0 0.0
    %6684 = vmatpush1.xpose.msra.mxu0 0.0
    %6685 = vmatprep.subr.mxu0 0.0
    %6686 = vmatpush1.xpose.msra.mxu0 0.0
    %6687 = vmatprep.subr.mxu0 0.0
    %6688 = vmatpush1.xpose.msra.mxu0 0.0
    %6689 = vmatprep.subr.mxu0 0.0
    %6690 = vmatpush1.xpose.msra.mxu0 0.0
    %6691 = vmatprep.subr.mxu0 0.0
    %6692 = vmatpush1.xpose.msra.mxu0 0.0
    %6693 = vmatprep.subr.mxu0 0.0
    %6694 = vmatpush1.xpose.msra.mxu0 0.0
    %6695 = vmatprep.subr.mxu0 0.0
    %6696 = vmatpush1.xpose.msra.mxu0 0.0
    %6697 = vmatprep.subr.mxu0 0.0
    %6698 = vmatpush1.xpose.msra.mxu0 0.0
    %6699 = vmatprep.subr.mxu0 0.0
    %6700 = vmatpush1.xpose.msra.mxu0 0.0
    %6701 = vmatprep.subr.mxu0 0.0
    %6702 = vmatpush1.xpose.msra.mxu0 0.0
    %6703 = vmatprep.subr.mxu0 0.0
    %6704 = vmatpush1.xpose.msra.mxu0 0.0
    %6705 = vmatprep.subr.mxu0 0.0
    %6706 = vmatpush1.xpose.msra.mxu0 0.0
    %6707 = vmatprep.subr.mxu0 0.0
    %6708 = vmatpush1.xpose.msra.mxu0 0.0
    %6709 = vmatprep.subr.mxu0 0.0
    %6710 = vmatpush1.xpose.msra.mxu0 0.0
    %6711 = vmatprep.subr.mxu0 0.0
    %6712 = vmatpush1.xpose.msra.mxu0 0.0
    %6713 = vmatprep.subr.mxu0 0.0
    %6714 = vmatpush1.xpose.msra.mxu0 0.0
    %6715 = vmatprep.subr.mxu0 0.0
    %6716 = vmatpush1.xpose.msra.mxu0 0.0
    %6717 = vmatprep.subr.mxu0 0.0
    %6718 = vmatpush1.xpose.msra.mxu0 0.0
    %6719 = vmatprep.subr.mxu0 0.0
    %6720 = vmatpush1.xpose.msra.mxu0 0.0
    %6721 = vmatprep.subr.mxu0 0.0
    %6722 = vmatpush1.xpose.msra.mxu0 0.0
    %6723 = vmatprep.subr.mxu0 0.0
    %6724 = vmatpush1.xpose.msra.mxu0 0.0
    %6725 = vmatprep.subr.mxu0 0.0
    %6726 = vmatpush1.xpose.msra.mxu0 0.0
    %6727 = vmatprep.mubr.f32.mxu0 0.0
    %6728 = vmatmul.mubr.f32.gmra.mrb[0].mxu0 %v5988
    %v6729 = vpop.f32.mrb[0].mxu0
    %v6730 = vadd.f32 0.0, %v6729
    %v6731 = vpop.f32.mrb[0].mxu0
    %6732 = vdwg.mxu0
    %v6733 = vmul.f32 %v6730, 0.35355338
    %v6734 = vadd.f32 %v6733, %v6234
    %v6735 = vsel %vm461, %v6734, -inf
    %6736 = vmax.xlane.f32.xlu0 %v6735
    %v6737 = vpop.xlane.xlu0 %6736
    %v6738 = vsub.f32 %v6734, %v6737
    %v6739 = vmul.f32 %v6738, 1.442695
    %v6740 = vpow.pop %v6739
    %v6741 = vsel %vm461, %v6740, 0.0
    %6742 = vadd.xlane.f32.xlu0 %v6741
    %v6743 = vpop.xlane.xlu0 %6742
    %v6744 = vrcp.pop %v6743
    %v6745 = vmul.f32 %v6740, %v6744
    %6746 = vrot.lane.b32.xlu0 %v383, 72
    %v6747 = vpop.permute.xlu0 %6746
    %v6750 = vsel %vm461, %v6745, 0
    %6752 = vmatprep.subr.mxu0 0.0
    %6753 = vmatpush1.msra.mxu0 %v6747
    %6754 = vmatprep.subr.mxu0 0.0
    %6755 = vmatpush1.msra.mxu0 0.0
    %6756 = vmatprep.subr.mxu0 0.0
    %6757 = vmatpush1.msra.mxu0 0.0
    %6758 = vmatprep.subr.mxu0 0.0
    %6759 = vmatpush1.msra.mxu0 0.0
    %6760 = vmatprep.subr.mxu0 0.0
    %6761 = vmatpush1.msra.mxu0 0.0
    %6762 = vmatprep.subr.mxu0 0.0
    %6763 = vmatpush1.msra.mxu0 0.0
    %6764 = vmatprep.subr.mxu0 0.0
    %6765 = vmatpush1.msra.mxu0 0.0
    %6766 = vmatprep.subr.mxu0 0.0
    %6767 = vmatpush1.msra.mxu0 0.0
    %6768 = vmatprep.subr.mxu0 0.0
    %6769 = vmatpush1.msra.mxu0 0.0
    %6770 = vmatprep.subr.mxu0 0.0
    %6771 = vmatpush1.msra.mxu0 0.0
    %6772 = vmatprep.subr.mxu0 0.0
    %6773 = vmatpush1.msra.mxu0 0.0
    %6774 = vmatprep.subr.mxu0 0.0
    %6775 = vmatpush1.msra.mxu0 0.0
    %6776 = vmatprep.subr.mxu0 0.0
    %6777 = vmatpush1.msra.mxu0 0.0
    %6778 = vmatprep.subr.mxu0 0.0
    %6779 = vmatpush1.msra.mxu0 0.0
    %6780 = vmatprep.subr.mxu0 0.0
    %6781 = vmatpush1.msra.mxu0 0.0
    %6782 = vmatprep.subr.mxu0 0.0
    %6783 = vmatpush1.msra.mxu0 0.0
    %6784 = vmatprep.subr.mxu0 0.0
    %6785 = vmatpush1.msra.mxu0 0.0
    %6786 = vmatprep.subr.mxu0 0.0
    %6787 = vmatpush1.msra.mxu0 0.0
    %6788 = vmatprep.subr.mxu0 0.0
    %6789 = vmatpush1.msra.mxu0 0.0
    %6790 = vmatprep.subr.mxu0 0.0
    %6791 = vmatpush1.msra.mxu0 0.0
    %6792 = vmatprep.subr.mxu0 0.0
    %6793 = vmatpush1.msra.mxu0 0.0
    %6794 = vmatprep.subr.mxu0 0.0
    %6795 = vmatpush1.msra.mxu0 0.0
    %6796 = vmatprep.subr.mxu0 0.0
    %6797 = vmatpush1.msra.mxu0 0.0
    %6798 = vmatprep.subr.mxu0 0.0
    %6799 = vmatpush1.msra.mxu0 0.0
    %6800 = vmatprep.subr.mxu0 0.0
    %6801 = vmatpush1.msra.mxu0 0.0
    %6802 = vmatprep.subr.mxu0 0.0
    %6803 = vmatpush1.msra.mxu0 0.0
    %6804 = vmatprep.subr.mxu0 0.0
    %6805 = vmatpush1.msra.mxu0 0.0
    %6806 = vmatprep.subr.mxu0 0.0
    %6807 = vmatpush1.msra.mxu0 0.0
    %6808 = vmatprep.subr.mxu0 0.0
    %6809 = vmatpush1.msra.mxu0 0.0
    %6810 = vmatprep.subr.mxu0 0.0
    %6811 = vmatpush1.msra.mxu0 0.0
    %6812 = vmatprep.subr.mxu0 0.0
    %6813 = vmatpush1.msra.mxu0 0.0
    %6814 = vmatprep.subr.mxu0 0.0
    %6815 = vmatpush1.msra.mxu0 0.0
    %6816 = vmatprep.mubr.f32.mxu0 0.0
    %6817 = vmatmul.mubr.f32.gmra.mrb[0].mxu0 %v6750
    %v6818 = vpop.f32.mrb[0].mxu0
    %v6819 = vadd.f32 0.0, %v6818
    %v6820 = vpop.f32.mrb[0].mxu0
    %6821 = vdwg.mxu0
    %v6822 = vmul.f32 %v6325, %v6819
    %v6823 = vadd.f32 %v6152, %v6822
    %6824 = vrot.lane.b32.xlu0 %v5467, 126
    %v6825 = vpop.permute.xlu0 %6824
    %v6827 = vadd.f32 %v6156, %v6825
    %v6829 = vsel %vm461, %v386, 0
    %6831 = vmatprep.subr.mxu0 0.0
    %6832 = vmatpush1.xpose.msra.mxu0 %v6829
    %6833 = vmatprep.subr.mxu0 0.0
    %6834 = vmatpush1.xpose.msra.mxu0 0.0
    %6835 = vmatprep.subr.mxu0 0.0
    %6836 = vmatpush1.xpose.msra.mxu0 0.0
    %6837 = vmatprep.subr.mxu0 0.0
    %6838 = vmatpush1.xpose.msra.mxu0 0.0
    %6839 = vmatprep.subr.mxu0 0.0
    %6840 = vmatpush1.xpose.msra.mxu0 0.0
    %6841 = vmatprep.subr.mxu0 0.0
    %6842 = vmatpush1.xpose.msra.mxu0 0.0
    %6843 = vmatprep.subr.mxu0 0.0
    %6844 = vmatpush1.xpose.msra.mxu0 0.0
    %6845 = vmatprep.subr.mxu0 0.0
    %6846 = vmatpush1.xpose.msra.mxu0 0.0
    %6847 = vmatprep.subr.mxu0 0.0
    %6848 = vmatpush1.xpose.msra.mxu0 0.0
    %6849 = vmatprep.subr.mxu0 0.0
    %6850 = vmatpush1.xpose.msra.mxu0 0.0
    %6851 = vmatprep.subr.mxu0 0.0
    %6852 = vmatpush1.xpose.msra.mxu0 0.0
    %6853 = vmatprep.subr.mxu0 0.0
    %6854 = vmatpush1.xpose.msra.mxu0 0.0
    %6855 = vmatprep.subr.mxu0 0.0
    %6856 = vmatpush1.xpose.msra.mxu0 0.0
    %6857 = vmatprep.subr.mxu0 0.0
    %6858 = vmatpush1.xpose.msra.mxu0 0.0
    %6859 = vmatprep.subr.mxu0 0.0
    %6860 = vmatpush1.xpose.msra.mxu0 0.0
    %6861 = vmatprep.subr.mxu0 0.0
    %6862 = vmatpush1.xpose.msra.mxu0 0.0
    %6863 = vmatprep.subr.mxu0 0.0
    %6864 = vmatpush1.xpose.msra.mxu0 0.0
    %6865 = vmatprep.subr.mxu0 0.0
    %6866 = vmatpush1.xpose.msra.mxu0 0.0
    %6867 = vmatprep.subr.mxu0 0.0
    %6868 = vmatpush1.xpose.msra.mxu0 0.0
    %6869 = vmatprep.subr.mxu0 0.0
    %6870 = vmatpush1.xpose.msra.mxu0 0.0
    %6871 = vmatprep.subr.mxu0 0.0
    %6872 = vmatpush1.xpose.msra.mxu0 0.0
    %6873 = vmatprep.subr.mxu0 0.0
    %6874 = vmatpush1.xpose.msra.mxu0 0.0
    %6875 = vmatprep.subr.mxu0 0.0
    %6876 = vmatpush1.xpose.msra.mxu0 0.0
    %6877 = vmatprep.subr.mxu0 0.0
    %6878 = vmatpush1.xpose.msra.mxu0 0.0
    %6879 = vmatprep.subr.mxu0 0.0
    %6880 = vmatpush1.xpose.msra.mxu0 0.0
    %6881 = vmatprep.subr.mxu0 0.0
    %6882 = vmatpush1.xpose.msra.mxu0 0.0
    %6883 = vmatprep.subr.mxu0 0.0
    %6884 = vmatpush1.xpose.msra.mxu0 0.0
    %6885 = vmatprep.subr.mxu0 0.0
    %6886 = vmatpush1.xpose.msra.mxu0 0.0
    %6887 = vmatprep.subr.mxu0 0.0
    %6888 = vmatpush1.xpose.msra.mxu0 0.0
    %6889 = vmatprep.subr.mxu0 0.0
    %6890 = vmatpush1.xpose.msra.mxu0 0.0
    %6891 = vmatprep.subr.mxu0 0.0
    %6892 = vmatpush1.xpose.msra.mxu0 0.0
    %6893 = vmatprep.subr.mxu0 0.0
    %6894 = vmatpush1.xpose.msra.mxu0 0.0
    %6895 = vmatprep.mubr.f32.mxu0 0.0
    %6896 = vmatmul.mubr.f32.gmra.mrb[0].mxu0 %v5471
    %v6897 = vpop.f32.mrb[0].mxu0
    %v6898 = vadd.f32 0.0, %v6897
    %v6899 = vpop.f32.mrb[0].mxu0
    %6900 = vdwg.mxu0
    %v6901 = vmul.f32 %v6898, 0.35355338
    %v6902 = vlaneseq
    %v6903 = vshrl.u32 %v6902, 7
    %v6904 = vsub.s32 5, %v6903
    %v6905 = vrot.slane %v211, %v6904
    %v6906 = vadd.f32 %v6901, %v6905
    %v6907 = vsel %vm461, %v6906, -inf
    %6908 = vmax.xlane.f32.xlu0 %v6907
    %v6909 = vpop.xlane.xlu0 %6908
    %v6910 = vsub.f32 %v6906, %v6909
    %v6911 = vmul.f32 %v6910, 1.442695
    %v6912 = vpow.pop %v6911
    %v6913 = vsel %vm461, %v6912, 0.0
    %6914 = vadd.xlane.f32.xlu0 %v6913
    %v6915 = vpop.xlane.xlu0 %6914
    %v6916 = vrcp.pop %v6915
    %v6917 = vmul.f32 %v6912, %v6916
    %6918 = vrot.lane.b32.xlu0 %v386, 96
    %v6919 = vpop.permute.xlu0 %6918
    %v6922 = vsel %vm461, %v6917, 0
    %6924 = vmatprep.subr.mxu0 0.0
    %6925 = vmatpush1.msra.mxu0 %v6919
    %6926 = vmatprep.subr.mxu0 0.0
    %6927 = vmatpush1.msra.mxu0 0.0
    %6928 = vmatprep.subr.mxu0 0.0
    %6929 = vmatpush1.msra.mxu0 0.0
    %6930 = vmatprep.subr.mxu0 0.0
    %6931 = vmatpush1.msra.mxu0 0.0
    %6932 = vmatprep.subr.mxu0 0.0
    %6933 = vmatpush1.msra.mxu0 0.0
    %6934 = vmatprep.subr.mxu0 0.0
    %6935 = vmatpush1.msra.mxu0 0.0
    %6936 = vmatprep.subr.mxu0 0.0
    %6937 = vmatpush1.msra.mxu0 0.0
    %6938 = vmatprep.subr.mxu0 0.0
    %6939 = vmatpush1.msra.mxu0 0.0
    %6940 = vmatprep.subr.mxu0 0.0
    %6941 = vmatpush1.msra.mxu0 0.0
    %6942 = vmatprep.subr.mxu0 0.0
    %6943 = vmatpush1.msra.mxu0 0.0
    %6944 = vmatprep.subr.mxu0 0.0
    %6945 = vmatpush1.msra.mxu0 0.0
    %6946 = vmatprep.subr.mxu0 0.0
    %6947 = vmatpush1.msra.mxu0 0.0
    %6948 = vmatprep.subr.mxu0 0.0
    %6949 = vmatpush1.msra.mxu0 0.0
    %6950 = vmatprep.subr.mxu0 0.0
    %6951 = vmatpush1.msra.mxu0 0.0
    %6952 = vmatprep.subr.mxu0 0.0
    %6953 = vmatpush1.msra.mxu0 0.0
    %6954 = vmatprep.subr.mxu0 0.0
    %6955 = vmatpush1.msra.mxu0 0.0
    %6956 = vmatprep.subr.mxu0 0.0
    %6957 = vmatpush1.msra.mxu0 0.0
    %6958 = vmatprep.subr.mxu0 0.0
    %6959 = vmatpush1.msra.mxu0 0.0
    %6960 = vmatprep.subr.mxu0 0.0
    %6961 = vmatpush1.msra.mxu0 0.0
    %6962 = vmatprep.subr.mxu0 0.0
    %6963 = vmatpush1.msra.mxu0 0.0
    %6964 = vmatprep.subr.mxu0 0.0
    %6965 = vmatpush1.msra.mxu0 0.0
    %6966 = vmatprep.subr.mxu0 0.0
    %6967 = vmatpush1.msra.mxu0 0.0
    %6968 = vmatprep.subr.mxu0 0.0
    %6969 = vmatpush1.msra.mxu0 0.0
    %6970 = vmatprep.subr.mxu0 0.0
    %6971 = vmatpush1.msra.mxu0 0.0
    %6972 = vmatprep.subr.mxu0 0.0
    %6973 = vmatpush1.msra.mxu0 0.0
    %6974 = vmatprep.subr.mxu0 0.0
    %6975 = vmatpush1.msra.mxu0 0.0
    %6976 = vmatprep.subr.mxu0 0.0
    %6977 = vmatpush1.msra.mxu0 0.0
    %6978 = vmatprep.subr.mxu0 0.0
    %6979 = vmatpush1.msra.mxu0 0.0
    %6980 = vmatprep.subr.mxu0 0.0
    %6981 = vmatpush1.msra.mxu0 0.0
    %6982 = vmatprep.subr.mxu0 0.0
    %6983 = vmatpush1.msra.mxu0 0.0
    %6984 = vmatprep.subr.mxu0 0.0
    %6985 = vmatpush1.msra.mxu0 0.0
    %6986 = vmatprep.subr.mxu0 0.0
    %6987 = vmatpush1.msra.mxu0 0.0
    %6988 = vmatprep.mubr.f32.mxu0 0.0
    %6989 = vmatmul.mubr.f32.gmra.mrb[0].mxu0 %v6922
    %v6990 = vpop.f32.mrb[0].mxu0
    %v6991 = vadd.f32 0.0, %v6990
    %v6992 = vpop.f32.mrb[0].mxu0
    %6993 = vdwg.mxu0
    %6994 = vset.pattern.permute.xlu0 2
    %6995 = vperm.xlu0 %6994, %v5467
    %v6996 = vpop.permute.xlu0 %6995
    %v6998 = vmul.f32 %v6996, %v6991
    %v6999 = vadd.f32 %v6328, %v6998
    %7000 = vrot.lane.b32.xlu0 %v386, 120
    %v7001 = vpop.permute.xlu0 %7000
    %v7002 = vsel %vm461, %v7001, 0
    %7004 = vmatprep.subr.mxu0 0.0
    %7005 = vmatpush1.xpose.msra.mxu0 %v7002
    %7006 = vmatprep.subr.mxu0 0.0
    %7007 = vmatpush1.xpose.msra.mxu0 0.0
    %7008 = vmatprep.subr.mxu0 0.0
    %7009 = vmatpush1.xpose.msra.mxu0 0.0
    %7010 = vmatprep.subr.mxu0 0.0
    %7011 = vmatpush1.xpose.msra.mxu0 0.0
    %7012 = vmatprep.subr.mxu0 0.0
    %7013 = vmatpush1.xpose.msra.mxu0 0.0
    %7014 = vmatprep.subr.mxu0 0.0
    %7015 = vmatpush1.xpose.msra.mxu0 0.0
    %7016 = vmatprep.subr.mxu0 0.0
    %7017 = vmatpush1.xpose.msra.mxu0 0.0
    %7018 = vmatprep.subr.mxu0 0.0
    %7019 = vmatpush1.xpose.msra.mxu0 0.0
    %7020 = vmatprep.subr.mxu0 0.0
    %7021 = vmatpush1.xpose.msra.mxu0 0.0
    %7022 = vmatprep.subr.mxu0 0.0
    %7023 = vmatpush1.xpose.msra.mxu0 0.0
    %7024 = vmatprep.subr.mxu0 0.0
    %7025 = vmatpush1.xpose.msra.mxu0 0.0
    %7026 = vmatprep.subr.mxu0 0.0
    %7027 = vmatpush1.xpose.msra.mxu0 0.0
    %7028 = vmatprep.subr.mxu0 0.0
    %7029 = vmatpush1.xpose.msra.mxu0 0.0
    %7030 = vmatprep.subr.mxu0 0.0
    %7031 = vmatpush1.xpose.msra.mxu0 0.0
    %7032 = vmatprep.subr.mxu0 0.0
    %7033 = vmatpush1.xpose.msra.mxu0 0.0
    %7034 = vmatprep.subr.mxu0 0.0
    %7035 = vmatpush1.xpose.msra.mxu0 0.0
    %7036 = vmatprep.subr.mxu0 0.0
    %7037 = vmatpush1.xpose.msra.mxu0 0.0
    %7038 = vmatprep.subr.mxu0 0.0
    %7039 = vmatpush1.xpose.msra.mxu0 0.0
    %7040 = vmatprep.subr.mxu0 0.0
    %7041 = vmatpush1.xpose.msra.mxu0 0.0
    %7042 = vmatprep.subr.mxu0 0.0
    %7043 = vmatpush1.xpose.msra.mxu0 0.0
    %7044 = vmatprep.subr.mxu0 0.0
    %7045 = vmatpush1.xpose.msra.mxu0 0.0
    %7046 = vmatprep.subr.mxu0 0.0
    %7047 = vmatpush1.xpose.msra.mxu0 0.0
    %7048 = vmatprep.subr.mxu0 0.0
    %7049 = vmatpush1.xpose.msra.mxu0 0.0
    %7050 = vmatprep.subr.mxu0 0.0
    %7051 = vmatpush1.xpose.msra.mxu0 0.0
    %7052 = vmatprep.subr.mxu0 0.0
    %7053 = vmatpush1.xpose.msra.mxu0 0.0
    %7054 = vmatprep.subr.mxu0 0.0
    %7055 = vmatpush1.xpose.msra.mxu0 0.0
    %7056 = vmatprep.subr.mxu0 0.0
    %7057 = vmatpush1.xpose.msra.mxu0 0.0
    %7058 = vmatprep.subr.mxu0 0.0
    %7059 = vmatpush1.xpose.msra.mxu0 0.0
    %7060 = vmatprep.subr.mxu0 0.0
    %7061 = vmatpush1.xpose.msra.mxu0 0.0
    %7062 = vmatprep.subr.mxu0 0.0
    %7063 = vmatpush1.xpose.msra.mxu0 0.0
    %7064 = vmatprep.subr.mxu0 0.0
    %7065 = vmatpush1.xpose.msra.mxu0 0.0
    %7066 = vmatprep.subr.mxu0 0.0
    %7067 = vmatpush1.xpose.msra.mxu0 0.0
    %7068 = vmatprep.mubr.f32.mxu0 0.0
    %7069 = vmatmul.mubr.f32.gmra.mrb[0].mxu0 %v5650
    %v7070 = vpop.f32.mrb[0].mxu0
    %v7071 = vadd.f32 0.0, %v7070
    %v7072 = vpop.f32.mrb[0].mxu0
    %7073 = vdwg.mxu0
    %v7074 = vmul.f32 %v7071, 0.35355338
    %v7075 = vadd.f32 %v7074, %v6905
    %v7076 = vsel %vm461, %v7075, -inf
    %7077 = vmax.xlane.f32.xlu0 %v7076
    %v7078 = vpop.xlane.xlu0 %7077
    %v7079 = vsub.f32 %v7075, %v7078
    %v7080 = vmul.f32 %v7079, 1.442695
    %v7081 = vpow.pop %v7080
    %v7082 = vsel %vm461, %v7081, 0.0
    %7083 = vadd.xlane.f32.xlu0 %v7082
    %v7084 = vpop.xlane.xlu0 %7083
    %v7085 = vrcp.pop %v7084
    %v7086 = vmul.f32 %v7081, %v7085
    %7087 = vrot.lane.b32.xlu0 %v386, 88
    %v7088 = vpop.permute.xlu0 %7087
    %v7091 = vsel %vm461, %v7086, 0
    %7093 = vmatprep.subr.mxu0 0.0
    %7094 = vmatpush1.msra.mxu0 %v7088
    %7095 = vmatprep.subr.mxu0 0.0
    %7096 = vmatpush1.msra.mxu0 0.0
    %7097 = vmatprep.subr.mxu0 0.0
    %7098 = vmatpush1.msra.mxu0 0.0
    %7099 = vmatprep.subr.mxu0 0.0
    %7100 = vmatpush1.msra.mxu0 0.0
    %7101 = vmatprep.subr.mxu0 0.0
    %7102 = vmatpush1.msra.mxu0 0.0
    %7103 = vmatprep.subr.mxu0 0.0
    %7104 = vmatpush1.msra.mxu0 0.0
    %7105 = vmatprep.subr.mxu0 0.0
    %7106 = vmatpush1.msra.mxu0 0.0
    %7107 = vmatprep.subr.mxu0 0.0
    %7108 = vmatpush1.msra.mxu0 0.0
    %7109 = vmatprep.subr.mxu0 0.0
    %7110 = vmatpush1.msra.mxu0 0.0
    %7111 = vmatprep.subr.mxu0 0.0
    %7112 = vmatpush1.msra.mxu0 0.0
    %7113 = vmatprep.subr.mxu0 0.0
    %7114 = vmatpush1.msra.mxu0 0.0
    %7115 = vmatprep.subr.mxu0 0.0
    %7116 = vmatpush1.msra.mxu0 0.0
    %7117 = vmatprep.subr.mxu0 0.0
    %7118 = vmatpush1.msra.mxu0 0.0
    %7119 = vmatprep.subr.mxu0 0.0
    %7120 = vmatpush1.msra.mxu0 0.0
    %7121 = vmatprep.subr.mxu0 0.0
    %7122 = vmatpush1.msra.mxu0 0.0
    %7123 = vmatprep.subr.mxu0 0.0
    %7124 = vmatpush1.msra.mxu0 0.0
    %7125 = vmatprep.subr.mxu0 0.0
    %7126 = vmatpush1.msra.mxu0 0.0
    %7127 = vmatprep.subr.mxu0 0.0
    %7128 = vmatpush1.msra.mxu0 0.0
    %7129 = vmatprep.subr.mxu0 0.0
    %7130 = vmatpush1.msra.mxu0 0.0
    %7131 = vmatprep.subr.mxu0 0.0
    %7132 = vmatpush1.msra.mxu0 0.0
    %7133 = vmatprep.subr.mxu0 0.0
    %7134 = vmatpush1.msra.mxu0 0.0
    %7135 = vmatprep.subr.mxu0 0.0
    %7136 = vmatpush1.msra.mxu0 0.0
    %7137 = vmatprep.subr.mxu0 0.0
    %7138 = vmatpush1.msra.mxu0 0.0
    %7139 = vmatprep.subr.mxu0 0.0
    %7140 = vmatpush1.msra.mxu0 0.0
    %7141 = vmatprep.subr.mxu0 0.0
    %7142 = vmatpush1.msra.mxu0 0.0
    %7143 = vmatprep.subr.mxu0 0.0
    %7144 = vmatpush1.msra.mxu0 0.0
    %7145 = vmatprep.subr.mxu0 0.0
    %7146 = vmatpush1.msra.mxu0 0.0
    %7147 = vmatprep.subr.mxu0 0.0
    %7148 = vmatpush1.msra.mxu0 0.0
    %7149 = vmatprep.subr.mxu0 0.0
    %7150 = vmatpush1.msra.mxu0 0.0
    %7151 = vmatprep.subr.mxu0 0.0
    %7152 = vmatpush1.msra.mxu0 0.0
    %7153 = vmatprep.subr.mxu0 0.0
    %7154 = vmatpush1.msra.mxu0 0.0
    %7155 = vmatprep.subr.mxu0 0.0
    %7156 = vmatpush1.msra.mxu0 0.0
    %7157 = vmatprep.mubr.f32.mxu0 0.0
    %7158 = vmatmul.mubr.f32.gmra.mrb[0].mxu0 %v7091
    %v7159 = vpop.f32.mrb[0].mxu0
    %v7160 = vadd.f32 0.0, %v7159
    %v7161 = vpop.f32.mrb[0].mxu0
    %7162 = vdwg.mxu0
    %v7163 = vmul.f32 %v6996, %v7160
    %v7164 = vadd.f32 %v6493, %v7163
    %7165 = vrot.lane.b32.xlu0 %v386, 112
    %v7166 = vpop.permute.xlu0 %7165
    %v7167 = vsel %vm461, %v7166, 0
    %7169 = vmatprep.subr.mxu0 0.0
    %7170 = vmatpush1.xpose.msra.mxu0 %v7167
    %7171 = vmatprep.subr.mxu0 0.0
    %7172 = vmatpush1.xpose.msra.mxu0 0.0
    %7173 = vmatprep.subr.mxu0 0.0
    %7174 = vmatpush1.xpose.msra.mxu0 0.0
    %7175 = vmatprep.subr.mxu0 0.0
    %7176 = vmatpush1.xpose.msra.mxu0 0.0
    %7177 = vmatprep.subr.mxu0 0.0
    %7178 = vmatpush1.xpose.msra.mxu0 0.0
    %7179 = vmatprep.subr.mxu0 0.0
    %7180 = vmatpush1.xpose.msra.mxu0 0.0
    %7181 = vmatprep.subr.mxu0 0.0
    %7182 = vmatpush1.xpose.msra.mxu0 0.0
    %7183 = vmatprep.subr.mxu0 0.0
    %7184 = vmatpush1.xpose.msra.mxu0 0.0
    %7185 = vmatprep.subr.mxu0 0.0
    %7186 = vmatpush1.xpose.msra.mxu0 0.0
    %7187 = vmatprep.subr.mxu0 0.0
    %7188 = vmatpush1.xpose.msra.mxu0 0.0
    %7189 = vmatprep.subr.mxu0 0.0
    %7190 = vmatpush1.xpose.msra.mxu0 0.0
    %7191 = vmatprep.subr.mxu0 0.0
    %7192 = vmatpush1.xpose.msra.mxu0 0.0
    %7193 = vmatprep.subr.mxu0 0.0
    %7194 = vmatpush1.xpose.msra.mxu0 0.0
    %7195 = vmatprep.subr.mxu0 0.0
    %7196 = vmatpush1.xpose.msra.mxu0 0.0
    %7197 = vmatprep.subr.mxu0 0.0
    %7198 = vmatpush1.xpose.msra.mxu0 0.0
    %7199 = vmatprep.subr.mxu0 0.0
    %7200 = vmatpush1.xpose.msra.mxu0 0.0
    %7201 = vmatprep.subr.mxu0 0.0
    %7202 = vmatpush1.xpose.msra.mxu0 0.0
    %7203 = vmatprep.subr.mxu0 0.0
    %7204 = vmatpush1.xpose.msra.mxu0 0.0
    %7205 = vmatprep.subr.mxu0 0.0
    %7206 = vmatpush1.xpose.msra.mxu0 0.0
    %7207 = vmatprep.subr.mxu0 0.0
    %7208 = vmatpush1.xpose.msra.mxu0 0.0
    %7209 = vmatprep.subr.mxu0 0.0
    %7210 = vmatpush1.xpose.msra.mxu0 0.0
    %7211 = vmatprep.subr.mxu0 0.0
    %7212 = vmatpush1.xpose.msra.mxu0 0.0
    %7213 = vmatprep.subr.mxu0 0.0
    %7214 = vmatpush1.xpose.msra.mxu0 0.0
    %7215 = vmatprep.subr.mxu0 0.0
    %7216 = vmatpush1.xpose.msra.mxu0 0.0
    %7217 = vmatprep.subr.mxu0 0.0
    %7218 = vmatpush1.xpose.msra.mxu0 0.0
    %7219 = vmatprep.subr.mxu0 0.0
    %7220 = vmatpush1.xpose.msra.mxu0 0.0
    %7221 = vmatprep.subr.mxu0 0.0
    %7222 = vmatpush1.xpose.msra.mxu0 0.0
    %7223 = vmatprep.subr.mxu0 0.0
    %7224 = vmatpush1.xpose.msra.mxu0 0.0
    %7225 = vmatprep.subr.mxu0 0.0
    %7226 = vmatpush1.xpose.msra.mxu0 0.0
    %7227 = vmatprep.subr.mxu0 0.0
    %7228 = vmatpush1.xpose.msra.mxu0 0.0
    %7229 = vmatprep.subr.mxu0 0.0
    %7230 = vmatpush1.xpose.msra.mxu0 0.0
    %7231 = vmatprep.subr.mxu0 0.0
    %7232 = vmatpush1.xpose.msra.mxu0 0.0
    %7233 = vmatprep.mubr.f32.mxu0 0.0
    %7234 = vmatmul.mubr.f32.gmra.mrb[0].mxu0 %v5819
    %v7235 = vpop.f32.mrb[0].mxu0
    %v7236 = vadd.f32 0.0, %v7235
    %v7237 = vpop.f32.mrb[0].mxu0
    %7238 = vdwg.mxu0
    %v7239 = vmul.f32 %v7236, 0.35355338
    %v7240 = vadd.f32 %v7239, %v6905
    %v7241 = vsel %vm461, %v7240, -inf
    %7242 = vmax.xlane.f32.xlu0 %v7241
    %v7243 = vpop.xlane.xlu0 %7242
    %v7244 = vsub.f32 %v7240, %v7243
    %v7245 = vmul.f32 %v7244, 1.442695
    %v7246 = vpow.pop %v7245
    %v7247 = vsel %vm461, %v7246, 0.0
    %7248 = vadd.xlane.f32.xlu0 %v7247
    %v7249 = vpop.xlane.xlu0 %7248
    %v7250 = vrcp.pop %v7249
    %v7251 = vmul.f32 %v7246, %v7250
    %7252 = vrot.lane.b32.xlu0 %v386, 80
    %v7253 = vpop.permute.xlu0 %7252
    %v7256 = vsel %vm461, %v7251, 0
    %7258 = vmatprep.subr.mxu0 0.0
    %7259 = vmatpush1.msra.mxu0 %v7253
    %7260 = vmatprep.subr.mxu0 0.0
    %7261 = vmatpush1.msra.mxu0 0.0
    %7262 = vmatprep.subr.mxu0 0.0
    %7263 = vmatpush1.msra.mxu0 0.0
    %7264 = vmatprep.subr.mxu0 0.0
    %7265 = vmatpush1.msra.mxu0 0.0
    %7266 = vmatprep.subr.mxu0 0.0
    %7267 = vmatpush1.msra.mxu0 0.0
    %7268 = vmatprep.subr.mxu0 0.0
    %7269 = vmatpush1.msra.mxu0 0.0
    %7270 = vmatprep.subr.mxu0 0.0
    %7271 = vmatpush1.msra.mxu0 0.0
    %7272 = vmatprep.subr.mxu0 0.0
    %7273 = vmatpush1.msra.mxu0 0.0
    %7274 = vmatprep.subr.mxu0 0.0
    %7275 = vmatpush1.msra.mxu0 0.0
    %7276 = vmatprep.subr.mxu0 0.0
    %7277 = vmatpush1.msra.mxu0 0.0
    %7278 = vmatprep.subr.mxu0 0.0
    %7279 = vmatpush1.msra.mxu0 0.0
    %7280 = vmatprep.subr.mxu0 0.0
    %7281 = vmatpush1.msra.mxu0 0.0
    %7282 = vmatprep.subr.mxu0 0.0
    %7283 = vmatpush1.msra.mxu0 0.0
    %7284 = vmatprep.subr.mxu0 0.0
    %7285 = vmatpush1.msra.mxu0 0.0
    %7286 = vmatprep.subr.mxu0 0.0
    %7287 = vmatpush1.msra.mxu0 0.0
    %7288 = vmatprep.subr.mxu0 0.0
    %7289 = vmatpush1.msra.mxu0 0.0
    %7290 = vmatprep.subr.mxu0 0.0
    %7291 = vmatpush1.msra.mxu0 0.0
    %7292 = vmatprep.subr.mxu0 0.0
    %7293 = vmatpush1.msra.mxu0 0.0
    %7294 = vmatprep.subr.mxu0 0.0
    %7295 = vmatpush1.msra.mxu0 0.0
    %7296 = vmatprep.subr.mxu0 0.0
    %7297 = vmatpush1.msra.mxu0 0.0
    %7298 = vmatprep.subr.mxu0 0.0
    %7299 = vmatpush1.msra.mxu0 0.0
    %7300 = vmatprep.subr.mxu0 0.0
    %7301 = vmatpush1.msra.mxu0 0.0
    %7302 = vmatprep.subr.mxu0 0.0
    %7303 = vmatpush1.msra.mxu0 0.0
    %7304 = vmatprep.subr.mxu0 0.0
    %7305 = vmatpush1.msra.mxu0 0.0
    %7306 = vmatprep.subr.mxu0 0.0
    %7307 = vmatpush1.msra.mxu0 0.0
    %7308 = vmatprep.subr.mxu0 0.0
    %7309 = vmatpush1.msra.mxu0 0.0
    %7310 = vmatprep.subr.mxu0 0.0
    %7311 = vmatpush1.msra.mxu0 0.0
    %7312 = vmatprep.subr.mxu0 0.0
    %7313 = vmatpush1.msra.mxu0 0.0
    %7314 = vmatprep.subr.mxu0 0.0
    %7315 = vmatpush1.msra.mxu0 0.0
    %7316 = vmatprep.subr.mxu0 0.0
    %7317 = vmatpush1.msra.mxu0 0.0
    %7318 = vmatprep.subr.mxu0 0.0
    %7319 = vmatpush1.msra.mxu0 0.0
    %7320 = vmatprep.subr.mxu0 0.0
    %7321 = vmatpush1.msra.mxu0 0.0
    %7322 = vmatprep.mubr.f32.mxu0 0.0
    %7323 = vmatmul.mubr.f32.gmra.mrb[0].mxu0 %v7256
    %v7324 = vpop.f32.mrb[0].mxu0
    %v7325 = vadd.f32 0.0, %v7324
    %v7326 = vpop.f32.mrb[0].mxu0
    %7327 = vdwg.mxu0
    %v7328 = vmul.f32 %v6996, %v7325
    %v7329 = vadd.f32 %v6658, %v7328
    %7330 = vrot.lane.b32.xlu0 %v386, 104
    %v7331 = vpop.permute.xlu0 %7330
    %v7332 = vsel %vm461, %v7331, 0
    %7334 = vmatprep.subr.mxu0 0.0
    %7335 = vmatpush1.xpose.msra.mxu0 %v7332
    %7336 = vmatprep.subr.mxu0 0.0
    %7337 = vmatpush1.xpose.msra.mxu0 0.0
    %7338 = vmatprep.subr.mxu0 0.0
    %7339 = vmatpush1.xpose.msra.mxu0 0.0
    %7340 = vmatprep.subr.mxu0 0.0
    %7341 = vmatpush1.xpose.msra.mxu0 0.0
    %7342 = vmatprep.subr.mxu0 0.0
    %7343 = vmatpush1.xpose.msra.mxu0 0.0
    %7344 = vmatprep.subr.mxu0 0.0
    %7345 = vmatpush1.xpose.msra.mxu0 0.0
    %7346 = vmatprep.subr.mxu0 0.0
    %7347 = vmatpush1.xpose.msra.mxu0 0.0
    %7348 = vmatprep.subr.mxu0 0.0
    %7349 = vmatpush1.xpose.msra.mxu0 0.0
    %7350 = vmatprep.subr.mxu0 0.0
    %7351 = vmatpush1.xpose.msra.mxu0 0.0
    %7352 = vmatprep.subr.mxu0 0.0
    %7353 = vmatpush1.xpose.msra.mxu0 0.0
    %7354 = vmatprep.subr.mxu0 0.0
    %7355 = vmatpush1.xpose.msra.mxu0 0.0
    %7356 = vmatprep.subr.mxu0 0.0
    %7357 = vmatpush1.xpose.msra.mxu0 0.0
    %7358 = vmatprep.subr.mxu0 0.0
    %7359 = vmatpush1.xpose.msra.mxu0 0.0
    %7360 = vmatprep.subr.mxu0 0.0
    %7361 = vmatpush1.xpose.msra.mxu0 0.0
    %7362 = vmatprep.subr.mxu0 0.0
    %7363 = vmatpush1.xpose.msra.mxu0 0.0
    %7364 = vmatprep.subr.mxu0 0.0
    %7365 = vmatpush1.xpose.msra.mxu0 0.0
    %7366 = vmatprep.subr.mxu0 0.0
    %7367 = vmatpush1.xpose.msra.mxu0 0.0
    %7368 = vmatprep.subr.mxu0 0.0
    %7369 = vmatpush1.xpose.msra.mxu0 0.0
    %7370 = vmatprep.subr.mxu0 0.0
    %7371 = vmatpush1.xpose.msra.mxu0 0.0
    %7372 = vmatprep.subr.mxu0 0.0
    %7373 = vmatpush1.xpose.msra.mxu0 0.0
    %7374 = vmatprep.subr.mxu0 0.0
    %7375 = vmatpush1.xpose.msra.mxu0 0.0
    %7376 = vmatprep.subr.mxu0 0.0
    %7377 = vmatpush1.xpose.msra.mxu0 0.0
    %7378 = vmatprep.subr.mxu0 0.0
    %7379 = vmatpush1.xpose.msra.mxu0 0.0
    %7380 = vmatprep.subr.mxu0 0.0
    %7381 = vmatpush1.xpose.msra.mxu0 0.0
    %7382 = vmatprep.subr.mxu0 0.0
    %7383 = vmatpush1.xpose.msra.mxu0 0.0
    %7384 = vmatprep.subr.mxu0 0.0
    %7385 = vmatpush1.xpose.msra.mxu0 0.0
    %7386 = vmatprep.subr.mxu0 0.0
    %7387 = vmatpush1.xpose.msra.mxu0 0.0
    %7388 = vmatprep.subr.mxu0 0.0
    %7389 = vmatpush1.xpose.msra.mxu0 0.0
    %7390 = vmatprep.subr.mxu0 0.0
    %7391 = vmatpush1.xpose.msra.mxu0 0.0
    %7392 = vmatprep.subr.mxu0 0.0
    %7393 = vmatpush1.xpose.msra.mxu0 0.0
    %7394 = vmatprep.subr.mxu0 0.0
    %7395 = vmatpush1.xpose.msra.mxu0 0.0
    %7396 = vmatprep.subr.mxu0 0.0
    %7397 = vmatpush1.xpose.msra.mxu0 0.0
    %7398 = vmatprep.mubr.f32.mxu0 0.0
    %7399 = vmatmul.mubr.f32.gmra.mrb[0].mxu0 %v5988
    %v7400 = vpop.f32.mrb[0].mxu0
    %v7401 = vadd.f32 0.0, %v7400
    %v7402 = vpop.f32.mrb[0].mxu0
    %7403 = vdwg.mxu0
    %v7404 = vmul.f32 %v7401, 0.35355338
    %v7405 = vadd.f32 %v7404, %v6905
    %v7406 = vsel %vm461, %v7405, -inf
    %7407 = vmax.xlane.f32.xlu0 %v7406
    %v7408 = vpop.xlane.xlu0 %7407
    %v7409 = vsub.f32 %v7405, %v7408
    %v7410 = vmul.f32 %v7409, 1.442695
    %v7411 = vpow.pop %v7410
    %v7412 = vsel %vm461, %v7411, 0.0
    %7413 = vadd.xlane.f32.xlu0 %v7412
    %v7414 = vpop.xlane.xlu0 %7413
    %v7415 = vrcp.pop %v7414
    %v7416 = vmul.f32 %v7411, %v7415
    %7417 = vrot.lane.b32.xlu0 %v386, 72
    %v7418 = vpop.permute.xlu0 %7417
    %v7421 = vsel %vm461, %v7416, 0
    %7423 = vmatprep.subr.mxu0 0.0
    %7424 = vmatpush1.msra.mxu0 %v7418
    %7425 = vmatprep.subr.mxu0 0.0
    %7426 = vmatpush1.msra.mxu0 0.0
    %7427 = vmatprep.subr.mxu0 0.0
    %7428 = vmatpush1.msra.mxu0 0.0
    %7429 = vmatprep.subr.mxu0 0.0
    %7430 = vmatpush1.msra.mxu0 0.0
    %7431 = vmatprep.subr.mxu0 0.0
    %7432 = vmatpush1.msra.mxu0 0.0
    %7433 = vmatprep.subr.mxu0 0.0
    %7434 = vmatpush1.msra.mxu0 0.0
    %7435 = vmatprep.subr.mxu0 0.0
    %7436 = vmatpush1.msra.mxu0 0.0
    %7437 = vmatprep.subr.mxu0 0.0
    %7438 = vmatpush1.msra.mxu0 0.0
    %7439 = vmatprep.subr.mxu0 0.0
    %7440 = vmatpush1.msra.mxu0 0.0
    %7441 = vmatprep.subr.mxu0 0.0
    %7442 = vmatpush1.msra.mxu0 0.0
    %7443 = vmatprep.subr.mxu0 0.0
    %7444 = vmatpush1.msra.mxu0 0.0
    %7445 = vmatprep.subr.mxu0 0.0
    %7446 = vmatpush1.msra.mxu0 0.0
    %7447 = vmatprep.subr.mxu0 0.0
    %7448 = vmatpush1.msra.mxu0 0.0
    %7449 = vmatprep.subr.mxu0 0.0
    %7450 = vmatpush1.msra.mxu0 0.0
    %7451 = vmatprep.subr.mxu0 0.0
    %7452 = vmatpush1.msra.mxu0 0.0
    %7453 = vmatprep.subr.mxu0 0.0
    %7454 = vmatpush1.msra.mxu0 0.0
    %7455 = vmatprep.subr.mxu0 0.0
    %7456 = vmatpush1.msra.mxu0 0.0
    %7457 = vmatprep.subr.mxu0 0.0
    %7458 = vmatpush1.msra.mxu0 0.0
    %7459 = vmatprep.subr.mxu0 0.0
    %7460 = vmatpush1.msra.mxu0 0.0
    %7461 = vmatprep.subr.mxu0 0.0
    %7462 = vmatpush1.msra.mxu0 0.0
    %7463 = vmatprep.subr.mxu0 0.0
    %7464 = vmatpush1.msra.mxu0 0.0
    %7465 = vmatprep.subr.mxu0 0.0
    %7466 = vmatpush1.msra.mxu0 0.0
    %7467 = vmatprep.subr.mxu0 0.0
    %7468 = vmatpush1.msra.mxu0 0.0
    %7469 = vmatprep.subr.mxu0 0.0
    %7470 = vmatpush1.msra.mxu0 0.0
    %7471 = vmatprep.subr.mxu0 0.0
    %7472 = vmatpush1.msra.mxu0 0.0
    %7473 = vmatprep.subr.mxu0 0.0
    %7474 = vmatpush1.msra.mxu0 0.0
    %7475 = vmatprep.subr.mxu0 0.0
    %7476 = vmatpush1.msra.mxu0 0.0
    %7477 = vmatprep.subr.mxu0 0.0
    %7478 = vmatpush1.msra.mxu0 0.0
    %7479 = vmatprep.subr.mxu0 0.0
    %7480 = vmatpush1.msra.mxu0 0.0
    %7481 = vmatprep.subr.mxu0 0.0
    %7482 = vmatpush1.msra.mxu0 0.0
    %7483 = vmatprep.subr.mxu0 0.0
    %7484 = vmatpush1.msra.mxu0 0.0
    %7485 = vmatprep.subr.mxu0 0.0
    %7486 = vmatpush1.msra.mxu0 0.0
    %7487 = vmatprep.mubr.f32.mxu0 0.0
    %7488 = vmatmul.mubr.f32.gmra.mrb[0].mxu0 %v7421
    %v7489 = vpop.f32.mrb[0].mxu0
    %v7490 = vadd.f32 0.0, %v7489
    %v7491 = vpop.f32.mrb[0].mxu0
    %7492 = vdwg.mxu0
    %v7493 = vmul.f32 %v6996, %v7490
    %v7494 = vadd.f32 %v6823, %v7493
    %7496 = vset.pattern.permute.xlu0 0
    %7497 = vperm.xlu0 %7496, %v6827
    %v7498 = vpop.permute.xlu0 %7497
    %v7500 = vmul.f32 %v7498, %v3816
    %v7501 = vadd.f32 %v7500, %v5047
    %v7502 = vpack.c.bf16 %v6999, %v6999
    %v7504 = vsel %vm461, %v7502, 0
    %7506 = vmatprep.subr.bf16.mxu0 0
    %7507 = vmatpush1.bf16.msra.mxu0 %v3826
    %7508 = vmatprep.subr.bf16.mxu0 0
    %7509 = vmatpush1.bf16.msra.mxu0 0
    %7510 = vmatprep.subr.bf16.mxu0 0
    %7511 = vmatpush1.bf16.msra.mxu0 0
    %7512 = vmatprep.subr.bf16.mxu0 0
    %7513 = vmatpush1.bf16.msra.mxu0 0
    %7514 = vmatprep.subr.bf16.mxu0 0
    %7515 = vmatpush1.bf16.msra.mxu0 0
    %7516 = vmatprep.subr.bf16.mxu0 0
    %7517 = vmatpush1.bf16.msra.mxu0 0
    %7518 = vmatprep.subr.bf16.mxu0 0
    %7519 = vmatpush1.bf16.msra.mxu0 0
    %7520 = vmatprep.subr.bf16.mxu0 0
    %7521 = vmatpush1.bf16.msra.mxu0 0
    %7522 = vmatprep.subr.bf16.mxu0 0
    %7523 = vmatpush1.bf16.msra.mxu0 0
    %7524 = vmatprep.subr.bf16.mxu0 0
    %7525 = vmatpush1.bf16.msra.mxu0 0
    %7526 = vmatprep.subr.bf16.mxu0 0
    %7527 = vmatpush1.bf16.msra.mxu0 0
    %7528 = vmatprep.subr.bf16.mxu0 0
    %7529 = vmatpush1.bf16.msra.mxu0 0
    %7530 = vmatprep.subr.bf16.mxu0 0
    %7531 = vmatpush1.bf16.msra.mxu0 0
    %7532 = vmatprep.subr.bf16.mxu0 0
    %7533 = vmatpush1.bf16.msra.mxu0 0
    %7534 = vmatprep.subr.bf16.mxu0 0
    %7535 = vmatpush1.bf16.msra.mxu0 0
    %7536 = vmatprep.subr.bf16.mxu0 0
    %7537 = vmatpush1.bf16.msra.mxu0 0
    %7538 = vmatprep.mubr.bf16.mxu0 0
    %7539 = vmatmul.mubr.bf16.gmra.mrb[0].mxu0 %v7504
    %v7540 = vpop.f32.mrb[0].mxu0
    %v7541 = vadd.f32 0.0, %v7540
    %v7542 = vpop.f32.mrb[0].mxu0
    %v7543 = vpop.f32.mrb[0].mxu0
    %v7544 = vpop.f32.mrb[0].mxu0
    %7545 = vdwg.mxu0
    %v7546 = vadd.f32 %v7501, %v7541
    %v7547 = vpack.c.bf16 %v7164, %v7164
    %v7549 = vsel %vm461, %v7547, 0
    %7551 = vmatprep.subr.bf16.mxu0 0
    %7552 = vmatpush1.bf16.msra.mxu0 %v3875
    %7553 = vmatprep.subr.bf16.mxu0 0
    %7554 = vmatpush1.bf16.msra.mxu0 0
    %7555 = vmatprep.subr.bf16.mxu0 0
    %7556 = vmatpush1.bf16.msra.mxu0 0
    %7557 = vmatprep.subr.bf16.mxu0 0
    %7558 = vmatpush1.bf16.msra.mxu0 0
    %7559 = vmatprep.subr.bf16.mxu0 0
    %7560 = vmatpush1.bf16.msra.mxu0 0
    %7561 = vmatprep.subr.bf16.mxu0 0
    %7562 = vmatpush1.bf16.msra.mxu0 0
    %7563 = vmatprep.subr.bf16.mxu0 0
    %7564 = vmatpush1.bf16.msra.mxu0 0
    %7565 = vmatprep.subr.bf16.mxu0 0
    %7566 = vmatpush1.bf16.msra.mxu0 0
    %7567 = vmatprep.subr.bf16.mxu0 0
    %7568 = vmatpush1.bf16.msra.mxu0 0
    %7569 = vmatprep.subr.bf16.mxu0 0
    %7570 = vmatpush1.bf16.msra.mxu0 0
    %7571 = vmatprep.subr.bf16.mxu0 0
    %7572 = vmatpush1.bf16.msra.mxu0 0
    %7573 = vmatprep.subr.bf16.mxu0 0
    %7574 = vmatpush1.bf16.msra.mxu0 0
    %7575 = vmatprep.subr.bf16.mxu0 0
    %7576 = vmatpush1.bf16.msra.mxu0 0
    %7577 = vmatprep.subr.bf16.mxu0 0
    %7578 = vmatpush1.bf16.msra.mxu0 0
    %7579 = vmatprep.subr.bf16.mxu0 0
    %7580 = vmatpush1.bf16.msra.mxu0 0
    %7581 = vmatprep.subr.bf16.mxu0 0
    %7582 = vmatpush1.bf16.msra.mxu0 0
    %7583 = vmatprep.mubr.bf16.mxu0 0
    %7584 = vmatmul.mubr.bf16.gmra.mrb[0].mxu0 %v7549
    %v7585 = vpop.f32.mrb[0].mxu0
    %v7586 = vadd.f32 0.0, %v7585
    %v7587 = vpop.f32.mrb[0].mxu0
    %v7588 = vpop.f32.mrb[0].mxu0
    %v7589 = vpop.f32.mrb[0].mxu0
    %7590 = vdwg.mxu0
    %v7591 = vadd.f32 %v7546, %v7586
    %v7592 = vpack.c.bf16 %v7329, %v7329
    %v7594 = vsel %vm461, %v7592, 0
    %7596 = vmatprep.subr.bf16.mxu0 0
    %7597 = vmatpush1.bf16.msra.mxu0 %v3924
    %7598 = vmatprep.subr.bf16.mxu0 0
    %7599 = vmatpush1.bf16.msra.mxu0 0
    %7600 = vmatprep.subr.bf16.mxu0 0
    %7601 = vmatpush1.bf16.msra.mxu0 0
    %7602 = vmatprep.subr.bf16.mxu0 0
    %7603 = vmatpush1.bf16.msra.mxu0 0
    %7604 = vmatprep.subr.bf16.mxu0 0
    %7605 = vmatpush1.bf16.msra.mxu0 0
    %7606 = vmatprep.subr.bf16.mxu0 0
    %7607 = vmatpush1.bf16.msra.mxu0 0
    %7608 = vmatprep.subr.bf16.mxu0 0
    %7609 = vmatpush1.bf16.msra.mxu0 0
    %7610 = vmatprep.subr.bf16.mxu0 0
    %7611 = vmatpush1.bf16.msra.mxu0 0
    %7612 = vmatprep.subr.bf16.mxu0 0
    %7613 = vmatpush1.bf16.msra.mxu0 0
    %7614 = vmatprep.subr.bf16.mxu0 0
    %7615 = vmatpush1.bf16.msra.mxu0 0
    %7616 = vmatprep.subr.bf16.mxu0 0
    %7617 = vmatpush1.bf16.msra.mxu0 0
    %7618 = vmatprep.subr.bf16.mxu0 0
    %7619 = vmatpush1.bf16.msra.mxu0 0
    %7620 = vmatprep.subr.bf16.mxu0 0
    %7621 = vmatpush1.bf16.msra.mxu0 0
    %7622 = vmatprep.subr.bf16.mxu0 0
    %7623 = vmatpush1.bf16.msra.mxu0 0
    %7624 = vmatprep.subr.bf16.mxu0 0
    %7625 = vmatpush1.bf16.msra.mxu0 0
    %7626 = vmatprep.subr.bf16.mxu0 0
    %7627 = vmatpush1.bf16.msra.mxu0 0
    %7628 = vmatprep.mubr.bf16.mxu0 0
    %7629 = vmatmul.mubr.bf16.gmra.mrb[0].mxu0 %v7594
    %v7630 = vpop.f32.mrb[0].mxu0
    %v7631 = vadd.f32 0.0, %v7630
    %v7632 = vpop.f32.mrb[0].mxu0
    %v7633 = vpop.f32.mrb[0].mxu0
    %v7634 = vpop.f32.mrb[0].mxu0
    %7635 = vdwg.mxu0
    %v7636 = vadd.f32 %v7591, %v7631
    %v7637 = vpack.c.bf16 %v7494, %v7494
    %v7639 = vsel %vm461, %v7637, 0
    %7641 = vmatprep.subr.bf16.mxu0 0
    %7642 = vmatpush1.bf16.msra.mxu0 %v3973
    %7643 = vmatprep.subr.bf16.mxu0 0
    %7644 = vmatpush1.bf16.msra.mxu0 0
    %7645 = vmatprep.subr.bf16.mxu0 0
    %7646 = vmatpush1.bf16.msra.mxu0 0
    %7647 = vmatprep.subr.bf16.mxu0 0
    %7648 = vmatpush1.bf16.msra.mxu0 0
    %7649 = vmatprep.subr.bf16.mxu0 0
    %7650 = vmatpush1.bf16.msra.mxu0 0
    %7651 = vmatprep.subr.bf16.mxu0 0
    %7652 = vmatpush1.bf16.msra.mxu0 0
    %7653 = vmatprep.subr.bf16.mxu0 0
    %7654 = vmatpush1.bf16.msra.mxu0 0
    %7655 = vmatprep.subr.bf16.mxu0 0
    %7656 = vmatpush1.bf16.msra.mxu0 0
    %7657 = vmatprep.subr.bf16.mxu0 0
    %7658 = vmatpush1.bf16.msra.mxu0 0
    %7659 = vmatprep.subr.bf16.mxu0 0
    %7660 = vmatpush1.bf16.msra.mxu0 0
    %7661 = vmatprep.subr.bf16.mxu0 0
    %7662 = vmatpush1.bf16.msra.mxu0 0
    %7663 = vmatprep.subr.bf16.mxu0 0
    %7664 = vmatpush1.bf16.msra.mxu0 0
    %7665 = vmatprep.subr.bf16.mxu0 0
    %7666 = vmatpush1.bf16.msra.mxu0 0
    %7667 = vmatprep.subr.bf16.mxu0 0
    %7668 = vmatpush1.bf16.msra.mxu0 0
    %7669 = vmatprep.subr.bf16.mxu0 0
    %7670 = vmatpush1.bf16.msra.mxu0 0
    %7671 = vmatprep.subr.bf16.mxu0 0
    %7672 = vmatpush1.bf16.msra.mxu0 0
    %7673 = vmatprep.mubr.bf16.mxu0 0
    %7674 = vmatmul.mubr.bf16.gmra.mrb[0].mxu0 %v7639
    %v7675 = vpop.f32.mrb[0].mxu0
    %v7676 = vadd.f32 0.0, %v7675
    %v7677 = vpop.f32.mrb[0].mxu0
    %v7678 = vpop.f32.mrb[0].mxu0
    %v7679 = vpop.f32.mrb[0].mxu0
    %7680 = vdwg.mxu0
    %v7681 = vadd.f32 %v7636, %v7676
    %v7682 = vsel %vm262, %v7681, 0.0
    %7683 = vadd.xlane.f32.xlu0 %v7682
    %v7684 = vpop.xlane.xlu0 %7683
    %v7685 = vmul.f32 %v7684, %v1326
    %v7686 = vsub.f32 %v7681, %v7685
    %v7687 = vmul.f32 %v7686, %v7686
    %v7688 = vsel %vm262, %v7687, 0.0
    %7689 = vadd.xlane.f32.xlu0 %v7688
    %v7690 = vpop.xlane.xlu0 %7689
    %v7691 = vmul.f32 %v7690, %v1326
    %v7692 = vadd.f32 %v7691, 1e-05
    %v7693 = vrsqrt.pop %v7692
    %v7694 = vmul.f32 %v7686, %v7693
    %v7695 = vmul.f32 %v7694, %v4033
    %v7696 = vadd.f32 %v7695, %v4040
    %v7697 = vpack.c.bf16 %v7696, %v7696
    %v7699 = vsel %vm262, %v7697, 0
    %7701 = vmatprep.subr.bf16.mxu0 0
    %7702 = vmatpush1.bf16.msra.mxu0 %v4044
    %7703 = vmatprep.subr.bf16.mxu0 0
    %7704 = vmatpush1.bf16.msra.mxu0 %v4045
    %7705 = vmatprep.subr.bf16.mxu0 0
    %7706 = vmatpush1.bf16.msra.mxu0 0
    %7707 = vmatprep.subr.bf16.mxu0 0
    %7708 = vmatpush1.bf16.msra.mxu0 0
    %7709 = vmatprep.subr.bf16.mxu0 0
    %7710 = vmatpush1.bf16.msra.mxu0 0
    %7711 = vmatprep.subr.bf16.mxu0 0
    %7712 = vmatpush1.bf16.msra.mxu0 0
    %7713 = vmatprep.subr.bf16.mxu0 0
    %7714 = vmatpush1.bf16.msra.mxu0 0
    %7715 = vmatprep.subr.bf16.mxu0 0
    %7716 = vmatpush1.bf16.msra.mxu0 0
    %7717 = vmatprep.subr.bf16.mxu0 0
    %7718 = vmatpush1.bf16.msra.mxu0 0
    %7719 = vmatprep.subr.bf16.mxu0 0
    %7720 = vmatpush1.bf16.msra.mxu0 0
    %7721 = vmatprep.subr.bf16.mxu0 0
    %7722 = vmatpush1.bf16.msra.mxu0 0
    %7723 = vmatprep.subr.bf16.mxu0 0
    %7724 = vmatpush1.bf16.msra.mxu0 0
    %7725 = vmatprep.subr.bf16.mxu0 0
    %7726 = vmatpush1.bf16.msra.mxu0 0
    %7727 = vmatprep.subr.bf16.mxu0 0
    %7728 = vmatpush1.bf16.msra.mxu0 0
    %7729 = vmatprep.subr.bf16.mxu0 0
    %7730 = vmatpush1.bf16.msra.mxu0 0
    %7731 = vmatprep.subr.bf16.mxu0 0
    %7732 = vmatpush1.bf16.msra.mxu0 0
    %7733 = vmatprep.mubr.bf16.mxu0 0
    %7734 = vmatmul.mubr.bf16.gmra.mrb[0].mxu0 %v7699
    %v7735 = vpop.f32.mrb[0].mxu0
    %v7736 = vadd.f32 %v4050, %v7735
    %v7737 = vpop.f32.mrb[0].mxu0
    %v7738 = vpop.f32.mrb[0].mxu0
    %v7739 = vpop.f32.mrb[0].mxu0
    %7740 = vdwg.mxu0
    %v7741 = vmax.f32 %v7736, 0.0
    %v7742 = vpack.c.bf16 %v7741, %v7741
    %v7744 = vsel %vm4107, %v7742, 0
    %7746 = vmatprep.subr.bf16.mxu0 0
    %7747 = vmatpush1.bf16.msra.mxu0 %v4097
    %7748 = vmatprep.subr.bf16.mxu0 0
    %7749 = vmatpush1.bf16.msra.mxu0 %v4098
    %7750 = vmatprep.subr.bf16.mxu0 0
    %7751 = vmatpush1.bf16.msra.mxu0 %v4099
    %7752 = vmatprep.subr.bf16.mxu0 0
    %7753 = vmatpush1.bf16.msra.mxu0 %v4100
    %7754 = vmatprep.subr.bf16.mxu0 0
    %7755 = vmatpush1.bf16.msra.mxu0 0
    %7756 = vmatprep.subr.bf16.mxu0 0
    %7757 = vmatpush1.bf16.msra.mxu0 0
    %7758 = vmatprep.subr.bf16.mxu0 0
    %7759 = vmatpush1.bf16.msra.mxu0 0
    %7760 = vmatprep.subr.bf16.mxu0 0
    %7761 = vmatpush1.bf16.msra.mxu0 0
    %7762 = vmatprep.subr.bf16.mxu0 0
    %7763 = vmatpush1.bf16.msra.mxu0 0
    %7764 = vmatprep.subr.bf16.mxu0 0
    %7765 = vmatpush1.bf16.msra.mxu0 0
    %7766 = vmatprep.subr.bf16.mxu0 0
    %7767 = vmatpush1.bf16.msra.mxu0 0
    %7768 = vmatprep.subr.bf16.mxu0 0
    %7769 = vmatpush1.bf16.msra.mxu0 0
    %7770 = vmatprep.subr.bf16.mxu0 0
    %7771 = vmatpush1.bf16.msra.mxu0 0
    %7772 = vmatprep.subr.bf16.mxu0 0
    %7773 = vmatpush1.bf16.msra.mxu0 0
    %7774 = vmatprep.subr.bf16.mxu0 0
    %7775 = vmatpush1.bf16.msra.mxu0 0
    %7776 = vmatprep.subr.bf16.mxu0 0
    %7777 = vmatpush1.bf16.msra.mxu0 0
    %7778 = vmatprep.mubr.bf16.mxu0 0
    %7779 = vmatmul.mubr.bf16.gmra.mrb[0].mxu0 %v7744
    %v7780 = vpop.f32.mrb[0].mxu0
    %v7781 = vadd.f32 %v4105, %v7780
    %v7782 = vpop.f32.mrb[0].mxu0
    %v7783 = vpop.f32.mrb[0].mxu0
    %v7784 = vpop.f32.mrb[0].mxu0
    %7785 = vdwg.mxu0
    %v7786 = vadd.f32 %v7781, %v7696
    %v7787 = vsel %vm262, %v7786, 0.0
    %7788 = vadd.xlane.f32.xlu0 %v7787
    %v7789 = vpop.xlane.xlu0 %7788
    %v7790 = vmul.f32 %v7789, %v1326
    %v7791 = vsub.f32 %v7786, %v7790
    %v7792 = vmul.f32 %v7791, %v7791
    %v7793 = vsel %vm262, %v7792, 0.0
    %7794 = vadd.xlane.f32.xlu0 %v7793
    %v7795 = vpop.xlane.xlu0 %7794
    %v7796 = vmul.f32 %v7795, %v1326
    %v7797 = vadd.f32 %v7796, 1e-05
    %v7798 = vrsqrt.pop %v7797
    %v7799 = vmul.f32 %v7791, %v7798
    %v7800 = vmul.f32 %v7799, %v4169
    %v7801 = vadd.f32 %v7800, %v4176
    %7802 = vst.msk [vmem:[%s61 + $0x8] sm:$0xff] %vm262, %v7801
    // Predicated region
    $region146: #{decoder_layer_forward.1} parent=1 // pred_check
      _
    $region147: #{decoder_layer_forward.1} parent=1 // pred_check_branch
      %7804 = sbr.rel (0) target = $region149
    $region148: #{decoder_layer_forward.1} parent=1 // pred_region
      _
    $region149: #{decoder_layer_forward.1} parent=1 // pred_fallthru
      _
    // Predicated region
    $region150: #{decoder_layer_forward.1} parent=1 // pred_check
      _
    $region151: #{decoder_layer_forward.1} parent=1 // pred_check_branch
      %7806 = sbr.rel (0) target = $region153
    $region152: #{decoder_layer_forward.1} parent=1 // pred_region
      _
    $region153: #{decoder_layer_forward.1} parent=1 // pred_fallthru
      _
    %7807 = vsyncpa [#allocation3], 1
    %7808 = vsyncpa [#allocation5], 1
    %7809 = vsyncpa [#allocation8], 1
    %7810 = vsyncpa [#allocation11], 1

</llo_original>
